<compile_context>
chip_gen: v7x
topology: tpu7x:2x2x1
jax: 0.10.0
libtpu: 0.0.40
codegen_flags: <defaults>
</compile_context>

<pallas_src>
import numpy as np

import jax
import jax.numpy as jnp
from jax.experimental import pallas as pl
from jax.experimental.pallas import tpu as pltpu


# ---------------------------------------------------------------------------
# Constant 0/1 spatial gather / scatter matrices (built once with numpy).
# ---------------------------------------------------------------------------
def _conv_gather_mats(h, w, k=3, stride=2, pad=1):
    """S[t, i*wo+j, r*w+c] = 1 iff output (i,j) under tap t=(kh,kw) reads
    input (r,c) = (i*stride + kh - pad, j*stride + kw - pad)."""
    ho = (h + 2 * pad - k) // stride + 1
    wo = (w + 2 * pad - k) // stride + 1
    s = np.zeros((k * k, ho * wo, h * w), np.float32)
    for kh in range(k):
        for kw in range(k):
            t = kh * k + kw
            for i in range(ho):
                r = i * stride + kh - pad
                if not (0 <= r < h):
                    continue
                for j in range(wo):
                    c = j * stride + kw - pad
                    if 0 <= c < w:
                        s[t, i * wo + j, r * w + c] = 1.0
    return s, ho, wo


def _deconv_scatter_mats(h, w, k=3, stride=2, pad=1, out_pad=1):
    """S[t, r*wo+c, ih*w+iw] = 1 iff input (ih,iw) under tap t=(kh,kw)
    contributes to output (r,c) = (ih*stride - pad + kh, iw*stride - pad + kw)."""
    ho = (h - 1) * stride - 2 * pad + k + out_pad
    wo = (w - 1) * stride - 2 * pad + k + out_pad
    s = np.zeros((k * k, ho * wo, h * w), np.float32)
    for kh in range(k):
        for kw in range(k):
            t = kh * k + kw
            for ih in range(h):
                r = ih * stride - pad + kh
                if not (0 <= r < ho):
                    continue
                for iw in range(w):
                    c = iw * stride - pad + kw
                    if 0 <= c < wo:
                        s[t, r * wo + c, ih * w + iw] = 1.0
    return s, ho, wo


# ---------------------------------------------------------------------------
# Fused whole-network kernel: TB independent images per grid step.
# ---------------------------------------------------------------------------
def _autoencoder_kernel(x_ref,
                        s1, w1, b1, s2, w2, b2, s3, w3, b3,
                        s4, w4, b4, s5, w5, b5, s6, w6, b6,
                        o_ref):
    f32, bf16 = jnp.float32, jnp.bfloat16

    def enc_layer(x, s_ref, w_ref, b_ref):
        # spatial-first conv:  Y = sum_t (S_t @ X) @ W_t
        m_out = s_ref.shape[0] // 9
        c_out = w_ref.shape[2]
        g_all = jnp.dot(s_ref[...], x, preferred_element_type=f32).astype(bf16)
        acc = jnp.broadcast_to(b_ref[...], (m_out, c_out))          # bias init
        for t in range(9):                                          # unrolled taps
            acc = acc + jnp.dot(g_all[t * m_out:(t + 1) * m_out], w_ref[t],
                                preferred_element_type=f32)
        return jnp.maximum(acc, 0.0)

    def dec_layer_sf(x, s_ref, wcat_ref, b_ref):
        # spatial-first transposed conv:  Y = sum_t S_t @ (X @ W_t)
        m_out = s_ref.shape[1]
        c_out = wcat_ref.shape[1] // 9
        z_all = jnp.dot(x, wcat_ref[...], preferred_element_type=f32).astype(bf16)
        acc = jnp.broadcast_to(b_ref[...], (m_out, c_out))
        for t in range(9):
            acc = acc + jnp.dot(s_ref[t], z_all[:, t * c_out:(t + 1) * c_out],
                                preferred_element_type=f32)
        return jnp.maximum(acc, 0.0)

    def dec_layer_cf(x_cf, s_ref, wtv_ref, b_ref, act):
        # channels-first transposed conv:  Y^T = sum_t W_t^T @ X^T @ S_t^T
        c_blk = wtv_ref.shape[0] // 9
        m_out = s_ref.shape[2]
        ba = jnp.dot(wtv_ref[...], x_cf, preferred_element_type=f32).astype(bf16)
        acc = jnp.broadcast_to(b_ref[...], (c_blk, m_out))
        for t in range(9):
            acc = acc + jnp.dot(ba[t * c_blk:(t + 1) * c_blk], s_ref[t],
                                preferred_element_type=f32)
        if act == "relu":
            return jnp.maximum(acc, 0.0)
        return 1.0 / (1.0 + jnp.exp(-acc))                          # exact sigmoid

    tb = x_ref.shape[0]
    for b in range(tb):                                             # independent chains
        x = x_ref[b]                                                # (HW, 3) bf16
        h = enc_layer(x, s1, w1, b1).astype(bf16)                   # (64, 64)
        h = enc_layer(h, s2, w2, b2).astype(bf16)                   # (16, 128)
        h = enc_layer(h, s3, w3, b3).astype(bf16)                   # (8, 256): 4 spatial + pad
        h = dec_layer_sf(h, s4, w4, b4)                             # (16, 128) f32
        h_cf = jnp.transpose(h).astype(bf16)                        # (128, 16) channels-first
        h_cf = dec_layer_cf(h_cf, s5, w5, b5, "relu").astype(bf16)  # (64, 64)
        y = dec_layer_cf(h_cf, s6, w6, b6, "sigmoid")               # (8, 256): C pad 3->8
        o_ref[b] = y.astype(o_ref.dtype)


# ---------------------------------------------------------------------------
# Parameter / operand preparation (done once) + jitted forward wrapper.
# ---------------------------------------------------------------------------
def _conv_w_stack(w):    # Conv2d (Cout, Cin, 3, 3) -> (9, Cin, Cout)
    cout, cin = w.shape[0], w.shape[1]
    return jnp.transpose(w, (2, 3, 1, 0)).reshape(9, cin, cout)


def make_forward(params, *, height=16, width=16, max_tb=4):
    hw = height * width
    cin = params["e1_w"].shape[1]

    # ---- spatial 0/1 gather / scatter constants ---------------------------
    se1, h1, ww1 = _conv_gather_mats(height, width)        # (9, 64, 256)
    se2, h2, ww2 = _conv_gather_mats(h1, ww1)              # (9, 16, 64)
    se3, h3, ww3 = _conv_gather_mats(h2, ww2)              # (9, 4, 16)
    sd1, h4, ww4 = _deconv_scatter_mats(h3, ww3)           # (9, 16, 4)
    sd2, h5, ww5 = _deconv_scatter_mats(h4, ww4)           # (9, 64, 16)
    sd3, h6, ww6 = _deconv_scatter_mats(h5, ww5)           # (9, 256, 64)
    assert (h6, ww6) == (height, width)

    m1, m2, m3 = h1 * ww1, h2 * ww2, h3 * ww3
    assert m1 % 8 == 0 and m2 % 8 == 0, "encoder tap slices must be sublane aligned"
    m3p = ((m3 + 7) // 8) * 8                              # padded bottleneck spatial

    # encoder: vstack the 9 gather matrices (taps along sublanes).
    s1_stack = se1.reshape(9 * m1, hw)
    s2_stack = se2.reshape(9 * m2, m1)
    se3p = np.zeros((9, m3p, m2), np.float32); se3p[:, :m3, :] = se3
    s3_stack = se3p.reshape(9 * m3p, m2)
    # decoder d1: scatter matrices with the (padded) bottleneck axis as columns.
    sd1p = np.zeros((9, sd1.shape[1], m3p), np.float32); sd1p[:, :, :m3] = sd1
    # decoders d2/d3 (channels-first): transposed scatter matrices.
    s5_t = np.transpose(sd2, (0, 2, 1))                    # (9, 16, 64)
    s6_t = np.transpose(sd3, (0, 2, 1))                    # (9, 64, 256)

    # ---- weight / bias re-layout (hoisted, done once) ----------------------
    c_last = params["d3_w"].shape[1]                       # 3
    c_last_p = ((c_last + 7) // 8) * 8                     # pad to 8 sublanes

    w1s = _conv_w_stack(params["e1_w"])                    # (9, 3, 64)
    w2s = _conv_w_stack(params["e2_w"])                    # (9, 64, 128)
    w3s = _conv_w_stack(params["e3_w"])                    # (9, 128, 256)

    d1w = params["d1_w"]                                   # (256, 128, 3, 3)
    w4c = jnp.transpose(
        jnp.transpose(d1w, (2, 3, 0, 1)).reshape(9, d1w.shape[0], d1w.shape[1]),
        (1, 0, 2)).reshape(d1w.shape[0], 9 * d1w.shape[1])          # (256, 1152)
    d2w = params["d2_w"]                                   # (128, 64, 3, 3)
    w5tv = jnp.transpose(d2w, (2, 3, 1, 0)).reshape(9 * d2w.shape[1], d2w.shape[0])  # (576, 128)
    d3w = params["d3_w"]                                   # (64, 3, 3, 3)
    w6tv = jnp.pad(jnp.transpose(d3w, (2, 3, 1, 0)),
                   ((0, 0), (0, 0), (0, c_last_p - c_last), (0, 0))
                   ).reshape(9 * c_last_p, d3w.shape[0])             # (72, 64)

    b1 = params["e1_b"].reshape(1, -1)
    b2 = params["e2_b"].reshape(1, -1)
    b3 = params["e3_b"].reshape(1, -1)
    b4 = params["d1_b"].reshape(1, -1)
    b5 = params["d2_b"].reshape(-1, 1)                               # channels-first
    b6 = jnp.pad(params["d3_b"], (0, c_last_p - c_last)).reshape(-1, 1)

    bf16, f32 = jnp.bfloat16, jnp.float32
    operands = tuple(jax.device_put(o) for o in (
        jnp.asarray(s1_stack, bf16), w1s.astype(bf16), b1.astype(f32),
        jnp.asarray(s2_stack, bf16), w2s.astype(bf16), b2.astype(f32),
        jnp.asarray(s3_stack, bf16), w3s.astype(bf16), b3.astype(f32),
        jnp.asarray(sd1p,     bf16), w4c.astype(bf16), b4.astype(f32),
        jnp.asarray(s5_t,     bf16), w5tv.astype(bf16), b5.astype(f32),
        jnp.asarray(s6_t,     bf16), w6tv.astype(bf16), b6.astype(f32),
    ))

    def _pick_tb(n):
        # Largest TB (<= max_tb) dividing N that keeps the grid length even,
        # so both v7x TensorCores get work; fall back to any divisor.
        divs = [t for t in range(1, min(max_tb, n) + 1) if n % t == 0]
        even = [t for t in divs if (n // t) % 2 == 0]
        return max(even) if even else max(divs)

    @jax.jit
    def forward(x_nchw):
        n = x_nchw.shape[0]
        tb = _pick_tb(n)
        # NCHW -> (N, H*W, C) bf16 (3 KB/image).
        # TODO(synk): could move this tiny transpose in-kernel via a (C,HW)->(HW,C) relayout.
        x = jnp.transpose(x_nchw.reshape(n, cin, hw), (0, 2, 1)).astype(bf16)

        in_specs = [pl.BlockSpec((tb, hw, cin), lambda i: (i, 0, 0))]
        for op in operands:
            if op.ndim == 3:
                in_specs.append(pl.BlockSpec(op.shape, lambda i: (0, 0, 0)))
            else:
                in_specs.append(pl.BlockSpec(op.shape, lambda i: (0, 0)))
        out_specs = pl.BlockSpec((tb, c_last_p, hw), lambda i: (i, 0, 0))

        y = pl.pallas_call(
            _autoencoder_kernel,
            grid=(n // tb,),
            in_specs=in_specs,
            out_specs=out_specs,
            out_shape=jax.ShapeDtypeStruct((n, c_last_p, hw), jnp.float32),
            compiler_params=pltpu.CompilerParams(
                dimension_semantics=("parallel",)),
        )(x, *operands)

        # Kernel output is already channels-first: slice the padded channels
        # and reshape straight to NCHW (no transpose needed).
        return y[:, :c_last, :].reshape(n, c_last, height, width)

    return forward


# ---------------------------------------------------------------------------
# Parameters
# ---------------------------------------------------------------------------
def init_params(key):
    ks = jax.random.split(key, 12)
    s = 0.05
    return {
        "e1_w": jax.random.normal(ks[0], (64, 3, 3, 3), jnp.float32) * s,
        "e1_b": jax.random.normal(ks[1], (64,), jnp.float32) * s,
        "e2_w": jax.random.normal(ks[2], (128, 64, 3, 3), jnp.float32) * s,
        "e2_b": jax.random.normal(ks[3], (128,), jnp.float32) * s,
        "e3_w": jax.random.normal(ks[4], (256, 128, 3, 3), jnp.float32) * s,
        "e3_b": jax.random.normal(ks[5], (256,), jnp.float32) * s,
        "d1_w": jax.random.normal(ks[6], (256, 128, 3, 3), jnp.float32) * s,
        "d1_b": jax.random.normal(ks[7], (128,), jnp.float32) * s,
        "d2_w": jax.random.normal(ks[8], (128, 64, 3, 3), jnp.float32) * s,
        "d2_b": jax.random.normal(ks[9], (64,), jnp.float32) * s,
        "d3_w": jax.random.normal(ks[10], (64, 3, 3, 3), jnp.float32) * s,
        "d3_b": jax.random.normal(ks[11], (3,), jnp.float32) * s,
    }


# ---------------------------------------------------------------------------
# Pure-XLA f32 reference (correctness check of the Pallas path)
# ---------------------------------------------------------------------------
def _ref_conv(x, w, b, relu=True):
    w_hwio = jnp.transpose(w, (2, 3, 1, 0))
    y = jax.lax.conv_general_dilated(
        x, w_hwio, window_strides=(2, 2), padding=((1, 1), (1, 1)),
        dimension_numbers=("NHWC", "HWIO", "NHWC")) + b
    return jnp.maximum(y, 0.0) if relu else y


def _ref_deconv(x, w, b, act):
    w_eq = jnp.transpose(w[:, :, ::-1, ::-1], (1, 0, 2, 3))
    w_hwio = jnp.transpose(w_eq, (2, 3, 1, 0))
    y = jax.lax.conv_general_dilated(
        x, w_hwio, window_strides=(1, 1), padding=((1, 2), (1, 2)),
        lhs_dilation=(2, 2),
        dimension_numbers=("NHWC", "HWIO", "NHWC")) + b
    return jnp.maximum(y, 0.0) if act == "relu" else jax.nn.sigmoid(y)


def reference_forward(params, x_nchw):
    x = jnp.transpose(x_nchw, (0, 2, 3, 1))
    x = _ref_conv(x, params["e1_w"], params["e1_b"])
    x = _ref_conv(x, params["e2_w"], params["e2_b"])
    x = _ref_conv(x, params["e3_w"], params["e3_b"])
    x = _ref_deconv(x, params["d1_w"], params["d1_b"], "relu")
    x = _ref_deconv(x, params["d2_w"], params["d2_b"], "relu")
    x = _ref_deconv(x, params["d3_w"], params["d3_b"], "sigmoid")
    return jnp.transpose(x, (0, 3, 1, 2))


if __name__ == "__main__":
    key = jax.random.PRNGKey(0)
    k_param, k_x = jax.random.split(key)
    params = init_params(k_param)
    x = jax.random.uniform(k_x, (2, 3, 16, 16), jnp.float32)   # NCHW input

    forward = make_forward(params, height=16, width=16)
    out = jax.block_until_ready(forward(x))
    assert out.shape == (2, 3, 16, 16), out.shape

    ref = jax.block_until_ready(reference_forward(params, x))
    # bf16 MXU operands (f32 accumulation) -> bf16-level tolerance.
    err = float(jnp.max(jnp.abs(out - ref)))
    assert err < 2e-2, err

    print("KERNEL_OK")
</pallas_src>

<mosaic_0001>
module attributes {stable_mosaic.version = 11 : i64} {
  func.func @_autoencoder_kernel(%arg0: i32, %arg1: memref<1x256x3xbf16, #tpu.memory_space<vmem>>, %arg2: memref<576x256xbf16, #tpu.memory_space<vmem>>, %arg3: memref<9x3x64xbf16, #tpu.memory_space<vmem>>, %arg4: memref<1x64xf32, #tpu.memory_space<vmem>>, %arg5: memref<144x64xbf16, #tpu.memory_space<vmem>>, %arg6: memref<9x64x128xbf16, #tpu.memory_space<vmem>>, %arg7: memref<1x128xf32, #tpu.memory_space<vmem>>, %arg8: memref<72x16xbf16, #tpu.memory_space<vmem>>, %arg9: memref<9x128x256xbf16, #tpu.memory_space<vmem>>, %arg10: memref<1x256xf32, #tpu.memory_space<vmem>>, %arg11: memref<9x16x8xbf16, #tpu.memory_space<vmem>>, %arg12: memref<256x1152xbf16, #tpu.memory_space<vmem>>, %arg13: memref<1x128xf32, #tpu.memory_space<vmem>>, %arg14: memref<9x16x64xbf16, #tpu.memory_space<vmem>>, %arg15: memref<576x128xbf16, #tpu.memory_space<vmem>>, %arg16: memref<64x1xf32, #tpu.memory_space<vmem>>, %arg17: memref<9x64x256xbf16, #tpu.memory_space<vmem>>, %arg18: memref<72x64xbf16, #tpu.memory_space<vmem>>, %arg19: memref<8x1xf32, #tpu.memory_space<vmem>>, %arg20: memref<1x8x256xf32, #tpu.memory_space<vmem>>) attributes {dimension_semantics = [#tpu.dimension_semantics<parallel>], iteration_bounds = array<i64: 2>, scalar_prefetch = 0 : i64, scratch_operands = 0 : i64, tpu.core_type = #tpu.core_type<tc>, window_params = [{transform_indices = @transform_0, window_bounds = array<i64: 1, 256, 3>}, {pipeline_mode = #tpu.pipeline_mode<synchronous>, transform_indices = @transform_1, window_bounds = array<i64: 576, 256>}, {pipeline_mode = #tpu.pipeline_mode<synchronous>, transform_indices = @transform_2, window_bounds = array<i64: 9, 3, 64>}, {pipeline_mode = #tpu.pipeline_mode<synchronous>, transform_indices = @transform_3, window_bounds = array<i64: 1, 64>}, {pipeline_mode = #tpu.pipeline_mode<synchronous>, transform_indices = @transform_4, window_bounds = array<i64: 144, 64>}, {pipeline_mode = #tpu.pipeline_mode<synchronous>, transform_indices = @transform_5, window_bounds = array<i64: 9, 64, 128>}, {pipeline_mode = #tpu.pipeline_mode<synchronous>, transform_indices = @transform_6, window_bounds = array<i64: 1, 128>}, {pipeline_mode = #tpu.pipeline_mode<synchronous>, transform_indices = @transform_7, window_bounds = array<i64: 72, 16>}, {pipeline_mode = #tpu.pipeline_mode<synchronous>, transform_indices = @transform_8, window_bounds = array<i64: 9, 128, 256>}, {pipeline_mode = #tpu.pipeline_mode<synchronous>, transform_indices = @transform_9, window_bounds = array<i64: 1, 256>}, {pipeline_mode = #tpu.pipeline_mode<synchronous>, transform_indices = @transform_10, window_bounds = array<i64: 9, 16, 8>}, {pipeline_mode = #tpu.pipeline_mode<synchronous>, transform_indices = @transform_11, window_bounds = array<i64: 256, 1152>}, {pipeline_mode = #tpu.pipeline_mode<synchronous>, transform_indices = @transform_12, window_bounds = array<i64: 1, 128>}, {pipeline_mode = #tpu.pipeline_mode<synchronous>, transform_indices = @transform_13, window_bounds = array<i64: 9, 16, 64>}, {pipeline_mode = #tpu.pipeline_mode<synchronous>, transform_indices = @transform_14, window_bounds = array<i64: 576, 128>}, {pipeline_mode = #tpu.pipeline_mode<synchronous>, transform_indices = @transform_15, window_bounds = array<i64: 64, 1>}, {pipeline_mode = #tpu.pipeline_mode<synchronous>, transform_indices = @transform_16, window_bounds = array<i64: 9, 64, 256>}, {pipeline_mode = #tpu.pipeline_mode<synchronous>, transform_indices = @transform_17, window_bounds = array<i64: 72, 64>}, {pipeline_mode = #tpu.pipeline_mode<synchronous>, transform_indices = @transform_18, window_bounds = array<i64: 8, 1>}, {transform_indices = @transform_19, window_bounds = array<i64: 1, 8, 256>}]} {
    %c0 = arith.constant 0 : index
    %c0_0 = arith.constant 0 : index
    %c0_1 = arith.constant 0 : index
    %0 = vector.load %arg1[%c0, %c0_0, %c0_1] : memref<1x256x3xbf16, #tpu.memory_space<vmem>>, vector<1x256x3xbf16>
    %1 = vector.shape_cast %0 : vector<1x256x3xbf16> to vector<256x3xbf16>
    %c0_2 = arith.constant 0 : index
    %c0_3 = arith.constant 0 : index
    %2 = vector.load %arg2[%c0_2, %c0_3] : memref<576x256xbf16, #tpu.memory_space<vmem>>, vector<576x256xbf16>
    %cst = arith.constant dense<0.000000e+00> : vector<576x3xf32>
    %3 = tpu.matmul %2, %1, %cst {dimension_numbers = #tpu.dot_dimension_numbers<[1], [0], [0], [1], [0, 0, 1, 1], [], []>} : vector<576x256xbf16>, vector<256x3xbf16>, vector<576x3xf32> -> vector<576x3xf32>
    %4 = arith.truncf %3 : vector<576x3xf32> to vector<576x3xbf16>
    %c0_4 = arith.constant 0 : index
    %c0_5 = arith.constant 0 : index
    %5 = vector.load %arg4[%c0_4, %c0_5] : memref<1x64xf32, #tpu.memory_space<vmem>>, vector<1x64xf32>
    %6 = vector.shape_cast %5 : vector<1x64xf32> to vector<1x64xf32>
    %7 = vector.broadcast %6 : vector<1x64xf32> to vector<64x64xf32>
    %8 = vector.extract_strided_slice %4 {offsets = [0, 0], sizes = [64, 3], strides = [1, 1]} : vector<576x3xbf16> to vector<64x3xbf16>
    %c0_6 = arith.constant 0 : index
    %c0_7 = arith.constant 0 : index
    %c0_8 = arith.constant 0 : index
    %9 = vector.load %arg3[%c0_6, %c0_7, %c0_8] : memref<9x3x64xbf16, #tpu.memory_space<vmem>>, vector<1x3x64xbf16>
    %10 = vector.shape_cast %9 : vector<1x3x64xbf16> to vector<3x64xbf16>
    %cst_9 = arith.constant dense<0.000000e+00> : vector<64x64xf32>
    %11 = tpu.matmul %8, %10, %cst_9 {dimension_numbers = #tpu.dot_dimension_numbers<[1], [0], [0], [1], [0, 0, 1, 1], [], []>} : vector<64x3xbf16>, vector<3x64xbf16>, vector<64x64xf32> -> vector<64x64xf32>
    %12 = arith.addf %7, %11 : vector<64x64xf32>
    %13 = vector.extract_strided_slice %4 {offsets = [64, 0], sizes = [64, 3], strides = [1, 1]} : vector<576x3xbf16> to vector<64x3xbf16>
    %c1 = arith.constant 1 : index
    %c0_10 = arith.constant 0 : index
    %c0_11 = arith.constant 0 : index
    %14 = vector.load %arg3[%c1, %c0_10, %c0_11] : memref<9x3x64xbf16, #tpu.memory_space<vmem>>, vector<1x3x64xbf16>
    %15 = vector.shape_cast %14 : vector<1x3x64xbf16> to vector<3x64xbf16>
    %cst_12 = arith.constant dense<0.000000e+00> : vector<64x64xf32>
    %16 = tpu.matmul %13, %15, %cst_12 {dimension_numbers = #tpu.dot_dimension_numbers<[1], [0], [0], [1], [0, 0, 1, 1], [], []>} : vector<64x3xbf16>, vector<3x64xbf16>, vector<64x64xf32> -> vector<64x64xf32>
    %17 = arith.addf %12, %16 : vector<64x64xf32>
    %18 = vector.extract_strided_slice %4 {offsets = [128, 0], sizes = [64, 3], strides = [1, 1]} : vector<576x3xbf16> to vector<64x3xbf16>
    %c2 = arith.constant 2 : index
    %c0_13 = arith.constant 0 : index
    %c0_14 = arith.constant 0 : index
    %19 = vector.load %arg3[%c2, %c0_13, %c0_14] : memref<9x3x64xbf16, #tpu.memory_space<vmem>>, vector<1x3x64xbf16>
    %20 = vector.shape_cast %19 : vector<1x3x64xbf16> to vector<3x64xbf16>
    %cst_15 = arith.constant dense<0.000000e+00> : vector<64x64xf32>
    %21 = tpu.matmul %18, %20, %cst_15 {dimension_numbers = #tpu.dot_dimension_numbers<[1], [0], [0], [1], [0, 0, 1, 1], [], []>} : vector<64x3xbf16>, vector<3x64xbf16>, vector<64x64xf32> -> vector<64x64xf32>
    %22 = arith.addf %17, %21 : vector<64x64xf32>
    %23 = vector.extract_strided_slice %4 {offsets = [192, 0], sizes = [64, 3], strides = [1, 1]} : vector<576x3xbf16> to vector<64x3xbf16>
    %c3 = arith.constant 3 : index
    %c0_16 = arith.constant 0 : index
    %c0_17 = arith.constant 0 : index
    %24 = vector.load %arg3[%c3, %c0_16, %c0_17] : memref<9x3x64xbf16, #tpu.memory_space<vmem>>, vector<1x3x64xbf16>
    %25 = vector.shape_cast %24 : vector<1x3x64xbf16> to vector<3x64xbf16>
    %cst_18 = arith.constant dense<0.000000e+00> : vector<64x64xf32>
    %26 = tpu.matmul %23, %25, %cst_18 {dimension_numbers = #tpu.dot_dimension_numbers<[1], [0], [0], [1], [0, 0, 1, 1], [], []>} : vector<64x3xbf16>, vector<3x64xbf16>, vector<64x64xf32> -> vector<64x64xf32>
    %27 = arith.addf %22, %26 : vector<64x64xf32>
    %28 = vector.extract_strided_slice %4 {offsets = [256, 0], sizes = [64, 3], strides = [1, 1]} : vector<576x3xbf16> to vector<64x3xbf16>
    %c4 = arith.constant 4 : index
    %c0_19 = arith.constant 0 : index
    %c0_20 = arith.constant 0 : index
    %29 = vector.load %arg3[%c4, %c0_19, %c0_20] : memref<9x3x64xbf16, #tpu.memory_space<vmem>>, vector<1x3x64xbf16>
    %30 = vector.shape_cast %29 : vector<1x3x64xbf16> to vector<3x64xbf16>
    %cst_21 = arith.constant dense<0.000000e+00> : vector<64x64xf32>
    %31 = tpu.matmul %28, %30, %cst_21 {dimension_numbers = #tpu.dot_dimension_numbers<[1], [0], [0], [1], [0, 0, 1, 1], [], []>} : vector<64x3xbf16>, vector<3x64xbf16>, vector<64x64xf32> -> vector<64x64xf32>
    %32 = arith.addf %27, %31 : vector<64x64xf32>
    %33 = vector.extract_strided_slice %4 {offsets = [320, 0], sizes = [64, 3], strides = [1, 1]} : vector<576x3xbf16> to vector<64x3xbf16>
    %c5 = arith.constant 5 : index
    %c0_22 = arith.constant 0 : index
    %c0_23 = arith.constant 0 : index
    %34 = vector.load %arg3[%c5, %c0_22, %c0_23] : memref<9x3x64xbf16, #tpu.memory_space<vmem>>, vector<1x3x64xbf16>
    %35 = vector.shape_cast %34 : vector<1x3x64xbf16> to vector<3x64xbf16>
    %cst_24 = arith.constant dense<0.000000e+00> : vector<64x64xf32>
    %36 = tpu.matmul %33, %35, %cst_24 {dimension_numbers = #tpu.dot_dimension_numbers<[1], [0], [0], [1], [0, 0, 1, 1], [], []>} : vector<64x3xbf16>, vector<3x64xbf16>, vector<64x64xf32> -> vector<64x64xf32>
    %37 = arith.addf %32, %36 : vector<64x64xf32>
    %38 = vector.extract_strided_slice %4 {offsets = [384, 0], sizes = [64, 3], strides = [1, 1]} : vector<576x3xbf16> to vector<64x3xbf16>
    %c6 = arith.constant 6 : index
    %c0_25 = arith.constant 0 : index
    %c0_26 = arith.constant 0 : index
    %39 = vector.load %arg3[%c6, %c0_25, %c0_26] : memref<9x3x64xbf16, #tpu.memory_space<vmem>>, vector<1x3x64xbf16>
    %40 = vector.shape_cast %39 : vector<1x3x64xbf16> to vector<3x64xbf16>
    %cst_27 = arith.constant dense<0.000000e+00> : vector<64x64xf32>
    %41 = tpu.matmul %38, %40, %cst_27 {dimension_numbers = #tpu.dot_dimension_numbers<[1], [0], [0], [1], [0, 0, 1, 1], [], []>} : vector<64x3xbf16>, vector<3x64xbf16>, vector<64x64xf32> -> vector<64x64xf32>
    %42 = arith.addf %37, %41 : vector<64x64xf32>
    %43 = vector.extract_strided_slice %4 {offsets = [448, 0], sizes = [64, 3], strides = [1, 1]} : vector<576x3xbf16> to vector<64x3xbf16>
    %c7 = arith.constant 7 : index
    %c0_28 = arith.constant 0 : index
    %c0_29 = arith.constant 0 : index
    %44 = vector.load %arg3[%c7, %c0_28, %c0_29] : memref<9x3x64xbf16, #tpu.memory_space<vmem>>, vector<1x3x64xbf16>
    %45 = vector.shape_cast %44 : vector<1x3x64xbf16> to vector<3x64xbf16>
    %cst_30 = arith.constant dense<0.000000e+00> : vector<64x64xf32>
    %46 = tpu.matmul %43, %45, %cst_30 {dimension_numbers = #tpu.dot_dimension_numbers<[1], [0], [0], [1], [0, 0, 1, 1], [], []>} : vector<64x3xbf16>, vector<3x64xbf16>, vector<64x64xf32> -> vector<64x64xf32>
    %47 = arith.addf %42, %46 : vector<64x64xf32>
    %48 = vector.extract_strided_slice %4 {offsets = [512, 0], sizes = [64, 3], strides = [1, 1]} : vector<576x3xbf16> to vector<64x3xbf16>
    %c8 = arith.constant 8 : index
    %c0_31 = arith.constant 0 : index
    %c0_32 = arith.constant 0 : index
    %49 = vector.load %arg3[%c8, %c0_31, %c0_32] : memref<9x3x64xbf16, #tpu.memory_space<vmem>>, vector<1x3x64xbf16>
    %50 = vector.shape_cast %49 : vector<1x3x64xbf16> to vector<3x64xbf16>
    %cst_33 = arith.constant dense<0.000000e+00> : vector<64x64xf32>
    %51 = tpu.matmul %48, %50, %cst_33 {dimension_numbers = #tpu.dot_dimension_numbers<[1], [0], [0], [1], [0, 0, 1, 1], [], []>} : vector<64x3xbf16>, vector<3x64xbf16>, vector<64x64xf32> -> vector<64x64xf32>
    %52 = arith.addf %47, %51 : vector<64x64xf32>
    %cst_34 = arith.constant 0.000000e+00 : f32
    %53 = vector.broadcast %cst_34 : f32 to vector<64x64xf32>
    %54 = arith.maximumf %52, %53 : vector<64x64xf32>
    %55 = arith.truncf %54 : vector<64x64xf32> to vector<64x64xbf16>
    %c0_35 = arith.constant 0 : index
    %c0_36 = arith.constant 0 : index
    %56 = vector.load %arg5[%c0_35, %c0_36] : memref<144x64xbf16, #tpu.memory_space<vmem>>, vector<144x64xbf16>
    %cst_37 = arith.constant dense<0.000000e+00> : vector<144x64xf32>
    %57 = tpu.matmul %56, %55, %cst_37 {dimension_numbers = #tpu.dot_dimension_numbers<[1], [0], [0], [1], [0, 0, 1, 1], [], []>} : vector<144x64xbf16>, vector<64x64xbf16>, vector<144x64xf32> -> vector<144x64xf32>
    %58 = arith.truncf %57 : vector<144x64xf32> to vector<144x64xbf16>
    %c0_38 = arith.constant 0 : index
    %c0_39 = arith.constant 0 : index
    %59 = vector.load %arg7[%c0_38, %c0_39] : memref<1x128xf32, #tpu.memory_space<vmem>>, vector<1x128xf32>
    %60 = vector.shape_cast %59 : vector<1x128xf32> to vector<1x128xf32>
    %61 = vector.broadcast %60 : vector<1x128xf32> to vector<16x128xf32>
    %62 = vector.extract_strided_slice %58 {offsets = [0, 0], sizes = [16, 64], strides = [1, 1]} : vector<144x64xbf16> to vector<16x64xbf16>
    %c0_40 = arith.constant 0 : index
    %c0_41 = arith.constant 0 : index
    %c0_42 = arith.constant 0 : index
    %63 = vector.load %arg6[%c0_40, %c0_41, %c0_42] : memref<9x64x128xbf16, #tpu.memory_space<vmem>>, vector<1x64x128xbf16>
    %64 = vector.shape_cast %63 : vector<1x64x128xbf16> to vector<64x128xbf16>
    %cst_43 = arith.constant dense<0.000000e+00> : vector<16x128xf32>
    %65 = tpu.matmul %62, %64, %cst_43 {dimension_numbers = #tpu.dot_dimension_numbers<[1], [0], [0], [1], [0, 0, 1, 1], [], []>} : vector<16x64xbf16>, vector<64x128xbf16>, vector<16x128xf32> -> vector<16x128xf32>
    %66 = arith.addf %61, %65 : vector<16x128xf32>
    %67 = vector.extract_strided_slice %58 {offsets = [16, 0], sizes = [16, 64], strides = [1, 1]} : vector<144x64xbf16> to vector<16x64xbf16>
    %c1_44 = arith.constant 1 : index
    %c0_45 = arith.constant 0 : index
    %c0_46 = arith.constant 0 : index
    %68 = vector.load %arg6[%c1_44, %c0_45, %c0_46] : memref<9x64x128xbf16, #tpu.memory_space<vmem>>, vector<1x64x128xbf16>
    %69 = vector.shape_cast %68 : vector<1x64x128xbf16> to vector<64x128xbf16>
    %cst_47 = arith.constant dense<0.000000e+00> : vector<16x128xf32>
    %70 = tpu.matmul %67, %69, %cst_47 {dimension_numbers = #tpu.dot_dimension_numbers<[1], [0], [0], [1], [0, 0, 1, 1], [], []>} : vector<16x64xbf16>, vector<64x128xbf16>, vector<16x128xf32> -> vector<16x128xf32>
    %71 = arith.addf %66, %70 : vector<16x128xf32>
    %72 = vector.extract_strided_slice %58 {offsets = [32, 0], sizes = [16, 64], strides = [1, 1]} : vector<144x64xbf16> to vector<16x64xbf16>
    %c2_48 = arith.constant 2 : index
    %c0_49 = arith.constant 0 : index
    %c0_50 = arith.constant 0 : index
    %73 = vector.load %arg6[%c2_48, %c0_49, %c0_50] : memref<9x64x128xbf16, #tpu.memory_space<vmem>>, vector<1x64x128xbf16>
    %74 = vector.shape_cast %73 : vector<1x64x128xbf16> to vector<64x128xbf16>
    %cst_51 = arith.constant dense<0.000000e+00> : vector<16x128xf32>
    %75 = tpu.matmul %72, %74, %cst_51 {dimension_numbers = #tpu.dot_dimension_numbers<[1], [0], [0], [1], [0, 0, 1, 1], [], []>} : vector<16x64xbf16>, vector<64x128xbf16>, vector<16x128xf32> -> vector<16x128xf32>
    %76 = arith.addf %71, %75 : vector<16x128xf32>
    %77 = vector.extract_strided_slice %58 {offsets = [48, 0], sizes = [16, 64], strides = [1, 1]} : vector<144x64xbf16> to vector<16x64xbf16>
    %c3_52 = arith.constant 3 : index
    %c0_53 = arith.constant 0 : index
    %c0_54 = arith.constant 0 : index
    %78 = vector.load %arg6[%c3_52, %c0_53, %c0_54] : memref<9x64x128xbf16, #tpu.memory_space<vmem>>, vector<1x64x128xbf16>
    %79 = vector.shape_cast %78 : vector<1x64x128xbf16> to vector<64x128xbf16>
    %cst_55 = arith.constant dense<0.000000e+00> : vector<16x128xf32>
    %80 = tpu.matmul %77, %79, %cst_55 {dimension_numbers = #tpu.dot_dimension_numbers<[1], [0], [0], [1], [0, 0, 1, 1], [], []>} : vector<16x64xbf16>, vector<64x128xbf16>, vector<16x128xf32> -> vector<16x128xf32>
    %81 = arith.addf %76, %80 : vector<16x128xf32>
    %82 = vector.extract_strided_slice %58 {offsets = [64, 0], sizes = [16, 64], strides = [1, 1]} : vector<144x64xbf16> to vector<16x64xbf16>
    %c4_56 = arith.constant 4 : index
    %c0_57 = arith.constant 0 : index
    %c0_58 = arith.constant 0 : index
    %83 = vector.load %arg6[%c4_56, %c0_57, %c0_58] : memref<9x64x128xbf16, #tpu.memory_space<vmem>>, vector<1x64x128xbf16>
    %84 = vector.shape_cast %83 : vector<1x64x128xbf16> to vector<64x128xbf16>
    %cst_59 = arith.constant dense<0.000000e+00> : vector<16x128xf32>
    %85 = tpu.matmul %82, %84, %cst_59 {dimension_numbers = #tpu.dot_dimension_numbers<[1], [0], [0], [1], [0, 0, 1, 1], [], []>} : vector<16x64xbf16>, vector<64x128xbf16>, vector<16x128xf32> -> vector<16x128xf32>
    %86 = arith.addf %81, %85 : vector<16x128xf32>
    %87 = vector.extract_strided_slice %58 {offsets = [80, 0], sizes = [16, 64], strides = [1, 1]} : vector<144x64xbf16> to vector<16x64xbf16>
    %c5_60 = arith.constant 5 : index
    %c0_61 = arith.constant 0 : index
    %c0_62 = arith.constant 0 : index
    %88 = vector.load %arg6[%c5_60, %c0_61, %c0_62] : memref<9x64x128xbf16, #tpu.memory_space<vmem>>, vector<1x64x128xbf16>
    %89 = vector.shape_cast %88 : vector<1x64x128xbf16> to vector<64x128xbf16>
    %cst_63 = arith.constant dense<0.000000e+00> : vector<16x128xf32>
    %90 = tpu.matmul %87, %89, %cst_63 {dimension_numbers = #tpu.dot_dimension_numbers<[1], [0], [0], [1], [0, 0, 1, 1], [], []>} : vector<16x64xbf16>, vector<64x128xbf16>, vector<16x128xf32> -> vector<16x128xf32>
    %91 = arith.addf %86, %90 : vector<16x128xf32>
    %92 = vector.extract_strided_slice %58 {offsets = [96, 0], sizes = [16, 64], strides = [1, 1]} : vector<144x64xbf16> to vector<16x64xbf16>
    %c6_64 = arith.constant 6 : index
    %c0_65 = arith.constant 0 : index
    %c0_66 = arith.constant 0 : index
    %93 = vector.load %arg6[%c6_64, %c0_65, %c0_66] : memref<9x64x128xbf16, #tpu.memory_space<vmem>>, vector<1x64x128xbf16>
    %94 = vector.shape_cast %93 : vector<1x64x128xbf16> to vector<64x128xbf16>
    %cst_67 = arith.constant dense<0.000000e+00> : vector<16x128xf32>
    %95 = tpu.matmul %92, %94, %cst_67 {dimension_numbers = #tpu.dot_dimension_numbers<[1], [0], [0], [1], [0, 0, 1, 1], [], []>} : vector<16x64xbf16>, vector<64x128xbf16>, vector<16x128xf32> -> vector<16x128xf32>
    %96 = arith.addf %91, %95 : vector<16x128xf32>
    %97 = vector.extract_strided_slice %58 {offsets = [112, 0], sizes = [16, 64], strides = [1, 1]} : vector<144x64xbf16> to vector<16x64xbf16>
    %c7_68 = arith.constant 7 : index
    %c0_69 = arith.constant 0 : index
    %c0_70 = arith.constant 0 : index
    %98 = vector.load %arg6[%c7_68, %c0_69, %c0_70] : memref<9x64x128xbf16, #tpu.memory_space<vmem>>, vector<1x64x128xbf16>
    %99 = vector.shape_cast %98 : vector<1x64x128xbf16> to vector<64x128xbf16>
    %cst_71 = arith.constant dense<0.000000e+00> : vector<16x128xf32>
    %100 = tpu.matmul %97, %99, %cst_71 {dimension_numbers = #tpu.dot_dimension_numbers<[1], [0], [0], [1], [0, 0, 1, 1], [], []>} : vector<16x64xbf16>, vector<64x128xbf16>, vector<16x128xf32> -> vector<16x128xf32>
    %101 = arith.addf %96, %100 : vector<16x128xf32>
    %102 = vector.extract_strided_slice %58 {offsets = [128, 0], sizes = [16, 64], strides = [1, 1]} : vector<144x64xbf16> to vector<16x64xbf16>
    %c8_72 = arith.constant 8 : index
    %c0_73 = arith.constant 0 : index
    %c0_74 = arith.constant 0 : index
    %103 = vector.load %arg6[%c8_72, %c0_73, %c0_74] : memref<9x64x128xbf16, #tpu.memory_space<vmem>>, vector<1x64x128xbf16>
    %104 = vector.shape_cast %103 : vector<1x64x128xbf16> to vector<64x128xbf16>
    %cst_75 = arith.constant dense<0.000000e+00> : vector<16x128xf32>
    %105 = tpu.matmul %102, %104, %cst_75 {dimension_numbers = #tpu.dot_dimension_numbers<[1], [0], [0], [1], [0, 0, 1, 1], [], []>} : vector<16x64xbf16>, vector<64x128xbf16>, vector<16x128xf32> -> vector<16x128xf32>
    %106 = arith.addf %101, %105 : vector<16x128xf32>
    %cst_76 = arith.constant 0.000000e+00 : f32
    %107 = vector.broadcast %cst_76 : f32 to vector<16x128xf32>
    %108 = arith.maximumf %106, %107 : vector<16x128xf32>
    %109 = arith.truncf %108 : vector<16x128xf32> to vector<16x128xbf16>
    %c0_77 = arith.constant 0 : index
    %c0_78 = arith.constant 0 : index
    %110 = vector.load %arg8[%c0_77, %c0_78] : memref<72x16xbf16, #tpu.memory_space<vmem>>, vector<72x16xbf16>
    %cst_79 = arith.constant dense<0.000000e+00> : vector<72x128xf32>
    %111 = tpu.matmul %110, %109, %cst_79 {dimension_numbers = #tpu.dot_dimension_numbers<[1], [0], [0], [1], [0, 0, 1, 1], [], []>} : vector<72x16xbf16>, vector<16x128xbf16>, vector<72x128xf32> -> vector<72x128xf32>
    %112 = arith.truncf %111 : vector<72x128xf32> to vector<72x128xbf16>
    %c0_80 = arith.constant 0 : index
    %c0_81 = arith.constant 0 : index
    %113 = vector.load %arg10[%c0_80, %c0_81] : memref<1x256xf32, #tpu.memory_space<vmem>>, vector<1x256xf32>
    %114 = vector.shape_cast %113 : vector<1x256xf32> to vector<1x256xf32>
    %115 = vector.broadcast %114 : vector<1x256xf32> to vector<8x256xf32>
    %116 = vector.extract_strided_slice %112 {offsets = [0, 0], sizes = [8, 128], strides = [1, 1]} : vector<72x128xbf16> to vector<8x128xbf16>
    %c0_82 = arith.constant 0 : index
    %c0_83 = arith.constant 0 : index
    %c0_84 = arith.constant 0 : index
    %117 = vector.load %arg9[%c0_82, %c0_83, %c0_84] : memref<9x128x256xbf16, #tpu.memory_space<vmem>>, vector<1x128x256xbf16>
    %118 = vector.shape_cast %117 : vector<1x128x256xbf16> to vector<128x256xbf16>
    %cst_85 = arith.constant dense<0.000000e+00> : vector<8x256xf32>
    %119 = tpu.matmul %116, %118, %cst_85 {dimension_numbers = #tpu.dot_dimension_numbers<[1], [0], [0], [1], [0, 0, 1, 1], [], []>} : vector<8x128xbf16>, vector<128x256xbf16>, vector<8x256xf32> -> vector<8x256xf32>
    %120 = arith.addf %115, %119 : vector<8x256xf32>
    %121 = vector.extract_strided_slice %112 {offsets = [8, 0], sizes = [8, 128], strides = [1, 1]} : vector<72x128xbf16> to vector<8x128xbf16>
    %c1_86 = arith.constant 1 : index
    %c0_87 = arith.constant 0 : index
    %c0_88 = arith.constant 0 : index
    %122 = vector.load %arg9[%c1_86, %c0_87, %c0_88] : memref<9x128x256xbf16, #tpu.memory_space<vmem>>, vector<1x128x256xbf16>
    %123 = vector.shape_cast %122 : vector<1x128x256xbf16> to vector<128x256xbf16>
    %cst_89 = arith.constant dense<0.000000e+00> : vector<8x256xf32>
    %124 = tpu.matmul %121, %123, %cst_89 {dimension_numbers = #tpu.dot_dimension_numbers<[1], [0], [0], [1], [0, 0, 1, 1], [], []>} : vector<8x128xbf16>, vector<128x256xbf16>, vector<8x256xf32> -> vector<8x256xf32>
    %125 = arith.addf %120, %124 : vector<8x256xf32>
    %126 = vector.extract_strided_slice %112 {offsets = [16, 0], sizes = [8, 128], strides = [1, 1]} : vector<72x128xbf16> to vector<8x128xbf16>
    %c2_90 = arith.constant 2 : index
    %c0_91 = arith.constant 0 : index
    %c0_92 = arith.constant 0 : index
    %127 = vector.load %arg9[%c2_90, %c0_91, %c0_92] : memref<9x128x256xbf16, #tpu.memory_space<vmem>>, vector<1x128x256xbf16>
    %128 = vector.shape_cast %127 : vector<1x128x256xbf16> to vector<128x256xbf16>
    %cst_93 = arith.constant dense<0.000000e+00> : vector<8x256xf32>
    %129 = tpu.matmul %126, %128, %cst_93 {dimension_numbers = #tpu.dot_dimension_numbers<[1], [0], [0], [1], [0, 0, 1, 1], [], []>} : vector<8x128xbf16>, vector<128x256xbf16>, vector<8x256xf32> -> vector<8x256xf32>
    %130 = arith.addf %125, %129 : vector<8x256xf32>
    %131 = vector.extract_strided_slice %112 {offsets = [24, 0], sizes = [8, 128], strides = [1, 1]} : vector<72x128xbf16> to vector<8x128xbf16>
    %c3_94 = arith.constant 3 : index
    %c0_95 = arith.constant 0 : index
    %c0_96 = arith.constant 0 : index
    %132 = vector.load %arg9[%c3_94, %c0_95, %c0_96] : memref<9x128x256xbf16, #tpu.memory_space<vmem>>, vector<1x128x256xbf16>
    %133 = vector.shape_cast %132 : vector<1x128x256xbf16> to vector<128x256xbf16>
    %cst_97 = arith.constant dense<0.000000e+00> : vector<8x256xf32>
    %134 = tpu.matmul %131, %133, %cst_97 {dimension_numbers = #tpu.dot_dimension_numbers<[1], [0], [0], [1], [0, 0, 1, 1], [], []>} : vector<8x128xbf16>, vector<128x256xbf16>, vector<8x256xf32> -> vector<8x256xf32>
    %135 = arith.addf %130, %134 : vector<8x256xf32>
    %136 = vector.extract_strided_slice %112 {offsets = [32, 0], sizes = [8, 128], strides = [1, 1]} : vector<72x128xbf16> to vector<8x128xbf16>
    %c4_98 = arith.constant 4 : index
    %c0_99 = arith.constant 0 : index
    %c0_100 = arith.constant 0 : index
    %137 = vector.load %arg9[%c4_98, %c0_99, %c0_100] : memref<9x128x256xbf16, #tpu.memory_space<vmem>>, vector<1x128x256xbf16>
    %138 = vector.shape_cast %137 : vector<1x128x256xbf16> to vector<128x256xbf16>
    %cst_101 = arith.constant dense<0.000000e+00> : vector<8x256xf32>
    %139 = tpu.matmul %136, %138, %cst_101 {dimension_numbers = #tpu.dot_dimension_numbers<[1], [0], [0], [1], [0, 0, 1, 1], [], []>} : vector<8x128xbf16>, vector<128x256xbf16>, vector<8x256xf32> -> vector<8x256xf32>
    %140 = arith.addf %135, %139 : vector<8x256xf32>
    %141 = vector.extract_strided_slice %112 {offsets = [40, 0], sizes = [8, 128], strides = [1, 1]} : vector<72x128xbf16> to vector<8x128xbf16>
    %c5_102 = arith.constant 5 : index
    %c0_103 = arith.constant 0 : index
    %c0_104 = arith.constant 0 : index
    %142 = vector.load %arg9[%c5_102, %c0_103, %c0_104] : memref<9x128x256xbf16, #tpu.memory_space<vmem>>, vector<1x128x256xbf16>
    %143 = vector.shape_cast %142 : vector<1x128x256xbf16> to vector<128x256xbf16>
    %cst_105 = arith.constant dense<0.000000e+00> : vector<8x256xf32>
    %144 = tpu.matmul %141, %143, %cst_105 {dimension_numbers = #tpu.dot_dimension_numbers<[1], [0], [0], [1], [0, 0, 1, 1], [], []>} : vector<8x128xbf16>, vector<128x256xbf16>, vector<8x256xf32> -> vector<8x256xf32>
    %145 = arith.addf %140, %144 : vector<8x256xf32>
    %146 = vector.extract_strided_slice %112 {offsets = [48, 0], sizes = [8, 128], strides = [1, 1]} : vector<72x128xbf16> to vector<8x128xbf16>
    %c6_106 = arith.constant 6 : index
    %c0_107 = arith.constant 0 : index
    %c0_108 = arith.constant 0 : index
    %147 = vector.load %arg9[%c6_106, %c0_107, %c0_108] : memref<9x128x256xbf16, #tpu.memory_space<vmem>>, vector<1x128x256xbf16>
    %148 = vector.shape_cast %147 : vector<1x128x256xbf16> to vector<128x256xbf16>
    %cst_109 = arith.constant dense<0.000000e+00> : vector<8x256xf32>
    %149 = tpu.matmul %146, %148, %cst_109 {dimension_numbers = #tpu.dot_dimension_numbers<[1], [0], [0], [1], [0, 0, 1, 1], [], []>} : vector<8x128xbf16>, vector<128x256xbf16>, vector<8x256xf32> -> vector<8x256xf32>
    %150 = arith.addf %145, %149 : vector<8x256xf32>
    %151 = vector.extract_strided_slice %112 {offsets = [56, 0], sizes = [8, 128], strides = [1, 1]} : vector<72x128xbf16> to vector<8x128xbf16>
    %c7_110 = arith.constant 7 : index
    %c0_111 = arith.constant 0 : index
    %c0_112 = arith.constant 0 : index
    %152 = vector.load %arg9[%c7_110, %c0_111, %c0_112] : memref<9x128x256xbf16, #tpu.memory_space<vmem>>, vector<1x128x256xbf16>
    %153 = vector.shape_cast %152 : vector<1x128x256xbf16> to vector<128x256xbf16>
    %cst_113 = arith.constant dense<0.000000e+00> : vector<8x256xf32>
    %154 = tpu.matmul %151, %153, %cst_113 {dimension_numbers = #tpu.dot_dimension_numbers<[1], [0], [0], [1], [0, 0, 1, 1], [], []>} : vector<8x128xbf16>, vector<128x256xbf16>, vector<8x256xf32> -> vector<8x256xf32>
    %155 = arith.addf %150, %154 : vector<8x256xf32>
    %156 = vector.extract_strided_slice %112 {offsets = [64, 0], sizes = [8, 128], strides = [1, 1]} : vector<72x128xbf16> to vector<8x128xbf16>
    %c8_114 = arith.constant 8 : index
    %c0_115 = arith.constant 0 : index
    %c0_116 = arith.constant 0 : index
    %157 = vector.load %arg9[%c8_114, %c0_115, %c0_116] : memref<9x128x256xbf16, #tpu.memory_space<vmem>>, vector<1x128x256xbf16>
    %158 = vector.shape_cast %157 : vector<1x128x256xbf16> to vector<128x256xbf16>
    %cst_117 = arith.constant dense<0.000000e+00> : vector<8x256xf32>
    %159 = tpu.matmul %156, %158, %cst_117 {dimension_numbers = #tpu.dot_dimension_numbers<[1], [0], [0], [1], [0, 0, 1, 1], [], []>} : vector<8x128xbf16>, vector<128x256xbf16>, vector<8x256xf32> -> vector<8x256xf32>
    %160 = arith.addf %155, %159 : vector<8x256xf32>
    %cst_118 = arith.constant 0.000000e+00 : f32
    %161 = vector.broadcast %cst_118 : f32 to vector<8x256xf32>
    %162 = arith.maximumf %160, %161 : vector<8x256xf32>
    %163 = arith.truncf %162 : vector<8x256xf32> to vector<8x256xbf16>
    %c0_119 = arith.constant 0 : index
    %c0_120 = arith.constant 0 : index
    %164 = vector.load %arg12[%c0_119, %c0_120] : memref<256x1152xbf16, #tpu.memory_space<vmem>>, vector<256x1152xbf16>
    %cst_121 = arith.constant dense<0.000000e+00> : vector<8x1152xf32>
    %165 = tpu.matmul %163, %164, %cst_121 {dimension_numbers = #tpu.dot_dimension_numbers<[1], [0], [0], [1], [0, 0, 1, 1], [], []>} : vector<8x256xbf16>, vector<256x1152xbf16>, vector<8x1152xf32> -> vector<8x1152xf32>
    %166 = arith.truncf %165 : vector<8x1152xf32> to vector<8x1152xbf16>
    %c0_122 = arith.constant 0 : index
    %c0_123 = arith.constant 0 : index
    %167 = vector.load %arg13[%c0_122, %c0_123] : memref<1x128xf32, #tpu.memory_space<vmem>>, vector<1x128xf32>
    %168 = vector.shape_cast %167 : vector<1x128xf32> to vector<1x128xf32>
    %169 = vector.broadcast %168 : vector<1x128xf32> to vector<16x128xf32>
    %c0_124 = arith.constant 0 : index
    %c0_125 = arith.constant 0 : index
    %c0_126 = arith.constant 0 : index
    %170 = vector.load %arg11[%c0_124, %c0_125, %c0_126] : memref<9x16x8xbf16, #tpu.memory_space<vmem>>, vector<1x16x8xbf16>
    %171 = vector.shape_cast %170 : vector<1x16x8xbf16> to vector<16x8xbf16>
    %172 = vector.extract_strided_slice %166 {offsets = [0, 0], sizes = [8, 128], strides = [1, 1]} : vector<8x1152xbf16> to vector<8x128xbf16>
    %cst_127 = arith.constant dense<0.000000e+00> : vector<16x128xf32>
    %173 = tpu.matmul %171, %172, %cst_127 {dimension_numbers = #tpu.dot_dimension_numbers<[1], [0], [0], [1], [0, 0, 1, 1], [], []>} : vector<16x8xbf16>, vector<8x128xbf16>, vector<16x128xf32> -> vector<16x128xf32>
    %174 = arith.addf %169, %173 : vector<16x128xf32>
    %c1_128 = arith.constant 1 : index
    %c0_129 = arith.constant 0 : index
    %c0_130 = arith.constant 0 : index
    %175 = vector.load %arg11[%c1_128, %c0_129, %c0_130] : memref<9x16x8xbf16, #tpu.memory_space<vmem>>, vector<1x16x8xbf16>
    %176 = vector.shape_cast %175 : vector<1x16x8xbf16> to vector<16x8xbf16>
    %177 = vector.extract_strided_slice %166 {offsets = [0, 128], sizes = [8, 128], strides = [1, 1]} : vector<8x1152xbf16> to vector<8x128xbf16>
    %cst_131 = arith.constant dense<0.000000e+00> : vector<16x128xf32>
    %178 = tpu.matmul %176, %177, %cst_131 {dimension_numbers = #tpu.dot_dimension_numbers<[1], [0], [0], [1], [0, 0, 1, 1], [], []>} : vector<16x8xbf16>, vector<8x128xbf16>, vector<16x128xf32> -> vector<16x128xf32>
    %179 = arith.addf %174, %178 : vector<16x128xf32>
    %c2_132 = arith.constant 2 : index
    %c0_133 = arith.constant 0 : index
    %c0_134 = arith.constant 0 : index
    %180 = vector.load %arg11[%c2_132, %c0_133, %c0_134] : memref<9x16x8xbf16, #tpu.memory_space<vmem>>, vector<1x16x8xbf16>
    %181 = vector.shape_cast %180 : vector<1x16x8xbf16> to vector<16x8xbf16>
    %182 = vector.extract_strided_slice %166 {offsets = [0, 256], sizes = [8, 128], strides = [1, 1]} : vector<8x1152xbf16> to vector<8x128xbf16>
    %cst_135 = arith.constant dense<0.000000e+00> : vector<16x128xf32>
    %183 = tpu.matmul %181, %182, %cst_135 {dimension_numbers = #tpu.dot_dimension_numbers<[1], [0], [0], [1], [0, 0, 1, 1], [], []>} : vector<16x8xbf16>, vector<8x128xbf16>, vector<16x128xf32> -> vector<16x128xf32>
    %184 = arith.addf %179, %183 : vector<16x128xf32>
    %c3_136 = arith.constant 3 : index
    %c0_137 = arith.constant 0 : index
    %c0_138 = arith.constant 0 : index
    %185 = vector.load %arg11[%c3_136, %c0_137, %c0_138] : memref<9x16x8xbf16, #tpu.memory_space<vmem>>, vector<1x16x8xbf16>
    %186 = vector.shape_cast %185 : vector<1x16x8xbf16> to vector<16x8xbf16>
    %187 = vector.extract_strided_slice %166 {offsets = [0, 384], sizes = [8, 128], strides = [1, 1]} : vector<8x1152xbf16> to vector<8x128xbf16>
    %cst_139 = arith.constant dense<0.000000e+00> : vector<16x128xf32>
    %188 = tpu.matmul %186, %187, %cst_139 {dimension_numbers = #tpu.dot_dimension_numbers<[1], [0], [0], [1], [0, 0, 1, 1], [], []>} : vector<16x8xbf16>, vector<8x128xbf16>, vector<16x128xf32> -> vector<16x128xf32>
    %189 = arith.addf %184, %188 : vector<16x128xf32>
    %c4_140 = arith.constant 4 : index
    %c0_141 = arith.constant 0 : index
    %c0_142 = arith.constant 0 : index
    %190 = vector.load %arg11[%c4_140, %c0_141, %c0_142] : memref<9x16x8xbf16, #tpu.memory_space<vmem>>, vector<1x16x8xbf16>
    %191 = vector.shape_cast %190 : vector<1x16x8xbf16> to vector<16x8xbf16>
    %192 = vector.extract_strided_slice %166 {offsets = [0, 512], sizes = [8, 128], strides = [1, 1]} : vector<8x1152xbf16> to vector<8x128xbf16>
    %cst_143 = arith.constant dense<0.000000e+00> : vector<16x128xf32>
    %193 = tpu.matmul %191, %192, %cst_143 {dimension_numbers = #tpu.dot_dimension_numbers<[1], [0], [0], [1], [0, 0, 1, 1], [], []>} : vector<16x8xbf16>, vector<8x128xbf16>, vector<16x128xf32> -> vector<16x128xf32>
    %194 = arith.addf %189, %193 : vector<16x128xf32>
    %c5_144 = arith.constant 5 : index
    %c0_145 = arith.constant 0 : index
    %c0_146 = arith.constant 0 : index
    %195 = vector.load %arg11[%c5_144, %c0_145, %c0_146] : memref<9x16x8xbf16, #tpu.memory_space<vmem>>, vector<1x16x8xbf16>
    %196 = vector.shape_cast %195 : vector<1x16x8xbf16> to vector<16x8xbf16>
    %197 = vector.extract_strided_slice %166 {offsets = [0, 640], sizes = [8, 128], strides = [1, 1]} : vector<8x1152xbf16> to vector<8x128xbf16>
    %cst_147 = arith.constant dense<0.000000e+00> : vector<16x128xf32>
    %198 = tpu.matmul %196, %197, %cst_147 {dimension_numbers = #tpu.dot_dimension_numbers<[1], [0], [0], [1], [0, 0, 1, 1], [], []>} : vector<16x8xbf16>, vector<8x128xbf16>, vector<16x128xf32> -> vector<16x128xf32>
    %199 = arith.addf %194, %198 : vector<16x128xf32>
    %c6_148 = arith.constant 6 : index
    %c0_149 = arith.constant 0 : index
    %c0_150 = arith.constant 0 : index
    %200 = vector.load %arg11[%c6_148, %c0_149, %c0_150] : memref<9x16x8xbf16, #tpu.memory_space<vmem>>, vector<1x16x8xbf16>
    %201 = vector.shape_cast %200 : vector<1x16x8xbf16> to vector<16x8xbf16>
    %202 = vector.extract_strided_slice %166 {offsets = [0, 768], sizes = [8, 128], strides = [1, 1]} : vector<8x1152xbf16> to vector<8x128xbf16>
    %cst_151 = arith.constant dense<0.000000e+00> : vector<16x128xf32>
    %203 = tpu.matmul %201, %202, %cst_151 {dimension_numbers = #tpu.dot_dimension_numbers<[1], [0], [0], [1], [0, 0, 1, 1], [], []>} : vector<16x8xbf16>, vector<8x128xbf16>, vector<16x128xf32> -> vector<16x128xf32>
    %204 = arith.addf %199, %203 : vector<16x128xf32>
    %c7_152 = arith.constant 7 : index
    %c0_153 = arith.constant 0 : index
    %c0_154 = arith.constant 0 : index
    %205 = vector.load %arg11[%c7_152, %c0_153, %c0_154] : memref<9x16x8xbf16, #tpu.memory_space<vmem>>, vector<1x16x8xbf16>
    %206 = vector.shape_cast %205 : vector<1x16x8xbf16> to vector<16x8xbf16>
    %207 = vector.extract_strided_slice %166 {offsets = [0, 896], sizes = [8, 128], strides = [1, 1]} : vector<8x1152xbf16> to vector<8x128xbf16>
    %cst_155 = arith.constant dense<0.000000e+00> : vector<16x128xf32>
    %208 = tpu.matmul %206, %207, %cst_155 {dimension_numbers = #tpu.dot_dimension_numbers<[1], [0], [0], [1], [0, 0, 1, 1], [], []>} : vector<16x8xbf16>, vector<8x128xbf16>, vector<16x128xf32> -> vector<16x128xf32>
    %209 = arith.addf %204, %208 : vector<16x128xf32>
    %c8_156 = arith.constant 8 : index
    %c0_157 = arith.constant 0 : index
    %c0_158 = arith.constant 0 : index
    %210 = vector.load %arg11[%c8_156, %c0_157, %c0_158] : memref<9x16x8xbf16, #tpu.memory_space<vmem>>, vector<1x16x8xbf16>
    %211 = vector.shape_cast %210 : vector<1x16x8xbf16> to vector<16x8xbf16>
    %212 = vector.extract_strided_slice %166 {offsets = [0, 1024], sizes = [8, 128], strides = [1, 1]} : vector<8x1152xbf16> to vector<8x128xbf16>
    %cst_159 = arith.constant dense<0.000000e+00> : vector<16x128xf32>
    %213 = tpu.matmul %211, %212, %cst_159 {dimension_numbers = #tpu.dot_dimension_numbers<[1], [0], [0], [1], [0, 0, 1, 1], [], []>} : vector<16x8xbf16>, vector<8x128xbf16>, vector<16x128xf32> -> vector<16x128xf32>
    %214 = arith.addf %209, %213 : vector<16x128xf32>
    %cst_160 = arith.constant 0.000000e+00 : f32
    %215 = vector.broadcast %cst_160 : f32 to vector<16x128xf32>
    %216 = arith.maximumf %214, %215 : vector<16x128xf32>
    %217 = tpu.transpose %216, [1, 0] : vector<16x128xf32> -> vector<128x16xf32>
    %218 = arith.truncf %217 : vector<128x16xf32> to vector<128x16xbf16>
    %c0_161 = arith.constant 0 : index
    %c0_162 = arith.constant 0 : index
    %219 = vector.load %arg15[%c0_161, %c0_162] : memref<576x128xbf16, #tpu.memory_space<vmem>>, vector<576x128xbf16>
    %cst_163 = arith.constant dense<0.000000e+00> : vector<576x16xf32>
    %220 = tpu.matmul %219, %218, %cst_163 {dimension_numbers = #tpu.dot_dimension_numbers<[1], [0], [0], [1], [0, 0, 1, 1], [], []>} : vector<576x128xbf16>, vector<128x16xbf16>, vector<576x16xf32> -> vector<576x16xf32>
    %221 = arith.truncf %220 : vector<576x16xf32> to vector<576x16xbf16>
    %c0_164 = arith.constant 0 : index
    %c0_165 = arith.constant 0 : index
    %222 = vector.load %arg16[%c0_164, %c0_165] : memref<64x1xf32, #tpu.memory_space<vmem>>, vector<64x1xf32>
    %223 = vector.shape_cast %222 : vector<64x1xf32> to vector<64x1xf32>
    %224 = vector.broadcast %223 : vector<64x1xf32> to vector<64x64xf32>
    %225 = vector.extract_strided_slice %221 {offsets = [0, 0], sizes = [64, 16], strides = [1, 1]} : vector<576x16xbf16> to vector<64x16xbf16>
    %c0_166 = arith.constant 0 : index
    %c0_167 = arith.constant 0 : index
    %c0_168 = arith.constant 0 : index
    %226 = vector.load %arg14[%c0_166, %c0_167, %c0_168] : memref<9x16x64xbf16, #tpu.memory_space<vmem>>, vector<1x16x64xbf16>
    %227 = vector.shape_cast %226 : vector<1x16x64xbf16> to vector<16x64xbf16>
    %cst_169 = arith.constant dense<0.000000e+00> : vector<64x64xf32>
    %228 = tpu.matmul %225, %227, %cst_169 {dimension_numbers = #tpu.dot_dimension_numbers<[1], [0], [0], [1], [0, 0, 1, 1], [], []>} : vector<64x16xbf16>, vector<16x64xbf16>, vector<64x64xf32> -> vector<64x64xf32>
    %229 = arith.addf %224, %228 : vector<64x64xf32>
    %230 = vector.extract_strided_slice %221 {offsets = [64, 0], sizes = [64, 16], strides = [1, 1]} : vector<576x16xbf16> to vector<64x16xbf16>
    %c1_170 = arith.constant 1 : index
    %c0_171 = arith.constant 0 : index
    %c0_172 = arith.constant 0 : index
    %231 = vector.load %arg14[%c1_170, %c0_171, %c0_172] : memref<9x16x64xbf16, #tpu.memory_space<vmem>>, vector<1x16x64xbf16>
    %232 = vector.shape_cast %231 : vector<1x16x64xbf16> to vector<16x64xbf16>
    %cst_173 = arith.constant dense<0.000000e+00> : vector<64x64xf32>
    %233 = tpu.matmul %230, %232, %cst_173 {dimension_numbers = #tpu.dot_dimension_numbers<[1], [0], [0], [1], [0, 0, 1, 1], [], []>} : vector<64x16xbf16>, vector<16x64xbf16>, vector<64x64xf32> -> vector<64x64xf32>
    %234 = arith.addf %229, %233 : vector<64x64xf32>
    %235 = vector.extract_strided_slice %221 {offsets = [128, 0], sizes = [64, 16], strides = [1, 1]} : vector<576x16xbf16> to vector<64x16xbf16>
    %c2_174 = arith.constant 2 : index
    %c0_175 = arith.constant 0 : index
    %c0_176 = arith.constant 0 : index
    %236 = vector.load %arg14[%c2_174, %c0_175, %c0_176] : memref<9x16x64xbf16, #tpu.memory_space<vmem>>, vector<1x16x64xbf16>
    %237 = vector.shape_cast %236 : vector<1x16x64xbf16> to vector<16x64xbf16>
    %cst_177 = arith.constant dense<0.000000e+00> : vector<64x64xf32>
    %238 = tpu.matmul %235, %237, %cst_177 {dimension_numbers = #tpu.dot_dimension_numbers<[1], [0], [0], [1], [0, 0, 1, 1], [], []>} : vector<64x16xbf16>, vector<16x64xbf16>, vector<64x64xf32> -> vector<64x64xf32>
    %239 = arith.addf %234, %238 : vector<64x64xf32>
    %240 = vector.extract_strided_slice %221 {offsets = [192, 0], sizes = [64, 16], strides = [1, 1]} : vector<576x16xbf16> to vector<64x16xbf16>
    %c3_178 = arith.constant 3 : index
    %c0_179 = arith.constant 0 : index
    %c0_180 = arith.constant 0 : index
    %241 = vector.load %arg14[%c3_178, %c0_179, %c0_180] : memref<9x16x64xbf16, #tpu.memory_space<vmem>>, vector<1x16x64xbf16>
    %242 = vector.shape_cast %241 : vector<1x16x64xbf16> to vector<16x64xbf16>
    %cst_181 = arith.constant dense<0.000000e+00> : vector<64x64xf32>
    %243 = tpu.matmul %240, %242, %cst_181 {dimension_numbers = #tpu.dot_dimension_numbers<[1], [0], [0], [1], [0, 0, 1, 1], [], []>} : vector<64x16xbf16>, vector<16x64xbf16>, vector<64x64xf32> -> vector<64x64xf32>
    %244 = arith.addf %239, %243 : vector<64x64xf32>
    %245 = vector.extract_strided_slice %221 {offsets = [256, 0], sizes = [64, 16], strides = [1, 1]} : vector<576x16xbf16> to vector<64x16xbf16>
    %c4_182 = arith.constant 4 : index
    %c0_183 = arith.constant 0 : index
    %c0_184 = arith.constant 0 : index
    %246 = vector.load %arg14[%c4_182, %c0_183, %c0_184] : memref<9x16x64xbf16, #tpu.memory_space<vmem>>, vector<1x16x64xbf16>
    %247 = vector.shape_cast %246 : vector<1x16x64xbf16> to vector<16x64xbf16>
    %cst_185 = arith.constant dense<0.000000e+00> : vector<64x64xf32>
    %248 = tpu.matmul %245, %247, %cst_185 {dimension_numbers = #tpu.dot_dimension_numbers<[1], [0], [0], [1], [0, 0, 1, 1], [], []>} : vector<64x16xbf16>, vector<16x64xbf16>, vector<64x64xf32> -> vector<64x64xf32>
    %249 = arith.addf %244, %248 : vector<64x64xf32>
    %250 = vector.extract_strided_slice %221 {offsets = [320, 0], sizes = [64, 16], strides = [1, 1]} : vector<576x16xbf16> to vector<64x16xbf16>
    %c5_186 = arith.constant 5 : index
    %c0_187 = arith.constant 0 : index
    %c0_188 = arith.constant 0 : index
    %251 = vector.load %arg14[%c5_186, %c0_187, %c0_188] : memref<9x16x64xbf16, #tpu.memory_space<vmem>>, vector<1x16x64xbf16>
    %252 = vector.shape_cast %251 : vector<1x16x64xbf16> to vector<16x64xbf16>
    %cst_189 = arith.constant dense<0.000000e+00> : vector<64x64xf32>
    %253 = tpu.matmul %250, %252, %cst_189 {dimension_numbers = #tpu.dot_dimension_numbers<[1], [0], [0], [1], [0, 0, 1, 1], [], []>} : vector<64x16xbf16>, vector<16x64xbf16>, vector<64x64xf32> -> vector<64x64xf32>
    %254 = arith.addf %249, %253 : vector<64x64xf32>
    %255 = vector.extract_strided_slice %221 {offsets = [384, 0], sizes = [64, 16], strides = [1, 1]} : vector<576x16xbf16> to vector<64x16xbf16>
    %c6_190 = arith.constant 6 : index
    %c0_191 = arith.constant 0 : index
    %c0_192 = arith.constant 0 : index
    %256 = vector.load %arg14[%c6_190, %c0_191, %c0_192] : memref<9x16x64xbf16, #tpu.memory_space<vmem>>, vector<1x16x64xbf16>
    %257 = vector.shape_cast %256 : vector<1x16x64xbf16> to vector<16x64xbf16>
    %cst_193 = arith.constant dense<0.000000e+00> : vector<64x64xf32>
    %258 = tpu.matmul %255, %257, %cst_193 {dimension_numbers = #tpu.dot_dimension_numbers<[1], [0], [0], [1], [0, 0, 1, 1], [], []>} : vector<64x16xbf16>, vector<16x64xbf16>, vector<64x64xf32> -> vector<64x64xf32>
    %259 = arith.addf %254, %258 : vector<64x64xf32>
    %260 = vector.extract_strided_slice %221 {offsets = [448, 0], sizes = [64, 16], strides = [1, 1]} : vector<576x16xbf16> to vector<64x16xbf16>
    %c7_194 = arith.constant 7 : index
    %c0_195 = arith.constant 0 : index
    %c0_196 = arith.constant 0 : index
    %261 = vector.load %arg14[%c7_194, %c0_195, %c0_196] : memref<9x16x64xbf16, #tpu.memory_space<vmem>>, vector<1x16x64xbf16>
    %262 = vector.shape_cast %261 : vector<1x16x64xbf16> to vector<16x64xbf16>
    %cst_197 = arith.constant dense<0.000000e+00> : vector<64x64xf32>
    %263 = tpu.matmul %260, %262, %cst_197 {dimension_numbers = #tpu.dot_dimension_numbers<[1], [0], [0], [1], [0, 0, 1, 1], [], []>} : vector<64x16xbf16>, vector<16x64xbf16>, vector<64x64xf32> -> vector<64x64xf32>
    %264 = arith.addf %259, %263 : vector<64x64xf32>
    %265 = vector.extract_strided_slice %221 {offsets = [512, 0], sizes = [64, 16], strides = [1, 1]} : vector<576x16xbf16> to vector<64x16xbf16>
    %c8_198 = arith.constant 8 : index
    %c0_199 = arith.constant 0 : index
    %c0_200 = arith.constant 0 : index
    %266 = vector.load %arg14[%c8_198, %c0_199, %c0_200] : memref<9x16x64xbf16, #tpu.memory_space<vmem>>, vector<1x16x64xbf16>
    %267 = vector.shape_cast %266 : vector<1x16x64xbf16> to vector<16x64xbf16>
    %cst_201 = arith.constant dense<0.000000e+00> : vector<64x64xf32>
    %268 = tpu.matmul %265, %267, %cst_201 {dimension_numbers = #tpu.dot_dimension_numbers<[1], [0], [0], [1], [0, 0, 1, 1], [], []>} : vector<64x16xbf16>, vector<16x64xbf16>, vector<64x64xf32> -> vector<64x64xf32>
    %269 = arith.addf %264, %268 : vector<64x64xf32>
    %cst_202 = arith.constant 0.000000e+00 : f32
    %270 = vector.broadcast %cst_202 : f32 to vector<64x64xf32>
    %271 = arith.maximumf %269, %270 : vector<64x64xf32>
    %272 = arith.truncf %271 : vector<64x64xf32> to vector<64x64xbf16>
    %c0_203 = arith.constant 0 : index
    %c0_204 = arith.constant 0 : index
    %273 = vector.load %arg18[%c0_203, %c0_204] : memref<72x64xbf16, #tpu.memory_space<vmem>>, vector<72x64xbf16>
    %cst_205 = arith.constant dense<0.000000e+00> : vector<72x64xf32>
    %274 = tpu.matmul %273, %272, %cst_205 {dimension_numbers = #tpu.dot_dimension_numbers<[1], [0], [0], [1], [0, 0, 1, 1], [], []>} : vector<72x64xbf16>, vector<64x64xbf16>, vector<72x64xf32> -> vector<72x64xf32>
    %275 = arith.truncf %274 : vector<72x64xf32> to vector<72x64xbf16>
    %c0_206 = arith.constant 0 : index
    %c0_207 = arith.constant 0 : index
    %276 = vector.load %arg19[%c0_206, %c0_207] : memref<8x1xf32, #tpu.memory_space<vmem>>, vector<8x1xf32>
    %277 = vector.shape_cast %276 : vector<8x1xf32> to vector<8x1xf32>
    %278 = vector.broadcast %277 : vector<8x1xf32> to vector<8x256xf32>
    %279 = vector.extract_strided_slice %275 {offsets = [0, 0], sizes = [8, 64], strides = [1, 1]} : vector<72x64xbf16> to vector<8x64xbf16>
    %c0_208 = arith.constant 0 : index
    %c0_209 = arith.constant 0 : index
    %c0_210 = arith.constant 0 : index
    %280 = vector.load %arg17[%c0_208, %c0_209, %c0_210] : memref<9x64x256xbf16, #tpu.memory_space<vmem>>, vector<1x64x256xbf16>
    %281 = vector.shape_cast %280 : vector<1x64x256xbf16> to vector<64x256xbf16>
    %cst_211 = arith.constant dense<0.000000e+00> : vector<8x256xf32>
    %282 = tpu.matmul %279, %281, %cst_211 {dimension_numbers = #tpu.dot_dimension_numbers<[1], [0], [0], [1], [0, 0, 1, 1], [], []>} : vector<8x64xbf16>, vector<64x256xbf16>, vector<8x256xf32> -> vector<8x256xf32>
    %283 = arith.addf %278, %282 : vector<8x256xf32>
    %284 = vector.extract_strided_slice %275 {offsets = [8, 0], sizes = [8, 64], strides = [1, 1]} : vector<72x64xbf16> to vector<8x64xbf16>
    %c1_212 = arith.constant 1 : index
    %c0_213 = arith.constant 0 : index
    %c0_214 = arith.constant 0 : index
    %285 = vector.load %arg17[%c1_212, %c0_213, %c0_214] : memref<9x64x256xbf16, #tpu.memory_space<vmem>>, vector<1x64x256xbf16>
    %286 = vector.shape_cast %285 : vector<1x64x256xbf16> to vector<64x256xbf16>
    %cst_215 = arith.constant dense<0.000000e+00> : vector<8x256xf32>
    %287 = tpu.matmul %284, %286, %cst_215 {dimension_numbers = #tpu.dot_dimension_numbers<[1], [0], [0], [1], [0, 0, 1, 1], [], []>} : vector<8x64xbf16>, vector<64x256xbf16>, vector<8x256xf32> -> vector<8x256xf32>
    %288 = arith.addf %283, %287 : vector<8x256xf32>
    %289 = vector.extract_strided_slice %275 {offsets = [16, 0], sizes = [8, 64], strides = [1, 1]} : vector<72x64xbf16> to vector<8x64xbf16>
    %c2_216 = arith.constant 2 : index
    %c0_217 = arith.constant 0 : index
    %c0_218 = arith.constant 0 : index
    %290 = vector.load %arg17[%c2_216, %c0_217, %c0_218] : memref<9x64x256xbf16, #tpu.memory_space<vmem>>, vector<1x64x256xbf16>
    %291 = vector.shape_cast %290 : vector<1x64x256xbf16> to vector<64x256xbf16>
    %cst_219 = arith.constant dense<0.000000e+00> : vector<8x256xf32>
    %292 = tpu.matmul %289, %291, %cst_219 {dimension_numbers = #tpu.dot_dimension_numbers<[1], [0], [0], [1], [0, 0, 1, 1], [], []>} : vector<8x64xbf16>, vector<64x256xbf16>, vector<8x256xf32> -> vector<8x256xf32>
    %293 = arith.addf %288, %292 : vector<8x256xf32>
    %294 = vector.extract_strided_slice %275 {offsets = [24, 0], sizes = [8, 64], strides = [1, 1]} : vector<72x64xbf16> to vector<8x64xbf16>
    %c3_220 = arith.constant 3 : index
    %c0_221 = arith.constant 0 : index
    %c0_222 = arith.constant 0 : index
    %295 = vector.load %arg17[%c3_220, %c0_221, %c0_222] : memref<9x64x256xbf16, #tpu.memory_space<vmem>>, vector<1x64x256xbf16>
    %296 = vector.shape_cast %295 : vector<1x64x256xbf16> to vector<64x256xbf16>
    %cst_223 = arith.constant dense<0.000000e+00> : vector<8x256xf32>
    %297 = tpu.matmul %294, %296, %cst_223 {dimension_numbers = #tpu.dot_dimension_numbers<[1], [0], [0], [1], [0, 0, 1, 1], [], []>} : vector<8x64xbf16>, vector<64x256xbf16>, vector<8x256xf32> -> vector<8x256xf32>
    %298 = arith.addf %293, %297 : vector<8x256xf32>
    %299 = vector.extract_strided_slice %275 {offsets = [32, 0], sizes = [8, 64], strides = [1, 1]} : vector<72x64xbf16> to vector<8x64xbf16>
    %c4_224 = arith.constant 4 : index
    %c0_225 = arith.constant 0 : index
    %c0_226 = arith.constant 0 : index
    %300 = vector.load %arg17[%c4_224, %c0_225, %c0_226] : memref<9x64x256xbf16, #tpu.memory_space<vmem>>, vector<1x64x256xbf16>
    %301 = vector.shape_cast %300 : vector<1x64x256xbf16> to vector<64x256xbf16>
    %cst_227 = arith.constant dense<0.000000e+00> : vector<8x256xf32>
    %302 = tpu.matmul %299, %301, %cst_227 {dimension_numbers = #tpu.dot_dimension_numbers<[1], [0], [0], [1], [0, 0, 1, 1], [], []>} : vector<8x64xbf16>, vector<64x256xbf16>, vector<8x256xf32> -> vector<8x256xf32>
    %303 = arith.addf %298, %302 : vector<8x256xf32>
    %304 = vector.extract_strided_slice %275 {offsets = [40, 0], sizes = [8, 64], strides = [1, 1]} : vector<72x64xbf16> to vector<8x64xbf16>
    %c5_228 = arith.constant 5 : index
    %c0_229 = arith.constant 0 : index
    %c0_230 = arith.constant 0 : index
    %305 = vector.load %arg17[%c5_228, %c0_229, %c0_230] : memref<9x64x256xbf16, #tpu.memory_space<vmem>>, vector<1x64x256xbf16>
    %306 = vector.shape_cast %305 : vector<1x64x256xbf16> to vector<64x256xbf16>
    %cst_231 = arith.constant dense<0.000000e+00> : vector<8x256xf32>
    %307 = tpu.matmul %304, %306, %cst_231 {dimension_numbers = #tpu.dot_dimension_numbers<[1], [0], [0], [1], [0, 0, 1, 1], [], []>} : vector<8x64xbf16>, vector<64x256xbf16>, vector<8x256xf32> -> vector<8x256xf32>
    %308 = arith.addf %303, %307 : vector<8x256xf32>
    %309 = vector.extract_strided_slice %275 {offsets = [48, 0], sizes = [8, 64], strides = [1, 1]} : vector<72x64xbf16> to vector<8x64xbf16>
    %c6_232 = arith.constant 6 : index
    %c0_233 = arith.constant 0 : index
    %c0_234 = arith.constant 0 : index
    %310 = vector.load %arg17[%c6_232, %c0_233, %c0_234] : memref<9x64x256xbf16, #tpu.memory_space<vmem>>, vector<1x64x256xbf16>
    %311 = vector.shape_cast %310 : vector<1x64x256xbf16> to vector<64x256xbf16>
    %cst_235 = arith.constant dense<0.000000e+00> : vector<8x256xf32>
    %312 = tpu.matmul %309, %311, %cst_235 {dimension_numbers = #tpu.dot_dimension_numbers<[1], [0], [0], [1], [0, 0, 1, 1], [], []>} : vector<8x64xbf16>, vector<64x256xbf16>, vector<8x256xf32> -> vector<8x256xf32>
    %313 = arith.addf %308, %312 : vector<8x256xf32>
    %314 = vector.extract_strided_slice %275 {offsets = [56, 0], sizes = [8, 64], strides = [1, 1]} : vector<72x64xbf16> to vector<8x64xbf16>
    %c7_236 = arith.constant 7 : index
    %c0_237 = arith.constant 0 : index
    %c0_238 = arith.constant 0 : index
    %315 = vector.load %arg17[%c7_236, %c0_237, %c0_238] : memref<9x64x256xbf16, #tpu.memory_space<vmem>>, vector<1x64x256xbf16>
    %316 = vector.shape_cast %315 : vector<1x64x256xbf16> to vector<64x256xbf16>
    %cst_239 = arith.constant dense<0.000000e+00> : vector<8x256xf32>
    %317 = tpu.matmul %314, %316, %cst_239 {dimension_numbers = #tpu.dot_dimension_numbers<[1], [0], [0], [1], [0, 0, 1, 1], [], []>} : vector<8x64xbf16>, vector<64x256xbf16>, vector<8x256xf32> -> vector<8x256xf32>
    %318 = arith.addf %313, %317 : vector<8x256xf32>
    %319 = vector.extract_strided_slice %275 {offsets = [64, 0], sizes = [8, 64], strides = [1, 1]} : vector<72x64xbf16> to vector<8x64xbf16>
    %c8_240 = arith.constant 8 : index
    %c0_241 = arith.constant 0 : index
    %c0_242 = arith.constant 0 : index
    %320 = vector.load %arg17[%c8_240, %c0_241, %c0_242] : memref<9x64x256xbf16, #tpu.memory_space<vmem>>, vector<1x64x256xbf16>
    %321 = vector.shape_cast %320 : vector<1x64x256xbf16> to vector<64x256xbf16>
    %cst_243 = arith.constant dense<0.000000e+00> : vector<8x256xf32>
    %322 = tpu.matmul %319, %321, %cst_243 {dimension_numbers = #tpu.dot_dimension_numbers<[1], [0], [0], [1], [0, 0, 1, 1], [], []>} : vector<8x64xbf16>, vector<64x256xbf16>, vector<8x256xf32> -> vector<8x256xf32>
    %323 = arith.addf %318, %322 : vector<8x256xf32>
    %cst_244 = arith.constant 0.000000e+00 : f32
    %324 = vector.broadcast %cst_244 : f32 to vector<8x256xf32>
    %325 = arith.subf %324, %323 : vector<8x256xf32>
    %326 = math.exp %325 : vector<8x256xf32>
    %cst_245 = arith.constant 1.000000e+00 : f32
    %327 = vector.broadcast %cst_245 : f32 to vector<8x256xf32>
    %328 = arith.addf %327, %326 : vector<8x256xf32>
    %cst_246 = arith.constant 1.000000e+00 : f32
    %329 = vector.broadcast %cst_246 : f32 to vector<8x256xf32>
    %330 = arith.divf %329, %328 : vector<8x256xf32>
    %c0_247 = arith.constant 0 : index
    %c0_248 = arith.constant 0 : index
    %c0_249 = arith.constant 0 : index
    %331 = vector.load %arg20[%c0_247, %c0_248, %c0_249] : memref<1x8x256xf32, #tpu.memory_space<vmem>>, vector<1x8x256xf32>
    %332 = vector.shape_cast %331 : vector<1x8x256xf32> to vector<8x256xf32>
    %333 = vector.shape_cast %330 : vector<8x256xf32> to vector<1x8x256xf32>
    tpu.vector_store %arg20[%c0_247, %c0_248, %c0_249], %333 {strides = array<i32>} : memref<1x8x256xf32, #tpu.memory_space<vmem>>, vector<1x8x256xf32>,
    return
  }
  func.func @transform_0(%arg0: i32) -> (i32, i32, i32) {
    %c0_i32 = arith.constant 0 : i32
    %c0_i32_0 = arith.constant 0 : i32
    %c0_i32_1 = arith.constant 0 : i32
    return %arg0, %c0_i32, %c0_i32_0 : i32, i32, i32
  }
  func.func @transform_1(%arg0: i32) -> (i32, i32) {
    %c0_i32 = arith.constant 0 : i32
    %c0_i32_0 = arith.constant 0 : i32
    %c0_i32_1 = arith.constant 0 : i32
    return %c0_i32, %c0_i32_0 : i32, i32
  }
  func.func @transform_2(%arg0: i32) -> (i32, i32, i32) {
    %c0_i32 = arith.constant 0 : i32
    %c0_i32_0 = arith.constant 0 : i32
    %c0_i32_1 = arith.constant 0 : i32
    %c0_i32_2 = arith.constant 0 : i32
    return %c0_i32, %c0_i32_0, %c0_i32_1 : i32, i32, i32
  }
  func.func @transform_3(%arg0: i32) -> (i32, i32) {
    %c0_i32 = arith.constant 0 : i32
    %c0_i32_0 = arith.constant 0 : i32
    %c0_i32_1 = arith.constant 0 : i32
    return %c0_i32, %c0_i32_0 : i32, i32
  }
  func.func @transform_4(%arg0: i32) -> (i32, i32) {
    %c0_i32 = arith.constant 0 : i32
    %c0_i32_0 = arith.constant 0 : i32
    %c0_i32_1 = arith.constant 0 : i32
    return %c0_i32, %c0_i32_0 : i32, i32
  }
  func.func @transform_5(%arg0: i32) -> (i32, i32, i32) {
    %c0_i32 = arith.constant 0 : i32
    %c0_i32_0 = arith.constant 0 : i32
    %c0_i32_1 = arith.constant 0 : i32
    %c0_i32_2 = arith.constant 0 : i32
    return %c0_i32, %c0_i32_0, %c0_i32_1 : i32, i32, i32
  }
  func.func @transform_6(%arg0: i32) -> (i32, i32) {
    %c0_i32 = arith.constant 0 : i32
    %c0_i32_0 = arith.constant 0 : i32
    %c0_i32_1 = arith.constant 0 : i32
    return %c0_i32, %c0_i32_0 : i32, i32
  }
  func.func @transform_7(%arg0: i32) -> (i32, i32) {
    %c0_i32 = arith.constant 0 : i32
    %c0_i32_0 = arith.constant 0 : i32
    %c0_i32_1 = arith.constant 0 : i32
    return %c0_i32, %c0_i32_0 : i32, i32
  }
  func.func @transform_8(%arg0: i32) -> (i32, i32, i32) {
    %c0_i32 = arith.constant 0 : i32
    %c0_i32_0 = arith.constant 0 : i32
    %c0_i32_1 = arith.constant 0 : i32
    %c0_i32_2 = arith.constant 0 : i32
    return %c0_i32, %c0_i32_0, %c0_i32_1 : i32, i32, i32
  }
  func.func @transform_9(%arg0: i32) -> (i32, i32) {
    %c0_i32 = arith.constant 0 : i32
    %c0_i32_0 = arith.constant 0 : i32
    %c0_i32_1 = arith.constant 0 : i32
    return %c0_i32, %c0_i32_0 : i32, i32
  }
  func.func @transform_10(%arg0: i32) -> (i32, i32, i32) {
    %c0_i32 = arith.constant 0 : i32
    %c0_i32_0 = arith.constant 0 : i32
    %c0_i32_1 = arith.constant 0 : i32
    %c0_i32_2 = arith.constant 0 : i32
    return %c0_i32, %c0_i32_0, %c0_i32_1 : i32, i32, i32
  }
  func.func @transform_11(%arg0: i32) -> (i32, i32) {
    %c0_i32 = arith.constant 0 : i32
    %c0_i32_0 = arith.constant 0 : i32
    %c0_i32_1 = arith.constant 0 : i32
    return %c0_i32, %c0_i32_0 : i32, i32
  }
  func.func @transform_12(%arg0: i32) -> (i32, i32) {
    %c0_i32 = arith.constant 0 : i32
    %c0_i32_0 = arith.constant 0 : i32
    %c0_i32_1 = arith.constant 0 : i32
    return %c0_i32, %c0_i32_0 : i32, i32
  }
  func.func @transform_13(%arg0: i32) -> (i32, i32, i32) {
    %c0_i32 = arith.constant 0 : i32
    %c0_i32_0 = arith.constant 0 : i32
    %c0_i32_1 = arith.constant 0 : i32
    %c0_i32_2 = arith.constant 0 : i32
    return %c0_i32, %c0_i32_0, %c0_i32_1 : i32, i32, i32
  }
  func.func @transform_14(%arg0: i32) -> (i32, i32) {
    %c0_i32 = arith.constant 0 : i32
    %c0_i32_0 = arith.constant 0 : i32
    %c0_i32_1 = arith.constant 0 : i32
    return %c0_i32, %c0_i32_0 : i32, i32
  }
  func.func @transform_15(%arg0: i32) -> (i32, i32) {
    %c0_i32 = arith.constant 0 : i32
    %c0_i32_0 = arith.constant 0 : i32
    %c0_i32_1 = arith.constant 0 : i32
    return %c0_i32, %c0_i32_0 : i32, i32
  }
  func.func @transform_16(%arg0: i32) -> (i32, i32, i32) {
    %c0_i32 = arith.constant 0 : i32
    %c0_i32_0 = arith.constant 0 : i32
    %c0_i32_1 = arith.constant 0 : i32
    %c0_i32_2 = arith.constant 0 : i32
    return %c0_i32, %c0_i32_0, %c0_i32_1 : i32, i32, i32
  }
  func.func @transform_17(%arg0: i32) -> (i32, i32) {
    %c0_i32 = arith.constant 0 : i32
    %c0_i32_0 = arith.constant 0 : i32
    %c0_i32_1 = arith.constant 0 : i32
    return %c0_i32, %c0_i32_0 : i32, i32
  }
  func.func @transform_18(%arg0: i32) -> (i32, i32) {
    %c0_i32 = arith.constant 0 : i32
    %c0_i32_0 = arith.constant 0 : i32
    %c0_i32_1 = arith.constant 0 : i32
    return %c0_i32, %c0_i32_0 : i32, i32
  }
  func.func @transform_19(%arg0: i32) -> (i32, i32, i32) {
    %c0_i32 = arith.constant 0 : i32
    %c0_i32_0 = arith.constant 0 : i32
    %c0_i32_1 = arith.constant 0 : i32
    return %arg0, %c0_i32, %c0_i32_0 : i32, i32, i32
  }
}

</mosaic_0001>

<llo_original>
// kernel: forward.1
$region0: #{forward.1}
  #allocation0 [shape = 'u32[]', space=smem, size = 0x4, offset = 0x4, fixed_abs, tag = 'smem constant byte address 0x4 - core index']
  #allocation1 [shape = 'u32[144,128]{1,0:T(1,128)}', space=vmem, size = 0x12000, scoped, tag = 'internal scratch']
  %s0 = inlined_call_operand.vmem [shape: bf16[2,256,3], index: 0, kind: input, shape index: {}]
  %s1 = inlined_call_operand.vmem [shape: bf16[576,256], index: 1, kind: input, shape index: {}]
  %s2 = inlined_call_operand.vmem [shape: bf16[9,3,64], index: 2, kind: input, shape index: {}]
  %s3 = inlined_call_operand.vmem [shape: f32[1,64], index: 3, kind: input, shape index: {}]
  %s4 = inlined_call_operand.vmem [shape: bf16[144,64], index: 4, kind: input, shape index: {}]
  %s5 = inlined_call_operand.vmem [shape: bf16[9,64,128], index: 5, kind: input, shape index: {}]
  %s6 = inlined_call_operand.vmem [shape: f32[1,128], index: 6, kind: input, shape index: {}]
  %s7 = inlined_call_operand.vmem [shape: bf16[72,16], index: 7, kind: input, shape index: {}]
  %s8 = inlined_call_operand.vmem [shape: bf16[9,128,256], index: 8, kind: input, shape index: {}]
  %s9 = inlined_call_operand.vmem [shape: f32[1,256], index: 9, kind: input, shape index: {}]
  %s10 = inlined_call_operand.vmem [shape: bf16[9,16,8], index: 10, kind: input, shape index: {}]
  %s11 = inlined_call_operand.vmem [shape: bf16[256,1152], index: 11, kind: input, shape index: {}]
  %s12 = inlined_call_operand.vmem [shape: f32[1,128], index: 12, kind: input, shape index: {}]
  %s13 = inlined_call_operand.vmem [shape: bf16[9,16,64], index: 13, kind: input, shape index: {}]
  %s14 = inlined_call_operand.vmem [shape: bf16[576,128], index: 14, kind: input, shape index: {}]
  %s15 = inlined_call_operand.vmem [shape: f32[64,1], index: 15, kind: input, shape index: {}]
  %s16 = inlined_call_operand.vmem [shape: bf16[9,64,256], index: 16, kind: input, shape index: {}]
  %s17 = inlined_call_operand.vmem [shape: bf16[72,64], index: 17, kind: input, shape index: {}]
  %s18 = inlined_call_operand.vmem [shape: f32[8,1], index: 18, kind: input, shape index: {}]
  %s19 = inlined_call_operand.vmem [shape: f32[2,8,256], index: 19, kind: output, shape index: {}]
  %s20 = sld [smem:[#allocation0]]
  $region109: #{forward.1} parent=0
    _
  %s22 = ssub.s32 1, %s20
  %s23 = scalar_select 0, %s22, %s20
  loop: start=0, step=1, limit=4
  $region2: #{forward.1} parent=0 // loop_pre_header
    _
  $region3: #{forward.1} parent=0 // loop_header
    %s25 = sphi 0, %s29
    %p26 = scmp.ge.s32.totalorder %s25, 4
    %s35 = sphi 0, %s37
    %s38 = sphi 0, %s35
    %s39 = sphi 0, %s38
    %s55 = sphi 0, %s39
    %s59 = sphi 0, %s59
    %s61 = sphi 0, %s59
    %s62 = sphi 0, %s61
    %s76 = sphi 0, %s62
    %s80 = sphi 0, %s80
    %s82 = sphi 0, %s80
    %s83 = sphi 0, %s82
    %s97 = sphi 0, %s83
    %s101 = sphi 0, %s101
    %s103 = sphi 0, %s101
    %s104 = sphi 0, %s103
    %s118 = sphi 0, %s104
    %s122 = sphi 0, %s122
    %s124 = sphi 0, %s122
    %s125 = sphi 0, %s124
    %s139 = sphi 0, %s125
    %s143 = sphi 0, %s143
    %s145 = sphi 0, %s143
    %s146 = sphi 0, %s145
    %s160 = sphi 0, %s146
    %s164 = sphi 0, %s164
    %s166 = sphi 0, %s164
    %s167 = sphi 0, %s166
    %s181 = sphi 0, %s167
    %s185 = sphi 0, %s185
    %s187 = sphi 0, %s185
    %s188 = sphi 0, %s187
    %s202 = sphi 0, %s188
    %s206 = sphi 0, %s206
    %s208 = sphi 0, %s206
    %s209 = sphi 0, %s208
    %s223 = sphi 0, %s209
    %s227 = sphi 0, %s227
    %s229 = sphi 0, %s227
    %s230 = sphi 0, %s229
    %s244 = sphi 0, %s230
    %s248 = sphi 0, %s248
    %s250 = sphi 0, %s248
    %s251 = sphi 0, %s250
    %s265 = sphi 0, %s251
    %s269 = sphi 0, %s269
    %s271 = sphi 0, %s269
    %s272 = sphi 0, %s271
    %s286 = sphi 0, %s272
    %s290 = sphi 0, %s290
    %s292 = sphi 0, %s290
    %s293 = sphi 0, %s292
    %s307 = sphi 0, %s293
    %s311 = sphi 0, %s311
    %s313 = sphi 0, %s311
    %s314 = sphi 0, %s313
    %s328 = sphi 0, %s314
    %s332 = sphi 0, %s332
    %s334 = sphi 0, %s332
    %s335 = sphi 0, %s334
    %s349 = sphi 0, %s335
    %s353 = sphi 0, %s353
    %s355 = sphi 0, %s353
    %s356 = sphi 0, %s355
    %s370 = sphi 0, %s356
    %s374 = sphi 0, %s374
    %s376 = sphi 0, %s374
    %s377 = sphi 0, %s376
    %s391 = sphi 0, %s377
    %s395 = sphi 0, %s395
    %s397 = sphi 0, %s395
    %s398 = sphi 0, %s397
    %s412 = sphi 0, %s398
    %s416 = sphi 0, %s416
    %s418 = sphi 0, %s416
    %s419 = sphi 0, %s418
    %s433 = sphi 0, %s419
    %s439 = sphi 0, %s441
    %s442 = sphi 0, %s439
    %s443 = sphi 0, %s442
    %s459 = sphi 0, %s443
  $region4: #{forward.1} parent=0 // loop_header_branch
    %28 = sbr.rel (%p26) target = $region8
  $region5: #{forward.1} parent=0 // loop_body
    %s30 = ssub.s32 %s25, 1
    %s31 = ssub.s32 %s25, 2
    %s32 = sadd.s32 %s25, 1
    %s33 = ssub.s32 %s25, %s32
    %p34 = scmp.eq.s32.totalorder %s33, 0
    %s36 = sadd.s32 %s35, 1
    %s37 = scalar_select %p34, %s35, %s36
    %p40 = pneg %p34
    %p41 = scmp.eq.s32.totalorder %s25, 1
    %p42 = por %p40, %p41
    %p43 = scmp.ne.s32.totalorder %s35, %s38
    %p44 = scmp.eq.s32.totalorder %s25, 0
    %p45 = por %p43, %p44
    %p46 = scmp.ne.s32.totalorder %s35, %s38
    %p47 = scmp.eq.s32.totalorder %s30, 1
    %p48 = por %p46, %p47
    %p49 = scmp.ne.s32.totalorder %s38, %s39
    %p50 = scmp.eq.s32.totalorder %s30, 0
    %p51 = por %p49, %p50
    %p52 = scmp.ne.s32.totalorder %s38, %s39
    %p53 = scmp.eq.s32.totalorder %s31, 1
    %p54 = por %p52, %p53
    %p56 = scmp.ne.s32.totalorder %s39, %s55
    %p57 = scmp.eq.s32.totalorder %s31, 0
    %p58 = por %p56, %p57
    %s60 = sadd.s32 %s59, 1
    %p63 = scmp.eq.s32.totalorder %s25, 1
    %p64 = scmp.ne.s32.totalorder %s59, %s61
    %p65 = scmp.eq.s32.totalorder %s25, 0
    %p66 = por %p64, %p65
    %p67 = scmp.ne.s32.totalorder %s59, %s61
    %p68 = scmp.eq.s32.totalorder %s30, 1
    %p69 = por %p67, %p68
    %p70 = scmp.ne.s32.totalorder %s61, %s62
    %p71 = scmp.eq.s32.totalorder %s30, 0
    %p72 = por %p70, %p71
    %p73 = scmp.ne.s32.totalorder %s61, %s62
    %p74 = scmp.eq.s32.totalorder %s31, 1
    %p75 = por %p73, %p74
    %p77 = scmp.ne.s32.totalorder %s62, %s76
    %p78 = scmp.eq.s32.totalorder %s31, 0
    %p79 = por %p77, %p78
    %s81 = sadd.s32 %s80, 1
    %p84 = scmp.eq.s32.totalorder %s25, 1
    %p85 = scmp.ne.s32.totalorder %s80, %s82
    %p86 = scmp.eq.s32.totalorder %s25, 0
    %p87 = por %p85, %p86
    %p88 = scmp.ne.s32.totalorder %s80, %s82
    %p89 = scmp.eq.s32.totalorder %s30, 1
    %p90 = por %p88, %p89
    %p91 = scmp.ne.s32.totalorder %s82, %s83
    %p92 = scmp.eq.s32.totalorder %s30, 0
    %p93 = por %p91, %p92
    %p94 = scmp.ne.s32.totalorder %s82, %s83
    %p95 = scmp.eq.s32.totalorder %s31, 1
    %p96 = por %p94, %p95
    %p98 = scmp.ne.s32.totalorder %s83, %s97
    %p99 = scmp.eq.s32.totalorder %s31, 0
    %p100 = por %p98, %p99
    %s102 = sadd.s32 %s101, 1
    %p105 = scmp.eq.s32.totalorder %s25, 1
    %p106 = scmp.ne.s32.totalorder %s101, %s103
    %p107 = scmp.eq.s32.totalorder %s25, 0
    %p108 = por %p106, %p107
    %p109 = scmp.ne.s32.totalorder %s101, %s103
    %p110 = scmp.eq.s32.totalorder %s30, 1
    %p111 = por %p109, %p110
    %p112 = scmp.ne.s32.totalorder %s103, %s104
    %p113 = scmp.eq.s32.totalorder %s30, 0
    %p114 = por %p112, %p113
    %p115 = scmp.ne.s32.totalorder %s103, %s104
    %p116 = scmp.eq.s32.totalorder %s31, 1
    %p117 = por %p115, %p116
    %p119 = scmp.ne.s32.totalorder %s104, %s118
    %p120 = scmp.eq.s32.totalorder %s31, 0
    %p121 = por %p119, %p120
    %s123 = sadd.s32 %s122, 1
    %p126 = scmp.eq.s32.totalorder %s25, 1
    %p127 = scmp.ne.s32.totalorder %s122, %s124
    %p128 = scmp.eq.s32.totalorder %s25, 0
    %p129 = por %p127, %p128
    %p130 = scmp.ne.s32.totalorder %s122, %s124
    %p131 = scmp.eq.s32.totalorder %s30, 1
    %p132 = por %p130, %p131
    %p133 = scmp.ne.s32.totalorder %s124, %s125
    %p134 = scmp.eq.s32.totalorder %s30, 0
    %p135 = por %p133, %p134
    %p136 = scmp.ne.s32.totalorder %s124, %s125
    %p137 = scmp.eq.s32.totalorder %s31, 1
    %p138 = por %p136, %p137
    %p140 = scmp.ne.s32.totalorder %s125, %s139
    %p141 = scmp.eq.s32.totalorder %s31, 0
    %p142 = por %p140, %p141
    %s144 = sadd.s32 %s143, 1
    %p147 = scmp.eq.s32.totalorder %s25, 1
    %p148 = scmp.ne.s32.totalorder %s143, %s145
    %p149 = scmp.eq.s32.totalorder %s25, 0
    %p150 = por %p148, %p149
    %p151 = scmp.ne.s32.totalorder %s143, %s145
    %p152 = scmp.eq.s32.totalorder %s30, 1
    %p153 = por %p151, %p152
    %p154 = scmp.ne.s32.totalorder %s145, %s146
    %p155 = scmp.eq.s32.totalorder %s30, 0
    %p156 = por %p154, %p155
    %p157 = scmp.ne.s32.totalorder %s145, %s146
    %p158 = scmp.eq.s32.totalorder %s31, 1
    %p159 = por %p157, %p158
    %p161 = scmp.ne.s32.totalorder %s146, %s160
    %p162 = scmp.eq.s32.totalorder %s31, 0
    %p163 = por %p161, %p162
    %s165 = sadd.s32 %s164, 1
    %p168 = scmp.eq.s32.totalorder %s25, 1
    %p169 = scmp.ne.s32.totalorder %s164, %s166
    %p170 = scmp.eq.s32.totalorder %s25, 0
    %p171 = por %p169, %p170
    %p172 = scmp.ne.s32.totalorder %s164, %s166
    %p173 = scmp.eq.s32.totalorder %s30, 1
    %p174 = por %p172, %p173
    %p175 = scmp.ne.s32.totalorder %s166, %s167
    %p176 = scmp.eq.s32.totalorder %s30, 0
    %p177 = por %p175, %p176
    %p178 = scmp.ne.s32.totalorder %s166, %s167
    %p179 = scmp.eq.s32.totalorder %s31, 1
    %p180 = por %p178, %p179
    %p182 = scmp.ne.s32.totalorder %s167, %s181
    %p183 = scmp.eq.s32.totalorder %s31, 0
    %p184 = por %p182, %p183
    %s186 = sadd.s32 %s185, 1
    %p189 = scmp.eq.s32.totalorder %s25, 1
    %p190 = scmp.ne.s32.totalorder %s185, %s187
    %p191 = scmp.eq.s32.totalorder %s25, 0
    %p192 = por %p190, %p191
    %p193 = scmp.ne.s32.totalorder %s185, %s187
    %p194 = scmp.eq.s32.totalorder %s30, 1
    %p195 = por %p193, %p194
    %p196 = scmp.ne.s32.totalorder %s187, %s188
    %p197 = scmp.eq.s32.totalorder %s30, 0
    %p198 = por %p196, %p197
    %p199 = scmp.ne.s32.totalorder %s187, %s188
    %p200 = scmp.eq.s32.totalorder %s31, 1
    %p201 = por %p199, %p200
    %p203 = scmp.ne.s32.totalorder %s188, %s202
    %p204 = scmp.eq.s32.totalorder %s31, 0
    %p205 = por %p203, %p204
    %s207 = sadd.s32 %s206, 1
    %p210 = scmp.eq.s32.totalorder %s25, 1
    %p211 = scmp.ne.s32.totalorder %s206, %s208
    %p212 = scmp.eq.s32.totalorder %s25, 0
    %p213 = por %p211, %p212
    %p214 = scmp.ne.s32.totalorder %s206, %s208
    %p215 = scmp.eq.s32.totalorder %s30, 1
    %p216 = por %p214, %p215
    %p217 = scmp.ne.s32.totalorder %s208, %s209
    %p218 = scmp.eq.s32.totalorder %s30, 0
    %p219 = por %p217, %p218
    %p220 = scmp.ne.s32.totalorder %s208, %s209
    %p221 = scmp.eq.s32.totalorder %s31, 1
    %p222 = por %p220, %p221
    %p224 = scmp.ne.s32.totalorder %s209, %s223
    %p225 = scmp.eq.s32.totalorder %s31, 0
    %p226 = por %p224, %p225
    %s228 = sadd.s32 %s227, 1
    %p231 = scmp.eq.s32.totalorder %s25, 1
    %p232 = scmp.ne.s32.totalorder %s227, %s229
    %p233 = scmp.eq.s32.totalorder %s25, 0
    %p234 = por %p232, %p233
    %p235 = scmp.ne.s32.totalorder %s227, %s229
    %p236 = scmp.eq.s32.totalorder %s30, 1
    %p237 = por %p235, %p236
    %p238 = scmp.ne.s32.totalorder %s229, %s230
    %p239 = scmp.eq.s32.totalorder %s30, 0
    %p240 = por %p238, %p239
    %p241 = scmp.ne.s32.totalorder %s229, %s230
    %p242 = scmp.eq.s32.totalorder %s31, 1
    %p243 = por %p241, %p242
    %p245 = scmp.ne.s32.totalorder %s230, %s244
    %p246 = scmp.eq.s32.totalorder %s31, 0
    %p247 = por %p245, %p246
    %s249 = sadd.s32 %s248, 1
    %p252 = scmp.eq.s32.totalorder %s25, 1
    %p253 = scmp.ne.s32.totalorder %s248, %s250
    %p254 = scmp.eq.s32.totalorder %s25, 0
    %p255 = por %p253, %p254
    %p256 = scmp.ne.s32.totalorder %s248, %s250
    %p257 = scmp.eq.s32.totalorder %s30, 1
    %p258 = por %p256, %p257
    %p259 = scmp.ne.s32.totalorder %s250, %s251
    %p260 = scmp.eq.s32.totalorder %s30, 0
    %p261 = por %p259, %p260
    %p262 = scmp.ne.s32.totalorder %s250, %s251
    %p263 = scmp.eq.s32.totalorder %s31, 1
    %p264 = por %p262, %p263
    %p266 = scmp.ne.s32.totalorder %s251, %s265
    %p267 = scmp.eq.s32.totalorder %s31, 0
    %p268 = por %p266, %p267
    %s270 = sadd.s32 %s269, 1
    %p273 = scmp.eq.s32.totalorder %s25, 1
    %p274 = scmp.ne.s32.totalorder %s269, %s271
    %p275 = scmp.eq.s32.totalorder %s25, 0
    %p276 = por %p274, %p275
    %p277 = scmp.ne.s32.totalorder %s269, %s271
    %p278 = scmp.eq.s32.totalorder %s30, 1
    %p279 = por %p277, %p278
    %p280 = scmp.ne.s32.totalorder %s271, %s272
    %p281 = scmp.eq.s32.totalorder %s30, 0
    %p282 = por %p280, %p281
    %p283 = scmp.ne.s32.totalorder %s271, %s272
    %p284 = scmp.eq.s32.totalorder %s31, 1
    %p285 = por %p283, %p284
    %p287 = scmp.ne.s32.totalorder %s272, %s286
    %p288 = scmp.eq.s32.totalorder %s31, 0
    %p289 = por %p287, %p288
    %s291 = sadd.s32 %s290, 1
    %p294 = scmp.eq.s32.totalorder %s25, 1
    %p295 = scmp.ne.s32.totalorder %s290, %s292
    %p296 = scmp.eq.s32.totalorder %s25, 0
    %p297 = por %p295, %p296
    %p298 = scmp.ne.s32.totalorder %s290, %s292
    %p299 = scmp.eq.s32.totalorder %s30, 1
    %p300 = por %p298, %p299
    %p301 = scmp.ne.s32.totalorder %s292, %s293
    %p302 = scmp.eq.s32.totalorder %s30, 0
    %p303 = por %p301, %p302
    %p304 = scmp.ne.s32.totalorder %s292, %s293
    %p305 = scmp.eq.s32.totalorder %s31, 1
    %p306 = por %p304, %p305
    %p308 = scmp.ne.s32.totalorder %s293, %s307
    %p309 = scmp.eq.s32.totalorder %s31, 0
    %p310 = por %p308, %p309
    %s312 = sadd.s32 %s311, 1
    %p315 = scmp.eq.s32.totalorder %s25, 1
    %p316 = scmp.ne.s32.totalorder %s311, %s313
    %p317 = scmp.eq.s32.totalorder %s25, 0
    %p318 = por %p316, %p317
    %p319 = scmp.ne.s32.totalorder %s311, %s313
    %p320 = scmp.eq.s32.totalorder %s30, 1
    %p321 = por %p319, %p320
    %p322 = scmp.ne.s32.totalorder %s313, %s314
    %p323 = scmp.eq.s32.totalorder %s30, 0
    %p324 = por %p322, %p323
    %p325 = scmp.ne.s32.totalorder %s313, %s314
    %p326 = scmp.eq.s32.totalorder %s31, 1
    %p327 = por %p325, %p326
    %p329 = scmp.ne.s32.totalorder %s314, %s328
    %p330 = scmp.eq.s32.totalorder %s31, 0
    %p331 = por %p329, %p330
    %s333 = sadd.s32 %s332, 1
    %p336 = scmp.eq.s32.totalorder %s25, 1
    %p337 = scmp.ne.s32.totalorder %s332, %s334
    %p338 = scmp.eq.s32.totalorder %s25, 0
    %p339 = por %p337, %p338
    %p340 = scmp.ne.s32.totalorder %s332, %s334
    %p341 = scmp.eq.s32.totalorder %s30, 1
    %p342 = por %p340, %p341
    %p343 = scmp.ne.s32.totalorder %s334, %s335
    %p344 = scmp.eq.s32.totalorder %s30, 0
    %p345 = por %p343, %p344
    %p346 = scmp.ne.s32.totalorder %s334, %s335
    %p347 = scmp.eq.s32.totalorder %s31, 1
    %p348 = por %p346, %p347
    %p350 = scmp.ne.s32.totalorder %s335, %s349
    %p351 = scmp.eq.s32.totalorder %s31, 0
    %p352 = por %p350, %p351
    %s354 = sadd.s32 %s353, 1
    %p357 = scmp.eq.s32.totalorder %s25, 1
    %p358 = scmp.ne.s32.totalorder %s353, %s355
    %p359 = scmp.eq.s32.totalorder %s25, 0
    %p360 = por %p358, %p359
    %p361 = scmp.ne.s32.totalorder %s353, %s355
    %p362 = scmp.eq.s32.totalorder %s30, 1
    %p363 = por %p361, %p362
    %p364 = scmp.ne.s32.totalorder %s355, %s356
    %p365 = scmp.eq.s32.totalorder %s30, 0
    %p366 = por %p364, %p365
    %p367 = scmp.ne.s32.totalorder %s355, %s356
    %p368 = scmp.eq.s32.totalorder %s31, 1
    %p369 = por %p367, %p368
    %p371 = scmp.ne.s32.totalorder %s356, %s370
    %p372 = scmp.eq.s32.totalorder %s31, 0
    %p373 = por %p371, %p372
    %s375 = sadd.s32 %s374, 1
    %p378 = scmp.eq.s32.totalorder %s25, 1
    %p379 = scmp.ne.s32.totalorder %s374, %s376
    %p380 = scmp.eq.s32.totalorder %s25, 0
    %p381 = por %p379, %p380
    %p382 = scmp.ne.s32.totalorder %s374, %s376
    %p383 = scmp.eq.s32.totalorder %s30, 1
    %p384 = por %p382, %p383
    %p385 = scmp.ne.s32.totalorder %s376, %s377
    %p386 = scmp.eq.s32.totalorder %s30, 0
    %p387 = por %p385, %p386
    %p388 = scmp.ne.s32.totalorder %s376, %s377
    %p389 = scmp.eq.s32.totalorder %s31, 1
    %p390 = por %p388, %p389
    %p392 = scmp.ne.s32.totalorder %s377, %s391
    %p393 = scmp.eq.s32.totalorder %s31, 0
    %p394 = por %p392, %p393
    %s396 = sadd.s32 %s395, 1
    %p399 = scmp.eq.s32.totalorder %s25, 1
    %p400 = scmp.ne.s32.totalorder %s395, %s397
    %p401 = scmp.eq.s32.totalorder %s25, 0
    %p402 = por %p400, %p401
    %p403 = scmp.ne.s32.totalorder %s395, %s397
    %p404 = scmp.eq.s32.totalorder %s30, 1
    %p405 = por %p403, %p404
    %p406 = scmp.ne.s32.totalorder %s397, %s398
    %p407 = scmp.eq.s32.totalorder %s30, 0
    %p408 = por %p406, %p407
    %p409 = scmp.ne.s32.totalorder %s397, %s398
    %p410 = scmp.eq.s32.totalorder %s31, 1
    %p411 = por %p409, %p410
    %p413 = scmp.ne.s32.totalorder %s398, %s412
    %p414 = scmp.eq.s32.totalorder %s31, 0
    %p415 = por %p413, %p414
    %s417 = sadd.s32 %s416, 1
    %p420 = scmp.eq.s32.totalorder %s25, 1
    %p421 = scmp.ne.s32.totalorder %s416, %s418
    %p422 = scmp.eq.s32.totalorder %s25, 0
    %p423 = por %p421, %p422
    %p424 = scmp.ne.s32.totalorder %s416, %s418
    %p425 = scmp.eq.s32.totalorder %s30, 1
    %p426 = por %p424, %p425
    %p427 = scmp.ne.s32.totalorder %s418, %s419
    %p428 = scmp.eq.s32.totalorder %s30, 0
    %p429 = por %p427, %p428
    %p430 = scmp.ne.s32.totalorder %s418, %s419
    %p431 = scmp.eq.s32.totalorder %s31, 1
    %p432 = por %p430, %p431
    %p434 = scmp.ne.s32.totalorder %s419, %s433
    %p435 = scmp.eq.s32.totalorder %s31, 0
    %p436 = por %p434, %p435
    %s437 = ssub.s32 %s25, %s32
    %p438 = scmp.eq.s32.totalorder %s437, 0
    %s440 = sadd.s32 %s439, 1
    %s441 = scalar_select %p438, %s439, %s440
    %p444 = pneg %p438
    %p445 = scmp.eq.s32.totalorder %s25, 1
    %p446 = por %p444, %p445
    %p447 = scmp.ne.s32.totalorder %s439, %s442
    %p448 = scmp.eq.s32.totalorder %s25, 0
    %p449 = por %p447, %p448
    %p450 = scmp.ne.s32.totalorder %s439, %s442
    %p451 = scmp.eq.s32.totalorder %s30, 1
    %p452 = por %p450, %p451
    %p453 = scmp.ne.s32.totalorder %s442, %s443
    %p454 = scmp.eq.s32.totalorder %s30, 0
    %p455 = por %p453, %p454
    %p456 = scmp.ne.s32.totalorder %s442, %s443
    %p457 = scmp.eq.s32.totalorder %s31, 1
    %p458 = por %p456, %p457
    %p460 = scmp.ne.s32.totalorder %s443, %s459
    %p461 = scmp.eq.s32.totalorder %s31, 0
    %p462 = por %p460, %p461
    %p463 = scmp.le.s32.totalorder 1, %s25
    %p464 = scmp.lt.s32.totalorder %s25, 3
    %p465 = pnand %p463, %p464
    %p466 = pneg %p465
    // Predicated region
    $region9: #{forward.1} parent=5 // pred_check
      _
    $region10: #{forward.1} parent=5 // pred_check_branch
      %468 = sbr.rel (%p465) target = $region12
    $region11: #{forward.1} parent=5 // pred_region
      %s469 = ssub.s32 %s25, 1
      // Predicated region
      $region13: #{forward.1} parent=11 // pred_check
        %p470 = pneg %p72
      $region14: #{forward.1} parent=11 // pred_check_branch
        %472 = sbr.rel (%p470) target = $region16
      $region15: #{forward.1} parent=11 // pred_region
        _
      $region16: #{forward.1} parent=11 // pred_fallthru
        _
      // Predicated region
      $region17: #{forward.1} parent=11 // pred_check
        %p473 = pneg %p93
      $region18: #{forward.1} parent=11 // pred_check_branch
        %475 = sbr.rel (%p473) target = $region20
      $region19: #{forward.1} parent=11 // pred_region
        _
      $region20: #{forward.1} parent=11 // pred_fallthru
        _
      // Predicated region
      $region21: #{forward.1} parent=11 // pred_check
        %p476 = pneg %p114
      $region22: #{forward.1} parent=11 // pred_check_branch
        %478 = sbr.rel (%p476) target = $region24
      $region23: #{forward.1} parent=11 // pred_region
        _
      $region24: #{forward.1} parent=11 // pred_fallthru
        _
      // Predicated region
      $region25: #{forward.1} parent=11 // pred_check
        %p479 = pneg %p135
      $region26: #{forward.1} parent=11 // pred_check_branch
        %481 = sbr.rel (%p479) target = $region28
      $region27: #{forward.1} parent=11 // pred_region
        _
      $region28: #{forward.1} parent=11 // pred_fallthru
        _
      // Predicated region
      $region29: #{forward.1} parent=11 // pred_check
        %p482 = pneg %p156
      $region30: #{forward.1} parent=11 // pred_check_branch
        %484 = sbr.rel (%p482) target = $region32
      $region31: #{forward.1} parent=11 // pred_region
        _
      $region32: #{forward.1} parent=11 // pred_fallthru
        _
      // Predicated region
      $region33: #{forward.1} parent=11 // pred_check
        %p485 = pneg %p177
      $region34: #{forward.1} parent=11 // pred_check_branch
        %487 = sbr.rel (%p485) target = $region36
      $region35: #{forward.1} parent=11 // pred_region
        _
      $region36: #{forward.1} parent=11 // pred_fallthru
        _
      // Predicated region
      $region37: #{forward.1} parent=11 // pred_check
        %p488 = pneg %p198
      $region38: #{forward.1} parent=11 // pred_check_branch
        %490 = sbr.rel (%p488) target = $region40
      $region39: #{forward.1} parent=11 // pred_region
        _
      $region40: #{forward.1} parent=11 // pred_fallthru
        _
      // Predicated region
      $region41: #{forward.1} parent=11 // pred_check
        %p491 = pneg %p219
      $region42: #{forward.1} parent=11 // pred_check_branch
        %493 = sbr.rel (%p491) target = $region44
      $region43: #{forward.1} parent=11 // pred_region
        _
      $region44: #{forward.1} parent=11 // pred_fallthru
        _
      // Predicated region
      $region45: #{forward.1} parent=11 // pred_check
        %p494 = pneg %p240
      $region46: #{forward.1} parent=11 // pred_check_branch
        %496 = sbr.rel (%p494) target = $region48
      $region47: #{forward.1} parent=11 // pred_region
        _
      $region48: #{forward.1} parent=11 // pred_fallthru
        _
      // Predicated region
      $region49: #{forward.1} parent=11 // pred_check
        %p497 = pneg %p261
      $region50: #{forward.1} parent=11 // pred_check_branch
        %499 = sbr.rel (%p497) target = $region52
      $region51: #{forward.1} parent=11 // pred_region
        _
      $region52: #{forward.1} parent=11 // pred_fallthru
        _
      // Predicated region
      $region53: #{forward.1} parent=11 // pred_check
        %p500 = pneg %p282
      $region54: #{forward.1} parent=11 // pred_check_branch
        %502 = sbr.rel (%p500) target = $region56
      $region55: #{forward.1} parent=11 // pred_region
        _
      $region56: #{forward.1} parent=11 // pred_fallthru
        _
      // Predicated region
      $region57: #{forward.1} parent=11 // pred_check
        %p503 = pneg %p303
      $region58: #{forward.1} parent=11 // pred_check_branch
        %505 = sbr.rel (%p503) target = $region60
      $region59: #{forward.1} parent=11 // pred_region
        _
      $region60: #{forward.1} parent=11 // pred_fallthru
        _
      // Predicated region
      $region61: #{forward.1} parent=11 // pred_check
        %p506 = pneg %p324
      $region62: #{forward.1} parent=11 // pred_check_branch
        %508 = sbr.rel (%p506) target = $region64
      $region63: #{forward.1} parent=11 // pred_region
        _
      $region64: #{forward.1} parent=11 // pred_fallthru
        _
      // Predicated region
      $region65: #{forward.1} parent=11 // pred_check
        %p509 = pneg %p345
      $region66: #{forward.1} parent=11 // pred_check_branch
        %511 = sbr.rel (%p509) target = $region68
      $region67: #{forward.1} parent=11 // pred_region
        _
      $region68: #{forward.1} parent=11 // pred_fallthru
        _
      // Predicated region
      $region69: #{forward.1} parent=11 // pred_check
        %p512 = pneg %p366
      $region70: #{forward.1} parent=11 // pred_check_branch
        %514 = sbr.rel (%p512) target = $region72
      $region71: #{forward.1} parent=11 // pred_region
        _
      $region72: #{forward.1} parent=11 // pred_fallthru
        _
      // Predicated region
      $region73: #{forward.1} parent=11 // pred_check
        %p515 = pneg %p387
      $region74: #{forward.1} parent=11 // pred_check_branch
        %517 = sbr.rel (%p515) target = $region76
      $region75: #{forward.1} parent=11 // pred_region
        _
      $region76: #{forward.1} parent=11 // pred_fallthru
        _
      // Predicated region
      $region77: #{forward.1} parent=11 // pred_check
        %p518 = pneg %p408
      $region78: #{forward.1} parent=11 // pred_check_branch
        %520 = sbr.rel (%p518) target = $region80
      $region79: #{forward.1} parent=11 // pred_region
        _
      $region80: #{forward.1} parent=11 // pred_fallthru
        _
      // Predicated region
      $region81: #{forward.1} parent=11 // pred_check
        %p521 = pneg %p429
      $region82: #{forward.1} parent=11 // pred_check_branch
        %523 = sbr.rel (%p521) target = $region84
      $region83: #{forward.1} parent=11 // pred_region
        _
      $region84: #{forward.1} parent=11 // pred_fallthru
        _
    $region12: #{forward.1} parent=5 // pred_fallthru
      _
    %p524 = scmp.lt.s32.totalorder %s25, 2
    // Predicated region
    $region85: #{forward.1} parent=5 // pred_check
      %p525 = pneg %p524
    $region86: #{forward.1} parent=5 // pred_check_branch
      %527 = sbr.rel (%p525) target = $region88
    $region87: #{forward.1} parent=5 // pred_region
      // Predicated region
      $region89: #{forward.1} parent=87 // pred_check
        %p528 = pneg %p45
      $region90: #{forward.1} parent=87 // pred_check_branch
        %530 = sbr.rel (%p528) target = $region92
      $region91: #{forward.1} parent=87 // pred_region
        %p531 = scmp.lt.s32.totalorder %s25, 1
        %s532 = scalar_select %p531, %s25, 1
        %s533 = smul.addr %s532, 32
        %s534 = smul.addr %s533, 4
        %s535 = scalar_lea.vmem %s0, %s534
      $region92: #{forward.1} parent=87 // pred_fallthru
        _
    $region88: #{forward.1} parent=5 // pred_fallthru
      _
    %p536 = scmp.le.s32.totalorder 1, %s25
    %p537 = scmp.lt.s32.totalorder %s25, 3
    %p538 = pnand %p536, %p537
    %p539 = pneg %p538
    // Predicated region
    $region93: #{forward.1} parent=5 // pred_check
      _
    $region94: #{forward.1} parent=5 // pred_check_branch
      %541 = sbr.rel (%p538) target = $region96
    $region95: #{forward.1} parent=5 // pred_region
      %s542 = ssub.s32 %s25, 1
      %p543 = scmp.lt.s32.totalorder %s30, 1
      %s544 = scalar_select %p543, %s30, 1
      %s545 = smul.addr %s544, 32
      %s546 = smul.addr %s545, 4
      %s547 = scalar_lea.vmem %s0, %s546
      %p548 = pneg %p51
      %p549 = pneg %p48
      %p550 = pneg %p72
      %p551 = pneg %p69
      %p552 = pneg %p93
      %p553 = pneg %p90
      %p554 = pneg %p114
      %p555 = pneg %p111
      %p556 = pneg %p135
      %p557 = pneg %p132
      %p558 = pneg %p156
      %p559 = pneg %p153
      %p560 = pneg %p177
      %p561 = pneg %p174
      %p562 = pneg %p198
      %p563 = pneg %p195
      %p564 = pneg %p219
      %p565 = pneg %p216
      %p566 = pneg %p240
      %p567 = pneg %p237
      %p568 = pneg %p261
      %p569 = pneg %p258
      %p570 = pneg %p282
      %p571 = pneg %p279
      %p572 = pneg %p303
      %p573 = pneg %p300
      %p574 = pneg %p324
      %p575 = pneg %p321
      %p576 = pneg %p345
      %p577 = pneg %p342
      %p578 = pneg %p366
      %p579 = pneg %p363
      %p580 = pneg %p387
      %p581 = pneg %p384
      %p582 = pneg %p408
      %p583 = pneg %p405
      %p584 = pneg %p429
      %p585 = pneg %p426
      %p586 = pneg %p455
      %p587 = pneg %p452
      %p588 = scmp.lt.s32.totalorder %s30, 1
      %s589 = scalar_select %p588, %s30, 1
      %s590 = smul.addr %s589, 2
      %s591 = smul.addr %s590, 8
      %s592 = scalar_lea.vmem %s19, %s591
      %p593 = scmp.lt.s32.totalorder %s30, 1
      %s594 = scalar_select %p593, %s30, 1
      %s595 = smul.addr %s594, 32
      %s596 = smul.addr %s595, 4
      %s597 = scalar_lea.vmem %s0, %s596
      %p598 = scmp.lt.s32.totalorder %s30, 1
      %s599 = scalar_select %p598, %s30, 1
      %s600 = smul.addr %s599, 2
      %s601 = smul.addr %s600, 8
      %s602 = scalar_lea.vmem %s19, %s601
      %v604 = vld [vmem:[%s597] sm:$0xf]
      %v605 = vld [vmem:[%s597 + $0x4] sm:$0xf]
      %v606 = vld [vmem:[%s597 + $0x8] sm:$0xf]
      %v607 = vld [vmem:[%s597 + $0xc] sm:$0xf]
      %v608 = vld [vmem:[%s597 + $0x10] sm:$0xf]
      %v609 = vld [vmem:[%s597 + $0x14] sm:$0xf]
      %v610 = vld [vmem:[%s597 + $0x18] sm:$0xf]
      %v611 = vld [vmem:[%s597 + $0x1c] sm:$0xf]
      %v612 = vld [vmem:[%s597 + $0x20] sm:$0xf]
      %v613 = vld [vmem:[%s597 + $0x24] sm:$0xf]
      %v614 = vld [vmem:[%s597 + $0x28] sm:$0xf]
      %v615 = vld [vmem:[%s597 + $0x2c] sm:$0xf]
      %v616 = vld [vmem:[%s597 + $0x30] sm:$0xf]
      %v617 = vld [vmem:[%s597 + $0x34] sm:$0xf]
      %v618 = vld [vmem:[%s597 + $0x38] sm:$0xf]
      %v619 = vld [vmem:[%s597 + $0x3c] sm:$0xf]
      %v620 = vld [vmem:[%s597 + $0x40] sm:$0xf]
      %v621 = vld [vmem:[%s597 + $0x44] sm:$0xf]
      %v622 = vld [vmem:[%s597 + $0x48] sm:$0xf]
      %v623 = vld [vmem:[%s597 + $0x4c] sm:$0xf]
      %v624 = vld [vmem:[%s597 + $0x50] sm:$0xf]
      %v625 = vld [vmem:[%s597 + $0x54] sm:$0xf]
      %v626 = vld [vmem:[%s597 + $0x58] sm:$0xf]
      %v627 = vld [vmem:[%s597 + $0x5c] sm:$0xf]
      %v628 = vld [vmem:[%s597 + $0x60] sm:$0xf]
      %v629 = vld [vmem:[%s597 + $0x64] sm:$0xf]
      %v630 = vld [vmem:[%s597 + $0x68] sm:$0xf]
      %v631 = vld [vmem:[%s597 + $0x6c] sm:$0xf]
      %v632 = vld [vmem:[%s597 + $0x70] sm:$0xf]
      %v633 = vld [vmem:[%s597 + $0x74] sm:$0xf]
      %v634 = vld [vmem:[%s597 + $0x78] sm:$0xf]
      %v635 = vld [vmem:[%s597 + $0x7c] sm:$0xf]
      %v636 = vld [vmem:[%s1] sm:$0xff]
      %v637 = vld [vmem:[%s1 + $0x8] sm:$0xff]
      %v638 = vld [vmem:[%s1 + $0x10] sm:$0xff]
      %v639 = vld [vmem:[%s1 + $0x18] sm:$0xff]
      %v640 = vld [vmem:[%s1 + $0x20] sm:$0xff]
      %v641 = vld [vmem:[%s1 + $0x28] sm:$0xff]
      %v642 = vld [vmem:[%s1 + $0x30] sm:$0xff]
      %v643 = vld [vmem:[%s1 + $0x38] sm:$0xff]
      %v644 = vld [vmem:[%s1 + $0x40] sm:$0xff]
      %v645 = vld [vmem:[%s1 + $0x48] sm:$0xff]
      %v646 = vld [vmem:[%s1 + $0x50] sm:$0xff]
      %v647 = vld [vmem:[%s1 + $0x58] sm:$0xff]
      %v648 = vld [vmem:[%s1 + $0x60] sm:$0xff]
      %v649 = vld [vmem:[%s1 + $0x68] sm:$0xff]
      %v650 = vld [vmem:[%s1 + $0x70] sm:$0xff]
      %v651 = vld [vmem:[%s1 + $0x78] sm:$0xff]
      %v652 = vld [vmem:[%s1 + $0x80] sm:$0xff]
      %v653 = vld [vmem:[%s1 + $0x88] sm:$0xff]
      %v654 = vld [vmem:[%s1 + $0x90] sm:$0xff]
      %v655 = vld [vmem:[%s1 + $0x98] sm:$0xff]
      %v656 = vld [vmem:[%s1 + $0xa0] sm:$0xff]
      %v657 = vld [vmem:[%s1 + $0xa8] sm:$0xff]
      %v658 = vld [vmem:[%s1 + $0xb0] sm:$0xff]
      %v659 = vld [vmem:[%s1 + $0xb8] sm:$0xff]
      %v660 = vld [vmem:[%s1 + $0xc0] sm:$0xff]
      %v661 = vld [vmem:[%s1 + $0xc8] sm:$0xff]
      %v662 = vld [vmem:[%s1 + $0xd0] sm:$0xff]
      %v663 = vld [vmem:[%s1 + $0xd8] sm:$0xff]
      %v664 = vld [vmem:[%s1 + $0xe0] sm:$0xff]
      %v665 = vld [vmem:[%s1 + $0xe8] sm:$0xff]
      %v666 = vld [vmem:[%s1 + $0xf0] sm:$0xff]
      %v667 = vld [vmem:[%s1 + $0xf8] sm:$0xff]
      %v668 = vld [vmem:[%s1 + $0x100] sm:$0xff]
      %v669 = vld [vmem:[%s1 + $0x108] sm:$0xff]
      %v670 = vld [vmem:[%s1 + $0x110] sm:$0xff]
      %v671 = vld [vmem:[%s1 + $0x118] sm:$0xff]
      %v672 = vld [vmem:[%s1 + $0x120] sm:$0xff]
      %v673 = vld [vmem:[%s1 + $0x128] sm:$0xff]
      %v674 = vld [vmem:[%s1 + $0x130] sm:$0xff]
      %v675 = vld [vmem:[%s1 + $0x138] sm:$0xff]
      %v676 = vld [vmem:[%s1 + $0x140] sm:$0xff]
      %v677 = vld [vmem:[%s1 + $0x148] sm:$0xff]
      %v678 = vld [vmem:[%s1 + $0x150] sm:$0xff]
      %v679 = vld [vmem:[%s1 + $0x158] sm:$0xff]
      %v680 = vld [vmem:[%s1 + $0x160] sm:$0xff]
      %v681 = vld [vmem:[%s1 + $0x168] sm:$0xff]
      %v682 = vld [vmem:[%s1 + $0x170] sm:$0xff]
      %v683 = vld [vmem:[%s1 + $0x178] sm:$0xff]
      %v684 = vld [vmem:[%s1 + $0x180] sm:$0xff]
      %v685 = vld [vmem:[%s1 + $0x188] sm:$0xff]
      %v686 = vld [vmem:[%s1 + $0x190] sm:$0xff]
      %v687 = vld [vmem:[%s1 + $0x198] sm:$0xff]
      %v688 = vld [vmem:[%s1 + $0x1a0] sm:$0xff]
      %v689 = vld [vmem:[%s1 + $0x1a8] sm:$0xff]
      %v690 = vld [vmem:[%s1 + $0x1b0] sm:$0xff]
      %v691 = vld [vmem:[%s1 + $0x1b8] sm:$0xff]
      %v692 = vld [vmem:[%s1 + $0x1c0] sm:$0xff]
      %v693 = vld [vmem:[%s1 + $0x1c8] sm:$0xff]
      %v694 = vld [vmem:[%s1 + $0x1d0] sm:$0xff]
      %v695 = vld [vmem:[%s1 + $0x1d8] sm:$0xff]
      %v696 = vld [vmem:[%s1 + $0x1e0] sm:$0xff]
      %v697 = vld [vmem:[%s1 + $0x1e8] sm:$0xff]
      %v698 = vld [vmem:[%s1 + $0x1f0] sm:$0xff]
      %v699 = vld [vmem:[%s1 + $0x1f8] sm:$0xff]
      %v700 = vld [vmem:[%s1 + $0x200] sm:$0xff]
      %v701 = vld [vmem:[%s1 + $0x208] sm:$0xff]
      %v702 = vld [vmem:[%s1 + $0x210] sm:$0xff]
      %v703 = vld [vmem:[%s1 + $0x218] sm:$0xff]
      %v704 = vld [vmem:[%s1 + $0x220] sm:$0xff]
      %v705 = vld [vmem:[%s1 + $0x228] sm:$0xff]
      %v706 = vld [vmem:[%s1 + $0x230] sm:$0xff]
      %v707 = vld [vmem:[%s1 + $0x238] sm:$0xff]
      %v780 = vunpack.c.l.b16 %v636
      %v781 = vunpack.c.h.b16 %v636
      %v782 = vunpack.c.l.b16 %v637
      %v783 = vunpack.c.h.b16 %v637
      %v784 = vunpack.c.l.b16 %v638
      %v785 = vunpack.c.h.b16 %v638
      %v786 = vunpack.c.l.b16 %v639
      %v787 = vunpack.c.h.b16 %v639
      %v788 = vunpack.c.l.b16 %v640
      %v789 = vunpack.c.h.b16 %v640
      %v790 = vunpack.c.l.b16 %v641
      %v791 = vunpack.c.h.b16 %v641
      %v792 = vunpack.c.l.b16 %v642
      %v793 = vunpack.c.h.b16 %v642
      %v794 = vunpack.c.l.b16 %v643
      %v795 = vunpack.c.h.b16 %v643
      %v796 = vunpack.c.l.b16 %v644
      %v797 = vunpack.c.h.b16 %v644
      %v798 = vunpack.c.l.b16 %v645
      %v799 = vunpack.c.h.b16 %v645
      %v800 = vunpack.c.l.b16 %v646
      %v801 = vunpack.c.h.b16 %v646
      %v802 = vunpack.c.l.b16 %v647
      %v803 = vunpack.c.h.b16 %v647
      %v804 = vunpack.c.l.b16 %v648
      %v805 = vunpack.c.h.b16 %v648
      %v806 = vunpack.c.l.b16 %v649
      %v807 = vunpack.c.h.b16 %v649
      %v808 = vunpack.c.l.b16 %v650
      %v809 = vunpack.c.h.b16 %v650
      %v810 = vunpack.c.l.b16 %v651
      %v811 = vunpack.c.h.b16 %v651
      %v812 = vunpack.c.l.b16 %v652
      %v813 = vunpack.c.h.b16 %v652
      %v814 = vunpack.c.l.b16 %v653
      %v815 = vunpack.c.h.b16 %v653
      %v816 = vunpack.c.l.b16 %v654
      %v817 = vunpack.c.h.b16 %v654
      %v818 = vunpack.c.l.b16 %v655
      %v819 = vunpack.c.h.b16 %v655
      %v820 = vunpack.c.l.b16 %v656
      %v821 = vunpack.c.h.b16 %v656
      %v822 = vunpack.c.l.b16 %v657
      %v823 = vunpack.c.h.b16 %v657
      %v824 = vunpack.c.l.b16 %v658
      %v825 = vunpack.c.h.b16 %v658
      %v826 = vunpack.c.l.b16 %v659
      %v827 = vunpack.c.h.b16 %v659
      %v828 = vunpack.c.l.b16 %v660
      %v829 = vunpack.c.h.b16 %v660
      %v830 = vunpack.c.l.b16 %v661
      %v831 = vunpack.c.h.b16 %v661
      %v832 = vunpack.c.l.b16 %v662
      %v833 = vunpack.c.h.b16 %v662
      %v834 = vunpack.c.l.b16 %v663
      %v835 = vunpack.c.h.b16 %v663
      %v836 = vunpack.c.l.b16 %v664
      %v837 = vunpack.c.h.b16 %v664
      %v838 = vunpack.c.l.b16 %v665
      %v839 = vunpack.c.h.b16 %v665
      %v840 = vunpack.c.l.b16 %v666
      %v841 = vunpack.c.h.b16 %v666
      %v842 = vunpack.c.l.b16 %v667
      %v843 = vunpack.c.h.b16 %v667
      %v844 = vunpack.c.l.b16 %v668
      %v845 = vunpack.c.h.b16 %v668
      %v846 = vunpack.c.l.b16 %v669
      %v847 = vunpack.c.h.b16 %v669
      %v848 = vunpack.c.l.b16 %v670
      %v849 = vunpack.c.h.b16 %v670
      %v850 = vunpack.c.l.b16 %v671
      %v851 = vunpack.c.h.b16 %v671
      %v852 = vunpack.c.l.b16 %v672
      %v853 = vunpack.c.h.b16 %v672
      %v854 = vunpack.c.l.b16 %v673
      %v855 = vunpack.c.h.b16 %v673
      %v856 = vunpack.c.l.b16 %v674
      %v857 = vunpack.c.h.b16 %v674
      %v858 = vunpack.c.l.b16 %v675
      %v859 = vunpack.c.h.b16 %v675
      %v860 = vunpack.c.l.b16 %v676
      %v861 = vunpack.c.h.b16 %v676
      %v862 = vunpack.c.l.b16 %v677
      %v863 = vunpack.c.h.b16 %v677
      %v864 = vunpack.c.l.b16 %v678
      %v865 = vunpack.c.h.b16 %v678
      %v866 = vunpack.c.l.b16 %v679
      %v867 = vunpack.c.h.b16 %v679
      %v868 = vunpack.c.l.b16 %v680
      %v869 = vunpack.c.h.b16 %v680
      %v870 = vunpack.c.l.b16 %v681
      %v871 = vunpack.c.h.b16 %v681
      %v872 = vunpack.c.l.b16 %v682
      %v873 = vunpack.c.h.b16 %v682
      %v874 = vunpack.c.l.b16 %v683
      %v875 = vunpack.c.h.b16 %v683
      %v876 = vunpack.c.l.b16 %v684
      %v877 = vunpack.c.h.b16 %v684
      %v878 = vunpack.c.l.b16 %v685
      %v879 = vunpack.c.h.b16 %v685
      %v880 = vunpack.c.l.b16 %v686
      %v881 = vunpack.c.h.b16 %v686
      %v882 = vunpack.c.l.b16 %v687
      %v883 = vunpack.c.h.b16 %v687
      %v884 = vunpack.c.l.b16 %v688
      %v885 = vunpack.c.h.b16 %v688
      %v886 = vunpack.c.l.b16 %v689
      %v887 = vunpack.c.h.b16 %v689
      %v888 = vunpack.c.l.b16 %v690
      %v889 = vunpack.c.h.b16 %v690
      %v890 = vunpack.c.l.b16 %v691
      %v891 = vunpack.c.h.b16 %v691
      %v892 = vunpack.c.l.b16 %v692
      %v893 = vunpack.c.h.b16 %v692
      %v894 = vunpack.c.l.b16 %v693
      %v895 = vunpack.c.h.b16 %v693
      %v896 = vunpack.c.l.b16 %v694
      %v897 = vunpack.c.h.b16 %v694
      %v898 = vunpack.c.l.b16 %v695
      %v899 = vunpack.c.h.b16 %v695
      %v900 = vunpack.c.l.b16 %v696
      %v901 = vunpack.c.h.b16 %v696
      %v902 = vunpack.c.l.b16 %v697
      %v903 = vunpack.c.h.b16 %v697
      %v904 = vunpack.c.l.b16 %v698
      %v905 = vunpack.c.h.b16 %v698
      %v906 = vunpack.c.l.b16 %v699
      %v907 = vunpack.c.h.b16 %v699
      %v908 = vunpack.c.l.b16 %v700
      %v909 = vunpack.c.h.b16 %v700
      %v910 = vunpack.c.l.b16 %v701
      %v911 = vunpack.c.h.b16 %v701
      %v912 = vunpack.c.l.b16 %v702
      %v913 = vunpack.c.h.b16 %v702
      %v914 = vunpack.c.l.b16 %v703
      %v915 = vunpack.c.h.b16 %v703
      %v916 = vunpack.c.l.b16 %v704
      %v917 = vunpack.c.h.b16 %v704
      %v918 = vunpack.c.l.b16 %v705
      %v919 = vunpack.c.h.b16 %v705
      %v920 = vunpack.c.l.b16 %v706
      %v921 = vunpack.c.h.b16 %v706
      %v922 = vunpack.c.l.b16 %v707
      %v923 = vunpack.c.h.b16 %v707
      %v924 = vpack.c.b16 %v782, %v780
      %v925 = vpack.c.b16 %v783, %v781
      %v926 = vpack.c.b16 %v786, %v784
      %v927 = vpack.c.b16 %v787, %v785
      %v928 = vpack.c.b16 %v790, %v788
      %v929 = vpack.c.b16 %v791, %v789
      %v930 = vpack.c.b16 %v794, %v792
      %v931 = vpack.c.b16 %v795, %v793
      %v932 = vpack.c.b16 %v798, %v796
      %v933 = vpack.c.b16 %v799, %v797
      %v934 = vpack.c.b16 %v802, %v800
      %v935 = vpack.c.b16 %v803, %v801
      %v936 = vpack.c.b16 %v806, %v804
      %v937 = vpack.c.b16 %v807, %v805
      %v938 = vpack.c.b16 %v810, %v808
      %v939 = vpack.c.b16 %v811, %v809
      %v940 = vpack.c.b16 %v814, %v812
      %v941 = vpack.c.b16 %v815, %v813
      %v942 = vpack.c.b16 %v818, %v816
      %v943 = vpack.c.b16 %v819, %v817
      %v944 = vpack.c.b16 %v822, %v820
      %v945 = vpack.c.b16 %v823, %v821
      %v946 = vpack.c.b16 %v826, %v824
      %v947 = vpack.c.b16 %v827, %v825
      %v948 = vpack.c.b16 %v830, %v828
      %v949 = vpack.c.b16 %v831, %v829
      %v950 = vpack.c.b16 %v834, %v832
      %v951 = vpack.c.b16 %v835, %v833
      %v952 = vpack.c.b16 %v838, %v836
      %v953 = vpack.c.b16 %v839, %v837
      %v954 = vpack.c.b16 %v842, %v840
      %v955 = vpack.c.b16 %v843, %v841
      %v956 = vpack.c.b16 %v846, %v844
      %v957 = vpack.c.b16 %v847, %v845
      %v958 = vpack.c.b16 %v850, %v848
      %v959 = vpack.c.b16 %v851, %v849
      %v960 = vpack.c.b16 %v854, %v852
      %v961 = vpack.c.b16 %v855, %v853
      %v962 = vpack.c.b16 %v858, %v856
      %v963 = vpack.c.b16 %v859, %v857
      %v964 = vpack.c.b16 %v862, %v860
      %v965 = vpack.c.b16 %v863, %v861
      %v966 = vpack.c.b16 %v866, %v864
      %v967 = vpack.c.b16 %v867, %v865
      %v968 = vpack.c.b16 %v870, %v868
      %v969 = vpack.c.b16 %v871, %v869
      %v970 = vpack.c.b16 %v874, %v872
      %v971 = vpack.c.b16 %v875, %v873
      %v972 = vpack.c.b16 %v878, %v876
      %v973 = vpack.c.b16 %v879, %v877
      %v974 = vpack.c.b16 %v882, %v880
      %v975 = vpack.c.b16 %v883, %v881
      %v976 = vpack.c.b16 %v886, %v884
      %v977 = vpack.c.b16 %v887, %v885
      %v978 = vpack.c.b16 %v890, %v888
      %v979 = vpack.c.b16 %v891, %v889
      %v980 = vpack.c.b16 %v894, %v892
      %v981 = vpack.c.b16 %v895, %v893
      %v982 = vpack.c.b16 %v898, %v896
      %v983 = vpack.c.b16 %v899, %v897
      %v984 = vpack.c.b16 %v902, %v900
      %v985 = vpack.c.b16 %v903, %v901
      %v986 = vpack.c.b16 %v906, %v904
      %v987 = vpack.c.b16 %v907, %v905
      %v988 = vpack.c.b16 %v910, %v908
      %v989 = vpack.c.b16 %v911, %v909
      %v990 = vpack.c.b16 %v914, %v912
      %v991 = vpack.c.b16 %v915, %v913
      %v992 = vpack.c.b16 %v918, %v916
      %v993 = vpack.c.b16 %v919, %v917
      %v994 = vpack.c.b16 %v922, %v920
      %v995 = vpack.c.b16 %v923, %v921
      %v1100 = vunpack.c.l.b16 %v604
      %v1101 = vunpack.c.l.b16 %v605
      %v1102 = vunpack.c.l.b16 %v606
      %v1103 = vunpack.c.l.b16 %v607
      %v1104 = vunpack.c.l.b16 %v608
      %v1105 = vunpack.c.l.b16 %v609
      %v1106 = vunpack.c.l.b16 %v610
      %v1107 = vunpack.c.l.b16 %v611
      %v1108 = vunpack.c.l.b16 %v612
      %v1109 = vunpack.c.l.b16 %v613
      %v1110 = vunpack.c.l.b16 %v614
      %v1111 = vunpack.c.l.b16 %v615
      %v1112 = vunpack.c.l.b16 %v616
      %v1113 = vunpack.c.l.b16 %v617
      %v1114 = vunpack.c.l.b16 %v618
      %v1115 = vunpack.c.l.b16 %v619
      %v1116 = vunpack.c.l.b16 %v620
      %v1117 = vunpack.c.l.b16 %v621
      %v1118 = vunpack.c.l.b16 %v622
      %v1119 = vunpack.c.l.b16 %v623
      %v1120 = vunpack.c.l.b16 %v624
      %v1121 = vunpack.c.l.b16 %v625
      %v1122 = vunpack.c.l.b16 %v626
      %v1123 = vunpack.c.l.b16 %v627
      %v1124 = vunpack.c.l.b16 %v628
      %v1125 = vunpack.c.l.b16 %v629
      %v1126 = vunpack.c.l.b16 %v630
      %v1127 = vunpack.c.l.b16 %v631
      %v1128 = vunpack.c.l.b16 %v632
      %v1129 = vunpack.c.l.b16 %v633
      %v1130 = vunpack.c.l.b16 %v634
      %v1131 = vunpack.c.l.b16 %v635
      %v1132 = vpack.c.b16 %v1101, %v1100
      %v1133 = vpack.c.b16 %v1103, %v1102
      %v1134 = vpack.c.b16 %v1105, %v1104
      %v1135 = vpack.c.b16 %v1107, %v1106
      %v1136 = vpack.c.b16 %v1109, %v1108
      %v1137 = vpack.c.b16 %v1111, %v1110
      %v1138 = vpack.c.b16 %v1113, %v1112
      %v1139 = vpack.c.b16 %v1115, %v1114
      %v1140 = vpack.c.b16 %v1117, %v1116
      %v1141 = vpack.c.b16 %v1119, %v1118
      %v1142 = vpack.c.b16 %v1121, %v1120
      %v1143 = vpack.c.b16 %v1123, %v1122
      %v1144 = vpack.c.b16 %v1125, %v1124
      %v1145 = vpack.c.b16 %v1127, %v1126
      %v1146 = vpack.c.b16 %v1129, %v1128
      %v1147 = vpack.c.b16 %v1131, %v1130
      %1164 = vmatprep.subr.bf16.mxu0 0
      %1165 = vmatpush1.bf16.msra.mxu0 %v1132
      %1166 = vmatprep.subr.bf16.mxu0 0
      %1167 = vmatpush1.bf16.msra.mxu0 %v1133
      %1168 = vmatprep.subr.bf16.mxu0 0
      %1169 = vmatpush1.bf16.msra.mxu0 %v1134
      %1170 = vmatprep.subr.bf16.mxu0 0
      %1171 = vmatpush1.bf16.msra.mxu0 %v1135
      %1172 = vmatprep.subr.bf16.mxu0 0
      %1173 = vmatpush1.bf16.msra.mxu0 %v1136
      %1174 = vmatprep.subr.bf16.mxu0 0
      %1175 = vmatpush1.bf16.msra.mxu0 %v1137
      %1176 = vmatprep.subr.bf16.mxu0 0
      %1177 = vmatpush1.bf16.msra.mxu0 %v1138
      %1178 = vmatprep.subr.bf16.mxu0 0
      %1179 = vmatpush1.bf16.msra.mxu0 %v1139
      %1180 = vmatprep.subr.bf16.mxu0 0
      %1181 = vmatpush1.bf16.msra.mxu0 %v1140
      %1182 = vmatprep.subr.bf16.mxu0 0
      %1183 = vmatpush1.bf16.msra.mxu0 %v1141
      %1184 = vmatprep.subr.bf16.mxu0 0
      %1185 = vmatpush1.bf16.msra.mxu0 %v1142
      %1186 = vmatprep.subr.bf16.mxu0 0
      %1187 = vmatpush1.bf16.msra.mxu0 %v1143
      %1188 = vmatprep.subr.bf16.mxu0 0
      %1189 = vmatpush1.bf16.msra.mxu0 %v1144
      %1190 = vmatprep.subr.bf16.mxu0 0
      %1191 = vmatpush1.bf16.msra.mxu0 %v1145
      %1192 = vmatprep.subr.bf16.mxu0 0
      %1193 = vmatpush1.bf16.msra.mxu0 %v1146
      %1194 = vmatprep.subr.bf16.mxu0 0
      %1195 = vmatpush1.bf16.msra.mxu0 %v1147
      %1196 = vmatprep.mubr.bf16.mxu0 %v925
      %1197 = vmatmul.mubr.bf16.gmra.mrb[0].mxu0 %v924
      %v1198 = vpop.f32.mrb[0].mxu0
      %v1199 = vadd.f32 0.0, %v1198
      %v1200 = vpop.f32.mrb[0].mxu0
      %v1201 = vpop.f32.mrb[0].mxu0
      %v1202 = vadd.f32 0.0, %v1201
      %v1203 = vpop.f32.mrb[0].mxu0
      %1204 = vmatprep.mubr.bf16.mxu0 %v927
      %1205 = vmatmul.mubr.bf16.gmra.mrb[0].mxu0 %v926
      %v1206 = vpop.f32.mrb[0].mxu0
      %v1207 = vadd.f32 0.0, %v1206
      %v1208 = vpop.f32.mrb[0].mxu0
      %v1209 = vpop.f32.mrb[0].mxu0
      %v1210 = vadd.f32 0.0, %v1209
      %v1211 = vpop.f32.mrb[0].mxu0
      %1212 = vmatprep.mubr.bf16.mxu0 %v929
      %1213 = vmatmul.mubr.bf16.gmra.mrb[0].mxu0 %v928
      %v1214 = vpop.f32.mrb[0].mxu0
      %v1215 = vadd.f32 0.0, %v1214
      %v1216 = vpop.f32.mrb[0].mxu0
      %v1217 = vpop.f32.mrb[0].mxu0
      %v1218 = vadd.f32 0.0, %v1217
      %v1219 = vpop.f32.mrb[0].mxu0
      %1220 = vmatprep.mubr.bf16.mxu0 %v931
      %1221 = vmatmul.mubr.bf16.gmra.mrb[0].mxu0 %v930
      %v1222 = vpop.f32.mrb[0].mxu0
      %v1223 = vadd.f32 0.0, %v1222
      %v1224 = vpop.f32.mrb[0].mxu0
      %v1225 = vpop.f32.mrb[0].mxu0
      %v1226 = vadd.f32 0.0, %v1225
      %v1227 = vpop.f32.mrb[0].mxu0
      %1228 = vmatprep.mubr.bf16.mxu0 %v933
      %1229 = vmatmul.mubr.bf16.gmra.mrb[0].mxu0 %v932
      %v1230 = vpop.f32.mrb[0].mxu0
      %v1231 = vadd.f32 0.0, %v1230
      %v1232 = vpop.f32.mrb[0].mxu0
      %v1233 = vpop.f32.mrb[0].mxu0
      %v1234 = vadd.f32 0.0, %v1233
      %v1235 = vpop.f32.mrb[0].mxu0
      %1236 = vmatprep.mubr.bf16.mxu0 %v935
      %1237 = vmatmul.mubr.bf16.gmra.mrb[0].mxu0 %v934
      %v1238 = vpop.f32.mrb[0].mxu0
      %v1239 = vadd.f32 0.0, %v1238
      %v1240 = vpop.f32.mrb[0].mxu0
      %v1241 = vpop.f32.mrb[0].mxu0
      %v1242 = vadd.f32 0.0, %v1241
      %v1243 = vpop.f32.mrb[0].mxu0
      %1244 = vmatprep.mubr.bf16.mxu0 %v937
      %1245 = vmatmul.mubr.bf16.gmra.mrb[0].mxu0 %v936
      %v1246 = vpop.f32.mrb[0].mxu0
      %v1247 = vadd.f32 0.0, %v1246
      %v1248 = vpop.f32.mrb[0].mxu0
      %v1249 = vpop.f32.mrb[0].mxu0
      %v1250 = vadd.f32 0.0, %v1249
      %v1251 = vpop.f32.mrb[0].mxu0
      %1252 = vmatprep.mubr.bf16.mxu0 %v939
      %1253 = vmatmul.mubr.bf16.gmra.mrb[0].mxu0 %v938
      %v1254 = vpop.f32.mrb[0].mxu0
      %v1255 = vadd.f32 0.0, %v1254
      %v1256 = vpop.f32.mrb[0].mxu0
      %v1257 = vpop.f32.mrb[0].mxu0
      %v1258 = vadd.f32 0.0, %v1257
      %v1259 = vpop.f32.mrb[0].mxu0
      %1260 = vmatprep.mubr.bf16.mxu0 %v941
      %1261 = vmatmul.mubr.bf16.gmra.mrb[0].mxu0 %v940
      %v1262 = vpop.f32.mrb[0].mxu0
      %v1263 = vadd.f32 0.0, %v1262
      %v1264 = vpop.f32.mrb[0].mxu0
      %v1265 = vpop.f32.mrb[0].mxu0
      %v1266 = vadd.f32 0.0, %v1265
      %v1267 = vpop.f32.mrb[0].mxu0
      %1268 = vmatprep.mubr.bf16.mxu0 %v943
      %1269 = vmatmul.mubr.bf16.gmra.mrb[0].mxu0 %v942
      %v1270 = vpop.f32.mrb[0].mxu0
      %v1271 = vadd.f32 0.0, %v1270
      %v1272 = vpop.f32.mrb[0].mxu0
      %v1273 = vpop.f32.mrb[0].mxu0
      %v1274 = vadd.f32 0.0, %v1273
      %v1275 = vpop.f32.mrb[0].mxu0
      %1276 = vmatprep.mubr.bf16.mxu0 %v945
      %1277 = vmatmul.mubr.bf16.gmra.mrb[0].mxu0 %v944
      %v1278 = vpop.f32.mrb[0].mxu0
      %v1279 = vadd.f32 0.0, %v1278
      %v1280 = vpop.f32.mrb[0].mxu0
      %v1281 = vpop.f32.mrb[0].mxu0
      %v1282 = vadd.f32 0.0, %v1281
      %v1283 = vpop.f32.mrb[0].mxu0
      %1284 = vmatprep.mubr.bf16.mxu0 %v947
      %1285 = vmatmul.mubr.bf16.gmra.mrb[0].mxu0 %v946
      %v1286 = vpop.f32.mrb[0].mxu0
      %v1287 = vadd.f32 0.0, %v1286
      %v1288 = vpop.f32.mrb[0].mxu0
      %v1289 = vpop.f32.mrb[0].mxu0
      %v1290 = vadd.f32 0.0, %v1289
      %v1291 = vpop.f32.mrb[0].mxu0
      %1292 = vmatprep.mubr.bf16.mxu0 %v949
      %1293 = vmatmul.mubr.bf16.gmra.mrb[0].mxu0 %v948
      %v1294 = vpop.f32.mrb[0].mxu0
      %v1295 = vadd.f32 0.0, %v1294
      %v1296 = vpop.f32.mrb[0].mxu0
      %v1297 = vpop.f32.mrb[0].mxu0
      %v1298 = vadd.f32 0.0, %v1297
      %v1299 = vpop.f32.mrb[0].mxu0
      %1300 = vmatprep.mubr.bf16.mxu0 %v951
      %1301 = vmatmul.mubr.bf16.gmra.mrb[0].mxu0 %v950
      %v1302 = vpop.f32.mrb[0].mxu0
      %v1303 = vadd.f32 0.0, %v1302
      %v1304 = vpop.f32.mrb[0].mxu0
      %v1305 = vpop.f32.mrb[0].mxu0
      %v1306 = vadd.f32 0.0, %v1305
      %v1307 = vpop.f32.mrb[0].mxu0
      %1308 = vmatprep.mubr.bf16.mxu0 %v953
      %1309 = vmatmul.mubr.bf16.gmra.mrb[0].mxu0 %v952
      %v1310 = vpop.f32.mrb[0].mxu0
      %v1311 = vadd.f32 0.0, %v1310
      %v1312 = vpop.f32.mrb[0].mxu0
      %v1313 = vpop.f32.mrb[0].mxu0
      %v1314 = vadd.f32 0.0, %v1313
      %v1315 = vpop.f32.mrb[0].mxu0
      %1316 = vmatprep.mubr.bf16.mxu0 %v955
      %1317 = vmatmul.mubr.bf16.gmra.mrb[0].mxu0 %v954
      %v1318 = vpop.f32.mrb[0].mxu0
      %v1319 = vadd.f32 0.0, %v1318
      %v1320 = vpop.f32.mrb[0].mxu0
      %v1321 = vpop.f32.mrb[0].mxu0
      %v1322 = vadd.f32 0.0, %v1321
      %v1323 = vpop.f32.mrb[0].mxu0
      %1324 = vmatprep.mubr.bf16.mxu0 %v957
      %1325 = vmatmul.mubr.bf16.gmra.mrb[0].mxu0 %v956
      %v1326 = vpop.f32.mrb[0].mxu0
      %v1327 = vadd.f32 0.0, %v1326
      %v1328 = vpop.f32.mrb[0].mxu0
      %v1329 = vpop.f32.mrb[0].mxu0
      %v1330 = vadd.f32 0.0, %v1329
      %v1331 = vpop.f32.mrb[0].mxu0
      %1332 = vmatprep.mubr.bf16.mxu0 %v959
      %1333 = vmatmul.mubr.bf16.gmra.mrb[0].mxu0 %v958
      %v1334 = vpop.f32.mrb[0].mxu0
      %v1335 = vadd.f32 0.0, %v1334
      %v1336 = vpop.f32.mrb[0].mxu0
      %v1337 = vpop.f32.mrb[0].mxu0
      %v1338 = vadd.f32 0.0, %v1337
      %v1339 = vpop.f32.mrb[0].mxu0
      %1340 = vmatprep.mubr.bf16.mxu0 %v961
      %1341 = vmatmul.mubr.bf16.gmra.mrb[0].mxu0 %v960
      %v1342 = vpop.f32.mrb[0].mxu0
      %v1343 = vadd.f32 0.0, %v1342
      %v1344 = vpop.f32.mrb[0].mxu0
      %v1345 = vpop.f32.mrb[0].mxu0
      %v1346 = vadd.f32 0.0, %v1345
      %v1347 = vpop.f32.mrb[0].mxu0
      %1348 = vmatprep.mubr.bf16.mxu0 %v963
      %1349 = vmatmul.mubr.bf16.gmra.mrb[0].mxu0 %v962
      %v1350 = vpop.f32.mrb[0].mxu0
      %v1351 = vadd.f32 0.0, %v1350
      %v1352 = vpop.f32.mrb[0].mxu0
      %v1353 = vpop.f32.mrb[0].mxu0
      %v1354 = vadd.f32 0.0, %v1353
      %v1355 = vpop.f32.mrb[0].mxu0
      %1356 = vmatprep.mubr.bf16.mxu0 %v965
      %1357 = vmatmul.mubr.bf16.gmra.mrb[0].mxu0 %v964
      %v1358 = vpop.f32.mrb[0].mxu0
      %v1359 = vadd.f32 0.0, %v1358
      %v1360 = vpop.f32.mrb[0].mxu0
      %v1361 = vpop.f32.mrb[0].mxu0
      %v1362 = vadd.f32 0.0, %v1361
      %v1363 = vpop.f32.mrb[0].mxu0
      %1364 = vmatprep.mubr.bf16.mxu0 %v967
      %1365 = vmatmul.mubr.bf16.gmra.mrb[0].mxu0 %v966
      %v1366 = vpop.f32.mrb[0].mxu0
      %v1367 = vadd.f32 0.0, %v1366
      %v1368 = vpop.f32.mrb[0].mxu0
      %v1369 = vpop.f32.mrb[0].mxu0
      %v1370 = vadd.f32 0.0, %v1369
      %v1371 = vpop.f32.mrb[0].mxu0
      %1372 = vmatprep.mubr.bf16.mxu0 %v969
      %1373 = vmatmul.mubr.bf16.gmra.mrb[0].mxu0 %v968
      %v1374 = vpop.f32.mrb[0].mxu0
      %v1375 = vadd.f32 0.0, %v1374
      %v1376 = vpop.f32.mrb[0].mxu0
      %v1377 = vpop.f32.mrb[0].mxu0
      %v1378 = vadd.f32 0.0, %v1377
      %v1379 = vpop.f32.mrb[0].mxu0
      %1380 = vmatprep.mubr.bf16.mxu0 %v971
      %1381 = vmatmul.mubr.bf16.gmra.mrb[0].mxu0 %v970
      %v1382 = vpop.f32.mrb[0].mxu0
      %v1383 = vadd.f32 0.0, %v1382
      %v1384 = vpop.f32.mrb[0].mxu0
      %v1385 = vpop.f32.mrb[0].mxu0
      %v1386 = vadd.f32 0.0, %v1385
      %v1387 = vpop.f32.mrb[0].mxu0
      %1388 = vmatprep.mubr.bf16.mxu0 %v973
      %1389 = vmatmul.mubr.bf16.gmra.mrb[0].mxu0 %v972
      %v1390 = vpop.f32.mrb[0].mxu0
      %v1391 = vadd.f32 0.0, %v1390
      %v1392 = vpop.f32.mrb[0].mxu0
      %v1393 = vpop.f32.mrb[0].mxu0
      %v1394 = vadd.f32 0.0, %v1393
      %v1395 = vpop.f32.mrb[0].mxu0
      %1396 = vmatprep.mubr.bf16.mxu0 %v975
      %1397 = vmatmul.mubr.bf16.gmra.mrb[0].mxu0 %v974
      %v1398 = vpop.f32.mrb[0].mxu0
      %v1399 = vadd.f32 0.0, %v1398
      %v1400 = vpop.f32.mrb[0].mxu0
      %v1401 = vpop.f32.mrb[0].mxu0
      %v1402 = vadd.f32 0.0, %v1401
      %v1403 = vpop.f32.mrb[0].mxu0
      %1404 = vmatprep.mubr.bf16.mxu0 %v977
      %1405 = vmatmul.mubr.bf16.gmra.mrb[0].mxu0 %v976
      %v1406 = vpop.f32.mrb[0].mxu0
      %v1407 = vadd.f32 0.0, %v1406
      %v1408 = vpop.f32.mrb[0].mxu0
      %v1409 = vpop.f32.mrb[0].mxu0
      %v1410 = vadd.f32 0.0, %v1409
      %v1411 = vpop.f32.mrb[0].mxu0
      %1412 = vmatprep.mubr.bf16.mxu0 %v979
      %1413 = vmatmul.mubr.bf16.gmra.mrb[0].mxu0 %v978
      %v1414 = vpop.f32.mrb[0].mxu0
      %v1415 = vadd.f32 0.0, %v1414
      %v1416 = vpop.f32.mrb[0].mxu0
      %v1417 = vpop.f32.mrb[0].mxu0
      %v1418 = vadd.f32 0.0, %v1417
      %v1419 = vpop.f32.mrb[0].mxu0
      %1420 = vmatprep.mubr.bf16.mxu0 %v981
      %1421 = vmatmul.mubr.bf16.gmra.mrb[0].mxu0 %v980
      %v1422 = vpop.f32.mrb[0].mxu0
      %v1423 = vadd.f32 0.0, %v1422
      %v1424 = vpop.f32.mrb[0].mxu0
      %v1425 = vpop.f32.mrb[0].mxu0
      %v1426 = vadd.f32 0.0, %v1425
      %v1427 = vpop.f32.mrb[0].mxu0
      %1428 = vmatprep.mubr.bf16.mxu0 %v983
      %1429 = vmatmul.mubr.bf16.gmra.mrb[0].mxu0 %v982
      %v1430 = vpop.f32.mrb[0].mxu0
      %v1431 = vadd.f32 0.0, %v1430
      %v1432 = vpop.f32.mrb[0].mxu0
      %v1433 = vpop.f32.mrb[0].mxu0
      %v1434 = vadd.f32 0.0, %v1433
      %v1435 = vpop.f32.mrb[0].mxu0
      %1436 = vmatprep.mubr.bf16.mxu0 %v985
      %1437 = vmatmul.mubr.bf16.gmra.mrb[0].mxu0 %v984
      %v1438 = vpop.f32.mrb[0].mxu0
      %v1439 = vadd.f32 0.0, %v1438
      %v1440 = vpop.f32.mrb[0].mxu0
      %v1441 = vpop.f32.mrb[0].mxu0
      %v1442 = vadd.f32 0.0, %v1441
      %v1443 = vpop.f32.mrb[0].mxu0
      %1444 = vmatprep.mubr.bf16.mxu0 %v987
      %1445 = vmatmul.mubr.bf16.gmra.mrb[0].mxu0 %v986
      %v1446 = vpop.f32.mrb[0].mxu0
      %v1447 = vadd.f32 0.0, %v1446
      %v1448 = vpop.f32.mrb[0].mxu0
      %v1449 = vpop.f32.mrb[0].mxu0
      %v1450 = vadd.f32 0.0, %v1449
      %v1451 = vpop.f32.mrb[0].mxu0
      %1452 = vmatprep.mubr.bf16.mxu0 %v989
      %1453 = vmatmul.mubr.bf16.gmra.mrb[0].mxu0 %v988
      %v1454 = vpop.f32.mrb[0].mxu0
      %v1455 = vadd.f32 0.0, %v1454
      %v1456 = vpop.f32.mrb[0].mxu0
      %v1457 = vpop.f32.mrb[0].mxu0
      %v1458 = vadd.f32 0.0, %v1457
      %v1459 = vpop.f32.mrb[0].mxu0
      %1460 = vmatprep.mubr.bf16.mxu0 %v991
      %1461 = vmatmul.mubr.bf16.gmra.mrb[0].mxu0 %v990
      %v1462 = vpop.f32.mrb[0].mxu0
      %v1463 = vadd.f32 0.0, %v1462
      %v1464 = vpop.f32.mrb[0].mxu0
      %v1465 = vpop.f32.mrb[0].mxu0
      %v1466 = vadd.f32 0.0, %v1465
      %v1467 = vpop.f32.mrb[0].mxu0
      %1468 = vmatprep.mubr.bf16.mxu0 %v993
      %1469 = vmatmul.mubr.bf16.gmra.mrb[0].mxu0 %v992
      %v1470 = vpop.f32.mrb[0].mxu0
      %v1471 = vadd.f32 0.0, %v1470
      %v1472 = vpop.f32.mrb[0].mxu0
      %v1473 = vpop.f32.mrb[0].mxu0
      %v1474 = vadd.f32 0.0, %v1473
      %v1475 = vpop.f32.mrb[0].mxu0
      %1476 = vmatprep.mubr.bf16.mxu0 %v995
      %1477 = vmatmul.mubr.bf16.gmra.mrb[0].mxu0 %v994
      %v1478 = vpop.f32.mrb[0].mxu0
      %v1479 = vadd.f32 0.0, %v1478
      %v1480 = vpop.f32.mrb[0].mxu0
      %v1481 = vpop.f32.mrb[0].mxu0
      %v1482 = vadd.f32 0.0, %v1481
      %v1483 = vpop.f32.mrb[0].mxu0
      %1484 = vdwg.mxu0
      %v1485 = vpack.c.bf16 %v1202, %v1199
      %v1486 = vpack.c.bf16 %v1210, %v1207
      %v1487 = vpack.c.bf16 %v1218, %v1215
      %v1488 = vpack.c.bf16 %v1226, %v1223
      %v1489 = vpack.c.bf16 %v1234, %v1231
      %v1490 = vpack.c.bf16 %v1242, %v1239
      %v1491 = vpack.c.bf16 %v1250, %v1247
      %v1492 = vpack.c.bf16 %v1258, %v1255
      %v1493 = vpack.c.bf16 %v1266, %v1263
      %v1494 = vpack.c.bf16 %v1274, %v1271
      %v1495 = vpack.c.bf16 %v1282, %v1279
      %v1496 = vpack.c.bf16 %v1290, %v1287
      %v1497 = vpack.c.bf16 %v1298, %v1295
      %v1498 = vpack.c.bf16 %v1306, %v1303
      %v1499 = vpack.c.bf16 %v1314, %v1311
      %v1500 = vpack.c.bf16 %v1322, %v1319
      %v1501 = vpack.c.bf16 %v1330, %v1327
      %v1502 = vpack.c.bf16 %v1338, %v1335
      %v1503 = vpack.c.bf16 %v1346, %v1343
      %v1504 = vpack.c.bf16 %v1354, %v1351
      %v1505 = vpack.c.bf16 %v1362, %v1359
      %v1506 = vpack.c.bf16 %v1370, %v1367
      %v1507 = vpack.c.bf16 %v1378, %v1375
      %v1508 = vpack.c.bf16 %v1386, %v1383
      %v1509 = vpack.c.bf16 %v1394, %v1391
      %v1510 = vpack.c.bf16 %v1402, %v1399
      %v1511 = vpack.c.bf16 %v1410, %v1407
      %v1512 = vpack.c.bf16 %v1418, %v1415
      %v1513 = vpack.c.bf16 %v1426, %v1423
      %v1514 = vpack.c.bf16 %v1434, %v1431
      %v1515 = vpack.c.bf16 %v1442, %v1439
      %v1516 = vpack.c.bf16 %v1450, %v1447
      %v1517 = vpack.c.bf16 %v1458, %v1455
      %v1518 = vpack.c.bf16 %v1466, %v1463
      %v1519 = vpack.c.bf16 %v1474, %v1471
      %v1520 = vpack.c.bf16 %v1482, %v1479
      %v1521 = vld [vmem:[%s3] sm:$0x1]
      %v1523 = vlaneseq
      %v1524 = vshrl.u32 %v1523, 7
      %v1525 = vsub.s32 0, %v1524
      %v1526 = vrot.slane %v1521, %v1525
      %v1528 = vld [vmem:[%s2] sm:$0x3]
      %vm1529 = vcmask 23552
      %v1531 = vsel %vm1529, %v1485, 0
      %v1534 = vsel %vm1529, %v1486, 0
      %v1537 = vsel %vm1529, %v1487, 0
      %v1540 = vsel %vm1529, %v1488, 0
      %vm1542 = vcmask 1040384
      %vm1543 = vcmask 1041408
      %v1544 = vsel %vm1542, 4294967295, 65535
      %v1545 = vsel %vm1543, %v1544, 0
      %v1547 = vand.u32 %v1528, %v1545
      %1549 = vmatprep.subr.bf16.mxu0 0
      %1550 = vmatpush1.bf16.msra.mxu0 %v1547
      %1551 = vmatprep.subr.bf16.mxu0 0
      %1552 = vmatpush1.bf16.msra.mxu0 0
      %1553 = vmatprep.subr.bf16.mxu0 0
      %1554 = vmatpush1.bf16.msra.mxu0 0
      %1555 = vmatprep.subr.bf16.mxu0 0
      %1556 = vmatpush1.bf16.msra.mxu0 0
      %1557 = vmatprep.subr.bf16.mxu0 0
      %1558 = vmatpush1.bf16.msra.mxu0 0
      %1559 = vmatprep.subr.bf16.mxu0 0
      %1560 = vmatpush1.bf16.msra.mxu0 0
      %1561 = vmatprep.subr.bf16.mxu0 0
      %1562 = vmatpush1.bf16.msra.mxu0 0
      %1563 = vmatprep.subr.bf16.mxu0 0
      %1564 = vmatpush1.bf16.msra.mxu0 0
      %1565 = vmatprep.subr.bf16.mxu0 0
      %1566 = vmatpush1.bf16.msra.mxu0 0
      %1567 = vmatprep.subr.bf16.mxu0 0
      %1568 = vmatpush1.bf16.msra.mxu0 0
      %1569 = vmatprep.subr.bf16.mxu0 0
      %1570 = vmatpush1.bf16.msra.mxu0 0
      %1571 = vmatprep.subr.bf16.mxu0 0
      %1572 = vmatpush1.bf16.msra.mxu0 0
      %1573 = vmatprep.subr.bf16.mxu0 0
      %1574 = vmatpush1.bf16.msra.mxu0 0
      %1575 = vmatprep.subr.bf16.mxu0 0
      %1576 = vmatpush1.bf16.msra.mxu0 0
      %1577 = vmatprep.subr.bf16.mxu0 0
      %1578 = vmatpush1.bf16.msra.mxu0 0
      %1579 = vmatprep.subr.bf16.mxu0 0
      %1580 = vmatpush1.bf16.msra.mxu0 0
      %1581 = vmatprep.mubr.bf16.mxu0 0
      %1582 = vmatmul.mubr.bf16.gmra.mrb[0].mxu0 %v1531
      %v1583 = vpop.f32.mrb[0].mxu0
      %v1584 = vadd.f32 0.0, %v1583
      %v1585 = vpop.f32.mrb[0].mxu0
      %v1586 = vpop.f32.mrb[0].mxu0
      %v1587 = vadd.f32 0.0, %v1586
      %v1588 = vpop.f32.mrb[0].mxu0
      %1589 = vmatprep.mubr.bf16.mxu0 0
      %1590 = vmatmul.mubr.bf16.gmra.mrb[0].mxu0 %v1534
      %v1591 = vpop.f32.mrb[0].mxu0
      %v1592 = vadd.f32 0.0, %v1591
      %v1593 = vpop.f32.mrb[0].mxu0
      %v1594 = vpop.f32.mrb[0].mxu0
      %v1595 = vadd.f32 0.0, %v1594
      %v1596 = vpop.f32.mrb[0].mxu0
      %1597 = vmatprep.mubr.bf16.mxu0 0
      %1598 = vmatmul.mubr.bf16.gmra.mrb[0].mxu0 %v1537
      %v1599 = vpop.f32.mrb[0].mxu0
      %v1600 = vadd.f32 0.0, %v1599
      %v1601 = vpop.f32.mrb[0].mxu0
      %v1602 = vpop.f32.mrb[0].mxu0
      %v1603 = vadd.f32 0.0, %v1602
      %v1604 = vpop.f32.mrb[0].mxu0
      %1605 = vmatprep.mubr.bf16.mxu0 0
      %1606 = vmatmul.mubr.bf16.gmra.mrb[0].mxu0 %v1540
      %v1607 = vpop.f32.mrb[0].mxu0
      %v1608 = vadd.f32 0.0, %v1607
      %v1609 = vpop.f32.mrb[0].mxu0
      %v1610 = vpop.f32.mrb[0].mxu0
      %v1611 = vadd.f32 0.0, %v1610
      %v1612 = vpop.f32.mrb[0].mxu0
      %1613 = vdwg.mxu0
      %v1614 = vadd.f32 %v1526, %v1584
      %v1615 = vadd.f32 %v1526, %v1587
      %v1616 = vadd.f32 %v1526, %v1592
      %v1617 = vadd.f32 %v1526, %v1595
      %v1618 = vadd.f32 %v1526, %v1600
      %v1619 = vadd.f32 %v1526, %v1603
      %v1620 = vadd.f32 %v1526, %v1608
      %v1621 = vadd.f32 %v1526, %v1611
      %s1622 = scalar_lea.vmem %s2, 2
      %v1623 = vld [vmem:[%s1622] sm:$0x3]
      %v1625 = vsel %vm1529, %v1489, 0
      %v1628 = vsel %vm1529, %v1490, 0
      %v1631 = vsel %vm1529, %v1491, 0
      %v1634 = vsel %vm1529, %v1492, 0
      %v1637 = vand.u32 %v1623, %v1545
      %1639 = vmatprep.subr.bf16.mxu0 0
      %1640 = vmatpush1.bf16.msra.mxu0 %v1637
      %1641 = vmatprep.subr.bf16.mxu0 0
      %1642 = vmatpush1.bf16.msra.mxu0 0
      %1643 = vmatprep.subr.bf16.mxu0 0
      %1644 = vmatpush1.bf16.msra.mxu0 0
      %1645 = vmatprep.subr.bf16.mxu0 0
      %1646 = vmatpush1.bf16.msra.mxu0 0
      %1647 = vmatprep.subr.bf16.mxu0 0
      %1648 = vmatpush1.bf16.msra.mxu0 0
      %1649 = vmatprep.subr.bf16.mxu0 0
      %1650 = vmatpush1.bf16.msra.mxu0 0
      %1651 = vmatprep.subr.bf16.mxu0 0
      %1652 = vmatpush1.bf16.msra.mxu0 0
      %1653 = vmatprep.subr.bf16.mxu0 0
      %1654 = vmatpush1.bf16.msra.mxu0 0
      %1655 = vmatprep.subr.bf16.mxu0 0
      %1656 = vmatpush1.bf16.msra.mxu0 0
      %1657 = vmatprep.subr.bf16.mxu0 0
      %1658 = vmatpush1.bf16.msra.mxu0 0
      %1659 = vmatprep.subr.bf16.mxu0 0
      %1660 = vmatpush1.bf16.msra.mxu0 0
      %1661 = vmatprep.subr.bf16.mxu0 0
      %1662 = vmatpush1.bf16.msra.mxu0 0
      %1663 = vmatprep.subr.bf16.mxu0 0
      %1664 = vmatpush1.bf16.msra.mxu0 0
      %1665 = vmatprep.subr.bf16.mxu0 0
      %1666 = vmatpush1.bf16.msra.mxu0 0
      %1667 = vmatprep.subr.bf16.mxu0 0
      %1668 = vmatpush1.bf16.msra.mxu0 0
      %1669 = vmatprep.subr.bf16.mxu0 0
      %1670 = vmatpush1.bf16.msra.mxu0 0
      %1671 = vmatprep.mubr.bf16.mxu0 0
      %1672 = vmatmul.mubr.bf16.gmra.mrb[0].mxu0 %v1625
      %v1673 = vpop.f32.mrb[0].mxu0
      %v1674 = vadd.f32 0.0, %v1673
      %v1675 = vpop.f32.mrb[0].mxu0
      %v1676 = vpop.f32.mrb[0].mxu0
      %v1677 = vadd.f32 0.0, %v1676
      %v1678 = vpop.f32.mrb[0].mxu0
      %1679 = vmatprep.mubr.bf16.mxu0 0
      %1680 = vmatmul.mubr.bf16.gmra.mrb[0].mxu0 %v1628
      %v1681 = vpop.f32.mrb[0].mxu0
      %v1682 = vadd.f32 0.0, %v1681
      %v1683 = vpop.f32.mrb[0].mxu0
      %v1684 = vpop.f32.mrb[0].mxu0
      %v1685 = vadd.f32 0.0, %v1684
      %v1686 = vpop.f32.mrb[0].mxu0
      %1687 = vmatprep.mubr.bf16.mxu0 0
      %1688 = vmatmul.mubr.bf16.gmra.mrb[0].mxu0 %v1631
      %v1689 = vpop.f32.mrb[0].mxu0
      %v1690 = vadd.f32 0.0, %v1689
      %v1691 = vpop.f32.mrb[0].mxu0
      %v1692 = vpop.f32.mrb[0].mxu0
      %v1693 = vadd.f32 0.0, %v1692
      %v1694 = vpop.f32.mrb[0].mxu0
      %1695 = vmatprep.mubr.bf16.mxu0 0
      %1696 = vmatmul.mubr.bf16.gmra.mrb[0].mxu0 %v1634
      %v1697 = vpop.f32.mrb[0].mxu0
      %v1698 = vadd.f32 0.0, %v1697
      %v1699 = vpop.f32.mrb[0].mxu0
      %v1700 = vpop.f32.mrb[0].mxu0
      %v1701 = vadd.f32 0.0, %v1700
      %v1702 = vpop.f32.mrb[0].mxu0
      %1703 = vdwg.mxu0
      %v1704 = vadd.f32 %v1614, %v1674
      %v1705 = vadd.f32 %v1615, %v1677
      %v1706 = vadd.f32 %v1616, %v1682
      %v1707 = vadd.f32 %v1617, %v1685
      %v1708 = vadd.f32 %v1618, %v1690
      %v1709 = vadd.f32 %v1619, %v1693
      %v1710 = vadd.f32 %v1620, %v1698
      %v1711 = vadd.f32 %v1621, %v1701
      %s1712 = scalar_lea.vmem %s2, 4
      %v1713 = vld [vmem:[%s1712] sm:$0x3]
      %v1715 = vsel %vm1529, %v1493, 0
      %v1718 = vsel %vm1529, %v1494, 0
      %v1721 = vsel %vm1529, %v1495, 0
      %v1724 = vsel %vm1529, %v1496, 0
      %v1727 = vand.u32 %v1713, %v1545
      %1729 = vmatprep.subr.bf16.mxu0 0
      %1730 = vmatpush1.bf16.msra.mxu0 %v1727
      %1731 = vmatprep.subr.bf16.mxu0 0
      %1732 = vmatpush1.bf16.msra.mxu0 0
      %1733 = vmatprep.subr.bf16.mxu0 0
      %1734 = vmatpush1.bf16.msra.mxu0 0
      %1735 = vmatprep.subr.bf16.mxu0 0
      %1736 = vmatpush1.bf16.msra.mxu0 0
      %1737 = vmatprep.subr.bf16.mxu0 0
      %1738 = vmatpush1.bf16.msra.mxu0 0
      %1739 = vmatprep.subr.bf16.mxu0 0
      %1740 = vmatpush1.bf16.msra.mxu0 0
      %1741 = vmatprep.subr.bf16.mxu0 0
      %1742 = vmatpush1.bf16.msra.mxu0 0
      %1743 = vmatprep.subr.bf16.mxu0 0
      %1744 = vmatpush1.bf16.msra.mxu0 0
      %1745 = vmatprep.subr.bf16.mxu0 0
      %1746 = vmatpush1.bf16.msra.mxu0 0
      %1747 = vmatprep.subr.bf16.mxu0 0
      %1748 = vmatpush1.bf16.msra.mxu0 0
      %1749 = vmatprep.subr.bf16.mxu0 0
      %1750 = vmatpush1.bf16.msra.mxu0 0
      %1751 = vmatprep.subr.bf16.mxu0 0
      %1752 = vmatpush1.bf16.msra.mxu0 0
      %1753 = vmatprep.subr.bf16.mxu0 0
      %1754 = vmatpush1.bf16.msra.mxu0 0
      %1755 = vmatprep.subr.bf16.mxu0 0
      %1756 = vmatpush1.bf16.msra.mxu0 0
      %1757 = vmatprep.subr.bf16.mxu0 0
      %1758 = vmatpush1.bf16.msra.mxu0 0
      %1759 = vmatprep.subr.bf16.mxu0 0
      %1760 = vmatpush1.bf16.msra.mxu0 0
      %1761 = vmatprep.mubr.bf16.mxu0 0
      %1762 = vmatmul.mubr.bf16.gmra.mrb[0].mxu0 %v1715
      %v1763 = vpop.f32.mrb[0].mxu0
      %v1764 = vadd.f32 0.0, %v1763
      %v1765 = vpop.f32.mrb[0].mxu0
      %v1766 = vpop.f32.mrb[0].mxu0
      %v1767 = vadd.f32 0.0, %v1766
      %v1768 = vpop.f32.mrb[0].mxu0
      %1769 = vmatprep.mubr.bf16.mxu0 0
      %1770 = vmatmul.mubr.bf16.gmra.mrb[0].mxu0 %v1718
      %v1771 = vpop.f32.mrb[0].mxu0
      %v1772 = vadd.f32 0.0, %v1771
      %v1773 = vpop.f32.mrb[0].mxu0
      %v1774 = vpop.f32.mrb[0].mxu0
      %v1775 = vadd.f32 0.0, %v1774
      %v1776 = vpop.f32.mrb[0].mxu0
      %1777 = vmatprep.mubr.bf16.mxu0 0
      %1778 = vmatmul.mubr.bf16.gmra.mrb[0].mxu0 %v1721
      %v1779 = vpop.f32.mrb[0].mxu0
      %v1780 = vadd.f32 0.0, %v1779
      %v1781 = vpop.f32.mrb[0].mxu0
      %v1782 = vpop.f32.mrb[0].mxu0
      %v1783 = vadd.f32 0.0, %v1782
      %v1784 = vpop.f32.mrb[0].mxu0
      %1785 = vmatprep.mubr.bf16.mxu0 0
      %1786 = vmatmul.mubr.bf16.gmra.mrb[0].mxu0 %v1724
      %v1787 = vpop.f32.mrb[0].mxu0
      %v1788 = vadd.f32 0.0, %v1787
      %v1789 = vpop.f32.mrb[0].mxu0
      %v1790 = vpop.f32.mrb[0].mxu0
      %v1791 = vadd.f32 0.0, %v1790
      %v1792 = vpop.f32.mrb[0].mxu0
      %1793 = vdwg.mxu0
      %v1794 = vadd.f32 %v1704, %v1764
      %v1795 = vadd.f32 %v1705, %v1767
      %v1796 = vadd.f32 %v1706, %v1772
      %v1797 = vadd.f32 %v1707, %v1775
      %v1798 = vadd.f32 %v1708, %v1780
      %v1799 = vadd.f32 %v1709, %v1783
      %v1800 = vadd.f32 %v1710, %v1788
      %v1801 = vadd.f32 %v1711, %v1791
      %s1802 = scalar_lea.vmem %s2, 6
      %v1803 = vld [vmem:[%s1802] sm:$0x3]
      %v1805 = vsel %vm1529, %v1497, 0
      %v1808 = vsel %vm1529, %v1498, 0
      %v1811 = vsel %vm1529, %v1499, 0
      %v1814 = vsel %vm1529, %v1500, 0
      %v1817 = vand.u32 %v1803, %v1545
      %1819 = vmatprep.subr.bf16.mxu0 0
      %1820 = vmatpush1.bf16.msra.mxu0 %v1817
      %1821 = vmatprep.subr.bf16.mxu0 0
      %1822 = vmatpush1.bf16.msra.mxu0 0
      %1823 = vmatprep.subr.bf16.mxu0 0
      %1824 = vmatpush1.bf16.msra.mxu0 0
      %1825 = vmatprep.subr.bf16.mxu0 0
      %1826 = vmatpush1.bf16.msra.mxu0 0
      %1827 = vmatprep.subr.bf16.mxu0 0
      %1828 = vmatpush1.bf16.msra.mxu0 0
      %1829 = vmatprep.subr.bf16.mxu0 0
      %1830 = vmatpush1.bf16.msra.mxu0 0
      %1831 = vmatprep.subr.bf16.mxu0 0
      %1832 = vmatpush1.bf16.msra.mxu0 0
      %1833 = vmatprep.subr.bf16.mxu0 0
      %1834 = vmatpush1.bf16.msra.mxu0 0
      %1835 = vmatprep.subr.bf16.mxu0 0
      %1836 = vmatpush1.bf16.msra.mxu0 0
      %1837 = vmatprep.subr.bf16.mxu0 0
      %1838 = vmatpush1.bf16.msra.mxu0 0
      %1839 = vmatprep.subr.bf16.mxu0 0
      %1840 = vmatpush1.bf16.msra.mxu0 0
      %1841 = vmatprep.subr.bf16.mxu0 0
      %1842 = vmatpush1.bf16.msra.mxu0 0
      %1843 = vmatprep.subr.bf16.mxu0 0
      %1844 = vmatpush1.bf16.msra.mxu0 0
      %1845 = vmatprep.subr.bf16.mxu0 0
      %1846 = vmatpush1.bf16.msra.mxu0 0
      %1847 = vmatprep.subr.bf16.mxu0 0
      %1848 = vmatpush1.bf16.msra.mxu0 0
      %1849 = vmatprep.subr.bf16.mxu0 0
      %1850 = vmatpush1.bf16.msra.mxu0 0
      %1851 = vmatprep.mubr.bf16.mxu0 0
      %1852 = vmatmul.mubr.bf16.gmra.mrb[0].mxu0 %v1805
      %v1853 = vpop.f32.mrb[0].mxu0
      %v1854 = vadd.f32 0.0, %v1853
      %v1855 = vpop.f32.mrb[0].mxu0
      %v1856 = vpop.f32.mrb[0].mxu0
      %v1857 = vadd.f32 0.0, %v1856
      %v1858 = vpop.f32.mrb[0].mxu0
      %1859 = vmatprep.mubr.bf16.mxu0 0
      %1860 = vmatmul.mubr.bf16.gmra.mrb[0].mxu0 %v1808
      %v1861 = vpop.f32.mrb[0].mxu0
      %v1862 = vadd.f32 0.0, %v1861
      %v1863 = vpop.f32.mrb[0].mxu0
      %v1864 = vpop.f32.mrb[0].mxu0
      %v1865 = vadd.f32 0.0, %v1864
      %v1866 = vpop.f32.mrb[0].mxu0
      %1867 = vmatprep.mubr.bf16.mxu0 0
      %1868 = vmatmul.mubr.bf16.gmra.mrb[0].mxu0 %v1811
      %v1869 = vpop.f32.mrb[0].mxu0
      %v1870 = vadd.f32 0.0, %v1869
      %v1871 = vpop.f32.mrb[0].mxu0
      %v1872 = vpop.f32.mrb[0].mxu0
      %v1873 = vadd.f32 0.0, %v1872
      %v1874 = vpop.f32.mrb[0].mxu0
      %1875 = vmatprep.mubr.bf16.mxu0 0
      %1876 = vmatmul.mubr.bf16.gmra.mrb[0].mxu0 %v1814
      %v1877 = vpop.f32.mrb[0].mxu0
      %v1878 = vadd.f32 0.0, %v1877
      %v1879 = vpop.f32.mrb[0].mxu0
      %v1880 = vpop.f32.mrb[0].mxu0
      %v1881 = vadd.f32 0.0, %v1880
      %v1882 = vpop.f32.mrb[0].mxu0
      %1883 = vdwg.mxu0
      %v1884 = vadd.f32 %v1794, %v1854
      %v1885 = vadd.f32 %v1795, %v1857
      %v1886 = vadd.f32 %v1796, %v1862
      %v1887 = vadd.f32 %v1797, %v1865
      %v1888 = vadd.f32 %v1798, %v1870
      %v1889 = vadd.f32 %v1799, %v1873
      %v1890 = vadd.f32 %v1800, %v1878
      %v1891 = vadd.f32 %v1801, %v1881
      %s1892 = scalar_lea.vmem %s2, 8
      %v1893 = vld [vmem:[%s1892] sm:$0x3]
      %v1895 = vsel %vm1529, %v1501, 0
      %v1898 = vsel %vm1529, %v1502, 0
      %v1901 = vsel %vm1529, %v1503, 0
      %v1904 = vsel %vm1529, %v1504, 0
      %v1907 = vand.u32 %v1893, %v1545
      %1909 = vmatprep.subr.bf16.mxu0 0
      %1910 = vmatpush1.bf16.msra.mxu0 %v1907
      %1911 = vmatprep.subr.bf16.mxu0 0
      %1912 = vmatpush1.bf16.msra.mxu0 0
      %1913 = vmatprep.subr.bf16.mxu0 0
      %1914 = vmatpush1.bf16.msra.mxu0 0
      %1915 = vmatprep.subr.bf16.mxu0 0
      %1916 = vmatpush1.bf16.msra.mxu0 0
      %1917 = vmatprep.subr.bf16.mxu0 0
      %1918 = vmatpush1.bf16.msra.mxu0 0
      %1919 = vmatprep.subr.bf16.mxu0 0
      %1920 = vmatpush1.bf16.msra.mxu0 0
      %1921 = vmatprep.subr.bf16.mxu0 0
      %1922 = vmatpush1.bf16.msra.mxu0 0
      %1923 = vmatprep.subr.bf16.mxu0 0
      %1924 = vmatpush1.bf16.msra.mxu0 0
      %1925 = vmatprep.subr.bf16.mxu0 0
      %1926 = vmatpush1.bf16.msra.mxu0 0
      %1927 = vmatprep.subr.bf16.mxu0 0
      %1928 = vmatpush1.bf16.msra.mxu0 0
      %1929 = vmatprep.subr.bf16.mxu0 0
      %1930 = vmatpush1.bf16.msra.mxu0 0
      %1931 = vmatprep.subr.bf16.mxu0 0
      %1932 = vmatpush1.bf16.msra.mxu0 0
      %1933 = vmatprep.subr.bf16.mxu0 0
      %1934 = vmatpush1.bf16.msra.mxu0 0
      %1935 = vmatprep.subr.bf16.mxu0 0
      %1936 = vmatpush1.bf16.msra.mxu0 0
      %1937 = vmatprep.subr.bf16.mxu0 0
      %1938 = vmatpush1.bf16.msra.mxu0 0
      %1939 = vmatprep.subr.bf16.mxu0 0
      %1940 = vmatpush1.bf16.msra.mxu0 0
      %1941 = vmatprep.mubr.bf16.mxu0 0
      %1942 = vmatmul.mubr.bf16.gmra.mrb[0].mxu0 %v1895
      %v1943 = vpop.f32.mrb[0].mxu0
      %v1944 = vadd.f32 0.0, %v1943
      %v1945 = vpop.f32.mrb[0].mxu0
      %v1946 = vpop.f32.mrb[0].mxu0
      %v1947 = vadd.f32 0.0, %v1946
      %v1948 = vpop.f32.mrb[0].mxu0
      %1949 = vmatprep.mubr.bf16.mxu0 0
      %1950 = vmatmul.mubr.bf16.gmra.mrb[0].mxu0 %v1898
      %v1951 = vpop.f32.mrb[0].mxu0
      %v1952 = vadd.f32 0.0, %v1951
      %v1953 = vpop.f32.mrb[0].mxu0
      %v1954 = vpop.f32.mrb[0].mxu0
      %v1955 = vadd.f32 0.0, %v1954
      %v1956 = vpop.f32.mrb[0].mxu0
      %1957 = vmatprep.mubr.bf16.mxu0 0
      %1958 = vmatmul.mubr.bf16.gmra.mrb[0].mxu0 %v1901
      %v1959 = vpop.f32.mrb[0].mxu0
      %v1960 = vadd.f32 0.0, %v1959
      %v1961 = vpop.f32.mrb[0].mxu0
      %v1962 = vpop.f32.mrb[0].mxu0
      %v1963 = vadd.f32 0.0, %v1962
      %v1964 = vpop.f32.mrb[0].mxu0
      %1965 = vmatprep.mubr.bf16.mxu0 0
      %1966 = vmatmul.mubr.bf16.gmra.mrb[0].mxu0 %v1904
      %v1967 = vpop.f32.mrb[0].mxu0
      %v1968 = vadd.f32 0.0, %v1967
      %v1969 = vpop.f32.mrb[0].mxu0
      %v1970 = vpop.f32.mrb[0].mxu0
      %v1971 = vadd.f32 0.0, %v1970
      %v1972 = vpop.f32.mrb[0].mxu0
      %1973 = vdwg.mxu0
      %v1974 = vadd.f32 %v1884, %v1944
      %v1975 = vadd.f32 %v1885, %v1947
      %v1976 = vadd.f32 %v1886, %v1952
      %v1977 = vadd.f32 %v1887, %v1955
      %v1978 = vadd.f32 %v1888, %v1960
      %v1979 = vadd.f32 %v1889, %v1963
      %v1980 = vadd.f32 %v1890, %v1968
      %v1981 = vadd.f32 %v1891, %v1971
      %s1982 = scalar_lea.vmem %s2, 10
      %v1983 = vld [vmem:[%s1982] sm:$0x3]
      %v1985 = vsel %vm1529, %v1505, 0
      %v1988 = vsel %vm1529, %v1506, 0
      %v1991 = vsel %vm1529, %v1507, 0
      %v1994 = vsel %vm1529, %v1508, 0
      %v1997 = vand.u32 %v1983, %v1545
      %1999 = vmatprep.subr.bf16.mxu0 0
      %2000 = vmatpush1.bf16.msra.mxu0 %v1997
      %2001 = vmatprep.subr.bf16.mxu0 0
      %2002 = vmatpush1.bf16.msra.mxu0 0
      %2003 = vmatprep.subr.bf16.mxu0 0
      %2004 = vmatpush1.bf16.msra.mxu0 0
      %2005 = vmatprep.subr.bf16.mxu0 0
      %2006 = vmatpush1.bf16.msra.mxu0 0
      %2007 = vmatprep.subr.bf16.mxu0 0
      %2008 = vmatpush1.bf16.msra.mxu0 0
      %2009 = vmatprep.subr.bf16.mxu0 0
      %2010 = vmatpush1.bf16.msra.mxu0 0
      %2011 = vmatprep.subr.bf16.mxu0 0
      %2012 = vmatpush1.bf16.msra.mxu0 0
      %2013 = vmatprep.subr.bf16.mxu0 0
      %2014 = vmatpush1.bf16.msra.mxu0 0
      %2015 = vmatprep.subr.bf16.mxu0 0
      %2016 = vmatpush1.bf16.msra.mxu0 0
      %2017 = vmatprep.subr.bf16.mxu0 0
      %2018 = vmatpush1.bf16.msra.mxu0 0
      %2019 = vmatprep.subr.bf16.mxu0 0
      %2020 = vmatpush1.bf16.msra.mxu0 0
      %2021 = vmatprep.subr.bf16.mxu0 0
      %2022 = vmatpush1.bf16.msra.mxu0 0
      %2023 = vmatprep.subr.bf16.mxu0 0
      %2024 = vmatpush1.bf16.msra.mxu0 0
      %2025 = vmatprep.subr.bf16.mxu0 0
      %2026 = vmatpush1.bf16.msra.mxu0 0
      %2027 = vmatprep.subr.bf16.mxu0 0
      %2028 = vmatpush1.bf16.msra.mxu0 0
      %2029 = vmatprep.subr.bf16.mxu0 0
      %2030 = vmatpush1.bf16.msra.mxu0 0
      %2031 = vmatprep.mubr.bf16.mxu0 0
      %2032 = vmatmul.mubr.bf16.gmra.mrb[0].mxu0 %v1985
      %v2033 = vpop.f32.mrb[0].mxu0
      %v2034 = vadd.f32 0.0, %v2033
      %v2035 = vpop.f32.mrb[0].mxu0
      %v2036 = vpop.f32.mrb[0].mxu0
      %v2037 = vadd.f32 0.0, %v2036
      %v2038 = vpop.f32.mrb[0].mxu0
      %2039 = vmatprep.mubr.bf16.mxu0 0
      %2040 = vmatmul.mubr.bf16.gmra.mrb[0].mxu0 %v1988
      %v2041 = vpop.f32.mrb[0].mxu0
      %v2042 = vadd.f32 0.0, %v2041
      %v2043 = vpop.f32.mrb[0].mxu0
      %v2044 = vpop.f32.mrb[0].mxu0
      %v2045 = vadd.f32 0.0, %v2044
      %v2046 = vpop.f32.mrb[0].mxu0
      %2047 = vmatprep.mubr.bf16.mxu0 0
      %2048 = vmatmul.mubr.bf16.gmra.mrb[0].mxu0 %v1991
      %v2049 = vpop.f32.mrb[0].mxu0
      %v2050 = vadd.f32 0.0, %v2049
      %v2051 = vpop.f32.mrb[0].mxu0
      %v2052 = vpop.f32.mrb[0].mxu0
      %v2053 = vadd.f32 0.0, %v2052
      %v2054 = vpop.f32.mrb[0].mxu0
      %2055 = vmatprep.mubr.bf16.mxu0 0
      %2056 = vmatmul.mubr.bf16.gmra.mrb[0].mxu0 %v1994
      %v2057 = vpop.f32.mrb[0].mxu0
      %v2058 = vadd.f32 0.0, %v2057
      %v2059 = vpop.f32.mrb[0].mxu0
      %v2060 = vpop.f32.mrb[0].mxu0
      %v2061 = vadd.f32 0.0, %v2060
      %v2062 = vpop.f32.mrb[0].mxu0
      %2063 = vdwg.mxu0
      %v2064 = vadd.f32 %v1974, %v2034
      %v2065 = vadd.f32 %v1975, %v2037
      %v2066 = vadd.f32 %v1976, %v2042
      %v2067 = vadd.f32 %v1977, %v2045
      %v2068 = vadd.f32 %v1978, %v2050
      %v2069 = vadd.f32 %v1979, %v2053
      %v2070 = vadd.f32 %v1980, %v2058
      %v2071 = vadd.f32 %v1981, %v2061
      %s2072 = scalar_lea.vmem %s2, 12
      %v2073 = vld [vmem:[%s2072] sm:$0x3]
      %v2075 = vsel %vm1529, %v1509, 0
      %v2078 = vsel %vm1529, %v1510, 0
      %v2081 = vsel %vm1529, %v1511, 0
      %v2084 = vsel %vm1529, %v1512, 0
      %v2087 = vand.u32 %v2073, %v1545
      %2089 = vmatprep.subr.bf16.mxu0 0
      %2090 = vmatpush1.bf16.msra.mxu0 %v2087
      %2091 = vmatprep.subr.bf16.mxu0 0
      %2092 = vmatpush1.bf16.msra.mxu0 0
      %2093 = vmatprep.subr.bf16.mxu0 0
      %2094 = vmatpush1.bf16.msra.mxu0 0
      %2095 = vmatprep.subr.bf16.mxu0 0
      %2096 = vmatpush1.bf16.msra.mxu0 0
      %2097 = vmatprep.subr.bf16.mxu0 0
      %2098 = vmatpush1.bf16.msra.mxu0 0
      %2099 = vmatprep.subr.bf16.mxu0 0
      %2100 = vmatpush1.bf16.msra.mxu0 0
      %2101 = vmatprep.subr.bf16.mxu0 0
      %2102 = vmatpush1.bf16.msra.mxu0 0
      %2103 = vmatprep.subr.bf16.mxu0 0
      %2104 = vmatpush1.bf16.msra.mxu0 0
      %2105 = vmatprep.subr.bf16.mxu0 0
      %2106 = vmatpush1.bf16.msra.mxu0 0
      %2107 = vmatprep.subr.bf16.mxu0 0
      %2108 = vmatpush1.bf16.msra.mxu0 0
      %2109 = vmatprep.subr.bf16.mxu0 0
      %2110 = vmatpush1.bf16.msra.mxu0 0
      %2111 = vmatprep.subr.bf16.mxu0 0
      %2112 = vmatpush1.bf16.msra.mxu0 0
      %2113 = vmatprep.subr.bf16.mxu0 0
      %2114 = vmatpush1.bf16.msra.mxu0 0
      %2115 = vmatprep.subr.bf16.mxu0 0
      %2116 = vmatpush1.bf16.msra.mxu0 0
      %2117 = vmatprep.subr.bf16.mxu0 0
      %2118 = vmatpush1.bf16.msra.mxu0 0
      %2119 = vmatprep.subr.bf16.mxu0 0
      %2120 = vmatpush1.bf16.msra.mxu0 0
      %2121 = vmatprep.mubr.bf16.mxu0 0
      %2122 = vmatmul.mubr.bf16.gmra.mrb[0].mxu0 %v2075
      %v2123 = vpop.f32.mrb[0].mxu0
      %v2124 = vadd.f32 0.0, %v2123
      %v2125 = vpop.f32.mrb[0].mxu0
      %v2126 = vpop.f32.mrb[0].mxu0
      %v2127 = vadd.f32 0.0, %v2126
      %v2128 = vpop.f32.mrb[0].mxu0
      %2129 = vmatprep.mubr.bf16.mxu0 0
      %2130 = vmatmul.mubr.bf16.gmra.mrb[0].mxu0 %v2078
      %v2131 = vpop.f32.mrb[0].mxu0
      %v2132 = vadd.f32 0.0, %v2131
      %v2133 = vpop.f32.mrb[0].mxu0
      %v2134 = vpop.f32.mrb[0].mxu0
      %v2135 = vadd.f32 0.0, %v2134
      %v2136 = vpop.f32.mrb[0].mxu0
      %2137 = vmatprep.mubr.bf16.mxu0 0
      %2138 = vmatmul.mubr.bf16.gmra.mrb[0].mxu0 %v2081
      %v2139 = vpop.f32.mrb[0].mxu0
      %v2140 = vadd.f32 0.0, %v2139
      %v2141 = vpop.f32.mrb[0].mxu0
      %v2142 = vpop.f32.mrb[0].mxu0
      %v2143 = vadd.f32 0.0, %v2142
      %v2144 = vpop.f32.mrb[0].mxu0
      %2145 = vmatprep.mubr.bf16.mxu0 0
      %2146 = vmatmul.mubr.bf16.gmra.mrb[0].mxu0 %v2084
      %v2147 = vpop.f32.mrb[0].mxu0
      %v2148 = vadd.f32 0.0, %v2147
      %v2149 = vpop.f32.mrb[0].mxu0
      %v2150 = vpop.f32.mrb[0].mxu0
      %v2151 = vadd.f32 0.0, %v2150
      %v2152 = vpop.f32.mrb[0].mxu0
      %2153 = vdwg.mxu0
      %v2154 = vadd.f32 %v2064, %v2124
      %v2155 = vadd.f32 %v2065, %v2127
      %v2156 = vadd.f32 %v2066, %v2132
      %v2157 = vadd.f32 %v2067, %v2135
      %v2158 = vadd.f32 %v2068, %v2140
      %v2159 = vadd.f32 %v2069, %v2143
      %v2160 = vadd.f32 %v2070, %v2148
      %v2161 = vadd.f32 %v2071, %v2151
      %s2162 = scalar_lea.vmem %s2, 14
      %v2163 = vld [vmem:[%s2162] sm:$0x3]
      %v2165 = vsel %vm1529, %v1513, 0
      %v2168 = vsel %vm1529, %v1514, 0
      %v2171 = vsel %vm1529, %v1515, 0
      %v2174 = vsel %vm1529, %v1516, 0
      %v2177 = vand.u32 %v2163, %v1545
      %2179 = vmatprep.subr.bf16.mxu0 0
      %2180 = vmatpush1.bf16.msra.mxu0 %v2177
      %2181 = vmatprep.subr.bf16.mxu0 0
      %2182 = vmatpush1.bf16.msra.mxu0 0
      %2183 = vmatprep.subr.bf16.mxu0 0
      %2184 = vmatpush1.bf16.msra.mxu0 0
      %2185 = vmatprep.subr.bf16.mxu0 0
      %2186 = vmatpush1.bf16.msra.mxu0 0
      %2187 = vmatprep.subr.bf16.mxu0 0
      %2188 = vmatpush1.bf16.msra.mxu0 0
      %2189 = vmatprep.subr.bf16.mxu0 0
      %2190 = vmatpush1.bf16.msra.mxu0 0
      %2191 = vmatprep.subr.bf16.mxu0 0
      %2192 = vmatpush1.bf16.msra.mxu0 0
      %2193 = vmatprep.subr.bf16.mxu0 0
      %2194 = vmatpush1.bf16.msra.mxu0 0
      %2195 = vmatprep.subr.bf16.mxu0 0
      %2196 = vmatpush1.bf16.msra.mxu0 0
      %2197 = vmatprep.subr.bf16.mxu0 0
      %2198 = vmatpush1.bf16.msra.mxu0 0
      %2199 = vmatprep.subr.bf16.mxu0 0
      %2200 = vmatpush1.bf16.msra.mxu0 0
      %2201 = vmatprep.subr.bf16.mxu0 0
      %2202 = vmatpush1.bf16.msra.mxu0 0
      %2203 = vmatprep.subr.bf16.mxu0 0
      %2204 = vmatpush1.bf16.msra.mxu0 0
      %2205 = vmatprep.subr.bf16.mxu0 0
      %2206 = vmatpush1.bf16.msra.mxu0 0
      %2207 = vmatprep.subr.bf16.mxu0 0
      %2208 = vmatpush1.bf16.msra.mxu0 0
      %2209 = vmatprep.subr.bf16.mxu0 0
      %2210 = vmatpush1.bf16.msra.mxu0 0
      %2211 = vmatprep.mubr.bf16.mxu0 0
      %2212 = vmatmul.mubr.bf16.gmra.mrb[0].mxu0 %v2165
      %v2213 = vpop.f32.mrb[0].mxu0
      %v2214 = vadd.f32 0.0, %v2213
      %v2215 = vpop.f32.mrb[0].mxu0
      %v2216 = vpop.f32.mrb[0].mxu0
      %v2217 = vadd.f32 0.0, %v2216
      %v2218 = vpop.f32.mrb[0].mxu0
      %2219 = vmatprep.mubr.bf16.mxu0 0
      %2220 = vmatmul.mubr.bf16.gmra.mrb[0].mxu0 %v2168
      %v2221 = vpop.f32.mrb[0].mxu0
      %v2222 = vadd.f32 0.0, %v2221
      %v2223 = vpop.f32.mrb[0].mxu0
      %v2224 = vpop.f32.mrb[0].mxu0
      %v2225 = vadd.f32 0.0, %v2224
      %v2226 = vpop.f32.mrb[0].mxu0
      %2227 = vmatprep.mubr.bf16.mxu0 0
      %2228 = vmatmul.mubr.bf16.gmra.mrb[0].mxu0 %v2171
      %v2229 = vpop.f32.mrb[0].mxu0
      %v2230 = vadd.f32 0.0, %v2229
      %v2231 = vpop.f32.mrb[0].mxu0
      %v2232 = vpop.f32.mrb[0].mxu0
      %v2233 = vadd.f32 0.0, %v2232
      %v2234 = vpop.f32.mrb[0].mxu0
      %2235 = vmatprep.mubr.bf16.mxu0 0
      %2236 = vmatmul.mubr.bf16.gmra.mrb[0].mxu0 %v2174
      %v2237 = vpop.f32.mrb[0].mxu0
      %v2238 = vadd.f32 0.0, %v2237
      %v2239 = vpop.f32.mrb[0].mxu0
      %v2240 = vpop.f32.mrb[0].mxu0
      %v2241 = vadd.f32 0.0, %v2240
      %v2242 = vpop.f32.mrb[0].mxu0
      %2243 = vdwg.mxu0
      %v2244 = vadd.f32 %v2154, %v2214
      %v2245 = vadd.f32 %v2155, %v2217
      %v2246 = vadd.f32 %v2156, %v2222
      %v2247 = vadd.f32 %v2157, %v2225
      %v2248 = vadd.f32 %v2158, %v2230
      %v2249 = vadd.f32 %v2159, %v2233
      %v2250 = vadd.f32 %v2160, %v2238
      %v2251 = vadd.f32 %v2161, %v2241
      %s2252 = scalar_lea.vmem %s2, 16
      %v2253 = vld [vmem:[%s2252] sm:$0x3]
      %v2255 = vsel %vm1529, %v1517, 0
      %v2258 = vsel %vm1529, %v1518, 0
      %v2261 = vsel %vm1529, %v1519, 0
      %v2264 = vsel %vm1529, %v1520, 0
      %v2267 = vand.u32 %v2253, %v1545
      %2269 = vmatprep.subr.bf16.mxu0 0
      %2270 = vmatpush1.bf16.msra.mxu0 %v2267
      %2271 = vmatprep.subr.bf16.mxu0 0
      %2272 = vmatpush1.bf16.msra.mxu0 0
      %2273 = vmatprep.subr.bf16.mxu0 0
      %2274 = vmatpush1.bf16.msra.mxu0 0
      %2275 = vmatprep.subr.bf16.mxu0 0
      %2276 = vmatpush1.bf16.msra.mxu0 0
      %2277 = vmatprep.subr.bf16.mxu0 0
      %2278 = vmatpush1.bf16.msra.mxu0 0
      %2279 = vmatprep.subr.bf16.mxu0 0
      %2280 = vmatpush1.bf16.msra.mxu0 0
      %2281 = vmatprep.subr.bf16.mxu0 0
      %2282 = vmatpush1.bf16.msra.mxu0 0
      %2283 = vmatprep.subr.bf16.mxu0 0
      %2284 = vmatpush1.bf16.msra.mxu0 0
      %2285 = vmatprep.subr.bf16.mxu0 0
      %2286 = vmatpush1.bf16.msra.mxu0 0
      %2287 = vmatprep.subr.bf16.mxu0 0
      %2288 = vmatpush1.bf16.msra.mxu0 0
      %2289 = vmatprep.subr.bf16.mxu0 0
      %2290 = vmatpush1.bf16.msra.mxu0 0
      %2291 = vmatprep.subr.bf16.mxu0 0
      %2292 = vmatpush1.bf16.msra.mxu0 0
      %2293 = vmatprep.subr.bf16.mxu0 0
      %2294 = vmatpush1.bf16.msra.mxu0 0
      %2295 = vmatprep.subr.bf16.mxu0 0
      %2296 = vmatpush1.bf16.msra.mxu0 0
      %2297 = vmatprep.subr.bf16.mxu0 0
      %2298 = vmatpush1.bf16.msra.mxu0 0
      %2299 = vmatprep.subr.bf16.mxu0 0
      %2300 = vmatpush1.bf16.msra.mxu0 0
      %2301 = vmatprep.mubr.bf16.mxu0 0
      %2302 = vmatmul.mubr.bf16.gmra.mrb[0].mxu0 %v2255
      %v2303 = vpop.f32.mrb[0].mxu0
      %v2304 = vadd.f32 0.0, %v2303
      %v2305 = vpop.f32.mrb[0].mxu0
      %v2306 = vpop.f32.mrb[0].mxu0
      %v2307 = vadd.f32 0.0, %v2306
      %v2308 = vpop.f32.mrb[0].mxu0
      %2309 = vmatprep.mubr.bf16.mxu0 0
      %2310 = vmatmul.mubr.bf16.gmra.mrb[0].mxu0 %v2258
      %v2311 = vpop.f32.mrb[0].mxu0
      %v2312 = vadd.f32 0.0, %v2311
      %v2313 = vpop.f32.mrb[0].mxu0
      %v2314 = vpop.f32.mrb[0].mxu0
      %v2315 = vadd.f32 0.0, %v2314
      %v2316 = vpop.f32.mrb[0].mxu0
      %2317 = vmatprep.mubr.bf16.mxu0 0
      %2318 = vmatmul.mubr.bf16.gmra.mrb[0].mxu0 %v2261
      %v2319 = vpop.f32.mrb[0].mxu0
      %v2320 = vadd.f32 0.0, %v2319
      %v2321 = vpop.f32.mrb[0].mxu0
      %v2322 = vpop.f32.mrb[0].mxu0
      %v2323 = vadd.f32 0.0, %v2322
      %v2324 = vpop.f32.mrb[0].mxu0
      %2325 = vmatprep.mubr.bf16.mxu0 0
      %2326 = vmatmul.mubr.bf16.gmra.mrb[0].mxu0 %v2264
      %v2327 = vpop.f32.mrb[0].mxu0
      %v2328 = vadd.f32 0.0, %v2327
      %v2329 = vpop.f32.mrb[0].mxu0
      %v2330 = vpop.f32.mrb[0].mxu0
      %v2331 = vadd.f32 0.0, %v2330
      %v2332 = vpop.f32.mrb[0].mxu0
      %2333 = vdwg.mxu0
      %v2334 = vadd.f32 %v2244, %v2304
      %v2335 = vadd.f32 %v2245, %v2307
      %v2336 = vadd.f32 %v2246, %v2312
      %v2337 = vadd.f32 %v2247, %v2315
      %v2338 = vadd.f32 %v2248, %v2320
      %v2339 = vadd.f32 %v2249, %v2323
      %v2340 = vadd.f32 %v2250, %v2328
      %v2341 = vadd.f32 %v2251, %v2331
      %v2342 = vmax.f32 %v2334, 0.0
      %v2343 = vmax.f32 %v2335, 0.0
      %v2344 = vmax.f32 %v2336, 0.0
      %v2345 = vmax.f32 %v2337, 0.0
      %v2346 = vmax.f32 %v2338, 0.0
      %v2347 = vmax.f32 %v2339, 0.0
      %v2348 = vmax.f32 %v2340, 0.0
      %v2349 = vmax.f32 %v2341, 0.0
      %v2350 = vpack.c.bf16 %v2343, %v2342
      %v2351 = vpack.c.bf16 %v2345, %v2344
      %v2352 = vpack.c.bf16 %v2347, %v2346
      %v2353 = vpack.c.bf16 %v2349, %v2348
      %v2354 = vld [vmem:[%s4] sm:$0xf]
      %v2355 = vld [vmem:[%s4 + $0x4] sm:$0xf]
      %v2356 = vld [vmem:[%s4 + $0x8] sm:$0xf]
      %v2357 = vld [vmem:[%s4 + $0xc] sm:$0xf]
      %v2358 = vld [vmem:[%s4 + $0x10] sm:$0xf]
      %v2359 = vld [vmem:[%s4 + $0x14] sm:$0xf]
      %v2360 = vld [vmem:[%s4 + $0x18] sm:$0xf]
      %v2361 = vld [vmem:[%s4 + $0x1c] sm:$0xf]
      %v2362 = vld [vmem:[%s4 + $0x20] sm:$0xf]
      %v2363 = vld [vmem:[%s4 + $0x24] sm:$0xf]
      %v2364 = vld [vmem:[%s4 + $0x28] sm:$0xf]
      %v2365 = vld [vmem:[%s4 + $0x2c] sm:$0xf]
      %v2366 = vld [vmem:[%s4 + $0x30] sm:$0xf]
      %v2367 = vld [vmem:[%s4 + $0x34] sm:$0xf]
      %v2368 = vld [vmem:[%s4 + $0x38] sm:$0xf]
      %v2369 = vld [vmem:[%s4 + $0x3c] sm:$0xf]
      %v2370 = vld [vmem:[%s4 + $0x40] sm:$0xf]
      %v2371 = vld [vmem:[%s4 + $0x44] sm:$0xf]
      %v2390 = vunpack.c.l.b16 %v2354
      %v2391 = vunpack.c.l.b16 %v2355
      %v2392 = vunpack.c.l.b16 %v2356
      %v2393 = vunpack.c.l.b16 %v2357
      %v2394 = vunpack.c.l.b16 %v2358
      %v2395 = vunpack.c.l.b16 %v2359
      %v2396 = vunpack.c.l.b16 %v2360
      %v2397 = vunpack.c.l.b16 %v2361
      %v2398 = vunpack.c.l.b16 %v2362
      %v2399 = vunpack.c.l.b16 %v2363
      %v2400 = vunpack.c.l.b16 %v2364
      %v2401 = vunpack.c.l.b16 %v2365
      %v2402 = vunpack.c.l.b16 %v2366
      %v2403 = vunpack.c.l.b16 %v2367
      %v2404 = vunpack.c.l.b16 %v2368
      %v2405 = vunpack.c.l.b16 %v2369
      %v2406 = vunpack.c.l.b16 %v2370
      %v2407 = vunpack.c.l.b16 %v2371
      %v2408 = vpack.c.b16 %v2391, %v2390
      %v2409 = vpack.c.b16 %v2393, %v2392
      %v2410 = vpack.c.b16 %v2395, %v2394
      %v2411 = vpack.c.b16 %v2397, %v2396
      %v2412 = vpack.c.b16 %v2399, %v2398
      %v2413 = vpack.c.b16 %v2401, %v2400
      %v2414 = vpack.c.b16 %v2403, %v2402
      %v2415 = vpack.c.b16 %v2405, %v2404
      %v2416 = vpack.c.b16 %v2407, %v2406
      %vm2417 = vcmask 523264
      %v2419 = vsel %vm2417, %v2408, 0
      %v2422 = vsel %vm2417, %v2409, 0
      %v2425 = vsel %vm2417, %v2410, 0
      %v2428 = vsel %vm2417, %v2411, 0
      %v2431 = vsel %vm2417, %v2412, 0
      %v2434 = vsel %vm2417, %v2413, 0
      %v2437 = vsel %vm2417, %v2414, 0
      %v2440 = vsel %vm2417, %v2415, 0
      %v2443 = vsel %vm2417, %v2416, 0
      %2445 = vmatprep.subr.bf16.mxu0 0
      %2446 = vmatpush1.bf16.msra.mxu0 %v2350
      %2447 = vmatprep.subr.bf16.mxu0 0
      %2448 = vmatpush1.bf16.msra.mxu0 %v2351
      %2449 = vmatprep.subr.bf16.mxu0 0
      %2450 = vmatpush1.bf16.msra.mxu0 %v2352
      %2451 = vmatprep.subr.bf16.mxu0 0
      %2452 = vmatpush1.bf16.msra.mxu0 %v2353
      %2453 = vmatprep.subr.bf16.mxu0 0
      %2454 = vmatpush1.bf16.msra.mxu0 0
      %2455 = vmatprep.subr.bf16.mxu0 0
      %2456 = vmatpush1.bf16.msra.mxu0 0
      %2457 = vmatprep.subr.bf16.mxu0 0
      %2458 = vmatpush1.bf16.msra.mxu0 0
      %2459 = vmatprep.subr.bf16.mxu0 0
      %2460 = vmatpush1.bf16.msra.mxu0 0
      %2461 = vmatprep.subr.bf16.mxu0 0
      %2462 = vmatpush1.bf16.msra.mxu0 0
      %2463 = vmatprep.subr.bf16.mxu0 0
      %2464 = vmatpush1.bf16.msra.mxu0 0
      %2465 = vmatprep.subr.bf16.mxu0 0
      %2466 = vmatpush1.bf16.msra.mxu0 0
      %2467 = vmatprep.subr.bf16.mxu0 0
      %2468 = vmatpush1.bf16.msra.mxu0 0
      %2469 = vmatprep.subr.bf16.mxu0 0
      %2470 = vmatpush1.bf16.msra.mxu0 0
      %2471 = vmatprep.subr.bf16.mxu0 0
      %2472 = vmatpush1.bf16.msra.mxu0 0
      %2473 = vmatprep.subr.bf16.mxu0 0
      %2474 = vmatpush1.bf16.msra.mxu0 0
      %2475 = vmatprep.subr.bf16.mxu0 0
      %2476 = vmatpush1.bf16.msra.mxu0 0
      %2477 = vmatprep.mubr.bf16.mxu0 0
      %2478 = vmatmul.mubr.bf16.gmra.mrb[0].mxu0 %v2419
      %v2479 = vpop.f32.mrb[0].mxu0
      %v2480 = vadd.f32 0.0, %v2479
      %v2481 = vpop.f32.mrb[0].mxu0
      %v2482 = vpop.f32.mrb[0].mxu0
      %v2483 = vadd.f32 0.0, %v2482
      %v2484 = vpop.f32.mrb[0].mxu0
      %2485 = vmatprep.mubr.bf16.mxu0 0
      %2486 = vmatmul.mubr.bf16.gmra.mrb[0].mxu0 %v2422
      %v2487 = vpop.f32.mrb[0].mxu0
      %v2488 = vadd.f32 0.0, %v2487
      %v2489 = vpop.f32.mrb[0].mxu0
      %v2490 = vpop.f32.mrb[0].mxu0
      %v2491 = vadd.f32 0.0, %v2490
      %v2492 = vpop.f32.mrb[0].mxu0
      %2493 = vmatprep.mubr.bf16.mxu0 0
      %2494 = vmatmul.mubr.bf16.gmra.mrb[0].mxu0 %v2425
      %v2495 = vpop.f32.mrb[0].mxu0
      %v2496 = vadd.f32 0.0, %v2495
      %v2497 = vpop.f32.mrb[0].mxu0
      %v2498 = vpop.f32.mrb[0].mxu0
      %v2499 = vadd.f32 0.0, %v2498
      %v2500 = vpop.f32.mrb[0].mxu0
      %2501 = vmatprep.mubr.bf16.mxu0 0
      %2502 = vmatmul.mubr.bf16.gmra.mrb[0].mxu0 %v2428
      %v2503 = vpop.f32.mrb[0].mxu0
      %v2504 = vadd.f32 0.0, %v2503
      %v2505 = vpop.f32.mrb[0].mxu0
      %v2506 = vpop.f32.mrb[0].mxu0
      %v2507 = vadd.f32 0.0, %v2506
      %v2508 = vpop.f32.mrb[0].mxu0
      %2509 = vmatprep.mubr.bf16.mxu0 0
      %2510 = vmatmul.mubr.bf16.gmra.mrb[0].mxu0 %v2431
      %v2511 = vpop.f32.mrb[0].mxu0
      %v2512 = vadd.f32 0.0, %v2511
      %v2513 = vpop.f32.mrb[0].mxu0
      %v2514 = vpop.f32.mrb[0].mxu0
      %v2515 = vadd.f32 0.0, %v2514
      %v2516 = vpop.f32.mrb[0].mxu0
      %2517 = vmatprep.mubr.bf16.mxu0 0
      %2518 = vmatmul.mubr.bf16.gmra.mrb[0].mxu0 %v2434
      %v2519 = vpop.f32.mrb[0].mxu0
      %v2520 = vadd.f32 0.0, %v2519
      %v2521 = vpop.f32.mrb[0].mxu0
      %v2522 = vpop.f32.mrb[0].mxu0
      %v2523 = vadd.f32 0.0, %v2522
      %v2524 = vpop.f32.mrb[0].mxu0
      %2525 = vmatprep.mubr.bf16.mxu0 0
      %2526 = vmatmul.mubr.bf16.gmra.mrb[0].mxu0 %v2437
      %v2527 = vpop.f32.mrb[0].mxu0
      %v2528 = vadd.f32 0.0, %v2527
      %v2529 = vpop.f32.mrb[0].mxu0
      %v2530 = vpop.f32.mrb[0].mxu0
      %v2531 = vadd.f32 0.0, %v2530
      %v2532 = vpop.f32.mrb[0].mxu0
      %2533 = vmatprep.mubr.bf16.mxu0 0
      %2534 = vmatmul.mubr.bf16.gmra.mrb[0].mxu0 %v2440
      %v2535 = vpop.f32.mrb[0].mxu0
      %v2536 = vadd.f32 0.0, %v2535
      %v2537 = vpop.f32.mrb[0].mxu0
      %v2538 = vpop.f32.mrb[0].mxu0
      %v2539 = vadd.f32 0.0, %v2538
      %v2540 = vpop.f32.mrb[0].mxu0
      %2541 = vmatprep.mubr.bf16.mxu0 0
      %2542 = vmatmul.mubr.bf16.gmra.mrb[0].mxu0 %v2443
      %v2543 = vpop.f32.mrb[0].mxu0
      %v2544 = vadd.f32 0.0, %v2543
      %v2545 = vpop.f32.mrb[0].mxu0
      %v2546 = vpop.f32.mrb[0].mxu0
      %v2547 = vadd.f32 0.0, %v2546
      %v2548 = vpop.f32.mrb[0].mxu0
      %2549 = vdwg.mxu0
      %v2550 = vpack.c.bf16 %v2483, %v2480
      %v2551 = vpack.c.bf16 %v2491, %v2488
      %v2552 = vpack.c.bf16 %v2499, %v2496
      %v2553 = vpack.c.bf16 %v2507, %v2504
      %v2554 = vpack.c.bf16 %v2515, %v2512
      %v2555 = vpack.c.bf16 %v2523, %v2520
      %v2556 = vpack.c.bf16 %v2531, %v2528
      %v2557 = vpack.c.bf16 %v2539, %v2536
      %v2558 = vpack.c.bf16 %v2547, %v2544
      %v2559 = vld [vmem:[%s6] sm:$0x1]
      %v2561 = vlaneseq
      %v2562 = vshrl.u32 %v2561, 7
      %v2563 = vsub.s32 0, %v2562
      %v2564 = vrot.slane %v2559, %v2563
      %v2566 = vld [vmem:[%s5] sm:$0xf]
      %v2567 = vld [vmem:[%s5 + $0x4] sm:$0xf]
      %v2568 = vld [vmem:[%s5 + $0x8] sm:$0xf]
      %v2569 = vld [vmem:[%s5 + $0xc] sm:$0xf]
      %v2570 = vld [vmem:[%s5 + $0x10] sm:$0xf]
      %v2571 = vld [vmem:[%s5 + $0x14] sm:$0xf]
      %v2572 = vld [vmem:[%s5 + $0x18] sm:$0xf]
      %v2573 = vld [vmem:[%s5 + $0x1c] sm:$0xf]
      %v2582 = vunpack.c.l.b16 %v2566
      %v2583 = vunpack.c.l.b16 %v2567
      %v2584 = vunpack.c.l.b16 %v2568
      %v2585 = vunpack.c.l.b16 %v2569
      %v2586 = vunpack.c.l.b16 %v2570
      %v2587 = vunpack.c.l.b16 %v2571
      %v2588 = vunpack.c.l.b16 %v2572
      %v2589 = vunpack.c.l.b16 %v2573
      %v2590 = vpack.c.b16 %v2583, %v2582
      %v2591 = vpack.c.b16 %v2585, %v2584
      %v2592 = vpack.c.b16 %v2587, %v2586
      %v2593 = vpack.c.b16 %v2589, %v2588
      %v2599 = vsel %vm2417, %v2550, 0
      %2601 = vmatprep.subr.bf16.mxu0 0
      %2602 = vmatpush1.bf16.msra.mxu0 %v2590
      %2603 = vmatprep.subr.bf16.mxu0 0
      %2604 = vmatpush1.bf16.msra.mxu0 %v2591
      %2605 = vmatprep.subr.bf16.mxu0 0
      %2606 = vmatpush1.bf16.msra.mxu0 %v2592
      %2607 = vmatprep.subr.bf16.mxu0 0
      %2608 = vmatpush1.bf16.msra.mxu0 %v2593
      %2609 = vmatprep.subr.bf16.mxu0 0
      %2610 = vmatpush1.bf16.msra.mxu0 0
      %2611 = vmatprep.subr.bf16.mxu0 0
      %2612 = vmatpush1.bf16.msra.mxu0 0
      %2613 = vmatprep.subr.bf16.mxu0 0
      %2614 = vmatpush1.bf16.msra.mxu0 0
      %2615 = vmatprep.subr.bf16.mxu0 0
      %2616 = vmatpush1.bf16.msra.mxu0 0
      %2617 = vmatprep.subr.bf16.mxu0 0
      %2618 = vmatpush1.bf16.msra.mxu0 0
      %2619 = vmatprep.subr.bf16.mxu0 0
      %2620 = vmatpush1.bf16.msra.mxu0 0
      %2621 = vmatprep.subr.bf16.mxu0 0
      %2622 = vmatpush1.bf16.msra.mxu0 0
      %2623 = vmatprep.subr.bf16.mxu0 0
      %2624 = vmatpush1.bf16.msra.mxu0 0
      %2625 = vmatprep.subr.bf16.mxu0 0
      %2626 = vmatpush1.bf16.msra.mxu0 0
      %2627 = vmatprep.subr.bf16.mxu0 0
      %2628 = vmatpush1.bf16.msra.mxu0 0
      %2629 = vmatprep.subr.bf16.mxu0 0
      %2630 = vmatpush1.bf16.msra.mxu0 0
      %2631 = vmatprep.subr.bf16.mxu0 0
      %2632 = vmatpush1.bf16.msra.mxu0 0
      %2633 = vmatprep.mubr.bf16.mxu0 0
      %2634 = vmatmul.mubr.bf16.gmra.mrb[0].mxu0 %v2599
      %v2635 = vpop.f32.mrb[0].mxu0
      %v2636 = vadd.f32 0.0, %v2635
      %v2637 = vpop.f32.mrb[0].mxu0
      %v2638 = vpop.f32.mrb[0].mxu0
      %v2639 = vadd.f32 0.0, %v2638
      %v2640 = vpop.f32.mrb[0].mxu0
      %2641 = vdwg.mxu0
      %v2642 = vadd.f32 %v2564, %v2636
      %v2643 = vadd.f32 %v2564, %v2639
      %s2644 = scalar_lea.vmem %s5, 32
      %v2645 = vld [vmem:[%s2644] sm:$0xf]
      %v2646 = vld [vmem:[%s2644 + $0x4] sm:$0xf]
      %v2647 = vld [vmem:[%s2644 + $0x8] sm:$0xf]
      %v2648 = vld [vmem:[%s2644 + $0xc] sm:$0xf]
      %v2649 = vld [vmem:[%s2644 + $0x10] sm:$0xf]
      %v2650 = vld [vmem:[%s2644 + $0x14] sm:$0xf]
      %v2651 = vld [vmem:[%s2644 + $0x18] sm:$0xf]
      %v2652 = vld [vmem:[%s2644 + $0x1c] sm:$0xf]
      %v2661 = vunpack.c.l.b16 %v2645
      %v2662 = vunpack.c.l.b16 %v2646
      %v2663 = vunpack.c.l.b16 %v2647
      %v2664 = vunpack.c.l.b16 %v2648
      %v2665 = vunpack.c.l.b16 %v2649
      %v2666 = vunpack.c.l.b16 %v2650
      %v2667 = vunpack.c.l.b16 %v2651
      %v2668 = vunpack.c.l.b16 %v2652
      %v2669 = vpack.c.b16 %v2662, %v2661
      %v2670 = vpack.c.b16 %v2664, %v2663
      %v2671 = vpack.c.b16 %v2666, %v2665
      %v2672 = vpack.c.b16 %v2668, %v2667
      %v2678 = vsel %vm2417, %v2551, 0
      %2680 = vmatprep.subr.bf16.mxu0 0
      %2681 = vmatpush1.bf16.msra.mxu0 %v2669
      %2682 = vmatprep.subr.bf16.mxu0 0
      %2683 = vmatpush1.bf16.msra.mxu0 %v2670
      %2684 = vmatprep.subr.bf16.mxu0 0
      %2685 = vmatpush1.bf16.msra.mxu0 %v2671
      %2686 = vmatprep.subr.bf16.mxu0 0
      %2687 = vmatpush1.bf16.msra.mxu0 %v2672
      %2688 = vmatprep.subr.bf16.mxu0 0
      %2689 = vmatpush1.bf16.msra.mxu0 0
      %2690 = vmatprep.subr.bf16.mxu0 0
      %2691 = vmatpush1.bf16.msra.mxu0 0
      %2692 = vmatprep.subr.bf16.mxu0 0
      %2693 = vmatpush1.bf16.msra.mxu0 0
      %2694 = vmatprep.subr.bf16.mxu0 0
      %2695 = vmatpush1.bf16.msra.mxu0 0
      %2696 = vmatprep.subr.bf16.mxu0 0
      %2697 = vmatpush1.bf16.msra.mxu0 0
      %2698 = vmatprep.subr.bf16.mxu0 0
      %2699 = vmatpush1.bf16.msra.mxu0 0
      %2700 = vmatprep.subr.bf16.mxu0 0
      %2701 = vmatpush1.bf16.msra.mxu0 0
      %2702 = vmatprep.subr.bf16.mxu0 0
      %2703 = vmatpush1.bf16.msra.mxu0 0
      %2704 = vmatprep.subr.bf16.mxu0 0
      %2705 = vmatpush1.bf16.msra.mxu0 0
      %2706 = vmatprep.subr.bf16.mxu0 0
      %2707 = vmatpush1.bf16.msra.mxu0 0
      %2708 = vmatprep.subr.bf16.mxu0 0
      %2709 = vmatpush1.bf16.msra.mxu0 0
      %2710 = vmatprep.subr.bf16.mxu0 0
      %2711 = vmatpush1.bf16.msra.mxu0 0
      %2712 = vmatprep.mubr.bf16.mxu0 0
      %2713 = vmatmul.mubr.bf16.gmra.mrb[0].mxu0 %v2678
      %v2714 = vpop.f32.mrb[0].mxu0
      %v2715 = vadd.f32 0.0, %v2714
      %v2716 = vpop.f32.mrb[0].mxu0
      %v2717 = vpop.f32.mrb[0].mxu0
      %v2718 = vadd.f32 0.0, %v2717
      %v2719 = vpop.f32.mrb[0].mxu0
      %2720 = vdwg.mxu0
      %v2721 = vadd.f32 %v2642, %v2715
      %v2722 = vadd.f32 %v2643, %v2718
      %s2723 = scalar_lea.vmem %s5, 64
      %v2724 = vld [vmem:[%s2723] sm:$0xf]
      %v2725 = vld [vmem:[%s2723 + $0x4] sm:$0xf]
      %v2726 = vld [vmem:[%s2723 + $0x8] sm:$0xf]
      %v2727 = vld [vmem:[%s2723 + $0xc] sm:$0xf]
      %v2728 = vld [vmem:[%s2723 + $0x10] sm:$0xf]
      %v2729 = vld [vmem:[%s2723 + $0x14] sm:$0xf]
      %v2730 = vld [vmem:[%s2723 + $0x18] sm:$0xf]
      %v2731 = vld [vmem:[%s2723 + $0x1c] sm:$0xf]
      %v2740 = vunpack.c.l.b16 %v2724
      %v2741 = vunpack.c.l.b16 %v2725
      %v2742 = vunpack.c.l.b16 %v2726
      %v2743 = vunpack.c.l.b16 %v2727
      %v2744 = vunpack.c.l.b16 %v2728
      %v2745 = vunpack.c.l.b16 %v2729
      %v2746 = vunpack.c.l.b16 %v2730
      %v2747 = vunpack.c.l.b16 %v2731
      %v2748 = vpack.c.b16 %v2741, %v2740
      %v2749 = vpack.c.b16 %v2743, %v2742
      %v2750 = vpack.c.b16 %v2745, %v2744
      %v2751 = vpack.c.b16 %v2747, %v2746
      %v2757 = vsel %vm2417, %v2552, 0
      %2759 = vmatprep.subr.bf16.mxu0 0
      %2760 = vmatpush1.bf16.msra.mxu0 %v2748
      %2761 = vmatprep.subr.bf16.mxu0 0
      %2762 = vmatpush1.bf16.msra.mxu0 %v2749
      %2763 = vmatprep.subr.bf16.mxu0 0
      %2764 = vmatpush1.bf16.msra.mxu0 %v2750
      %2765 = vmatprep.subr.bf16.mxu0 0
      %2766 = vmatpush1.bf16.msra.mxu0 %v2751
      %2767 = vmatprep.subr.bf16.mxu0 0
      %2768 = vmatpush1.bf16.msra.mxu0 0
      %2769 = vmatprep.subr.bf16.mxu0 0
      %2770 = vmatpush1.bf16.msra.mxu0 0
      %2771 = vmatprep.subr.bf16.mxu0 0
      %2772 = vmatpush1.bf16.msra.mxu0 0
      %2773 = vmatprep.subr.bf16.mxu0 0
      %2774 = vmatpush1.bf16.msra.mxu0 0
      %2775 = vmatprep.subr.bf16.mxu0 0
      %2776 = vmatpush1.bf16.msra.mxu0 0
      %2777 = vmatprep.subr.bf16.mxu0 0
      %2778 = vmatpush1.bf16.msra.mxu0 0
      %2779 = vmatprep.subr.bf16.mxu0 0
      %2780 = vmatpush1.bf16.msra.mxu0 0
      %2781 = vmatprep.subr.bf16.mxu0 0
      %2782 = vmatpush1.bf16.msra.mxu0 0
      %2783 = vmatprep.subr.bf16.mxu0 0
      %2784 = vmatpush1.bf16.msra.mxu0 0
      %2785 = vmatprep.subr.bf16.mxu0 0
      %2786 = vmatpush1.bf16.msra.mxu0 0
      %2787 = vmatprep.subr.bf16.mxu0 0
      %2788 = vmatpush1.bf16.msra.mxu0 0
      %2789 = vmatprep.subr.bf16.mxu0 0
      %2790 = vmatpush1.bf16.msra.mxu0 0
      %2791 = vmatprep.mubr.bf16.mxu0 0
      %2792 = vmatmul.mubr.bf16.gmra.mrb[0].mxu0 %v2757
      %v2793 = vpop.f32.mrb[0].mxu0
      %v2794 = vadd.f32 0.0, %v2793
      %v2795 = vpop.f32.mrb[0].mxu0
      %v2796 = vpop.f32.mrb[0].mxu0
      %v2797 = vadd.f32 0.0, %v2796
      %v2798 = vpop.f32.mrb[0].mxu0
      %2799 = vdwg.mxu0
      %v2800 = vadd.f32 %v2721, %v2794
      %v2801 = vadd.f32 %v2722, %v2797
      %s2802 = scalar_lea.vmem %s5, 96
      %v2803 = vld [vmem:[%s2802] sm:$0xf]
      %v2804 = vld [vmem:[%s2802 + $0x4] sm:$0xf]
      %v2805 = vld [vmem:[%s2802 + $0x8] sm:$0xf]
      %v2806 = vld [vmem:[%s2802 + $0xc] sm:$0xf]
      %v2807 = vld [vmem:[%s2802 + $0x10] sm:$0xf]
      %v2808 = vld [vmem:[%s2802 + $0x14] sm:$0xf]
      %v2809 = vld [vmem:[%s2802 + $0x18] sm:$0xf]
      %v2810 = vld [vmem:[%s2802 + $0x1c] sm:$0xf]
      %v2819 = vunpack.c.l.b16 %v2803
      %v2820 = vunpack.c.l.b16 %v2804
      %v2821 = vunpack.c.l.b16 %v2805
      %v2822 = vunpack.c.l.b16 %v2806
      %v2823 = vunpack.c.l.b16 %v2807
      %v2824 = vunpack.c.l.b16 %v2808
      %v2825 = vunpack.c.l.b16 %v2809
      %v2826 = vunpack.c.l.b16 %v2810
      %v2827 = vpack.c.b16 %v2820, %v2819
      %v2828 = vpack.c.b16 %v2822, %v2821
      %v2829 = vpack.c.b16 %v2824, %v2823
      %v2830 = vpack.c.b16 %v2826, %v2825
      %v2836 = vsel %vm2417, %v2553, 0
      %2838 = vmatprep.subr.bf16.mxu0 0
      %2839 = vmatpush1.bf16.msra.mxu0 %v2827
      %2840 = vmatprep.subr.bf16.mxu0 0
      %2841 = vmatpush1.bf16.msra.mxu0 %v2828
      %2842 = vmatprep.subr.bf16.mxu0 0
      %2843 = vmatpush1.bf16.msra.mxu0 %v2829
      %2844 = vmatprep.subr.bf16.mxu0 0
      %2845 = vmatpush1.bf16.msra.mxu0 %v2830
      %2846 = vmatprep.subr.bf16.mxu0 0
      %2847 = vmatpush1.bf16.msra.mxu0 0
      %2848 = vmatprep.subr.bf16.mxu0 0
      %2849 = vmatpush1.bf16.msra.mxu0 0
      %2850 = vmatprep.subr.bf16.mxu0 0
      %2851 = vmatpush1.bf16.msra.mxu0 0
      %2852 = vmatprep.subr.bf16.mxu0 0
      %2853 = vmatpush1.bf16.msra.mxu0 0
      %2854 = vmatprep.subr.bf16.mxu0 0
      %2855 = vmatpush1.bf16.msra.mxu0 0
      %2856 = vmatprep.subr.bf16.mxu0 0
      %2857 = vmatpush1.bf16.msra.mxu0 0
      %2858 = vmatprep.subr.bf16.mxu0 0
      %2859 = vmatpush1.bf16.msra.mxu0 0
      %2860 = vmatprep.subr.bf16.mxu0 0
      %2861 = vmatpush1.bf16.msra.mxu0 0
      %2862 = vmatprep.subr.bf16.mxu0 0
      %2863 = vmatpush1.bf16.msra.mxu0 0
      %2864 = vmatprep.subr.bf16.mxu0 0
      %2865 = vmatpush1.bf16.msra.mxu0 0
      %2866 = vmatprep.subr.bf16.mxu0 0
      %2867 = vmatpush1.bf16.msra.mxu0 0
      %2868 = vmatprep.subr.bf16.mxu0 0
      %2869 = vmatpush1.bf16.msra.mxu0 0
      %2870 = vmatprep.mubr.bf16.mxu0 0
      %2871 = vmatmul.mubr.bf16.gmra.mrb[0].mxu0 %v2836
      %v2872 = vpop.f32.mrb[0].mxu0
      %v2873 = vadd.f32 0.0, %v2872
      %v2874 = vpop.f32.mrb[0].mxu0
      %v2875 = vpop.f32.mrb[0].mxu0
      %v2876 = vadd.f32 0.0, %v2875
      %v2877 = vpop.f32.mrb[0].mxu0
      %2878 = vdwg.mxu0
      %v2879 = vadd.f32 %v2800, %v2873
      %v2880 = vadd.f32 %v2801, %v2876
      %s2881 = scalar_lea.vmem %s5, 128
      %v2882 = vld [vmem:[%s2881] sm:$0xf]
      %v2883 = vld [vmem:[%s2881 + $0x4] sm:$0xf]
      %v2884 = vld [vmem:[%s2881 + $0x8] sm:$0xf]
      %v2885 = vld [vmem:[%s2881 + $0xc] sm:$0xf]
      %v2886 = vld [vmem:[%s2881 + $0x10] sm:$0xf]
      %v2887 = vld [vmem:[%s2881 + $0x14] sm:$0xf]
      %v2888 = vld [vmem:[%s2881 + $0x18] sm:$0xf]
      %v2889 = vld [vmem:[%s2881 + $0x1c] sm:$0xf]
      %v2898 = vunpack.c.l.b16 %v2882
      %v2899 = vunpack.c.l.b16 %v2883
      %v2900 = vunpack.c.l.b16 %v2884
      %v2901 = vunpack.c.l.b16 %v2885
      %v2902 = vunpack.c.l.b16 %v2886
      %v2903 = vunpack.c.l.b16 %v2887
      %v2904 = vunpack.c.l.b16 %v2888
      %v2905 = vunpack.c.l.b16 %v2889
      %v2906 = vpack.c.b16 %v2899, %v2898
      %v2907 = vpack.c.b16 %v2901, %v2900
      %v2908 = vpack.c.b16 %v2903, %v2902
      %v2909 = vpack.c.b16 %v2905, %v2904
      %v2915 = vsel %vm2417, %v2554, 0
      %2917 = vmatprep.subr.bf16.mxu0 0
      %2918 = vmatpush1.bf16.msra.mxu0 %v2906
      %2919 = vmatprep.subr.bf16.mxu0 0
      %2920 = vmatpush1.bf16.msra.mxu0 %v2907
      %2921 = vmatprep.subr.bf16.mxu0 0
      %2922 = vmatpush1.bf16.msra.mxu0 %v2908
      %2923 = vmatprep.subr.bf16.mxu0 0
      %2924 = vmatpush1.bf16.msra.mxu0 %v2909
      %2925 = vmatprep.subr.bf16.mxu0 0
      %2926 = vmatpush1.bf16.msra.mxu0 0
      %2927 = vmatprep.subr.bf16.mxu0 0
      %2928 = vmatpush1.bf16.msra.mxu0 0
      %2929 = vmatprep.subr.bf16.mxu0 0
      %2930 = vmatpush1.bf16.msra.mxu0 0
      %2931 = vmatprep.subr.bf16.mxu0 0
      %2932 = vmatpush1.bf16.msra.mxu0 0
      %2933 = vmatprep.subr.bf16.mxu0 0
      %2934 = vmatpush1.bf16.msra.mxu0 0
      %2935 = vmatprep.subr.bf16.mxu0 0
      %2936 = vmatpush1.bf16.msra.mxu0 0
      %2937 = vmatprep.subr.bf16.mxu0 0
      %2938 = vmatpush1.bf16.msra.mxu0 0
      %2939 = vmatprep.subr.bf16.mxu0 0
      %2940 = vmatpush1.bf16.msra.mxu0 0
      %2941 = vmatprep.subr.bf16.mxu0 0
      %2942 = vmatpush1.bf16.msra.mxu0 0
      %2943 = vmatprep.subr.bf16.mxu0 0
      %2944 = vmatpush1.bf16.msra.mxu0 0
      %2945 = vmatprep.subr.bf16.mxu0 0
      %2946 = vmatpush1.bf16.msra.mxu0 0
      %2947 = vmatprep.subr.bf16.mxu0 0
      %2948 = vmatpush1.bf16.msra.mxu0 0
      %2949 = vmatprep.mubr.bf16.mxu0 0
      %2950 = vmatmul.mubr.bf16.gmra.mrb[0].mxu0 %v2915
      %v2951 = vpop.f32.mrb[0].mxu0
      %v2952 = vadd.f32 0.0, %v2951
      %v2953 = vpop.f32.mrb[0].mxu0
      %v2954 = vpop.f32.mrb[0].mxu0
      %v2955 = vadd.f32 0.0, %v2954
      %v2956 = vpop.f32.mrb[0].mxu0
      %2957 = vdwg.mxu0
      %v2958 = vadd.f32 %v2879, %v2952
      %v2959 = vadd.f32 %v2880, %v2955
      %s2960 = scalar_lea.vmem %s5, 160
      %v2961 = vld [vmem:[%s2960] sm:$0xf]
      %v2962 = vld [vmem:[%s2960 + $0x4] sm:$0xf]
      %v2963 = vld [vmem:[%s2960 + $0x8] sm:$0xf]
      %v2964 = vld [vmem:[%s2960 + $0xc] sm:$0xf]
      %v2965 = vld [vmem:[%s2960 + $0x10] sm:$0xf]
      %v2966 = vld [vmem:[%s2960 + $0x14] sm:$0xf]
      %v2967 = vld [vmem:[%s2960 + $0x18] sm:$0xf]
      %v2968 = vld [vmem:[%s2960 + $0x1c] sm:$0xf]
      %v2977 = vunpack.c.l.b16 %v2961
      %v2978 = vunpack.c.l.b16 %v2962
      %v2979 = vunpack.c.l.b16 %v2963
      %v2980 = vunpack.c.l.b16 %v2964
      %v2981 = vunpack.c.l.b16 %v2965
      %v2982 = vunpack.c.l.b16 %v2966
      %v2983 = vunpack.c.l.b16 %v2967
      %v2984 = vunpack.c.l.b16 %v2968
      %v2985 = vpack.c.b16 %v2978, %v2977
      %v2986 = vpack.c.b16 %v2980, %v2979
      %v2987 = vpack.c.b16 %v2982, %v2981
      %v2988 = vpack.c.b16 %v2984, %v2983
      %v2994 = vsel %vm2417, %v2555, 0
      %2996 = vmatprep.subr.bf16.mxu0 0
      %2997 = vmatpush1.bf16.msra.mxu0 %v2985
      %2998 = vmatprep.subr.bf16.mxu0 0
      %2999 = vmatpush1.bf16.msra.mxu0 %v2986
      %3000 = vmatprep.subr.bf16.mxu0 0
      %3001 = vmatpush1.bf16.msra.mxu0 %v2987
      %3002 = vmatprep.subr.bf16.mxu0 0
      %3003 = vmatpush1.bf16.msra.mxu0 %v2988
      %3004 = vmatprep.subr.bf16.mxu0 0
      %3005 = vmatpush1.bf16.msra.mxu0 0
      %3006 = vmatprep.subr.bf16.mxu0 0
      %3007 = vmatpush1.bf16.msra.mxu0 0
      %3008 = vmatprep.subr.bf16.mxu0 0
      %3009 = vmatpush1.bf16.msra.mxu0 0
      %3010 = vmatprep.subr.bf16.mxu0 0
      %3011 = vmatpush1.bf16.msra.mxu0 0
      %3012 = vmatprep.subr.bf16.mxu0 0
      %3013 = vmatpush1.bf16.msra.mxu0 0
      %3014 = vmatprep.subr.bf16.mxu0 0
      %3015 = vmatpush1.bf16.msra.mxu0 0
      %3016 = vmatprep.subr.bf16.mxu0 0
      %3017 = vmatpush1.bf16.msra.mxu0 0
      %3018 = vmatprep.subr.bf16.mxu0 0
      %3019 = vmatpush1.bf16.msra.mxu0 0
      %3020 = vmatprep.subr.bf16.mxu0 0
      %3021 = vmatpush1.bf16.msra.mxu0 0
      %3022 = vmatprep.subr.bf16.mxu0 0
      %3023 = vmatpush1.bf16.msra.mxu0 0
      %3024 = vmatprep.subr.bf16.mxu0 0
      %3025 = vmatpush1.bf16.msra.mxu0 0
      %3026 = vmatprep.subr.bf16.mxu0 0
      %3027 = vmatpush1.bf16.msra.mxu0 0
      %3028 = vmatprep.mubr.bf16.mxu0 0
      %3029 = vmatmul.mubr.bf16.gmra.mrb[0].mxu0 %v2994
      %v3030 = vpop.f32.mrb[0].mxu0
      %v3031 = vadd.f32 0.0, %v3030
      %v3032 = vpop.f32.mrb[0].mxu0
      %v3033 = vpop.f32.mrb[0].mxu0
      %v3034 = vadd.f32 0.0, %v3033
      %v3035 = vpop.f32.mrb[0].mxu0
      %3036 = vdwg.mxu0
      %v3037 = vadd.f32 %v2958, %v3031
      %v3038 = vadd.f32 %v2959, %v3034
      %s3039 = scalar_lea.vmem %s5, 192
      %v3040 = vld [vmem:[%s3039] sm:$0xf]
      %v3041 = vld [vmem:[%s3039 + $0x4] sm:$0xf]
      %v3042 = vld [vmem:[%s3039 + $0x8] sm:$0xf]
      %v3043 = vld [vmem:[%s3039 + $0xc] sm:$0xf]
      %v3044 = vld [vmem:[%s3039 + $0x10] sm:$0xf]
      %v3045 = vld [vmem:[%s3039 + $0x14] sm:$0xf]
      %v3046 = vld [vmem:[%s3039 + $0x18] sm:$0xf]
      %v3047 = vld [vmem:[%s3039 + $0x1c] sm:$0xf]
      %v3056 = vunpack.c.l.b16 %v3040
      %v3057 = vunpack.c.l.b16 %v3041
      %v3058 = vunpack.c.l.b16 %v3042
      %v3059 = vunpack.c.l.b16 %v3043
      %v3060 = vunpack.c.l.b16 %v3044
      %v3061 = vunpack.c.l.b16 %v3045
      %v3062 = vunpack.c.l.b16 %v3046
      %v3063 = vunpack.c.l.b16 %v3047
      %v3064 = vpack.c.b16 %v3057, %v3056
      %v3065 = vpack.c.b16 %v3059, %v3058
      %v3066 = vpack.c.b16 %v3061, %v3060
      %v3067 = vpack.c.b16 %v3063, %v3062
      %v3073 = vsel %vm2417, %v2556, 0
      %3075 = vmatprep.subr.bf16.mxu0 0
      %3076 = vmatpush1.bf16.msra.mxu0 %v3064
      %3077 = vmatprep.subr.bf16.mxu0 0
      %3078 = vmatpush1.bf16.msra.mxu0 %v3065
      %3079 = vmatprep.subr.bf16.mxu0 0
      %3080 = vmatpush1.bf16.msra.mxu0 %v3066
      %3081 = vmatprep.subr.bf16.mxu0 0
      %3082 = vmatpush1.bf16.msra.mxu0 %v3067
      %3083 = vmatprep.subr.bf16.mxu0 0
      %3084 = vmatpush1.bf16.msra.mxu0 0
      %3085 = vmatprep.subr.bf16.mxu0 0
      %3086 = vmatpush1.bf16.msra.mxu0 0
      %3087 = vmatprep.subr.bf16.mxu0 0
      %3088 = vmatpush1.bf16.msra.mxu0 0
      %3089 = vmatprep.subr.bf16.mxu0 0
      %3090 = vmatpush1.bf16.msra.mxu0 0
      %3091 = vmatprep.subr.bf16.mxu0 0
      %3092 = vmatpush1.bf16.msra.mxu0 0
      %3093 = vmatprep.subr.bf16.mxu0 0
      %3094 = vmatpush1.bf16.msra.mxu0 0
      %3095 = vmatprep.subr.bf16.mxu0 0
      %3096 = vmatpush1.bf16.msra.mxu0 0
      %3097 = vmatprep.subr.bf16.mxu0 0
      %3098 = vmatpush1.bf16.msra.mxu0 0
      %3099 = vmatprep.subr.bf16.mxu0 0
      %3100 = vmatpush1.bf16.msra.mxu0 0
      %3101 = vmatprep.subr.bf16.mxu0 0
      %3102 = vmatpush1.bf16.msra.mxu0 0
      %3103 = vmatprep.subr.bf16.mxu0 0
      %3104 = vmatpush1.bf16.msra.mxu0 0
      %3105 = vmatprep.subr.bf16.mxu0 0
      %3106 = vmatpush1.bf16.msra.mxu0 0
      %3107 = vmatprep.mubr.bf16.mxu0 0
      %3108 = vmatmul.mubr.bf16.gmra.mrb[0].mxu0 %v3073
      %v3109 = vpop.f32.mrb[0].mxu0
      %v3110 = vadd.f32 0.0, %v3109
      %v3111 = vpop.f32.mrb[0].mxu0
      %v3112 = vpop.f32.mrb[0].mxu0
      %v3113 = vadd.f32 0.0, %v3112
      %v3114 = vpop.f32.mrb[0].mxu0
      %3115 = vdwg.mxu0
      %v3116 = vadd.f32 %v3037, %v3110
      %v3117 = vadd.f32 %v3038, %v3113
      %s3118 = scalar_lea.vmem %s5, 224
      %v3119 = vld [vmem:[%s3118] sm:$0xf]
      %v3120 = vld [vmem:[%s3118 + $0x4] sm:$0xf]
      %v3121 = vld [vmem:[%s3118 + $0x8] sm:$0xf]
      %v3122 = vld [vmem:[%s3118 + $0xc] sm:$0xf]
      %v3123 = vld [vmem:[%s3118 + $0x10] sm:$0xf]
      %v3124 = vld [vmem:[%s3118 + $0x14] sm:$0xf]
      %v3125 = vld [vmem:[%s3118 + $0x18] sm:$0xf]
      %v3126 = vld [vmem:[%s3118 + $0x1c] sm:$0xf]
      %v3135 = vunpack.c.l.b16 %v3119
      %v3136 = vunpack.c.l.b16 %v3120
      %v3137 = vunpack.c.l.b16 %v3121
      %v3138 = vunpack.c.l.b16 %v3122
      %v3139 = vunpack.c.l.b16 %v3123
      %v3140 = vunpack.c.l.b16 %v3124
      %v3141 = vunpack.c.l.b16 %v3125
      %v3142 = vunpack.c.l.b16 %v3126
      %v3143 = vpack.c.b16 %v3136, %v3135
      %v3144 = vpack.c.b16 %v3138, %v3137
      %v3145 = vpack.c.b16 %v3140, %v3139
      %v3146 = vpack.c.b16 %v3142, %v3141
      %v3152 = vsel %vm2417, %v2557, 0
      %3154 = vmatprep.subr.bf16.mxu0 0
      %3155 = vmatpush1.bf16.msra.mxu0 %v3143
      %3156 = vmatprep.subr.bf16.mxu0 0
      %3157 = vmatpush1.bf16.msra.mxu0 %v3144
      %3158 = vmatprep.subr.bf16.mxu0 0
      %3159 = vmatpush1.bf16.msra.mxu0 %v3145
      %3160 = vmatprep.subr.bf16.mxu0 0
      %3161 = vmatpush1.bf16.msra.mxu0 %v3146
      %3162 = vmatprep.subr.bf16.mxu0 0
      %3163 = vmatpush1.bf16.msra.mxu0 0
      %3164 = vmatprep.subr.bf16.mxu0 0
      %3165 = vmatpush1.bf16.msra.mxu0 0
      %3166 = vmatprep.subr.bf16.mxu0 0
      %3167 = vmatpush1.bf16.msra.mxu0 0
      %3168 = vmatprep.subr.bf16.mxu0 0
      %3169 = vmatpush1.bf16.msra.mxu0 0
      %3170 = vmatprep.subr.bf16.mxu0 0
      %3171 = vmatpush1.bf16.msra.mxu0 0
      %3172 = vmatprep.subr.bf16.mxu0 0
      %3173 = vmatpush1.bf16.msra.mxu0 0
      %3174 = vmatprep.subr.bf16.mxu0 0
      %3175 = vmatpush1.bf16.msra.mxu0 0
      %3176 = vmatprep.subr.bf16.mxu0 0
      %3177 = vmatpush1.bf16.msra.mxu0 0
      %3178 = vmatprep.subr.bf16.mxu0 0
      %3179 = vmatpush1.bf16.msra.mxu0 0
      %3180 = vmatprep.subr.bf16.mxu0 0
      %3181 = vmatpush1.bf16.msra.mxu0 0
      %3182 = vmatprep.subr.bf16.mxu0 0
      %3183 = vmatpush1.bf16.msra.mxu0 0
      %3184 = vmatprep.subr.bf16.mxu0 0
      %3185 = vmatpush1.bf16.msra.mxu0 0
      %3186 = vmatprep.mubr.bf16.mxu0 0
      %3187 = vmatmul.mubr.bf16.gmra.mrb[0].mxu0 %v3152
      %v3188 = vpop.f32.mrb[0].mxu0
      %v3189 = vadd.f32 0.0, %v3188
      %v3190 = vpop.f32.mrb[0].mxu0
      %v3191 = vpop.f32.mrb[0].mxu0
      %v3192 = vadd.f32 0.0, %v3191
      %v3193 = vpop.f32.mrb[0].mxu0
      %3194 = vdwg.mxu0
      %v3195 = vadd.f32 %v3116, %v3189
      %v3196 = vadd.f32 %v3117, %v3192
      %s3197 = scalar_lea.vmem %s5, 256
      %v3198 = vld [vmem:[%s3197] sm:$0xf]
      %v3199 = vld [vmem:[%s3197 + $0x4] sm:$0xf]
      %v3200 = vld [vmem:[%s3197 + $0x8] sm:$0xf]
      %v3201 = vld [vmem:[%s3197 + $0xc] sm:$0xf]
      %v3202 = vld [vmem:[%s3197 + $0x10] sm:$0xf]
      %v3203 = vld [vmem:[%s3197 + $0x14] sm:$0xf]
      %v3204 = vld [vmem:[%s3197 + $0x18] sm:$0xf]
      %v3205 = vld [vmem:[%s3197 + $0x1c] sm:$0xf]
      %v3214 = vunpack.c.l.b16 %v3198
      %v3215 = vunpack.c.l.b16 %v3199
      %v3216 = vunpack.c.l.b16 %v3200
      %v3217 = vunpack.c.l.b16 %v3201
      %v3218 = vunpack.c.l.b16 %v3202
      %v3219 = vunpack.c.l.b16 %v3203
      %v3220 = vunpack.c.l.b16 %v3204
      %v3221 = vunpack.c.l.b16 %v3205
      %v3222 = vpack.c.b16 %v3215, %v3214
      %v3223 = vpack.c.b16 %v3217, %v3216
      %v3224 = vpack.c.b16 %v3219, %v3218
      %v3225 = vpack.c.b16 %v3221, %v3220
      %v3231 = vsel %vm2417, %v2558, 0
      %3233 = vmatprep.subr.bf16.mxu0 0
      %3234 = vmatpush1.bf16.msra.mxu0 %v3222
      %3235 = vmatprep.subr.bf16.mxu0 0
      %3236 = vmatpush1.bf16.msra.mxu0 %v3223
      %3237 = vmatprep.subr.bf16.mxu0 0
      %3238 = vmatpush1.bf16.msra.mxu0 %v3224
      %3239 = vmatprep.subr.bf16.mxu0 0
      %3240 = vmatpush1.bf16.msra.mxu0 %v3225
      %3241 = vmatprep.subr.bf16.mxu0 0
      %3242 = vmatpush1.bf16.msra.mxu0 0
      %3243 = vmatprep.subr.bf16.mxu0 0
      %3244 = vmatpush1.bf16.msra.mxu0 0
      %3245 = vmatprep.subr.bf16.mxu0 0
      %3246 = vmatpush1.bf16.msra.mxu0 0
      %3247 = vmatprep.subr.bf16.mxu0 0
      %3248 = vmatpush1.bf16.msra.mxu0 0
      %3249 = vmatprep.subr.bf16.mxu0 0
      %3250 = vmatpush1.bf16.msra.mxu0 0
      %3251 = vmatprep.subr.bf16.mxu0 0
      %3252 = vmatpush1.bf16.msra.mxu0 0
      %3253 = vmatprep.subr.bf16.mxu0 0
      %3254 = vmatpush1.bf16.msra.mxu0 0
      %3255 = vmatprep.subr.bf16.mxu0 0
      %3256 = vmatpush1.bf16.msra.mxu0 0
      %3257 = vmatprep.subr.bf16.mxu0 0
      %3258 = vmatpush1.bf16.msra.mxu0 0
      %3259 = vmatprep.subr.bf16.mxu0 0
      %3260 = vmatpush1.bf16.msra.mxu0 0
      %3261 = vmatprep.subr.bf16.mxu0 0
      %3262 = vmatpush1.bf16.msra.mxu0 0
      %3263 = vmatprep.subr.bf16.mxu0 0
      %3264 = vmatpush1.bf16.msra.mxu0 0
      %3265 = vmatprep.mubr.bf16.mxu0 0
      %3266 = vmatmul.mubr.bf16.gmra.mrb[0].mxu0 %v3231
      %v3267 = vpop.f32.mrb[0].mxu0
      %v3268 = vadd.f32 0.0, %v3267
      %v3269 = vpop.f32.mrb[0].mxu0
      %v3270 = vpop.f32.mrb[0].mxu0
      %v3271 = vadd.f32 0.0, %v3270
      %v3272 = vpop.f32.mrb[0].mxu0
      %3273 = vdwg.mxu0
      %v3274 = vadd.f32 %v3195, %v3268
      %v3275 = vadd.f32 %v3196, %v3271
      %v3276 = vmax.f32 %v3274, 0.0
      %v3277 = vmax.f32 %v3275, 0.0
      %v3278 = vpack.c.bf16 %v3277, %v3276
      %v3279 = vld [vmem:[%s7] sm:$0xf]
      %v3280 = vld [vmem:[%s7 + $0x4] sm:$0xf]
      %v3281 = vld [vmem:[%s7 + $0x8] sm:$0xf]
      %v3282 = vld [vmem:[%s7 + $0xc] sm:$0xf]
      %v3283 = vld [vmem:[%s7 + $0x10] sm:$0xf]
      %v3284 = vld [vmem:[%s7 + $0x14] sm:$0xf]
      %v3285 = vld [vmem:[%s7 + $0x18] sm:$0xf]
      %v3286 = vld [vmem:[%s7 + $0x1c] sm:$0xf]
      %v3287 = vld [vmem:[%s7 + $0x20] sm:$0xf]
      %v3297 = vunpack.c.l.b16 %v3279
      %v3298 = vunpack.c.l.b16 %v3280
      %v3299 = vunpack.c.l.b16 %v3281
      %v3300 = vunpack.c.l.b16 %v3282
      %v3301 = vunpack.c.l.b16 %v3283
      %v3302 = vunpack.c.l.b16 %v3284
      %v3303 = vunpack.c.l.b16 %v3285
      %v3304 = vunpack.c.l.b16 %v3286
      %v3305 = vunpack.c.l.b16 %v3287
      %v3306 = vpack.c.b16 %v3298, %v3297
      %v3307 = vpack.c.b16 %v3300, %v3299
      %v3308 = vpack.c.b16 %v3302, %v3301
      %v3309 = vpack.c.b16 %v3304, %v3303
      %v3310 = vpack.c.b16 %v3305, %v3305
      %vm3311 = vcmask 130048
      %v3313 = vsel %vm3311, %v3306, 0
      %v3316 = vsel %vm3311, %v3307, 0
      %v3319 = vsel %vm3311, %v3308, 0
      %v3322 = vsel %vm3311, %v3309, 0
      %v3325 = vsel %vm3311, %v3310, 0
      %3327 = vmatprep.subr.bf16.mxu0 0
      %3328 = vmatpush1.bf16.msra.mxu0 %v3278
      %3329 = vmatprep.subr.bf16.mxu0 0
      %3330 = vmatpush1.bf16.msra.mxu0 0
      %3331 = vmatprep.subr.bf16.mxu0 0
      %3332 = vmatpush1.bf16.msra.mxu0 0
      %3333 = vmatprep.subr.bf16.mxu0 0
      %3334 = vmatpush1.bf16.msra.mxu0 0
      %3335 = vmatprep.subr.bf16.mxu0 0
      %3336 = vmatpush1.bf16.msra.mxu0 0
      %3337 = vmatprep.subr.bf16.mxu0 0
      %3338 = vmatpush1.bf16.msra.mxu0 0
      %3339 = vmatprep.subr.bf16.mxu0 0
      %3340 = vmatpush1.bf16.msra.mxu0 0
      %3341 = vmatprep.subr.bf16.mxu0 0
      %3342 = vmatpush1.bf16.msra.mxu0 0
      %3343 = vmatprep.subr.bf16.mxu0 0
      %3344 = vmatpush1.bf16.msra.mxu0 0
      %3345 = vmatprep.subr.bf16.mxu0 0
      %3346 = vmatpush1.bf16.msra.mxu0 0
      %3347 = vmatprep.subr.bf16.mxu0 0
      %3348 = vmatpush1.bf16.msra.mxu0 0
      %3349 = vmatprep.subr.bf16.mxu0 0
      %3350 = vmatpush1.bf16.msra.mxu0 0
      %3351 = vmatprep.subr.bf16.mxu0 0
      %3352 = vmatpush1.bf16.msra.mxu0 0
      %3353 = vmatprep.subr.bf16.mxu0 0
      %3354 = vmatpush1.bf16.msra.mxu0 0
      %3355 = vmatprep.subr.bf16.mxu0 0
      %3356 = vmatpush1.bf16.msra.mxu0 0
      %3357 = vmatprep.subr.bf16.mxu0 0
      %3358 = vmatpush1.bf16.msra.mxu0 0
      %3359 = vmatprep.mubr.bf16.mxu0 0
      %3360 = vmatmul.mubr.bf16.gmra.mrb[0].mxu0 %v3313
      %v3361 = vpop.f32.mrb[0].mxu0
      %v3362 = vadd.f32 0.0, %v3361
      %v3363 = vpop.f32.mrb[0].mxu0
      %v3364 = vpop.f32.mrb[0].mxu0
      %v3365 = vadd.f32 0.0, %v3364
      %v3366 = vpop.f32.mrb[0].mxu0
      %3367 = vmatprep.mubr.bf16.mxu0 0
      %3368 = vmatmul.mubr.bf16.gmra.mrb[0].mxu0 %v3316
      %v3369 = vpop.f32.mrb[0].mxu0
      %v3370 = vadd.f32 0.0, %v3369
      %v3371 = vpop.f32.mrb[0].mxu0
      %v3372 = vpop.f32.mrb[0].mxu0
      %v3373 = vadd.f32 0.0, %v3372
      %v3374 = vpop.f32.mrb[0].mxu0
      %3375 = vmatprep.mubr.bf16.mxu0 0
      %3376 = vmatmul.mubr.bf16.gmra.mrb[0].mxu0 %v3319
      %v3377 = vpop.f32.mrb[0].mxu0
      %v3378 = vadd.f32 0.0, %v3377
      %v3379 = vpop.f32.mrb[0].mxu0
      %v3380 = vpop.f32.mrb[0].mxu0
      %v3381 = vadd.f32 0.0, %v3380
      %v3382 = vpop.f32.mrb[0].mxu0
      %3383 = vmatprep.mubr.bf16.mxu0 0
      %3384 = vmatmul.mubr.bf16.gmra.mrb[0].mxu0 %v3322
      %v3385 = vpop.f32.mrb[0].mxu0
      %v3386 = vadd.f32 0.0, %v3385
      %v3387 = vpop.f32.mrb[0].mxu0
      %v3388 = vpop.f32.mrb[0].mxu0
      %v3389 = vadd.f32 0.0, %v3388
      %v3390 = vpop.f32.mrb[0].mxu0
      %3391 = vmatprep.mubr.bf16.mxu0 0
      %3392 = vmatmul.mubr.bf16.gmra.mrb[0].mxu0 %v3325
      %v3393 = vpop.f32.mrb[0].mxu0
      %v3394 = vadd.f32 0.0, %v3393
      %v3395 = vpop.f32.mrb[0].mxu0
      %v3396 = vpop.f32.mrb[0].mxu0
      %v3397 = vpop.f32.mrb[0].mxu0
      %3398 = vdwg.mxu0
      %v3399 = vpack.c.bf16 %v3365, %v3362
      %v3400 = vpack.c.bf16 %v3373, %v3370
      %v3401 = vpack.c.bf16 %v3381, %v3378
      %v3402 = vpack.c.bf16 %v3389, %v3386
      %v3403 = vpack.c.bf16 %v3394, %v3394
      %v3404 = vld [vmem:[%s9] sm:$0x3]
      %v3406 = vlaneseq
      %v3407 = vshrl.u32 %v3406, 7
      %v3408 = vsub.s32 0, %v3407
      %v3409 = vrot.slane %v3404, %v3408
      %v3410 = vlaneseq
      %v3411 = vshrl.u32 %v3410, 7
      %v3412 = vsub.s32 1, %v3411
      %v3413 = vrot.slane %v3404, %v3412
      %v3416 = vld [vmem:[%s8] sm:$0xff]
      %v3417 = vld [vmem:[%s8 + $0x8] sm:$0xff]
      %v3418 = vld [vmem:[%s8 + $0x10] sm:$0xff]
      %v3419 = vld [vmem:[%s8 + $0x18] sm:$0xff]
      %v3420 = vld [vmem:[%s8 + $0x20] sm:$0xff]
      %v3421 = vld [vmem:[%s8 + $0x28] sm:$0xff]
      %v3422 = vld [vmem:[%s8 + $0x30] sm:$0xff]
      %v3423 = vld [vmem:[%s8 + $0x38] sm:$0xff]
      %v3424 = vld [vmem:[%s8 + $0x40] sm:$0xff]
      %v3425 = vld [vmem:[%s8 + $0x48] sm:$0xff]
      %v3426 = vld [vmem:[%s8 + $0x50] sm:$0xff]
      %v3427 = vld [vmem:[%s8 + $0x58] sm:$0xff]
      %v3428 = vld [vmem:[%s8 + $0x60] sm:$0xff]
      %v3429 = vld [vmem:[%s8 + $0x68] sm:$0xff]
      %v3430 = vld [vmem:[%s8 + $0x70] sm:$0xff]
      %v3431 = vld [vmem:[%s8 + $0x78] sm:$0xff]
      %v3448 = vunpack.c.l.b16 %v3416
      %v3449 = vunpack.c.h.b16 %v3416
      %v3450 = vunpack.c.l.b16 %v3417
      %v3451 = vunpack.c.h.b16 %v3417
      %v3452 = vunpack.c.l.b16 %v3418
      %v3453 = vunpack.c.h.b16 %v3418
      %v3454 = vunpack.c.l.b16 %v3419
      %v3455 = vunpack.c.h.b16 %v3419
      %v3456 = vunpack.c.l.b16 %v3420
      %v3457 = vunpack.c.h.b16 %v3420
      %v3458 = vunpack.c.l.b16 %v3421
      %v3459 = vunpack.c.h.b16 %v3421
      %v3460 = vunpack.c.l.b16 %v3422
      %v3461 = vunpack.c.h.b16 %v3422
      %v3462 = vunpack.c.l.b16 %v3423
      %v3463 = vunpack.c.h.b16 %v3423
      %v3464 = vunpack.c.l.b16 %v3424
      %v3465 = vunpack.c.h.b16 %v3424
      %v3466 = vunpack.c.l.b16 %v3425
      %v3467 = vunpack.c.h.b16 %v3425
      %v3468 = vunpack.c.l.b16 %v3426
      %v3469 = vunpack.c.h.b16 %v3426
      %v3470 = vunpack.c.l.b16 %v3427
      %v3471 = vunpack.c.h.b16 %v3427
      %v3472 = vunpack.c.l.b16 %v3428
      %v3473 = vunpack.c.h.b16 %v3428
      %v3474 = vunpack.c.l.b16 %v3429
      %v3475 = vunpack.c.h.b16 %v3429
      %v3476 = vunpack.c.l.b16 %v3430
      %v3477 = vunpack.c.h.b16 %v3430
      %v3478 = vunpack.c.l.b16 %v3431
      %v3479 = vunpack.c.h.b16 %v3431
      %v3480 = vpack.c.b16 %v3450, %v3448
      %v3481 = vpack.c.b16 %v3451, %v3449
      %v3482 = vpack.c.b16 %v3454, %v3452
      %v3483 = vpack.c.b16 %v3455, %v3453
      %v3484 = vpack.c.b16 %v3458, %v3456
      %v3485 = vpack.c.b16 %v3459, %v3457
      %v3486 = vpack.c.b16 %v3462, %v3460
      %v3487 = vpack.c.b16 %v3463, %v3461
      %v3488 = vpack.c.b16 %v3466, %v3464
      %v3489 = vpack.c.b16 %v3467, %v3465
      %v3490 = vpack.c.b16 %v3470, %v3468
      %v3491 = vpack.c.b16 %v3471, %v3469
      %v3492 = vpack.c.b16 %v3474, %v3472
      %v3493 = vpack.c.b16 %v3475, %v3473
      %v3494 = vpack.c.b16 %v3478, %v3476
      %v3495 = vpack.c.b16 %v3479, %v3477
      %3512 = vmatprep.subr.bf16.mxu0 %v3481
      %3513 = vmatpush1.bf16.msra.mxu0 %v3480
      %3514 = vmatprep.subr.bf16.mxu0 %v3483
      %3515 = vmatpush1.bf16.msra.mxu0 %v3482
      %3516 = vmatprep.subr.bf16.mxu0 %v3485
      %3517 = vmatpush1.bf16.msra.mxu0 %v3484
      %3518 = vmatprep.subr.bf16.mxu0 %v3487
      %3519 = vmatpush1.bf16.msra.mxu0 %v3486
      %3520 = vmatprep.subr.bf16.mxu0 %v3489
      %3521 = vmatpush1.bf16.msra.mxu0 %v3488
      %3522 = vmatprep.subr.bf16.mxu0 %v3491
      %3523 = vmatpush1.bf16.msra.mxu0 %v3490
      %3524 = vmatprep.subr.bf16.mxu0 %v3493
      %3525 = vmatpush1.bf16.msra.mxu0 %v3492
      %3526 = vmatprep.subr.bf16.mxu0 %v3495
      %3527 = vmatpush1.bf16.msra.mxu0 %v3494
      %3528 = vmatprep.subr.bf16.mxu0 0
      %3529 = vmatpush1.bf16.msra.mxu0 0
      %3530 = vmatprep.subr.bf16.mxu0 0
      %3531 = vmatpush1.bf16.msra.mxu0 0
      %3532 = vmatprep.subr.bf16.mxu0 0
      %3533 = vmatpush1.bf16.msra.mxu0 0
      %3534 = vmatprep.subr.bf16.mxu0 0
      %3535 = vmatpush1.bf16.msra.mxu0 0
      %3536 = vmatprep.subr.bf16.mxu0 0
      %3537 = vmatpush1.bf16.msra.mxu0 0
      %3538 = vmatprep.subr.bf16.mxu0 0
      %3539 = vmatpush1.bf16.msra.mxu0 0
      %3540 = vmatprep.subr.bf16.mxu0 0
      %3541 = vmatpush1.bf16.msra.mxu0 0
      %3542 = vmatprep.subr.bf16.mxu0 0
      %3543 = vmatpush1.bf16.msra.mxu0 0
      %3544 = vmatprep.mubr.bf16.mxu0 0
      %3545 = vmatmul.mubr.bf16.gmra.mrb[0].mxu0 %v3399
      %v3546 = vpop.f32.mrb[0].mxu0
      %v3547 = vadd.f32 0.0, %v3546
      %v3548 = vpop.f32.mrb[0].mxu0
      %v3549 = vadd.f32 0.0, %v3548
      %v3550 = vpop.f32.mrb[0].mxu0
      %v3551 = vpop.f32.mrb[0].mxu0
      %3552 = vdwg.mxu0
      %v3553 = vadd.f32 %v3409, %v3547
      %v3554 = vadd.f32 %v3413, %v3549
      %s3555 = scalar_lea.vmem %s8, 128
      %v3556 = vld [vmem:[%s3555] sm:$0xff]
      %v3557 = vld [vmem:[%s3555 + $0x8] sm:$0xff]
      %v3558 = vld [vmem:[%s3555 + $0x10] sm:$0xff]
      %v3559 = vld [vmem:[%s3555 + $0x18] sm:$0xff]
      %v3560 = vld [vmem:[%s3555 + $0x20] sm:$0xff]
      %v3561 = vld [vmem:[%s3555 + $0x28] sm:$0xff]
      %v3562 = vld [vmem:[%s3555 + $0x30] sm:$0xff]
      %v3563 = vld [vmem:[%s3555 + $0x38] sm:$0xff]
      %v3564 = vld [vmem:[%s3555 + $0x40] sm:$0xff]
      %v3565 = vld [vmem:[%s3555 + $0x48] sm:$0xff]
      %v3566 = vld [vmem:[%s3555 + $0x50] sm:$0xff]
      %v3567 = vld [vmem:[%s3555 + $0x58] sm:$0xff]
      %v3568 = vld [vmem:[%s3555 + $0x60] sm:$0xff]
      %v3569 = vld [vmem:[%s3555 + $0x68] sm:$0xff]
      %v3570 = vld [vmem:[%s3555 + $0x70] sm:$0xff]
      %v3571 = vld [vmem:[%s3555 + $0x78] sm:$0xff]
      %v3573 = vrot.slane %v3399, 4
      %v3591 = vunpack.c.l.b16 %v3556
      %v3592 = vunpack.c.h.b16 %v3556
      %v3593 = vunpack.c.l.b16 %v3557
      %v3594 = vunpack.c.h.b16 %v3557
      %v3595 = vunpack.c.l.b16 %v3558
      %v3596 = vunpack.c.h.b16 %v3558
      %v3597 = vunpack.c.l.b16 %v3559
      %v3598 = vunpack.c.h.b16 %v3559
      %v3599 = vunpack.c.l.b16 %v3560
      %v3600 = vunpack.c.h.b16 %v3560
      %v3601 = vunpack.c.l.b16 %v3561
      %v3602 = vunpack.c.h.b16 %v3561
      %v3603 = vunpack.c.l.b16 %v3562
      %v3604 = vunpack.c.h.b16 %v3562
      %v3605 = vunpack.c.l.b16 %v3563
      %v3606 = vunpack.c.h.b16 %v3563
      %v3607 = vunpack.c.l.b16 %v3564
      %v3608 = vunpack.c.h.b16 %v3564
      %v3609 = vunpack.c.l.b16 %v3565
      %v3610 = vunpack.c.h.b16 %v3565
      %v3611 = vunpack.c.l.b16 %v3566
      %v3612 = vunpack.c.h.b16 %v3566
      %v3613 = vunpack.c.l.b16 %v3567
      %v3614 = vunpack.c.h.b16 %v3567
      %v3615 = vunpack.c.l.b16 %v3568
      %v3616 = vunpack.c.h.b16 %v3568
      %v3617 = vunpack.c.l.b16 %v3569
      %v3618 = vunpack.c.h.b16 %v3569
      %v3619 = vunpack.c.l.b16 %v3570
      %v3620 = vunpack.c.h.b16 %v3570
      %v3621 = vunpack.c.l.b16 %v3571
      %v3622 = vunpack.c.h.b16 %v3571
      %v3623 = vpack.c.b16 %v3593, %v3591
      %v3624 = vpack.c.b16 %v3594, %v3592
      %v3625 = vpack.c.b16 %v3597, %v3595
      %v3626 = vpack.c.b16 %v3598, %v3596
      %v3627 = vpack.c.b16 %v3601, %v3599
      %v3628 = vpack.c.b16 %v3602, %v3600
      %v3629 = vpack.c.b16 %v3605, %v3603
      %v3630 = vpack.c.b16 %v3606, %v3604
      %v3631 = vpack.c.b16 %v3609, %v3607
      %v3632 = vpack.c.b16 %v3610, %v3608
      %v3633 = vpack.c.b16 %v3613, %v3611
      %v3634 = vpack.c.b16 %v3614, %v3612
      %v3635 = vpack.c.b16 %v3617, %v3615
      %v3636 = vpack.c.b16 %v3618, %v3616
      %v3637 = vpack.c.b16 %v3621, %v3619
      %v3638 = vpack.c.b16 %v3622, %v3620
      %3655 = vmatprep.subr.bf16.mxu0 %v3624
      %3656 = vmatpush1.bf16.msra.mxu0 %v3623
      %3657 = vmatprep.subr.bf16.mxu0 %v3626
      %3658 = vmatpush1.bf16.msra.mxu0 %v3625
      %3659 = vmatprep.subr.bf16.mxu0 %v3628
      %3660 = vmatpush1.bf16.msra.mxu0 %v3627
      %3661 = vmatprep.subr.bf16.mxu0 %v3630
      %3662 = vmatpush1.bf16.msra.mxu0 %v3629
      %3663 = vmatprep.subr.bf16.mxu0 %v3632
      %3664 = vmatpush1.bf16.msra.mxu0 %v3631
      %3665 = vmatprep.subr.bf16.mxu0 %v3634
      %3666 = vmatpush1.bf16.msra.mxu0 %v3633
      %3667 = vmatprep.subr.bf16.mxu0 %v3636
      %3668 = vmatpush1.bf16.msra.mxu0 %v3635
      %3669 = vmatprep.subr.bf16.mxu0 %v3638
      %3670 = vmatpush1.bf16.msra.mxu0 %v3637
      %3671 = vmatprep.subr.bf16.mxu0 0
      %3672 = vmatpush1.bf16.msra.mxu0 0
      %3673 = vmatprep.subr.bf16.mxu0 0
      %3674 = vmatpush1.bf16.msra.mxu0 0
      %3675 = vmatprep.subr.bf16.mxu0 0
      %3676 = vmatpush1.bf16.msra.mxu0 0
      %3677 = vmatprep.subr.bf16.mxu0 0
      %3678 = vmatpush1.bf16.msra.mxu0 0
      %3679 = vmatprep.subr.bf16.mxu0 0
      %3680 = vmatpush1.bf16.msra.mxu0 0
      %3681 = vmatprep.subr.bf16.mxu0 0
      %3682 = vmatpush1.bf16.msra.mxu0 0
      %3683 = vmatprep.subr.bf16.mxu0 0
      %3684 = vmatpush1.bf16.msra.mxu0 0
      %3685 = vmatprep.subr.bf16.mxu0 0
      %3686 = vmatpush1.bf16.msra.mxu0 0
      %3687 = vmatprep.mubr.bf16.mxu0 0
      %3688 = vmatmul.mubr.bf16.gmra.mrb[0].mxu0 %v3573
      %v3689 = vpop.f32.mrb[0].mxu0
      %v3690 = vadd.f32 0.0, %v3689
      %v3691 = vpop.f32.mrb[0].mxu0
      %v3692 = vadd.f32 0.0, %v3691
      %v3693 = vpop.f32.mrb[0].mxu0
      %v3694 = vpop.f32.mrb[0].mxu0
      %3695 = vdwg.mxu0
      %v3696 = vadd.f32 %v3553, %v3690
      %v3697 = vadd.f32 %v3554, %v3692
      %s3698 = scalar_lea.vmem %s8, 256
      %v3699 = vld [vmem:[%s3698] sm:$0xff]
      %v3700 = vld [vmem:[%s3698 + $0x8] sm:$0xff]
      %v3701 = vld [vmem:[%s3698 + $0x10] sm:$0xff]
      %v3702 = vld [vmem:[%s3698 + $0x18] sm:$0xff]
      %v3703 = vld [vmem:[%s3698 + $0x20] sm:$0xff]
      %v3704 = vld [vmem:[%s3698 + $0x28] sm:$0xff]
      %v3705 = vld [vmem:[%s3698 + $0x30] sm:$0xff]
      %v3706 = vld [vmem:[%s3698 + $0x38] sm:$0xff]
      %v3707 = vld [vmem:[%s3698 + $0x40] sm:$0xff]
      %v3708 = vld [vmem:[%s3698 + $0x48] sm:$0xff]
      %v3709 = vld [vmem:[%s3698 + $0x50] sm:$0xff]
      %v3710 = vld [vmem:[%s3698 + $0x58] sm:$0xff]
      %v3711 = vld [vmem:[%s3698 + $0x60] sm:$0xff]
      %v3712 = vld [vmem:[%s3698 + $0x68] sm:$0xff]
      %v3713 = vld [vmem:[%s3698 + $0x70] sm:$0xff]
      %v3714 = vld [vmem:[%s3698 + $0x78] sm:$0xff]
      %v3731 = vunpack.c.l.b16 %v3699
      %v3732 = vunpack.c.h.b16 %v3699
      %v3733 = vunpack.c.l.b16 %v3700
      %v3734 = vunpack.c.h.b16 %v3700
      %v3735 = vunpack.c.l.b16 %v3701
      %v3736 = vunpack.c.h.b16 %v3701
      %v3737 = vunpack.c.l.b16 %v3702
      %v3738 = vunpack.c.h.b16 %v3702
      %v3739 = vunpack.c.l.b16 %v3703
      %v3740 = vunpack.c.h.b16 %v3703
      %v3741 = vunpack.c.l.b16 %v3704
      %v3742 = vunpack.c.h.b16 %v3704
      %v3743 = vunpack.c.l.b16 %v3705
      %v3744 = vunpack.c.h.b16 %v3705
      %v3745 = vunpack.c.l.b16 %v3706
      %v3746 = vunpack.c.h.b16 %v3706
      %v3747 = vunpack.c.l.b16 %v3707
      %v3748 = vunpack.c.h.b16 %v3707
      %v3749 = vunpack.c.l.b16 %v3708
      %v3750 = vunpack.c.h.b16 %v3708
      %v3751 = vunpack.c.l.b16 %v3709
      %v3752 = vunpack.c.h.b16 %v3709
      %v3753 = vunpack.c.l.b16 %v3710
      %v3754 = vunpack.c.h.b16 %v3710
      %v3755 = vunpack.c.l.b16 %v3711
      %v3756 = vunpack.c.h.b16 %v3711
      %v3757 = vunpack.c.l.b16 %v3712
      %v3758 = vunpack.c.h.b16 %v3712
      %v3759 = vunpack.c.l.b16 %v3713
      %v3760 = vunpack.c.h.b16 %v3713
      %v3761 = vunpack.c.l.b16 %v3714
      %v3762 = vunpack.c.h.b16 %v3714
      %v3763 = vpack.c.b16 %v3733, %v3731
      %v3764 = vpack.c.b16 %v3734, %v3732
      %v3765 = vpack.c.b16 %v3737, %v3735
      %v3766 = vpack.c.b16 %v3738, %v3736
      %v3767 = vpack.c.b16 %v3741, %v3739
      %v3768 = vpack.c.b16 %v3742, %v3740
      %v3769 = vpack.c.b16 %v3745, %v3743
      %v3770 = vpack.c.b16 %v3746, %v3744
      %v3771 = vpack.c.b16 %v3749, %v3747
      %v3772 = vpack.c.b16 %v3750, %v3748
      %v3773 = vpack.c.b16 %v3753, %v3751
      %v3774 = vpack.c.b16 %v3754, %v3752
      %v3775 = vpack.c.b16 %v3757, %v3755
      %v3776 = vpack.c.b16 %v3758, %v3756
      %v3777 = vpack.c.b16 %v3761, %v3759
      %v3778 = vpack.c.b16 %v3762, %v3760
      %3795 = vmatprep.subr.bf16.mxu0 %v3764
      %3796 = vmatpush1.bf16.msra.mxu0 %v3763
      %3797 = vmatprep.subr.bf16.mxu0 %v3766
      %3798 = vmatpush1.bf16.msra.mxu0 %v3765
      %3799 = vmatprep.subr.bf16.mxu0 %v3768
      %3800 = vmatpush1.bf16.msra.mxu0 %v3767
      %3801 = vmatprep.subr.bf16.mxu0 %v3770
      %3802 = vmatpush1.bf16.msra.mxu0 %v3769
      %3803 = vmatprep.subr.bf16.mxu0 %v3772
      %3804 = vmatpush1.bf16.msra.mxu0 %v3771
      %3805 = vmatprep.subr.bf16.mxu0 %v3774
      %3806 = vmatpush1.bf16.msra.mxu0 %v3773
      %3807 = vmatprep.subr.bf16.mxu0 %v3776
      %3808 = vmatpush1.bf16.msra.mxu0 %v3775
      %3809 = vmatprep.subr.bf16.mxu0 %v3778
      %3810 = vmatpush1.bf16.msra.mxu0 %v3777
      %3811 = vmatprep.subr.bf16.mxu0 0
      %3812 = vmatpush1.bf16.msra.mxu0 0
      %3813 = vmatprep.subr.bf16.mxu0 0
      %3814 = vmatpush1.bf16.msra.mxu0 0
      %3815 = vmatprep.subr.bf16.mxu0 0
      %3816 = vmatpush1.bf16.msra.mxu0 0
      %3817 = vmatprep.subr.bf16.mxu0 0
      %3818 = vmatpush1.bf16.msra.mxu0 0
      %3819 = vmatprep.subr.bf16.mxu0 0
      %3820 = vmatpush1.bf16.msra.mxu0 0
      %3821 = vmatprep.subr.bf16.mxu0 0
      %3822 = vmatpush1.bf16.msra.mxu0 0
      %3823 = vmatprep.subr.bf16.mxu0 0
      %3824 = vmatpush1.bf16.msra.mxu0 0
      %3825 = vmatprep.subr.bf16.mxu0 0
      %3826 = vmatpush1.bf16.msra.mxu0 0
      %3827 = vmatprep.mubr.bf16.mxu0 0
      %3828 = vmatmul.mubr.bf16.gmra.mrb[0].mxu0 %v3400
      %v3829 = vpop.f32.mrb[0].mxu0
      %v3830 = vadd.f32 0.0, %v3829
      %v3831 = vpop.f32.mrb[0].mxu0
      %v3832 = vadd.f32 0.0, %v3831
      %v3833 = vpop.f32.mrb[0].mxu0
      %v3834 = vpop.f32.mrb[0].mxu0
      %3835 = vdwg.mxu0
      %v3836 = vadd.f32 %v3696, %v3830
      %v3837 = vadd.f32 %v3697, %v3832
      %s3838 = scalar_lea.vmem %s8, 384
      %v3839 = vld [vmem:[%s3838] sm:$0xff]
      %v3840 = vld [vmem:[%s3838 + $0x8] sm:$0xff]
      %v3841 = vld [vmem:[%s3838 + $0x10] sm:$0xff]
      %v3842 = vld [vmem:[%s3838 + $0x18] sm:$0xff]
      %v3843 = vld [vmem:[%s3838 + $0x20] sm:$0xff]
      %v3844 = vld [vmem:[%s3838 + $0x28] sm:$0xff]
      %v3845 = vld [vmem:[%s3838 + $0x30] sm:$0xff]
      %v3846 = vld [vmem:[%s3838 + $0x38] sm:$0xff]
      %v3847 = vld [vmem:[%s3838 + $0x40] sm:$0xff]
      %v3848 = vld [vmem:[%s3838 + $0x48] sm:$0xff]
      %v3849 = vld [vmem:[%s3838 + $0x50] sm:$0xff]
      %v3850 = vld [vmem:[%s3838 + $0x58] sm:$0xff]
      %v3851 = vld [vmem:[%s3838 + $0x60] sm:$0xff]
      %v3852 = vld [vmem:[%s3838 + $0x68] sm:$0xff]
      %v3853 = vld [vmem:[%s3838 + $0x70] sm:$0xff]
      %v3854 = vld [vmem:[%s3838 + $0x78] sm:$0xff]
      %v3856 = vrot.slane %v3400, 4
      %v3874 = vunpack.c.l.b16 %v3839
      %v3875 = vunpack.c.h.b16 %v3839
      %v3876 = vunpack.c.l.b16 %v3840
      %v3877 = vunpack.c.h.b16 %v3840
      %v3878 = vunpack.c.l.b16 %v3841
      %v3879 = vunpack.c.h.b16 %v3841
      %v3880 = vunpack.c.l.b16 %v3842
      %v3881 = vunpack.c.h.b16 %v3842
      %v3882 = vunpack.c.l.b16 %v3843
      %v3883 = vunpack.c.h.b16 %v3843
      %v3884 = vunpack.c.l.b16 %v3844
      %v3885 = vunpack.c.h.b16 %v3844
      %v3886 = vunpack.c.l.b16 %v3845
      %v3887 = vunpack.c.h.b16 %v3845
      %v3888 = vunpack.c.l.b16 %v3846
      %v3889 = vunpack.c.h.b16 %v3846
      %v3890 = vunpack.c.l.b16 %v3847
      %v3891 = vunpack.c.h.b16 %v3847
      %v3892 = vunpack.c.l.b16 %v3848
      %v3893 = vunpack.c.h.b16 %v3848
      %v3894 = vunpack.c.l.b16 %v3849
      %v3895 = vunpack.c.h.b16 %v3849
      %v3896 = vunpack.c.l.b16 %v3850
      %v3897 = vunpack.c.h.b16 %v3850
      %v3898 = vunpack.c.l.b16 %v3851
      %v3899 = vunpack.c.h.b16 %v3851
      %v3900 = vunpack.c.l.b16 %v3852
      %v3901 = vunpack.c.h.b16 %v3852
      %v3902 = vunpack.c.l.b16 %v3853
      %v3903 = vunpack.c.h.b16 %v3853
      %v3904 = vunpack.c.l.b16 %v3854
      %v3905 = vunpack.c.h.b16 %v3854
      %v3906 = vpack.c.b16 %v3876, %v3874
      %v3907 = vpack.c.b16 %v3877, %v3875
      %v3908 = vpack.c.b16 %v3880, %v3878
      %v3909 = vpack.c.b16 %v3881, %v3879
      %v3910 = vpack.c.b16 %v3884, %v3882
      %v3911 = vpack.c.b16 %v3885, %v3883
      %v3912 = vpack.c.b16 %v3888, %v3886
      %v3913 = vpack.c.b16 %v3889, %v3887
      %v3914 = vpack.c.b16 %v3892, %v3890
      %v3915 = vpack.c.b16 %v3893, %v3891
      %v3916 = vpack.c.b16 %v3896, %v3894
      %v3917 = vpack.c.b16 %v3897, %v3895
      %v3918 = vpack.c.b16 %v3900, %v3898
      %v3919 = vpack.c.b16 %v3901, %v3899
      %v3920 = vpack.c.b16 %v3904, %v3902
      %v3921 = vpack.c.b16 %v3905, %v3903
      %3938 = vmatprep.subr.bf16.mxu0 %v3907
      %3939 = vmatpush1.bf16.msra.mxu0 %v3906
      %3940 = vmatprep.subr.bf16.mxu0 %v3909
      %3941 = vmatpush1.bf16.msra.mxu0 %v3908
      %3942 = vmatprep.subr.bf16.mxu0 %v3911
      %3943 = vmatpush1.bf16.msra.mxu0 %v3910
      %3944 = vmatprep.subr.bf16.mxu0 %v3913
      %3945 = vmatpush1.bf16.msra.mxu0 %v3912
      %3946 = vmatprep.subr.bf16.mxu0 %v3915
      %3947 = vmatpush1.bf16.msra.mxu0 %v3914
      %3948 = vmatprep.subr.bf16.mxu0 %v3917
      %3949 = vmatpush1.bf16.msra.mxu0 %v3916
      %3950 = vmatprep.subr.bf16.mxu0 %v3919
      %3951 = vmatpush1.bf16.msra.mxu0 %v3918
      %3952 = vmatprep.subr.bf16.mxu0 %v3921
      %3953 = vmatpush1.bf16.msra.mxu0 %v3920
      %3954 = vmatprep.subr.bf16.mxu0 0
      %3955 = vmatpush1.bf16.msra.mxu0 0
      %3956 = vmatprep.subr.bf16.mxu0 0
      %3957 = vmatpush1.bf16.msra.mxu0 0
      %3958 = vmatprep.subr.bf16.mxu0 0
      %3959 = vmatpush1.bf16.msra.mxu0 0
      %3960 = vmatprep.subr.bf16.mxu0 0
      %3961 = vmatpush1.bf16.msra.mxu0 0
      %3962 = vmatprep.subr.bf16.mxu0 0
      %3963 = vmatpush1.bf16.msra.mxu0 0
      %3964 = vmatprep.subr.bf16.mxu0 0
      %3965 = vmatpush1.bf16.msra.mxu0 0
      %3966 = vmatprep.subr.bf16.mxu0 0
      %3967 = vmatpush1.bf16.msra.mxu0 0
      %3968 = vmatprep.subr.bf16.mxu0 0
      %3969 = vmatpush1.bf16.msra.mxu0 0
      %3970 = vmatprep.mubr.bf16.mxu0 0
      %3971 = vmatmul.mubr.bf16.gmra.mrb[0].mxu0 %v3856
      %v3972 = vpop.f32.mrb[0].mxu0
      %v3973 = vadd.f32 0.0, %v3972
      %v3974 = vpop.f32.mrb[0].mxu0
      %v3975 = vadd.f32 0.0, %v3974
      %v3976 = vpop.f32.mrb[0].mxu0
      %v3977 = vpop.f32.mrb[0].mxu0
      %3978 = vdwg.mxu0
      %v3979 = vadd.f32 %v3836, %v3973
      %v3980 = vadd.f32 %v3837, %v3975
      %s3981 = scalar_lea.vmem %s8, 512
      %v3982 = vld [vmem:[%s3981] sm:$0xff]
      %v3983 = vld [vmem:[%s3981 + $0x8] sm:$0xff]
      %v3984 = vld [vmem:[%s3981 + $0x10] sm:$0xff]
      %v3985 = vld [vmem:[%s3981 + $0x18] sm:$0xff]
      %v3986 = vld [vmem:[%s3981 + $0x20] sm:$0xff]
      %v3987 = vld [vmem:[%s3981 + $0x28] sm:$0xff]
      %v3988 = vld [vmem:[%s3981 + $0x30] sm:$0xff]
      %v3989 = vld [vmem:[%s3981 + $0x38] sm:$0xff]
      %v3990 = vld [vmem:[%s3981 + $0x40] sm:$0xff]
      %v3991 = vld [vmem:[%s3981 + $0x48] sm:$0xff]
      %v3992 = vld [vmem:[%s3981 + $0x50] sm:$0xff]
      %v3993 = vld [vmem:[%s3981 + $0x58] sm:$0xff]
      %v3994 = vld [vmem:[%s3981 + $0x60] sm:$0xff]
      %v3995 = vld [vmem:[%s3981 + $0x68] sm:$0xff]
      %v3996 = vld [vmem:[%s3981 + $0x70] sm:$0xff]
      %v3997 = vld [vmem:[%s3981 + $0x78] sm:$0xff]
      %v4014 = vunpack.c.l.b16 %v3982
      %v4015 = vunpack.c.h.b16 %v3982
      %v4016 = vunpack.c.l.b16 %v3983
      %v4017 = vunpack.c.h.b16 %v3983
      %v4018 = vunpack.c.l.b16 %v3984
      %v4019 = vunpack.c.h.b16 %v3984
      %v4020 = vunpack.c.l.b16 %v3985
      %v4021 = vunpack.c.h.b16 %v3985
      %v4022 = vunpack.c.l.b16 %v3986
      %v4023 = vunpack.c.h.b16 %v3986
      %v4024 = vunpack.c.l.b16 %v3987
      %v4025 = vunpack.c.h.b16 %v3987
      %v4026 = vunpack.c.l.b16 %v3988
      %v4027 = vunpack.c.h.b16 %v3988
      %v4028 = vunpack.c.l.b16 %v3989
      %v4029 = vunpack.c.h.b16 %v3989
      %v4030 = vunpack.c.l.b16 %v3990
      %v4031 = vunpack.c.h.b16 %v3990
      %v4032 = vunpack.c.l.b16 %v3991
      %v4033 = vunpack.c.h.b16 %v3991
      %v4034 = vunpack.c.l.b16 %v3992
      %v4035 = vunpack.c.h.b16 %v3992
      %v4036 = vunpack.c.l.b16 %v3993
      %v4037 = vunpack.c.h.b16 %v3993
      %v4038 = vunpack.c.l.b16 %v3994
      %v4039 = vunpack.c.h.b16 %v3994
      %v4040 = vunpack.c.l.b16 %v3995
      %v4041 = vunpack.c.h.b16 %v3995
      %v4042 = vunpack.c.l.b16 %v3996
      %v4043 = vunpack.c.h.b16 %v3996
      %v4044 = vunpack.c.l.b16 %v3997
      %v4045 = vunpack.c.h.b16 %v3997
      %v4046 = vpack.c.b16 %v4016, %v4014
      %v4047 = vpack.c.b16 %v4017, %v4015
      %v4048 = vpack.c.b16 %v4020, %v4018
      %v4049 = vpack.c.b16 %v4021, %v4019
      %v4050 = vpack.c.b16 %v4024, %v4022
      %v4051 = vpack.c.b16 %v4025, %v4023
      %v4052 = vpack.c.b16 %v4028, %v4026
      %v4053 = vpack.c.b16 %v4029, %v4027
      %v4054 = vpack.c.b16 %v4032, %v4030
      %v4055 = vpack.c.b16 %v4033, %v4031
      %v4056 = vpack.c.b16 %v4036, %v4034
      %v4057 = vpack.c.b16 %v4037, %v4035
      %v4058 = vpack.c.b16 %v4040, %v4038
      %v4059 = vpack.c.b16 %v4041, %v4039
      %v4060 = vpack.c.b16 %v4044, %v4042
      %v4061 = vpack.c.b16 %v4045, %v4043
      %4078 = vmatprep.subr.bf16.mxu0 %v4047
      %4079 = vmatpush1.bf16.msra.mxu0 %v4046
      %4080 = vmatprep.subr.bf16.mxu0 %v4049
      %4081 = vmatpush1.bf16.msra.mxu0 %v4048
      %4082 = vmatprep.subr.bf16.mxu0 %v4051
      %4083 = vmatpush1.bf16.msra.mxu0 %v4050
      %4084 = vmatprep.subr.bf16.mxu0 %v4053
      %4085 = vmatpush1.bf16.msra.mxu0 %v4052
      %4086 = vmatprep.subr.bf16.mxu0 %v4055
      %4087 = vmatpush1.bf16.msra.mxu0 %v4054
      %4088 = vmatprep.subr.bf16.mxu0 %v4057
      %4089 = vmatpush1.bf16.msra.mxu0 %v4056
      %4090 = vmatprep.subr.bf16.mxu0 %v4059
      %4091 = vmatpush1.bf16.msra.mxu0 %v4058
      %4092 = vmatprep.subr.bf16.mxu0 %v4061
      %4093 = vmatpush1.bf16.msra.mxu0 %v4060
      %4094 = vmatprep.subr.bf16.mxu0 0
      %4095 = vmatpush1.bf16.msra.mxu0 0
      %4096 = vmatprep.subr.bf16.mxu0 0
      %4097 = vmatpush1.bf16.msra.mxu0 0
      %4098 = vmatprep.subr.bf16.mxu0 0
      %4099 = vmatpush1.bf16.msra.mxu0 0
      %4100 = vmatprep.subr.bf16.mxu0 0
      %4101 = vmatpush1.bf16.msra.mxu0 0
      %4102 = vmatprep.subr.bf16.mxu0 0
      %4103 = vmatpush1.bf16.msra.mxu0 0
      %4104 = vmatprep.subr.bf16.mxu0 0
      %4105 = vmatpush1.bf16.msra.mxu0 0
      %4106 = vmatprep.subr.bf16.mxu0 0
      %4107 = vmatpush1.bf16.msra.mxu0 0
      %4108 = vmatprep.subr.bf16.mxu0 0
      %4109 = vmatpush1.bf16.msra.mxu0 0
      %4110 = vmatprep.mubr.bf16.mxu0 0
      %4111 = vmatmul.mubr.bf16.gmra.mrb[0].mxu0 %v3401
      %v4112 = vpop.f32.mrb[0].mxu0
      %v4113 = vadd.f32 0.0, %v4112
      %v4114 = vpop.f32.mrb[0].mxu0
      %v4115 = vadd.f32 0.0, %v4114
      %v4116 = vpop.f32.mrb[0].mxu0
      %v4117 = vpop.f32.mrb[0].mxu0
      %4118 = vdwg.mxu0
      %v4119 = vadd.f32 %v3979, %v4113
      %v4120 = vadd.f32 %v3980, %v4115
      %s4121 = scalar_lea.vmem %s8, 640
      %v4122 = vld [vmem:[%s4121] sm:$0xff]
      %v4123 = vld [vmem:[%s4121 + $0x8] sm:$0xff]
      %v4124 = vld [vmem:[%s4121 + $0x10] sm:$0xff]
      %v4125 = vld [vmem:[%s4121 + $0x18] sm:$0xff]
      %v4126 = vld [vmem:[%s4121 + $0x20] sm:$0xff]
      %v4127 = vld [vmem:[%s4121 + $0x28] sm:$0xff]
      %v4128 = vld [vmem:[%s4121 + $0x30] sm:$0xff]
      %v4129 = vld [vmem:[%s4121 + $0x38] sm:$0xff]
      %v4130 = vld [vmem:[%s4121 + $0x40] sm:$0xff]
      %v4131 = vld [vmem:[%s4121 + $0x48] sm:$0xff]
      %v4132 = vld [vmem:[%s4121 + $0x50] sm:$0xff]
      %v4133 = vld [vmem:[%s4121 + $0x58] sm:$0xff]
      %v4134 = vld [vmem:[%s4121 + $0x60] sm:$0xff]
      %v4135 = vld [vmem:[%s4121 + $0x68] sm:$0xff]
      %v4136 = vld [vmem:[%s4121 + $0x70] sm:$0xff]
      %v4137 = vld [vmem:[%s4121 + $0x78] sm:$0xff]
      %v4139 = vrot.slane %v3401, 4
      %v4157 = vunpack.c.l.b16 %v4122
      %v4158 = vunpack.c.h.b16 %v4122
      %v4159 = vunpack.c.l.b16 %v4123
      %v4160 = vunpack.c.h.b16 %v4123
      %v4161 = vunpack.c.l.b16 %v4124
      %v4162 = vunpack.c.h.b16 %v4124
      %v4163 = vunpack.c.l.b16 %v4125
      %v4164 = vunpack.c.h.b16 %v4125
      %v4165 = vunpack.c.l.b16 %v4126
      %v4166 = vunpack.c.h.b16 %v4126
      %v4167 = vunpack.c.l.b16 %v4127
      %v4168 = vunpack.c.h.b16 %v4127
      %v4169 = vunpack.c.l.b16 %v4128
      %v4170 = vunpack.c.h.b16 %v4128
      %v4171 = vunpack.c.l.b16 %v4129
      %v4172 = vunpack.c.h.b16 %v4129
      %v4173 = vunpack.c.l.b16 %v4130
      %v4174 = vunpack.c.h.b16 %v4130
      %v4175 = vunpack.c.l.b16 %v4131
      %v4176 = vunpack.c.h.b16 %v4131
      %v4177 = vunpack.c.l.b16 %v4132
      %v4178 = vunpack.c.h.b16 %v4132
      %v4179 = vunpack.c.l.b16 %v4133
      %v4180 = vunpack.c.h.b16 %v4133
      %v4181 = vunpack.c.l.b16 %v4134
      %v4182 = vunpack.c.h.b16 %v4134
      %v4183 = vunpack.c.l.b16 %v4135
      %v4184 = vunpack.c.h.b16 %v4135
      %v4185 = vunpack.c.l.b16 %v4136
      %v4186 = vunpack.c.h.b16 %v4136
      %v4187 = vunpack.c.l.b16 %v4137
      %v4188 = vunpack.c.h.b16 %v4137
      %v4189 = vpack.c.b16 %v4159, %v4157
      %v4190 = vpack.c.b16 %v4160, %v4158
      %v4191 = vpack.c.b16 %v4163, %v4161
      %v4192 = vpack.c.b16 %v4164, %v4162
      %v4193 = vpack.c.b16 %v4167, %v4165
      %v4194 = vpack.c.b16 %v4168, %v4166
      %v4195 = vpack.c.b16 %v4171, %v4169
      %v4196 = vpack.c.b16 %v4172, %v4170
      %v4197 = vpack.c.b16 %v4175, %v4173
      %v4198 = vpack.c.b16 %v4176, %v4174
      %v4199 = vpack.c.b16 %v4179, %v4177
      %v4200 = vpack.c.b16 %v4180, %v4178
      %v4201 = vpack.c.b16 %v4183, %v4181
      %v4202 = vpack.c.b16 %v4184, %v4182
      %v4203 = vpack.c.b16 %v4187, %v4185
      %v4204 = vpack.c.b16 %v4188, %v4186
      %4221 = vmatprep.subr.bf16.mxu0 %v4190
      %4222 = vmatpush1.bf16.msra.mxu0 %v4189
      %4223 = vmatprep.subr.bf16.mxu0 %v4192
      %4224 = vmatpush1.bf16.msra.mxu0 %v4191
      %4225 = vmatprep.subr.bf16.mxu0 %v4194
      %4226 = vmatpush1.bf16.msra.mxu0 %v4193
      %4227 = vmatprep.subr.bf16.mxu0 %v4196
      %4228 = vmatpush1.bf16.msra.mxu0 %v4195
      %4229 = vmatprep.subr.bf16.mxu0 %v4198
      %4230 = vmatpush1.bf16.msra.mxu0 %v4197
      %4231 = vmatprep.subr.bf16.mxu0 %v4200
      %4232 = vmatpush1.bf16.msra.mxu0 %v4199
      %4233 = vmatprep.subr.bf16.mxu0 %v4202
      %4234 = vmatpush1.bf16.msra.mxu0 %v4201
      %4235 = vmatprep.subr.bf16.mxu0 %v4204
      %4236 = vmatpush1.bf16.msra.mxu0 %v4203
      %4237 = vmatprep.subr.bf16.mxu0 0
      %4238 = vmatpush1.bf16.msra.mxu0 0
      %4239 = vmatprep.subr.bf16.mxu0 0
      %4240 = vmatpush1.bf16.msra.mxu0 0
      %4241 = vmatprep.subr.bf16.mxu0 0
      %4242 = vmatpush1.bf16.msra.mxu0 0
      %4243 = vmatprep.subr.bf16.mxu0 0
      %4244 = vmatpush1.bf16.msra.mxu0 0
      %4245 = vmatprep.subr.bf16.mxu0 0
      %4246 = vmatpush1.bf16.msra.mxu0 0
      %4247 = vmatprep.subr.bf16.mxu0 0
      %4248 = vmatpush1.bf16.msra.mxu0 0
      %4249 = vmatprep.subr.bf16.mxu0 0
      %4250 = vmatpush1.bf16.msra.mxu0 0
      %4251 = vmatprep.subr.bf16.mxu0 0
      %4252 = vmatpush1.bf16.msra.mxu0 0
      %4253 = vmatprep.mubr.bf16.mxu0 0
      %4254 = vmatmul.mubr.bf16.gmra.mrb[0].mxu0 %v4139
      %v4255 = vpop.f32.mrb[0].mxu0
      %v4256 = vadd.f32 0.0, %v4255
      %v4257 = vpop.f32.mrb[0].mxu0
      %v4258 = vadd.f32 0.0, %v4257
      %v4259 = vpop.f32.mrb[0].mxu0
      %v4260 = vpop.f32.mrb[0].mxu0
      %4261 = vdwg.mxu0
      %v4262 = vadd.f32 %v4119, %v4256
      %v4263 = vadd.f32 %v4120, %v4258
      %s4264 = scalar_lea.vmem %s8, 768
      %v4265 = vld [vmem:[%s4264] sm:$0xff]
      %v4266 = vld [vmem:[%s4264 + $0x8] sm:$0xff]
      %v4267 = vld [vmem:[%s4264 + $0x10] sm:$0xff]
      %v4268 = vld [vmem:[%s4264 + $0x18] sm:$0xff]
      %v4269 = vld [vmem:[%s4264 + $0x20] sm:$0xff]
      %v4270 = vld [vmem:[%s4264 + $0x28] sm:$0xff]
      %v4271 = vld [vmem:[%s4264 + $0x30] sm:$0xff]
      %v4272 = vld [vmem:[%s4264 + $0x38] sm:$0xff]
      %v4273 = vld [vmem:[%s4264 + $0x40] sm:$0xff]
      %v4274 = vld [vmem:[%s4264 + $0x48] sm:$0xff]
      %v4275 = vld [vmem:[%s4264 + $0x50] sm:$0xff]
      %v4276 = vld [vmem:[%s4264 + $0x58] sm:$0xff]
      %v4277 = vld [vmem:[%s4264 + $0x60] sm:$0xff]
      %v4278 = vld [vmem:[%s4264 + $0x68] sm:$0xff]
      %v4279 = vld [vmem:[%s4264 + $0x70] sm:$0xff]
      %v4280 = vld [vmem:[%s4264 + $0x78] sm:$0xff]
      %v4297 = vunpack.c.l.b16 %v4265
      %v4298 = vunpack.c.h.b16 %v4265
      %v4299 = vunpack.c.l.b16 %v4266
      %v4300 = vunpack.c.h.b16 %v4266
      %v4301 = vunpack.c.l.b16 %v4267
      %v4302 = vunpack.c.h.b16 %v4267
      %v4303 = vunpack.c.l.b16 %v4268
      %v4304 = vunpack.c.h.b16 %v4268
      %v4305 = vunpack.c.l.b16 %v4269
      %v4306 = vunpack.c.h.b16 %v4269
      %v4307 = vunpack.c.l.b16 %v4270
      %v4308 = vunpack.c.h.b16 %v4270
      %v4309 = vunpack.c.l.b16 %v4271
      %v4310 = vunpack.c.h.b16 %v4271
      %v4311 = vunpack.c.l.b16 %v4272
      %v4312 = vunpack.c.h.b16 %v4272
      %v4313 = vunpack.c.l.b16 %v4273
      %v4314 = vunpack.c.h.b16 %v4273
      %v4315 = vunpack.c.l.b16 %v4274
      %v4316 = vunpack.c.h.b16 %v4274
      %v4317 = vunpack.c.l.b16 %v4275
      %v4318 = vunpack.c.h.b16 %v4275
      %v4319 = vunpack.c.l.b16 %v4276
      %v4320 = vunpack.c.h.b16 %v4276
      %v4321 = vunpack.c.l.b16 %v4277
      %v4322 = vunpack.c.h.b16 %v4277
      %v4323 = vunpack.c.l.b16 %v4278
      %v4324 = vunpack.c.h.b16 %v4278
      %v4325 = vunpack.c.l.b16 %v4279
      %v4326 = vunpack.c.h.b16 %v4279
      %v4327 = vunpack.c.l.b16 %v4280
      %v4328 = vunpack.c.h.b16 %v4280
      %v4329 = vpack.c.b16 %v4299, %v4297
      %v4330 = vpack.c.b16 %v4300, %v4298
      %v4331 = vpack.c.b16 %v4303, %v4301
      %v4332 = vpack.c.b16 %v4304, %v4302
      %v4333 = vpack.c.b16 %v4307, %v4305
      %v4334 = vpack.c.b16 %v4308, %v4306
      %v4335 = vpack.c.b16 %v4311, %v4309
      %v4336 = vpack.c.b16 %v4312, %v4310
      %v4337 = vpack.c.b16 %v4315, %v4313
      %v4338 = vpack.c.b16 %v4316, %v4314
      %v4339 = vpack.c.b16 %v4319, %v4317
      %v4340 = vpack.c.b16 %v4320, %v4318
      %v4341 = vpack.c.b16 %v4323, %v4321
      %v4342 = vpack.c.b16 %v4324, %v4322
      %v4343 = vpack.c.b16 %v4327, %v4325
      %v4344 = vpack.c.b16 %v4328, %v4326
      %4361 = vmatprep.subr.bf16.mxu0 %v4330
      %4362 = vmatpush1.bf16.msra.mxu0 %v4329
      %4363 = vmatprep.subr.bf16.mxu0 %v4332
      %4364 = vmatpush1.bf16.msra.mxu0 %v4331
      %4365 = vmatprep.subr.bf16.mxu0 %v4334
      %4366 = vmatpush1.bf16.msra.mxu0 %v4333
      %4367 = vmatprep.subr.bf16.mxu0 %v4336
      %4368 = vmatpush1.bf16.msra.mxu0 %v4335
      %4369 = vmatprep.subr.bf16.mxu0 %v4338
      %4370 = vmatpush1.bf16.msra.mxu0 %v4337
      %4371 = vmatprep.subr.bf16.mxu0 %v4340
      %4372 = vmatpush1.bf16.msra.mxu0 %v4339
      %4373 = vmatprep.subr.bf16.mxu0 %v4342
      %4374 = vmatpush1.bf16.msra.mxu0 %v4341
      %4375 = vmatprep.subr.bf16.mxu0 %v4344
      %4376 = vmatpush1.bf16.msra.mxu0 %v4343
      %4377 = vmatprep.subr.bf16.mxu0 0
      %4378 = vmatpush1.bf16.msra.mxu0 0
      %4379 = vmatprep.subr.bf16.mxu0 0
      %4380 = vmatpush1.bf16.msra.mxu0 0
      %4381 = vmatprep.subr.bf16.mxu0 0
      %4382 = vmatpush1.bf16.msra.mxu0 0
      %4383 = vmatprep.subr.bf16.mxu0 0
      %4384 = vmatpush1.bf16.msra.mxu0 0
      %4385 = vmatprep.subr.bf16.mxu0 0
      %4386 = vmatpush1.bf16.msra.mxu0 0
      %4387 = vmatprep.subr.bf16.mxu0 0
      %4388 = vmatpush1.bf16.msra.mxu0 0
      %4389 = vmatprep.subr.bf16.mxu0 0
      %4390 = vmatpush1.bf16.msra.mxu0 0
      %4391 = vmatprep.subr.bf16.mxu0 0
      %4392 = vmatpush1.bf16.msra.mxu0 0
      %4393 = vmatprep.mubr.bf16.mxu0 0
      %4394 = vmatmul.mubr.bf16.gmra.mrb[0].mxu0 %v3402
      %v4395 = vpop.f32.mrb[0].mxu0
      %v4396 = vadd.f32 0.0, %v4395
      %v4397 = vpop.f32.mrb[0].mxu0
      %v4398 = vadd.f32 0.0, %v4397
      %v4399 = vpop.f32.mrb[0].mxu0
      %v4400 = vpop.f32.mrb[0].mxu0
      %4401 = vdwg.mxu0
      %v4402 = vadd.f32 %v4262, %v4396
      %v4403 = vadd.f32 %v4263, %v4398
      %s4404 = scalar_lea.vmem %s8, 896
      %v4405 = vld [vmem:[%s4404] sm:$0xff]
      %v4406 = vld [vmem:[%s4404 + $0x8] sm:$0xff]
      %v4407 = vld [vmem:[%s4404 + $0x10] sm:$0xff]
      %v4408 = vld [vmem:[%s4404 + $0x18] sm:$0xff]
      %v4409 = vld [vmem:[%s4404 + $0x20] sm:$0xff]
      %v4410 = vld [vmem:[%s4404 + $0x28] sm:$0xff]
      %v4411 = vld [vmem:[%s4404 + $0x30] sm:$0xff]
      %v4412 = vld [vmem:[%s4404 + $0x38] sm:$0xff]
      %v4413 = vld [vmem:[%s4404 + $0x40] sm:$0xff]
      %v4414 = vld [vmem:[%s4404 + $0x48] sm:$0xff]
      %v4415 = vld [vmem:[%s4404 + $0x50] sm:$0xff]
      %v4416 = vld [vmem:[%s4404 + $0x58] sm:$0xff]
      %v4417 = vld [vmem:[%s4404 + $0x60] sm:$0xff]
      %v4418 = vld [vmem:[%s4404 + $0x68] sm:$0xff]
      %v4419 = vld [vmem:[%s4404 + $0x70] sm:$0xff]
      %v4420 = vld [vmem:[%s4404 + $0x78] sm:$0xff]
      %v4422 = vrot.slane %v3402, 4
      %v4440 = vunpack.c.l.b16 %v4405
      %v4441 = vunpack.c.h.b16 %v4405
      %v4442 = vunpack.c.l.b16 %v4406
      %v4443 = vunpack.c.h.b16 %v4406
      %v4444 = vunpack.c.l.b16 %v4407
      %v4445 = vunpack.c.h.b16 %v4407
      %v4446 = vunpack.c.l.b16 %v4408
      %v4447 = vunpack.c.h.b16 %v4408
      %v4448 = vunpack.c.l.b16 %v4409
      %v4449 = vunpack.c.h.b16 %v4409
      %v4450 = vunpack.c.l.b16 %v4410
      %v4451 = vunpack.c.h.b16 %v4410
      %v4452 = vunpack.c.l.b16 %v4411
      %v4453 = vunpack.c.h.b16 %v4411
      %v4454 = vunpack.c.l.b16 %v4412
      %v4455 = vunpack.c.h.b16 %v4412
      %v4456 = vunpack.c.l.b16 %v4413
      %v4457 = vunpack.c.h.b16 %v4413
      %v4458 = vunpack.c.l.b16 %v4414
      %v4459 = vunpack.c.h.b16 %v4414
      %v4460 = vunpack.c.l.b16 %v4415
      %v4461 = vunpack.c.h.b16 %v4415
      %v4462 = vunpack.c.l.b16 %v4416
      %v4463 = vunpack.c.h.b16 %v4416
      %v4464 = vunpack.c.l.b16 %v4417
      %v4465 = vunpack.c.h.b16 %v4417
      %v4466 = vunpack.c.l.b16 %v4418
      %v4467 = vunpack.c.h.b16 %v4418
      %v4468 = vunpack.c.l.b16 %v4419
      %v4469 = vunpack.c.h.b16 %v4419
      %v4470 = vunpack.c.l.b16 %v4420
      %v4471 = vunpack.c.h.b16 %v4420
      %v4472 = vpack.c.b16 %v4442, %v4440
      %v4473 = vpack.c.b16 %v4443, %v4441
      %v4474 = vpack.c.b16 %v4446, %v4444
      %v4475 = vpack.c.b16 %v4447, %v4445
      %v4476 = vpack.c.b16 %v4450, %v4448
      %v4477 = vpack.c.b16 %v4451, %v4449
      %v4478 = vpack.c.b16 %v4454, %v4452
      %v4479 = vpack.c.b16 %v4455, %v4453
      %v4480 = vpack.c.b16 %v4458, %v4456
      %v4481 = vpack.c.b16 %v4459, %v4457
      %v4482 = vpack.c.b16 %v4462, %v4460
      %v4483 = vpack.c.b16 %v4463, %v4461
      %v4484 = vpack.c.b16 %v4466, %v4464
      %v4485 = vpack.c.b16 %v4467, %v4465
      %v4486 = vpack.c.b16 %v4470, %v4468
      %v4487 = vpack.c.b16 %v4471, %v4469
      %4504 = vmatprep.subr.bf16.mxu0 %v4473
      %4505 = vmatpush1.bf16.msra.mxu0 %v4472
      %4506 = vmatprep.subr.bf16.mxu0 %v4475
      %4507 = vmatpush1.bf16.msra.mxu0 %v4474
      %4508 = vmatprep.subr.bf16.mxu0 %v4477
      %4509 = vmatpush1.bf16.msra.mxu0 %v4476
      %4510 = vmatprep.subr.bf16.mxu0 %v4479
      %4511 = vmatpush1.bf16.msra.mxu0 %v4478
      %4512 = vmatprep.subr.bf16.mxu0 %v4481
      %4513 = vmatpush1.bf16.msra.mxu0 %v4480
      %4514 = vmatprep.subr.bf16.mxu0 %v4483
      %4515 = vmatpush1.bf16.msra.mxu0 %v4482
      %4516 = vmatprep.subr.bf16.mxu0 %v4485
      %4517 = vmatpush1.bf16.msra.mxu0 %v4484
      %4518 = vmatprep.subr.bf16.mxu0 %v4487
      %4519 = vmatpush1.bf16.msra.mxu0 %v4486
      %4520 = vmatprep.subr.bf16.mxu0 0
      %4521 = vmatpush1.bf16.msra.mxu0 0
      %4522 = vmatprep.subr.bf16.mxu0 0
      %4523 = vmatpush1.bf16.msra.mxu0 0
      %4524 = vmatprep.subr.bf16.mxu0 0
      %4525 = vmatpush1.bf16.msra.mxu0 0
      %4526 = vmatprep.subr.bf16.mxu0 0
      %4527 = vmatpush1.bf16.msra.mxu0 0
      %4528 = vmatprep.subr.bf16.mxu0 0
      %4529 = vmatpush1.bf16.msra.mxu0 0
      %4530 = vmatprep.subr.bf16.mxu0 0
      %4531 = vmatpush1.bf16.msra.mxu0 0
      %4532 = vmatprep.subr.bf16.mxu0 0
      %4533 = vmatpush1.bf16.msra.mxu0 0
      %4534 = vmatprep.subr.bf16.mxu0 0
      %4535 = vmatpush1.bf16.msra.mxu0 0
      %4536 = vmatprep.mubr.bf16.mxu0 0
      %4537 = vmatmul.mubr.bf16.gmra.mrb[0].mxu0 %v4422
      %v4538 = vpop.f32.mrb[0].mxu0
      %v4539 = vadd.f32 0.0, %v4538
      %v4540 = vpop.f32.mrb[0].mxu0
      %v4541 = vadd.f32 0.0, %v4540
      %v4542 = vpop.f32.mrb[0].mxu0
      %v4543 = vpop.f32.mrb[0].mxu0
      %4544 = vdwg.mxu0
      %v4545 = vadd.f32 %v4402, %v4539
      %v4546 = vadd.f32 %v4403, %v4541
      %s4547 = scalar_lea.vmem %s8, 1024
      %v4548 = vld [vmem:[%s4547] sm:$0xff]
      %v4549 = vld [vmem:[%s4547 + $0x8] sm:$0xff]
      %v4550 = vld [vmem:[%s4547 + $0x10] sm:$0xff]
      %v4551 = vld [vmem:[%s4547 + $0x18] sm:$0xff]
      %v4552 = vld [vmem:[%s4547 + $0x20] sm:$0xff]
      %v4553 = vld [vmem:[%s4547 + $0x28] sm:$0xff]
      %v4554 = vld [vmem:[%s4547 + $0x30] sm:$0xff]
      %v4555 = vld [vmem:[%s4547 + $0x38] sm:$0xff]
      %v4556 = vld [vmem:[%s4547 + $0x40] sm:$0xff]
      %v4557 = vld [vmem:[%s4547 + $0x48] sm:$0xff]
      %v4558 = vld [vmem:[%s4547 + $0x50] sm:$0xff]
      %v4559 = vld [vmem:[%s4547 + $0x58] sm:$0xff]
      %v4560 = vld [vmem:[%s4547 + $0x60] sm:$0xff]
      %v4561 = vld [vmem:[%s4547 + $0x68] sm:$0xff]
      %v4562 = vld [vmem:[%s4547 + $0x70] sm:$0xff]
      %v4563 = vld [vmem:[%s4547 + $0x78] sm:$0xff]
      %v4580 = vunpack.c.l.b16 %v4548
      %v4581 = vunpack.c.h.b16 %v4548
      %v4582 = vunpack.c.l.b16 %v4549
      %v4583 = vunpack.c.h.b16 %v4549
      %v4584 = vunpack.c.l.b16 %v4550
      %v4585 = vunpack.c.h.b16 %v4550
      %v4586 = vunpack.c.l.b16 %v4551
      %v4587 = vunpack.c.h.b16 %v4551
      %v4588 = vunpack.c.l.b16 %v4552
      %v4589 = vunpack.c.h.b16 %v4552
      %v4590 = vunpack.c.l.b16 %v4553
      %v4591 = vunpack.c.h.b16 %v4553
      %v4592 = vunpack.c.l.b16 %v4554
      %v4593 = vunpack.c.h.b16 %v4554
      %v4594 = vunpack.c.l.b16 %v4555
      %v4595 = vunpack.c.h.b16 %v4555
      %v4596 = vunpack.c.l.b16 %v4556
      %v4597 = vunpack.c.h.b16 %v4556
      %v4598 = vunpack.c.l.b16 %v4557
      %v4599 = vunpack.c.h.b16 %v4557
      %v4600 = vunpack.c.l.b16 %v4558
      %v4601 = vunpack.c.h.b16 %v4558
      %v4602 = vunpack.c.l.b16 %v4559
      %v4603 = vunpack.c.h.b16 %v4559
      %v4604 = vunpack.c.l.b16 %v4560
      %v4605 = vunpack.c.h.b16 %v4560
      %v4606 = vunpack.c.l.b16 %v4561
      %v4607 = vunpack.c.h.b16 %v4561
      %v4608 = vunpack.c.l.b16 %v4562
      %v4609 = vunpack.c.h.b16 %v4562
      %v4610 = vunpack.c.l.b16 %v4563
      %v4611 = vunpack.c.h.b16 %v4563
      %v4612 = vpack.c.b16 %v4582, %v4580
      %v4613 = vpack.c.b16 %v4583, %v4581
      %v4614 = vpack.c.b16 %v4586, %v4584
      %v4615 = vpack.c.b16 %v4587, %v4585
      %v4616 = vpack.c.b16 %v4590, %v4588
      %v4617 = vpack.c.b16 %v4591, %v4589
      %v4618 = vpack.c.b16 %v4594, %v4592
      %v4619 = vpack.c.b16 %v4595, %v4593
      %v4620 = vpack.c.b16 %v4598, %v4596
      %v4621 = vpack.c.b16 %v4599, %v4597
      %v4622 = vpack.c.b16 %v4602, %v4600
      %v4623 = vpack.c.b16 %v4603, %v4601
      %v4624 = vpack.c.b16 %v4606, %v4604
      %v4625 = vpack.c.b16 %v4607, %v4605
      %v4626 = vpack.c.b16 %v4610, %v4608
      %v4627 = vpack.c.b16 %v4611, %v4609
      %4644 = vmatprep.subr.bf16.mxu0 %v4613
      %4645 = vmatpush1.bf16.msra.mxu0 %v4612
      %4646 = vmatprep.subr.bf16.mxu0 %v4615
      %4647 = vmatpush1.bf16.msra.mxu0 %v4614
      %4648 = vmatprep.subr.bf16.mxu0 %v4617
      %4649 = vmatpush1.bf16.msra.mxu0 %v4616
      %4650 = vmatprep.subr.bf16.mxu0 %v4619
      %4651 = vmatpush1.bf16.msra.mxu0 %v4618
      %4652 = vmatprep.subr.bf16.mxu0 %v4621
      %4653 = vmatpush1.bf16.msra.mxu0 %v4620
      %4654 = vmatprep.subr.bf16.mxu0 %v4623
      %4655 = vmatpush1.bf16.msra.mxu0 %v4622
      %4656 = vmatprep.subr.bf16.mxu0 %v4625
      %4657 = vmatpush1.bf16.msra.mxu0 %v4624
      %4658 = vmatprep.subr.bf16.mxu0 %v4627
      %4659 = vmatpush1.bf16.msra.mxu0 %v4626
      %4660 = vmatprep.subr.bf16.mxu0 0
      %4661 = vmatpush1.bf16.msra.mxu0 0
      %4662 = vmatprep.subr.bf16.mxu0 0
      %4663 = vmatpush1.bf16.msra.mxu0 0
      %4664 = vmatprep.subr.bf16.mxu0 0
      %4665 = vmatpush1.bf16.msra.mxu0 0
      %4666 = vmatprep.subr.bf16.mxu0 0
      %4667 = vmatpush1.bf16.msra.mxu0 0
      %4668 = vmatprep.subr.bf16.mxu0 0
      %4669 = vmatpush1.bf16.msra.mxu0 0
      %4670 = vmatprep.subr.bf16.mxu0 0
      %4671 = vmatpush1.bf16.msra.mxu0 0
      %4672 = vmatprep.subr.bf16.mxu0 0
      %4673 = vmatpush1.bf16.msra.mxu0 0
      %4674 = vmatprep.subr.bf16.mxu0 0
      %4675 = vmatpush1.bf16.msra.mxu0 0
      %4676 = vmatprep.mubr.bf16.mxu0 0
      %4677 = vmatmul.mubr.bf16.gmra.mrb[0].mxu0 %v3403
      %v4678 = vpop.f32.mrb[0].mxu0
      %v4679 = vadd.f32 0.0, %v4678
      %v4680 = vpop.f32.mrb[0].mxu0
      %v4681 = vadd.f32 0.0, %v4680
      %v4682 = vpop.f32.mrb[0].mxu0
      %v4683 = vpop.f32.mrb[0].mxu0
      %4684 = vdwg.mxu0
      %v4685 = vadd.f32 %v4545, %v4679
      %v4686 = vadd.f32 %v4546, %v4681
      %v4687 = vmax.f32 %v4685, 0.0
      %v4688 = vmax.f32 %v4686, 0.0
      %v4689 = vpack.c.bf16 %v4687, %v4687
      %v4690 = vpack.c.bf16 %v4688, %v4688
      %v4691 = vld [vmem:[%s11] sm:$0xff]
      %v4692 = vld [vmem:[%s11 + $0x8] sm:$0xff]
      %v4693 = vld [vmem:[%s11 + $0x10] sm:$0xff]
      %v4694 = vld [vmem:[%s11 + $0x18] sm:$0xff]
      %v4695 = vld [vmem:[%s11 + $0x20] sm:$0xf]
      %v4696 = vld [vmem:[%s11 + $0x24] sm:$0xff]
      %v4697 = vld [vmem:[%s11 + $0x2c] sm:$0xff]
      %v4698 = vld [vmem:[%s11 + $0x34] sm:$0xff]
      %v4699 = vld [vmem:[%s11 + $0x3c] sm:$0xff]
      %v4700 = vld [vmem:[%s11 + $0x44] sm:$0xf]
      %v4701 = vld [vmem:[%s11 + $0x48] sm:$0xff]
      %v4702 = vld [vmem:[%s11 + $0x50] sm:$0xff]
      %v4703 = vld [vmem:[%s11 + $0x58] sm:$0xff]
      %v4704 = vld [vmem:[%s11 + $0x60] sm:$0xff]
      %v4705 = vld [vmem:[%s11 + $0x68] sm:$0xf]
      %v4706 = vld [vmem:[%s11 + $0x6c] sm:$0xff]
      %v4707 = vld [vmem:[%s11 + $0x74] sm:$0xff]
      %v4708 = vld [vmem:[%s11 + $0x7c] sm:$0xff]
      %v4709 = vld [vmem:[%s11 + $0x84] sm:$0xff]
      %v4710 = vld [vmem:[%s11 + $0x8c] sm:$0xf]
      %v4711 = vld [vmem:[%s11 + $0x90] sm:$0xff]
      %v4712 = vld [vmem:[%s11 + $0x98] sm:$0xff]
      %v4713 = vld [vmem:[%s11 + $0xa0] sm:$0xff]
      %v4714 = vld [vmem:[%s11 + $0xa8] sm:$0xff]
      %v4715 = vld [vmem:[%s11 + $0xb0] sm:$0xf]
      %v4716 = vld [vmem:[%s11 + $0xb4] sm:$0xff]
      %v4717 = vld [vmem:[%s11 + $0xbc] sm:$0xff]
      %v4718 = vld [vmem:[%s11 + $0xc4] sm:$0xff]
      %v4719 = vld [vmem:[%s11 + $0xcc] sm:$0xff]
      %v4720 = vld [vmem:[%s11 + $0xd4] sm:$0xf]
      %v4721 = vld [vmem:[%s11 + $0xd8] sm:$0xff]
      %v4722 = vld [vmem:[%s11 + $0xe0] sm:$0xff]
      %v4723 = vld [vmem:[%s11 + $0xe8] sm:$0xff]
      %v4724 = vld [vmem:[%s11 + $0xf0] sm:$0xff]
      %v4725 = vld [vmem:[%s11 + $0xf8] sm:$0xf]
      %v4726 = vld [vmem:[%s11 + $0xfc] sm:$0xff]
      %v4727 = vld [vmem:[%s11 + $0x104] sm:$0xff]
      %v4728 = vld [vmem:[%s11 + $0x10c] sm:$0xff]
      %v4729 = vld [vmem:[%s11 + $0x114] sm:$0xff]
      %v4730 = vld [vmem:[%s11 + $0x11c] sm:$0xf]
      %v4731 = vld [vmem:[%s11 + $0x120] sm:$0xff]
      %v4732 = vld [vmem:[%s11 + $0x128] sm:$0xff]
      %v4733 = vld [vmem:[%s11 + $0x130] sm:$0xff]
      %v4734 = vld [vmem:[%s11 + $0x138] sm:$0xff]
      %v4735 = vld [vmem:[%s11 + $0x140] sm:$0xf]
      %v4736 = vld [vmem:[%s11 + $0x144] sm:$0xff]
      %v4737 = vld [vmem:[%s11 + $0x14c] sm:$0xff]
      %v4738 = vld [vmem:[%s11 + $0x154] sm:$0xff]
      %v4739 = vld [vmem:[%s11 + $0x15c] sm:$0xff]
      %v4740 = vld [vmem:[%s11 + $0x164] sm:$0xf]
      %v4741 = vld [vmem:[%s11 + $0x168] sm:$0xff]
      %v4742 = vld [vmem:[%s11 + $0x170] sm:$0xff]
      %v4743 = vld [vmem:[%s11 + $0x178] sm:$0xff]
      %v4744 = vld [vmem:[%s11 + $0x180] sm:$0xff]
      %v4745 = vld [vmem:[%s11 + $0x188] sm:$0xf]
      %v4746 = vld [vmem:[%s11 + $0x18c] sm:$0xff]
      %v4747 = vld [vmem:[%s11 + $0x194] sm:$0xff]
      %v4748 = vld [vmem:[%s11 + $0x19c] sm:$0xff]
      %v4749 = vld [vmem:[%s11 + $0x1a4] sm:$0xff]
      %v4750 = vld [vmem:[%s11 + $0x1ac] sm:$0xf]
      %v4751 = vld [vmem:[%s11 + $0x1b0] sm:$0xff]
      %v4752 = vld [vmem:[%s11 + $0x1b8] sm:$0xff]
      %v4753 = vld [vmem:[%s11 + $0x1c0] sm:$0xff]
      %v4754 = vld [vmem:[%s11 + $0x1c8] sm:$0xff]
      %v4755 = vld [vmem:[%s11 + $0x1d0] sm:$0xf]
      %v4756 = vld [vmem:[%s11 + $0x1d4] sm:$0xff]
      %v4757 = vld [vmem:[%s11 + $0x1dc] sm:$0xff]
      %v4758 = vld [vmem:[%s11 + $0x1e4] sm:$0xff]
      %v4759 = vld [vmem:[%s11 + $0x1ec] sm:$0xff]
      %v4760 = vld [vmem:[%s11 + $0x1f4] sm:$0xf]
      %v4761 = vld [vmem:[%s11 + $0x1f8] sm:$0xff]
      %v4762 = vld [vmem:[%s11 + $0x200] sm:$0xff]
      %v4763 = vld [vmem:[%s11 + $0x208] sm:$0xff]
      %v4764 = vld [vmem:[%s11 + $0x210] sm:$0xff]
      %v4765 = vld [vmem:[%s11 + $0x218] sm:$0xf]
      %v4766 = vld [vmem:[%s11 + $0x21c] sm:$0xff]
      %v4767 = vld [vmem:[%s11 + $0x224] sm:$0xff]
      %v4768 = vld [vmem:[%s11 + $0x22c] sm:$0xff]
      %v4769 = vld [vmem:[%s11 + $0x234] sm:$0xff]
      %v4770 = vld [vmem:[%s11 + $0x23c] sm:$0xf]
      %v4771 = vld [vmem:[%s11 + $0x240] sm:$0xff]
      %v4772 = vld [vmem:[%s11 + $0x248] sm:$0xff]
      %v4773 = vld [vmem:[%s11 + $0x250] sm:$0xff]
      %v4774 = vld [vmem:[%s11 + $0x258] sm:$0xff]
      %v4775 = vld [vmem:[%s11 + $0x260] sm:$0xf]
      %v4776 = vld [vmem:[%s11 + $0x264] sm:$0xff]
      %v4777 = vld [vmem:[%s11 + $0x26c] sm:$0xff]
      %v4778 = vld [vmem:[%s11 + $0x274] sm:$0xff]
      %v4779 = vld [vmem:[%s11 + $0x27c] sm:$0xff]
      %v4780 = vld [vmem:[%s11 + $0x284] sm:$0xf]
      %v4781 = vld [vmem:[%s11 + $0x288] sm:$0xff]
      %v4782 = vld [vmem:[%s11 + $0x290] sm:$0xff]
      %v4783 = vld [vmem:[%s11 + $0x298] sm:$0xff]
      %v4784 = vld [vmem:[%s11 + $0x2a0] sm:$0xff]
      %v4785 = vld [vmem:[%s11 + $0x2a8] sm:$0xf]
      %v4786 = vld [vmem:[%s11 + $0x2ac] sm:$0xff]
      %v4787 = vld [vmem:[%s11 + $0x2b4] sm:$0xff]
      %v4788 = vld [vmem:[%s11 + $0x2bc] sm:$0xff]
      %v4789 = vld [vmem:[%s11 + $0x2c4] sm:$0xff]
      %v4790 = vld [vmem:[%s11 + $0x2cc] sm:$0xf]
      %v4791 = vld [vmem:[%s11 + $0x2d0] sm:$0xff]
      %v4792 = vld [vmem:[%s11 + $0x2d8] sm:$0xff]
      %v4793 = vld [vmem:[%s11 + $0x2e0] sm:$0xff]
      %v4794 = vld [vmem:[%s11 + $0x2e8] sm:$0xff]
      %v4795 = vld [vmem:[%s11 + $0x2f0] sm:$0xf]
      %v4796 = vld [vmem:[%s11 + $0x2f4] sm:$0xff]
      %v4797 = vld [vmem:[%s11 + $0x2fc] sm:$0xff]
      %v4798 = vld [vmem:[%s11 + $0x304] sm:$0xff]
      %v4799 = vld [vmem:[%s11 + $0x30c] sm:$0xff]
      %v4800 = vld [vmem:[%s11 + $0x314] sm:$0xf]
      %v4801 = vld [vmem:[%s11 + $0x318] sm:$0xff]
      %v4802 = vld [vmem:[%s11 + $0x320] sm:$0xff]
      %v4803 = vld [vmem:[%s11 + $0x328] sm:$0xff]
      %v4804 = vld [vmem:[%s11 + $0x330] sm:$0xff]
      %v4805 = vld [vmem:[%s11 + $0x338] sm:$0xf]
      %v4806 = vld [vmem:[%s11 + $0x33c] sm:$0xff]
      %v4807 = vld [vmem:[%s11 + $0x344] sm:$0xff]
      %v4808 = vld [vmem:[%s11 + $0x34c] sm:$0xff]
      %v4809 = vld [vmem:[%s11 + $0x354] sm:$0xff]
      %v4810 = vld [vmem:[%s11 + $0x35c] sm:$0xf]
      %v4811 = vld [vmem:[%s11 + $0x360] sm:$0xff]
      %v4812 = vld [vmem:[%s11 + $0x368] sm:$0xff]
      %v4813 = vld [vmem:[%s11 + $0x370] sm:$0xff]
      %v4814 = vld [vmem:[%s11 + $0x378] sm:$0xff]
      %v4815 = vld [vmem:[%s11 + $0x380] sm:$0xf]
      %v4816 = vld [vmem:[%s11 + $0x384] sm:$0xff]
      %v4817 = vld [vmem:[%s11 + $0x38c] sm:$0xff]
      %v4818 = vld [vmem:[%s11 + $0x394] sm:$0xff]
      %v4819 = vld [vmem:[%s11 + $0x39c] sm:$0xff]
      %v4820 = vld [vmem:[%s11 + $0x3a4] sm:$0xf]
      %v4821 = vld [vmem:[%s11 + $0x3a8] sm:$0xff]
      %v4822 = vld [vmem:[%s11 + $0x3b0] sm:$0xff]
      %v4823 = vld [vmem:[%s11 + $0x3b8] sm:$0xff]
      %v4824 = vld [vmem:[%s11 + $0x3c0] sm:$0xff]
      %v4825 = vld [vmem:[%s11 + $0x3c8] sm:$0xf]
      %v4826 = vld [vmem:[%s11 + $0x3cc] sm:$0xff]
      %v4827 = vld [vmem:[%s11 + $0x3d4] sm:$0xff]
      %v4828 = vld [vmem:[%s11 + $0x3dc] sm:$0xff]
      %v4829 = vld [vmem:[%s11 + $0x3e4] sm:$0xff]
      %v4830 = vld [vmem:[%s11 + $0x3ec] sm:$0xf]
      %v4831 = vld [vmem:[%s11 + $0x3f0] sm:$0xff]
      %v4832 = vld [vmem:[%s11 + $0x3f8] sm:$0xff]
      %v4833 = vld [vmem:[%s11 + $0x400] sm:$0xff]
      %v4834 = vld [vmem:[%s11 + $0x408] sm:$0xff]
      %v4835 = vld [vmem:[%s11 + $0x410] sm:$0xf]
      %v4836 = vld [vmem:[%s11 + $0x414] sm:$0xff]
      %v4837 = vld [vmem:[%s11 + $0x41c] sm:$0xff]
      %v4838 = vld [vmem:[%s11 + $0x424] sm:$0xff]
      %v4839 = vld [vmem:[%s11 + $0x42c] sm:$0xff]
      %v4840 = vld [vmem:[%s11 + $0x434] sm:$0xf]
      %v4841 = vld [vmem:[%s11 + $0x438] sm:$0xff]
      %v4842 = vld [vmem:[%s11 + $0x440] sm:$0xff]
      %v4843 = vld [vmem:[%s11 + $0x448] sm:$0xff]
      %v4844 = vld [vmem:[%s11 + $0x450] sm:$0xff]
      %v4845 = vld [vmem:[%s11 + $0x458] sm:$0xf]
      %v4846 = vld [vmem:[%s11 + $0x45c] sm:$0xff]
      %v4847 = vld [vmem:[%s11 + $0x464] sm:$0xff]
      %v4848 = vld [vmem:[%s11 + $0x46c] sm:$0xff]
      %v4849 = vld [vmem:[%s11 + $0x474] sm:$0xff]
      %v4850 = vld [vmem:[%s11 + $0x47c] sm:$0xf]
      %v5011 = vunpack.c.l.b16 %v4691
      %v5012 = vunpack.c.h.b16 %v4691
      %v5013 = vunpack.c.l.b16 %v4692
      %v5014 = vunpack.c.h.b16 %v4692
      %v5015 = vunpack.c.l.b16 %v4693
      %v5016 = vunpack.c.h.b16 %v4693
      %v5017 = vunpack.c.l.b16 %v4694
      %v5018 = vunpack.c.h.b16 %v4694
      %v5019 = vunpack.c.l.b16 %v4695
      %v5020 = vunpack.c.l.b16 %v4696
      %v5021 = vunpack.c.h.b16 %v4696
      %v5022 = vunpack.c.l.b16 %v4697
      %v5023 = vunpack.c.h.b16 %v4697
      %v5024 = vunpack.c.l.b16 %v4698
      %v5025 = vunpack.c.h.b16 %v4698
      %v5026 = vunpack.c.l.b16 %v4699
      %v5027 = vunpack.c.h.b16 %v4699
      %v5028 = vunpack.c.l.b16 %v4700
      %v5029 = vunpack.c.l.b16 %v4701
      %v5030 = vunpack.c.h.b16 %v4701
      %v5031 = vunpack.c.l.b16 %v4702
      %v5032 = vunpack.c.h.b16 %v4702
      %v5033 = vunpack.c.l.b16 %v4703
      %v5034 = vunpack.c.h.b16 %v4703
      %v5035 = vunpack.c.l.b16 %v4704
      %v5036 = vunpack.c.h.b16 %v4704
      %v5037 = vunpack.c.l.b16 %v4705
      %v5038 = vunpack.c.l.b16 %v4706
      %v5039 = vunpack.c.h.b16 %v4706
      %v5040 = vunpack.c.l.b16 %v4707
      %v5041 = vunpack.c.h.b16 %v4707
      %v5042 = vunpack.c.l.b16 %v4708
      %v5043 = vunpack.c.h.b16 %v4708
      %v5044 = vunpack.c.l.b16 %v4709
      %v5045 = vunpack.c.h.b16 %v4709
      %v5046 = vunpack.c.l.b16 %v4710
      %v5047 = vunpack.c.l.b16 %v4711
      %v5048 = vunpack.c.h.b16 %v4711
      %v5049 = vunpack.c.l.b16 %v4712
      %v5050 = vunpack.c.h.b16 %v4712
      %v5051 = vunpack.c.l.b16 %v4713
      %v5052 = vunpack.c.h.b16 %v4713
      %v5053 = vunpack.c.l.b16 %v4714
      %v5054 = vunpack.c.h.b16 %v4714
      %v5055 = vunpack.c.l.b16 %v4715
      %v5056 = vunpack.c.l.b16 %v4716
      %v5057 = vunpack.c.h.b16 %v4716
      %v5058 = vunpack.c.l.b16 %v4717
      %v5059 = vunpack.c.h.b16 %v4717
      %v5060 = vunpack.c.l.b16 %v4718
      %v5061 = vunpack.c.h.b16 %v4718
      %v5062 = vunpack.c.l.b16 %v4719
      %v5063 = vunpack.c.h.b16 %v4719
      %v5064 = vunpack.c.l.b16 %v4720
      %v5065 = vunpack.c.l.b16 %v4721
      %v5066 = vunpack.c.h.b16 %v4721
      %v5067 = vunpack.c.l.b16 %v4722
      %v5068 = vunpack.c.h.b16 %v4722
      %v5069 = vunpack.c.l.b16 %v4723
      %v5070 = vunpack.c.h.b16 %v4723
      %v5071 = vunpack.c.l.b16 %v4724
      %v5072 = vunpack.c.h.b16 %v4724
      %v5073 = vunpack.c.l.b16 %v4725
      %v5074 = vunpack.c.l.b16 %v4726
      %v5075 = vunpack.c.h.b16 %v4726
      %v5076 = vunpack.c.l.b16 %v4727
      %v5077 = vunpack.c.h.b16 %v4727
      %v5078 = vunpack.c.l.b16 %v4728
      %v5079 = vunpack.c.h.b16 %v4728
      %v5080 = vunpack.c.l.b16 %v4729
      %v5081 = vunpack.c.h.b16 %v4729
      %v5082 = vunpack.c.l.b16 %v4730
      %v5083 = vunpack.c.l.b16 %v4731
      %v5084 = vunpack.c.h.b16 %v4731
      %v5085 = vunpack.c.l.b16 %v4732
      %v5086 = vunpack.c.h.b16 %v4732
      %v5087 = vunpack.c.l.b16 %v4733
      %v5088 = vunpack.c.h.b16 %v4733
      %v5089 = vunpack.c.l.b16 %v4734
      %v5090 = vunpack.c.h.b16 %v4734
      %v5091 = vunpack.c.l.b16 %v4735
      %v5092 = vunpack.c.l.b16 %v4736
      %v5093 = vunpack.c.h.b16 %v4736
      %v5094 = vunpack.c.l.b16 %v4737
      %v5095 = vunpack.c.h.b16 %v4737
      %v5096 = vunpack.c.l.b16 %v4738
      %v5097 = vunpack.c.h.b16 %v4738
      %v5098 = vunpack.c.l.b16 %v4739
      %v5099 = vunpack.c.h.b16 %v4739
      %v5100 = vunpack.c.l.b16 %v4740
      %v5101 = vunpack.c.l.b16 %v4741
      %v5102 = vunpack.c.h.b16 %v4741
      %v5103 = vunpack.c.l.b16 %v4742
      %v5104 = vunpack.c.h.b16 %v4742
      %v5105 = vunpack.c.l.b16 %v4743
      %v5106 = vunpack.c.h.b16 %v4743
      %v5107 = vunpack.c.l.b16 %v4744
      %v5108 = vunpack.c.h.b16 %v4744
      %v5109 = vunpack.c.l.b16 %v4745
      %v5110 = vunpack.c.l.b16 %v4746
      %v5111 = vunpack.c.h.b16 %v4746
      %v5112 = vunpack.c.l.b16 %v4747
      %v5113 = vunpack.c.h.b16 %v4747
      %v5114 = vunpack.c.l.b16 %v4748
      %v5115 = vunpack.c.h.b16 %v4748
      %v5116 = vunpack.c.l.b16 %v4749
      %v5117 = vunpack.c.h.b16 %v4749
      %v5118 = vunpack.c.l.b16 %v4750
      %v5119 = vunpack.c.l.b16 %v4751
      %v5120 = vunpack.c.h.b16 %v4751
      %v5121 = vunpack.c.l.b16 %v4752
      %v5122 = vunpack.c.h.b16 %v4752
      %v5123 = vunpack.c.l.b16 %v4753
      %v5124 = vunpack.c.h.b16 %v4753
      %v5125 = vunpack.c.l.b16 %v4754
      %v5126 = vunpack.c.h.b16 %v4754
      %v5127 = vunpack.c.l.b16 %v4755
      %v5128 = vunpack.c.l.b16 %v4756
      %v5129 = vunpack.c.h.b16 %v4756
      %v5130 = vunpack.c.l.b16 %v4757
      %v5131 = vunpack.c.h.b16 %v4757
      %v5132 = vunpack.c.l.b16 %v4758
      %v5133 = vunpack.c.h.b16 %v4758
      %v5134 = vunpack.c.l.b16 %v4759
      %v5135 = vunpack.c.h.b16 %v4759
      %v5136 = vunpack.c.l.b16 %v4760
      %v5137 = vunpack.c.l.b16 %v4761
      %v5138 = vunpack.c.h.b16 %v4761
      %v5139 = vunpack.c.l.b16 %v4762
      %v5140 = vunpack.c.h.b16 %v4762
      %v5141 = vunpack.c.l.b16 %v4763
      %v5142 = vunpack.c.h.b16 %v4763
      %v5143 = vunpack.c.l.b16 %v4764
      %v5144 = vunpack.c.h.b16 %v4764
      %v5145 = vunpack.c.l.b16 %v4765
      %v5146 = vunpack.c.l.b16 %v4766
      %v5147 = vunpack.c.h.b16 %v4766
      %v5148 = vunpack.c.l.b16 %v4767
      %v5149 = vunpack.c.h.b16 %v4767
      %v5150 = vunpack.c.l.b16 %v4768
      %v5151 = vunpack.c.h.b16 %v4768
      %v5152 = vunpack.c.l.b16 %v4769
      %v5153 = vunpack.c.h.b16 %v4769
      %v5154 = vunpack.c.l.b16 %v4770
      %v5155 = vunpack.c.l.b16 %v4771
      %v5156 = vunpack.c.h.b16 %v4771
      %v5157 = vunpack.c.l.b16 %v4772
      %v5158 = vunpack.c.h.b16 %v4772
      %v5159 = vunpack.c.l.b16 %v4773
      %v5160 = vunpack.c.h.b16 %v4773
      %v5161 = vunpack.c.l.b16 %v4774
      %v5162 = vunpack.c.h.b16 %v4774
      %v5163 = vunpack.c.l.b16 %v4775
      %v5164 = vunpack.c.l.b16 %v4776
      %v5165 = vunpack.c.h.b16 %v4776
      %v5166 = vunpack.c.l.b16 %v4777
      %v5167 = vunpack.c.h.b16 %v4777
      %v5168 = vunpack.c.l.b16 %v4778
      %v5169 = vunpack.c.h.b16 %v4778
      %v5170 = vunpack.c.l.b16 %v4779
      %v5171 = vunpack.c.h.b16 %v4779
      %v5172 = vunpack.c.l.b16 %v4780
      %v5173 = vunpack.c.l.b16 %v4781
      %v5174 = vunpack.c.h.b16 %v4781
      %v5175 = vunpack.c.l.b16 %v4782
      %v5176 = vunpack.c.h.b16 %v4782
      %v5177 = vunpack.c.l.b16 %v4783
      %v5178 = vunpack.c.h.b16 %v4783
      %v5179 = vunpack.c.l.b16 %v4784
      %v5180 = vunpack.c.h.b16 %v4784
      %v5181 = vunpack.c.l.b16 %v4785
      %v5182 = vunpack.c.l.b16 %v4786
      %v5183 = vunpack.c.h.b16 %v4786
      %v5184 = vunpack.c.l.b16 %v4787
      %v5185 = vunpack.c.h.b16 %v4787
      %v5186 = vunpack.c.l.b16 %v4788
      %v5187 = vunpack.c.h.b16 %v4788
      %v5188 = vunpack.c.l.b16 %v4789
      %v5189 = vunpack.c.h.b16 %v4789
      %v5190 = vunpack.c.l.b16 %v4790
      %v5191 = vunpack.c.l.b16 %v4791
      %v5192 = vunpack.c.h.b16 %v4791
      %v5193 = vunpack.c.l.b16 %v4792
      %v5194 = vunpack.c.h.b16 %v4792
      %v5195 = vunpack.c.l.b16 %v4793
      %v5196 = vunpack.c.h.b16 %v4793
      %v5197 = vunpack.c.l.b16 %v4794
      %v5198 = vunpack.c.h.b16 %v4794
      %v5199 = vunpack.c.l.b16 %v4795
      %v5200 = vunpack.c.l.b16 %v4796
      %v5201 = vunpack.c.h.b16 %v4796
      %v5202 = vunpack.c.l.b16 %v4797
      %v5203 = vunpack.c.h.b16 %v4797
      %v5204 = vunpack.c.l.b16 %v4798
      %v5205 = vunpack.c.h.b16 %v4798
      %v5206 = vunpack.c.l.b16 %v4799
      %v5207 = vunpack.c.h.b16 %v4799
      %v5208 = vunpack.c.l.b16 %v4800
      %v5209 = vunpack.c.l.b16 %v4801
      %v5210 = vunpack.c.h.b16 %v4801
      %v5211 = vunpack.c.l.b16 %v4802
      %v5212 = vunpack.c.h.b16 %v4802
      %v5213 = vunpack.c.l.b16 %v4803
      %v5214 = vunpack.c.h.b16 %v4803
      %v5215 = vunpack.c.l.b16 %v4804
      %v5216 = vunpack.c.h.b16 %v4804
      %v5217 = vunpack.c.l.b16 %v4805
      %v5218 = vunpack.c.l.b16 %v4806
      %v5219 = vunpack.c.h.b16 %v4806
      %v5220 = vunpack.c.l.b16 %v4807
      %v5221 = vunpack.c.h.b16 %v4807
      %v5222 = vunpack.c.l.b16 %v4808
      %v5223 = vunpack.c.h.b16 %v4808
      %v5224 = vunpack.c.l.b16 %v4809
      %v5225 = vunpack.c.h.b16 %v4809
      %v5226 = vunpack.c.l.b16 %v4810
      %v5227 = vunpack.c.l.b16 %v4811
      %v5228 = vunpack.c.h.b16 %v4811
      %v5229 = vunpack.c.l.b16 %v4812
      %v5230 = vunpack.c.h.b16 %v4812
      %v5231 = vunpack.c.l.b16 %v4813
      %v5232 = vunpack.c.h.b16 %v4813
      %v5233 = vunpack.c.l.b16 %v4814
      %v5234 = vunpack.c.h.b16 %v4814
      %v5235 = vunpack.c.l.b16 %v4815
      %v5236 = vunpack.c.l.b16 %v4816
      %v5237 = vunpack.c.h.b16 %v4816
      %v5238 = vunpack.c.l.b16 %v4817
      %v5239 = vunpack.c.h.b16 %v4817
      %v5240 = vunpack.c.l.b16 %v4818
      %v5241 = vunpack.c.h.b16 %v4818
      %v5242 = vunpack.c.l.b16 %v4819
      %v5243 = vunpack.c.h.b16 %v4819
      %v5244 = vunpack.c.l.b16 %v4820
      %v5245 = vunpack.c.l.b16 %v4821
      %v5246 = vunpack.c.h.b16 %v4821
      %v5247 = vunpack.c.l.b16 %v4822
      %v5248 = vunpack.c.h.b16 %v4822
      %v5249 = vunpack.c.l.b16 %v4823
      %v5250 = vunpack.c.h.b16 %v4823
      %v5251 = vunpack.c.l.b16 %v4824
      %v5252 = vunpack.c.h.b16 %v4824
      %v5253 = vunpack.c.l.b16 %v4825
      %v5254 = vunpack.c.l.b16 %v4826
      %v5255 = vunpack.c.h.b16 %v4826
      %v5256 = vunpack.c.l.b16 %v4827
      %v5257 = vunpack.c.h.b16 %v4827
      %v5258 = vunpack.c.l.b16 %v4828
      %v5259 = vunpack.c.h.b16 %v4828
      %v5260 = vunpack.c.l.b16 %v4829
      %v5261 = vunpack.c.h.b16 %v4829
      %v5262 = vunpack.c.l.b16 %v4830
      %v5263 = vunpack.c.l.b16 %v4831
      %v5264 = vunpack.c.h.b16 %v4831
      %v5265 = vunpack.c.l.b16 %v4832
      %v5266 = vunpack.c.h.b16 %v4832
      %v5267 = vunpack.c.l.b16 %v4833
      %v5268 = vunpack.c.h.b16 %v4833
      %v5269 = vunpack.c.l.b16 %v4834
      %v5270 = vunpack.c.h.b16 %v4834
      %v5271 = vunpack.c.l.b16 %v4835
      %v5272 = vunpack.c.l.b16 %v4836
      %v5273 = vunpack.c.h.b16 %v4836
      %v5274 = vunpack.c.l.b16 %v4837
      %v5275 = vunpack.c.h.b16 %v4837
      %v5276 = vunpack.c.l.b16 %v4838
      %v5277 = vunpack.c.h.b16 %v4838
      %v5278 = vunpack.c.l.b16 %v4839
      %v5279 = vunpack.c.h.b16 %v4839
      %v5280 = vunpack.c.l.b16 %v4840
      %v5281 = vunpack.c.l.b16 %v4841
      %v5282 = vunpack.c.h.b16 %v4841
      %v5283 = vunpack.c.l.b16 %v4842
      %v5284 = vunpack.c.h.b16 %v4842
      %v5285 = vunpack.c.l.b16 %v4843
      %v5286 = vunpack.c.h.b16 %v4843
      %v5287 = vunpack.c.l.b16 %v4844
      %v5288 = vunpack.c.h.b16 %v4844
      %v5289 = vunpack.c.l.b16 %v4845
      %v5290 = vunpack.c.l.b16 %v4846
      %v5291 = vunpack.c.h.b16 %v4846
      %v5292 = vunpack.c.l.b16 %v4847
      %v5293 = vunpack.c.h.b16 %v4847
      %v5294 = vunpack.c.l.b16 %v4848
      %v5295 = vunpack.c.h.b16 %v4848
      %v5296 = vunpack.c.l.b16 %v4849
      %v5297 = vunpack.c.h.b16 %v4849
      %v5298 = vunpack.c.l.b16 %v4850
      %v5299 = vpack.c.b16 %v5020, %v5011
      %v5300 = vpack.c.b16 %v5021, %v5012
      %v5301 = vpack.c.b16 %v5022, %v5013
      %v5302 = vpack.c.b16 %v5023, %v5014
      %v5303 = vpack.c.b16 %v5024, %v5015
      %v5304 = vpack.c.b16 %v5025, %v5016
      %v5305 = vpack.c.b16 %v5026, %v5017
      %v5306 = vpack.c.b16 %v5027, %v5018
      %v5307 = vpack.c.b16 %v5028, %v5019
      %v5308 = vpack.c.b16 %v5038, %v5029
      %v5309 = vpack.c.b16 %v5039, %v5030
      %v5310 = vpack.c.b16 %v5040, %v5031
      %v5311 = vpack.c.b16 %v5041, %v5032
      %v5312 = vpack.c.b16 %v5042, %v5033
      %v5313 = vpack.c.b16 %v5043, %v5034
      %v5314 = vpack.c.b16 %v5044, %v5035
      %v5315 = vpack.c.b16 %v5045, %v5036
      %v5316 = vpack.c.b16 %v5046, %v5037
      %v5317 = vpack.c.b16 %v5056, %v5047
      %v5318 = vpack.c.b16 %v5057, %v5048
      %v5319 = vpack.c.b16 %v5058, %v5049
      %v5320 = vpack.c.b16 %v5059, %v5050
      %v5321 = vpack.c.b16 %v5060, %v5051
      %v5322 = vpack.c.b16 %v5061, %v5052
      %v5323 = vpack.c.b16 %v5062, %v5053
      %v5324 = vpack.c.b16 %v5063, %v5054
      %v5325 = vpack.c.b16 %v5064, %v5055
      %v5326 = vpack.c.b16 %v5074, %v5065
      %v5327 = vpack.c.b16 %v5075, %v5066
      %v5328 = vpack.c.b16 %v5076, %v5067
      %v5329 = vpack.c.b16 %v5077, %v5068
      %v5330 = vpack.c.b16 %v5078, %v5069
      %v5331 = vpack.c.b16 %v5079, %v5070
      %v5332 = vpack.c.b16 %v5080, %v5071
      %v5333 = vpack.c.b16 %v5081, %v5072
      %v5334 = vpack.c.b16 %v5082, %v5073
      %v5335 = vpack.c.b16 %v5092, %v5083
      %v5336 = vpack.c.b16 %v5093, %v5084
      %v5337 = vpack.c.b16 %v5094, %v5085
      %v5338 = vpack.c.b16 %v5095, %v5086
      %v5339 = vpack.c.b16 %v5096, %v5087
      %v5340 = vpack.c.b16 %v5097, %v5088
      %v5341 = vpack.c.b16 %v5098, %v5089
      %v5342 = vpack.c.b16 %v5099, %v5090
      %v5343 = vpack.c.b16 %v5100, %v5091
      %v5344 = vpack.c.b16 %v5110, %v5101
      %v5345 = vpack.c.b16 %v5111, %v5102
      %v5346 = vpack.c.b16 %v5112, %v5103
      %v5347 = vpack.c.b16 %v5113, %v5104
      %v5348 = vpack.c.b16 %v5114, %v5105
      %v5349 = vpack.c.b16 %v5115, %v5106
      %v5350 = vpack.c.b16 %v5116, %v5107
      %v5351 = vpack.c.b16 %v5117, %v5108
      %v5352 = vpack.c.b16 %v5118, %v5109
      %v5353 = vpack.c.b16 %v5128, %v5119
      %v5354 = vpack.c.b16 %v5129, %v5120
      %v5355 = vpack.c.b16 %v5130, %v5121
      %v5356 = vpack.c.b16 %v5131, %v5122
      %v5357 = vpack.c.b16 %v5132, %v5123
      %v5358 = vpack.c.b16 %v5133, %v5124
      %v5359 = vpack.c.b16 %v5134, %v5125
      %v5360 = vpack.c.b16 %v5135, %v5126
      %v5361 = vpack.c.b16 %v5136, %v5127
      %v5362 = vpack.c.b16 %v5146, %v5137
      %v5363 = vpack.c.b16 %v5147, %v5138
      %v5364 = vpack.c.b16 %v5148, %v5139
      %v5365 = vpack.c.b16 %v5149, %v5140
      %v5366 = vpack.c.b16 %v5150, %v5141
      %v5367 = vpack.c.b16 %v5151, %v5142
      %v5368 = vpack.c.b16 %v5152, %v5143
      %v5369 = vpack.c.b16 %v5153, %v5144
      %v5370 = vpack.c.b16 %v5154, %v5145
      %v5371 = vpack.c.b16 %v5164, %v5155
      %v5372 = vpack.c.b16 %v5165, %v5156
      %v5373 = vpack.c.b16 %v5166, %v5157
      %v5374 = vpack.c.b16 %v5167, %v5158
      %v5375 = vpack.c.b16 %v5168, %v5159
      %v5376 = vpack.c.b16 %v5169, %v5160
      %v5377 = vpack.c.b16 %v5170, %v5161
      %v5378 = vpack.c.b16 %v5171, %v5162
      %v5379 = vpack.c.b16 %v5172, %v5163
      %v5380 = vpack.c.b16 %v5182, %v5173
      %v5381 = vpack.c.b16 %v5183, %v5174
      %v5382 = vpack.c.b16 %v5184, %v5175
      %v5383 = vpack.c.b16 %v5185, %v5176
      %v5384 = vpack.c.b16 %v5186, %v5177
      %v5385 = vpack.c.b16 %v5187, %v5178
      %v5386 = vpack.c.b16 %v5188, %v5179
      %v5387 = vpack.c.b16 %v5189, %v5180
      %v5388 = vpack.c.b16 %v5190, %v5181
      %v5389 = vpack.c.b16 %v5200, %v5191
      %v5390 = vpack.c.b16 %v5201, %v5192
      %v5391 = vpack.c.b16 %v5202, %v5193
      %v5392 = vpack.c.b16 %v5203, %v5194
      %v5393 = vpack.c.b16 %v5204, %v5195
      %v5394 = vpack.c.b16 %v5205, %v5196
      %v5395 = vpack.c.b16 %v5206, %v5197
      %v5396 = vpack.c.b16 %v5207, %v5198
      %v5397 = vpack.c.b16 %v5208, %v5199
      %v5398 = vpack.c.b16 %v5218, %v5209
      %v5399 = vpack.c.b16 %v5219, %v5210
      %v5400 = vpack.c.b16 %v5220, %v5211
      %v5401 = vpack.c.b16 %v5221, %v5212
      %v5402 = vpack.c.b16 %v5222, %v5213
      %v5403 = vpack.c.b16 %v5223, %v5214
      %v5404 = vpack.c.b16 %v5224, %v5215
      %v5405 = vpack.c.b16 %v5225, %v5216
      %v5406 = vpack.c.b16 %v5226, %v5217
      %v5407 = vpack.c.b16 %v5236, %v5227
      %v5408 = vpack.c.b16 %v5237, %v5228
      %v5409 = vpack.c.b16 %v5238, %v5229
      %v5410 = vpack.c.b16 %v5239, %v5230
      %v5411 = vpack.c.b16 %v5240, %v5231
      %v5412 = vpack.c.b16 %v5241, %v5232
      %v5413 = vpack.c.b16 %v5242, %v5233
      %v5414 = vpack.c.b16 %v5243, %v5234
      %v5415 = vpack.c.b16 %v5244, %v5235
      %v5416 = vpack.c.b16 %v5254, %v5245
      %v5417 = vpack.c.b16 %v5255, %v5246
      %v5418 = vpack.c.b16 %v5256, %v5247
      %v5419 = vpack.c.b16 %v5257, %v5248
      %v5420 = vpack.c.b16 %v5258, %v5249
      %v5421 = vpack.c.b16 %v5259, %v5250
      %v5422 = vpack.c.b16 %v5260, %v5251
      %v5423 = vpack.c.b16 %v5261, %v5252
      %v5424 = vpack.c.b16 %v5262, %v5253
      %v5425 = vpack.c.b16 %v5272, %v5263
      %v5426 = vpack.c.b16 %v5273, %v5264
      %v5427 = vpack.c.b16 %v5274, %v5265
      %v5428 = vpack.c.b16 %v5275, %v5266
      %v5429 = vpack.c.b16 %v5276, %v5267
      %v5430 = vpack.c.b16 %v5277, %v5268
      %v5431 = vpack.c.b16 %v5278, %v5269
      %v5432 = vpack.c.b16 %v5279, %v5270
      %v5433 = vpack.c.b16 %v5280, %v5271
      %v5434 = vpack.c.b16 %v5290, %v5281
      %v5435 = vpack.c.b16 %v5291, %v5282
      %v5436 = vpack.c.b16 %v5292, %v5283
      %v5437 = vpack.c.b16 %v5293, %v5284
      %v5438 = vpack.c.b16 %v5294, %v5285
      %v5439 = vpack.c.b16 %v5295, %v5286
      %v5440 = vpack.c.b16 %v5296, %v5287
      %v5441 = vpack.c.b16 %v5297, %v5288
      %v5442 = vpack.c.b16 %v5298, %v5289
      %5587 = vmatprep.subr.bf16.mxu0 %v5300
      %5588 = vmatpush1.bf16.msra.mxu0 %v5299
      %5589 = vmatprep.subr.bf16.mxu0 %v5309
      %5590 = vmatpush1.bf16.msra.mxu0 %v5308
      %5591 = vmatprep.subr.bf16.mxu0 %v5318
      %5592 = vmatpush1.bf16.msra.mxu0 %v5317
      %5593 = vmatprep.subr.bf16.mxu0 %v5327
      %5594 = vmatpush1.bf16.msra.mxu0 %v5326
      %5595 = vmatprep.subr.bf16.mxu0 %v5336
      %5596 = vmatpush1.bf16.msra.mxu0 %v5335
      %5597 = vmatprep.subr.bf16.mxu0 %v5345
      %5598 = vmatpush1.bf16.msra.mxu0 %v5344
      %5599 = vmatprep.subr.bf16.mxu0 %v5354
      %5600 = vmatpush1.bf16.msra.mxu0 %v5353
      %5601 = vmatprep.subr.bf16.mxu0 %v5363
      %5602 = vmatpush1.bf16.msra.mxu0 %v5362
      %5603 = vmatprep.subr.bf16.mxu0 %v5372
      %5604 = vmatpush1.bf16.msra.mxu0 %v5371
      %5605 = vmatprep.subr.bf16.mxu0 %v5381
      %5606 = vmatpush1.bf16.msra.mxu0 %v5380
      %5607 = vmatprep.subr.bf16.mxu0 %v5390
      %5608 = vmatpush1.bf16.msra.mxu0 %v5389
      %5609 = vmatprep.subr.bf16.mxu0 %v5399
      %5610 = vmatpush1.bf16.msra.mxu0 %v5398
      %5611 = vmatprep.subr.bf16.mxu0 %v5408
      %5612 = vmatpush1.bf16.msra.mxu0 %v5407
      %5613 = vmatprep.subr.bf16.mxu0 %v5417
      %5614 = vmatpush1.bf16.msra.mxu0 %v5416
      %5615 = vmatprep.subr.bf16.mxu0 %v5426
      %5616 = vmatpush1.bf16.msra.mxu0 %v5425
      %5617 = vmatprep.subr.bf16.mxu0 %v5435
      %5618 = vmatpush1.bf16.msra.mxu0 %v5434
      %5619 = vmatprep.mubr.bf16.mxu0 %v4690
      %5620 = vmatmul.mubr.bf16.gmra.mrb[0].mxu0 %v4689
      %v5621 = vpop.f32.mrb[0].mxu0
      %v5622 = vadd.f32 0.0, %v5621
      %v5623 = vpop.f32.mrb[0].mxu0
      %v5624 = vadd.f32 0.0, %v5623
      %v5625 = vpop.f32.mrb[0].mxu0
      %v5626 = vpop.f32.mrb[0].mxu0
      %5627 = vdwg.mxu0
      %5628 = vmatprep.subr.bf16.mxu0 %v5302
      %5629 = vmatpush1.bf16.msra.mxu0 %v5301
      %5630 = vmatprep.subr.bf16.mxu0 %v5311
      %5631 = vmatpush1.bf16.msra.mxu0 %v5310
      %5632 = vmatprep.subr.bf16.mxu0 %v5320
      %5633 = vmatpush1.bf16.msra.mxu0 %v5319
      %5634 = vmatprep.subr.bf16.mxu0 %v5329
      %5635 = vmatpush1.bf16.msra.mxu0 %v5328
      %5636 = vmatprep.subr.bf16.mxu0 %v5338
      %5637 = vmatpush1.bf16.msra.mxu0 %v5337
      %5638 = vmatprep.subr.bf16.mxu0 %v5347
      %5639 = vmatpush1.bf16.msra.mxu0 %v5346
      %5640 = vmatprep.subr.bf16.mxu0 %v5356
      %5641 = vmatpush1.bf16.msra.mxu0 %v5355
      %5642 = vmatprep.subr.bf16.mxu0 %v5365
      %5643 = vmatpush1.bf16.msra.mxu0 %v5364
      %5644 = vmatprep.subr.bf16.mxu0 %v5374
      %5645 = vmatpush1.bf16.msra.mxu0 %v5373
      %5646 = vmatprep.subr.bf16.mxu0 %v5383
      %5647 = vmatpush1.bf16.msra.mxu0 %v5382
      %5648 = vmatprep.subr.bf16.mxu0 %v5392
      %5649 = vmatpush1.bf16.msra.mxu0 %v5391
      %5650 = vmatprep.subr.bf16.mxu0 %v5401
      %5651 = vmatpush1.bf16.msra.mxu0 %v5400
      %5652 = vmatprep.subr.bf16.mxu0 %v5410
      %5653 = vmatpush1.bf16.msra.mxu0 %v5409
      %5654 = vmatprep.subr.bf16.mxu0 %v5419
      %5655 = vmatpush1.bf16.msra.mxu0 %v5418
      %5656 = vmatprep.subr.bf16.mxu0 %v5428
      %5657 = vmatpush1.bf16.msra.mxu0 %v5427
      %5658 = vmatprep.subr.bf16.mxu0 %v5437
      %5659 = vmatpush1.bf16.msra.mxu0 %v5436
      %5660 = vmatprep.mubr.bf16.mxu0 %v4690
      %5661 = vmatmul.mubr.bf16.gmra.mrb[0].mxu0 %v4689
      %v5662 = vpop.f32.mrb[0].mxu0
      %v5663 = vadd.f32 0.0, %v5662
      %v5664 = vpop.f32.mrb[0].mxu0
      %v5665 = vadd.f32 0.0, %v5664
      %v5666 = vpop.f32.mrb[0].mxu0
      %v5667 = vpop.f32.mrb[0].mxu0
      %5668 = vdwg.mxu0
      %5669 = vmatprep.subr.bf16.mxu0 %v5304
      %5670 = vmatpush1.bf16.msra.mxu0 %v5303
      %5671 = vmatprep.subr.bf16.mxu0 %v5313
      %5672 = vmatpush1.bf16.msra.mxu0 %v5312
      %5673 = vmatprep.subr.bf16.mxu0 %v5322
      %5674 = vmatpush1.bf16.msra.mxu0 %v5321
      %5675 = vmatprep.subr.bf16.mxu0 %v5331
      %5676 = vmatpush1.bf16.msra.mxu0 %v5330
      %5677 = vmatprep.subr.bf16.mxu0 %v5340
      %5678 = vmatpush1.bf16.msra.mxu0 %v5339
      %5679 = vmatprep.subr.bf16.mxu0 %v5349
      %5680 = vmatpush1.bf16.msra.mxu0 %v5348
      %5681 = vmatprep.subr.bf16.mxu0 %v5358
      %5682 = vmatpush1.bf16.msra.mxu0 %v5357
      %5683 = vmatprep.subr.bf16.mxu0 %v5367
      %5684 = vmatpush1.bf16.msra.mxu0 %v5366
      %5685 = vmatprep.subr.bf16.mxu0 %v5376
      %5686 = vmatpush1.bf16.msra.mxu0 %v5375
      %5687 = vmatprep.subr.bf16.mxu0 %v5385
      %5688 = vmatpush1.bf16.msra.mxu0 %v5384
      %5689 = vmatprep.subr.bf16.mxu0 %v5394
      %5690 = vmatpush1.bf16.msra.mxu0 %v5393
      %5691 = vmatprep.subr.bf16.mxu0 %v5403
      %5692 = vmatpush1.bf16.msra.mxu0 %v5402
      %5693 = vmatprep.subr.bf16.mxu0 %v5412
      %5694 = vmatpush1.bf16.msra.mxu0 %v5411
      %5695 = vmatprep.subr.bf16.mxu0 %v5421
      %5696 = vmatpush1.bf16.msra.mxu0 %v5420
      %5697 = vmatprep.subr.bf16.mxu0 %v5430
      %5698 = vmatpush1.bf16.msra.mxu0 %v5429
      %5699 = vmatprep.subr.bf16.mxu0 %v5439
      %5700 = vmatpush1.bf16.msra.mxu0 %v5438
      %5701 = vmatprep.mubr.bf16.mxu0 %v4690
      %5702 = vmatmul.mubr.bf16.gmra.mrb[0].mxu0 %v4689
      %v5703 = vpop.f32.mrb[0].mxu0
      %v5704 = vadd.f32 0.0, %v5703
      %v5705 = vpop.f32.mrb[0].mxu0
      %v5706 = vadd.f32 0.0, %v5705
      %v5707 = vpop.f32.mrb[0].mxu0
      %v5708 = vpop.f32.mrb[0].mxu0
      %5709 = vdwg.mxu0
      %5710 = vmatprep.subr.bf16.mxu0 %v5306
      %5711 = vmatpush1.bf16.msra.mxu0 %v5305
      %5712 = vmatprep.subr.bf16.mxu0 %v5315
      %5713 = vmatpush1.bf16.msra.mxu0 %v5314
      %5714 = vmatprep.subr.bf16.mxu0 %v5324
      %5715 = vmatpush1.bf16.msra.mxu0 %v5323
      %5716 = vmatprep.subr.bf16.mxu0 %v5333
      %5717 = vmatpush1.bf16.msra.mxu0 %v5332
      %5718 = vmatprep.subr.bf16.mxu0 %v5342
      %5719 = vmatpush1.bf16.msra.mxu0 %v5341
      %5720 = vmatprep.subr.bf16.mxu0 %v5351
      %5721 = vmatpush1.bf16.msra.mxu0 %v5350
      %5722 = vmatprep.subr.bf16.mxu0 %v5360
      %5723 = vmatpush1.bf16.msra.mxu0 %v5359
      %5724 = vmatprep.subr.bf16.mxu0 %v5369
      %5725 = vmatpush1.bf16.msra.mxu0 %v5368
      %5726 = vmatprep.subr.bf16.mxu0 %v5378
      %5727 = vmatpush1.bf16.msra.mxu0 %v5377
      %5728 = vmatprep.subr.bf16.mxu0 %v5387
      %5729 = vmatpush1.bf16.msra.mxu0 %v5386
      %5730 = vmatprep.subr.bf16.mxu0 %v5396
      %5731 = vmatpush1.bf16.msra.mxu0 %v5395
      %5732 = vmatprep.subr.bf16.mxu0 %v5405
      %5733 = vmatpush1.bf16.msra.mxu0 %v5404
      %5734 = vmatprep.subr.bf16.mxu0 %v5414
      %5735 = vmatpush1.bf16.msra.mxu0 %v5413
      %5736 = vmatprep.subr.bf16.mxu0 %v5423
      %5737 = vmatpush1.bf16.msra.mxu0 %v5422
      %5738 = vmatprep.subr.bf16.mxu0 %v5432
      %5739 = vmatpush1.bf16.msra.mxu0 %v5431
      %5740 = vmatprep.subr.bf16.mxu0 %v5441
      %5741 = vmatpush1.bf16.msra.mxu0 %v5440
      %5742 = vmatprep.mubr.bf16.mxu0 %v4690
      %5743 = vmatmul.mubr.bf16.gmra.mrb[0].mxu0 %v4689
      %v5744 = vpop.f32.mrb[0].mxu0
      %v5745 = vadd.f32 0.0, %v5744
      %v5746 = vpop.f32.mrb[0].mxu0
      %v5747 = vadd.f32 0.0, %v5746
      %v5748 = vpop.f32.mrb[0].mxu0
      %v5749 = vpop.f32.mrb[0].mxu0
      %5750 = vdwg.mxu0
      %5751 = vmatprep.subr.bf16.mxu0 0
      %5752 = vmatpush1.bf16.msra.mxu0 %v5307
      %5753 = vmatprep.subr.bf16.mxu0 0
      %5754 = vmatpush1.bf16.msra.mxu0 %v5316
      %5755 = vmatprep.subr.bf16.mxu0 0
      %5756 = vmatpush1.bf16.msra.mxu0 %v5325
      %5757 = vmatprep.subr.bf16.mxu0 0
      %5758 = vmatpush1.bf16.msra.mxu0 %v5334
      %5759 = vmatprep.subr.bf16.mxu0 0
      %5760 = vmatpush1.bf16.msra.mxu0 %v5343
      %5761 = vmatprep.subr.bf16.mxu0 0
      %5762 = vmatpush1.bf16.msra.mxu0 %v5352
      %5763 = vmatprep.subr.bf16.mxu0 0
      %5764 = vmatpush1.bf16.msra.mxu0 %v5361
      %5765 = vmatprep.subr.bf16.mxu0 0
      %5766 = vmatpush1.bf16.msra.mxu0 %v5370
      %5767 = vmatprep.subr.bf16.mxu0 0
      %5768 = vmatpush1.bf16.msra.mxu0 %v5379
      %5769 = vmatprep.subr.bf16.mxu0 0
      %5770 = vmatpush1.bf16.msra.mxu0 %v5388
      %5771 = vmatprep.subr.bf16.mxu0 0
      %5772 = vmatpush1.bf16.msra.mxu0 %v5397
      %5773 = vmatprep.subr.bf16.mxu0 0
      %5774 = vmatpush1.bf16.msra.mxu0 %v5406
      %5775 = vmatprep.subr.bf16.mxu0 0
      %5776 = vmatpush1.bf16.msra.mxu0 %v5415
      %5777 = vmatprep.subr.bf16.mxu0 0
      %5778 = vmatpush1.bf16.msra.mxu0 %v5424
      %5779 = vmatprep.subr.bf16.mxu0 0
      %5780 = vmatpush1.bf16.msra.mxu0 %v5433
      %5781 = vmatprep.subr.bf16.mxu0 0
      %5782 = vmatpush1.bf16.msra.mxu0 %v5442
      %5783 = vmatprep.mubr.bf16.mxu0 %v4690
      %5784 = vmatmul.mubr.bf16.gmra.mrb[0].mxu0 %v4689
      %v5785 = vpop.f32.mrb[0].mxu0
      %v5786 = vadd.f32 0.0, %v5785
      %v5787 = vpop.f32.mrb[0].mxu0
      %v5788 = vpop.f32.mrb[0].mxu0
      %v5789 = vpop.f32.mrb[0].mxu0
      %5790 = vdwg.mxu0
      %v5791 = vpack.c.bf16 %v5622, %v5622
      %v5792 = vpack.c.bf16 %v5624, %v5624
      %v5793 = vpack.c.bf16 %v5663, %v5663
      %v5794 = vpack.c.bf16 %v5665, %v5665
      %v5795 = vpack.c.bf16 %v5704, %v5704
      %v5796 = vpack.c.bf16 %v5706, %v5706
      %v5797 = vpack.c.bf16 %v5745, %v5745
      %v5798 = vpack.c.bf16 %v5747, %v5747
      %v5799 = vpack.c.bf16 %v5786, %v5786
      %v5800 = vld [vmem:[%s12] sm:$0x1]
      %v5802 = vlaneseq
      %v5803 = vshrl.u32 %v5802, 7
      %v5804 = vsub.s32 0, %v5803
      %v5805 = vrot.slane %v5800, %v5804
      %v5807 = vld [vmem:[%s10] sm:$0xf]
      %v5808 = vld [vmem:[%s10 + $0x4] sm:$0xf]
      %v5811 = vunpack.c.l.b16 %v5807
      %v5812 = vunpack.c.l.b16 %v5808
      %v5813 = vpack.c.b16 %v5812, %v5811
      %vm5814 = vcmask 64512
      %v5816 = vsel %vm5814, %v5813, 0
      %vm5818 = vcmask 1043456
      %v5820 = vsel %vm5818, %v5791, 0
      %5822 = vmatprep.subr.bf16.mxu0 0
      %5823 = vmatpush1.bf16.msra.mxu0 %v5820
      %5824 = vmatprep.subr.bf16.mxu0 0
      %5825 = vmatpush1.bf16.msra.mxu0 0
      %5826 = vmatprep.subr.bf16.mxu0 0
      %5827 = vmatpush1.bf16.msra.mxu0 0
      %5828 = vmatprep.subr.bf16.mxu0 0
      %5829 = vmatpush1.bf16.msra.mxu0 0
      %5830 = vmatprep.subr.bf16.mxu0 0
      %5831 = vmatpush1.bf16.msra.mxu0 0
      %5832 = vmatprep.subr.bf16.mxu0 0
      %5833 = vmatpush1.bf16.msra.mxu0 0
      %5834 = vmatprep.subr.bf16.mxu0 0
      %5835 = vmatpush1.bf16.msra.mxu0 0
      %5836 = vmatprep.subr.bf16.mxu0 0
      %5837 = vmatpush1.bf16.msra.mxu0 0
      %5838 = vmatprep.subr.bf16.mxu0 0
      %5839 = vmatpush1.bf16.msra.mxu0 0
      %5840 = vmatprep.subr.bf16.mxu0 0
      %5841 = vmatpush1.bf16.msra.mxu0 0
      %5842 = vmatprep.subr.bf16.mxu0 0
      %5843 = vmatpush1.bf16.msra.mxu0 0
      %5844 = vmatprep.subr.bf16.mxu0 0
      %5845 = vmatpush1.bf16.msra.mxu0 0
      %5846 = vmatprep.subr.bf16.mxu0 0
      %5847 = vmatpush1.bf16.msra.mxu0 0
      %5848 = vmatprep.subr.bf16.mxu0 0
      %5849 = vmatpush1.bf16.msra.mxu0 0
      %5850 = vmatprep.subr.bf16.mxu0 0
      %5851 = vmatpush1.bf16.msra.mxu0 0
      %5852 = vmatprep.subr.bf16.mxu0 0
      %5853 = vmatpush1.bf16.msra.mxu0 0
      %5854 = vmatprep.mubr.bf16.mxu0 0
      %5855 = vmatmul.mubr.bf16.gmra.mrb[0].mxu0 %v5816
      %v5856 = vpop.f32.mrb[0].mxu0
      %v5857 = vadd.f32 0.0, %v5856
      %v5858 = vpop.f32.mrb[0].mxu0
      %v5859 = vpop.f32.mrb[0].mxu0
      %v5860 = vadd.f32 0.0, %v5859
      %v5861 = vpop.f32.mrb[0].mxu0
      %5862 = vdwg.mxu0
      %v5863 = vadd.f32 %v5805, %v5857
      %v5864 = vadd.f32 %v5805, %v5860
      %s5865 = scalar_lea.vmem %s10, 8
      %v5866 = vld [vmem:[%s5865] sm:$0xf]
      %v5867 = vld [vmem:[%s5865 + $0x4] sm:$0xf]
      %v5870 = vunpack.c.l.b16 %v5866
      %v5871 = vunpack.c.l.b16 %v5867
      %v5872 = vpack.c.b16 %v5871, %v5870
      %v5874 = vsel %vm5814, %v5872, 0
      %v5877 = vsel %vm5818, %v5792, 0
      %5879 = vmatprep.subr.bf16.mxu0 0
      %5880 = vmatpush1.bf16.msra.mxu0 %v5877
      %5881 = vmatprep.subr.bf16.mxu0 0
      %5882 = vmatpush1.bf16.msra.mxu0 0
      %5883 = vmatprep.subr.bf16.mxu0 0
      %5884 = vmatpush1.bf16.msra.mxu0 0
      %5885 = vmatprep.subr.bf16.mxu0 0
      %5886 = vmatpush1.bf16.msra.mxu0 0
      %5887 = vmatprep.subr.bf16.mxu0 0
      %5888 = vmatpush1.bf16.msra.mxu0 0
      %5889 = vmatprep.subr.bf16.mxu0 0
      %5890 = vmatpush1.bf16.msra.mxu0 0
      %5891 = vmatprep.subr.bf16.mxu0 0
      %5892 = vmatpush1.bf16.msra.mxu0 0
      %5893 = vmatprep.subr.bf16.mxu0 0
      %5894 = vmatpush1.bf16.msra.mxu0 0
      %5895 = vmatprep.subr.bf16.mxu0 0
      %5896 = vmatpush1.bf16.msra.mxu0 0
      %5897 = vmatprep.subr.bf16.mxu0 0
      %5898 = vmatpush1.bf16.msra.mxu0 0
      %5899 = vmatprep.subr.bf16.mxu0 0
      %5900 = vmatpush1.bf16.msra.mxu0 0
      %5901 = vmatprep.subr.bf16.mxu0 0
      %5902 = vmatpush1.bf16.msra.mxu0 0
      %5903 = vmatprep.subr.bf16.mxu0 0
      %5904 = vmatpush1.bf16.msra.mxu0 0
      %5905 = vmatprep.subr.bf16.mxu0 0
      %5906 = vmatpush1.bf16.msra.mxu0 0
      %5907 = vmatprep.subr.bf16.mxu0 0
      %5908 = vmatpush1.bf16.msra.mxu0 0
      %5909 = vmatprep.subr.bf16.mxu0 0
      %5910 = vmatpush1.bf16.msra.mxu0 0
      %5911 = vmatprep.mubr.bf16.mxu0 0
      %5912 = vmatmul.mubr.bf16.gmra.mrb[0].mxu0 %v5874
      %v5913 = vpop.f32.mrb[0].mxu0
      %v5914 = vadd.f32 0.0, %v5913
      %v5915 = vpop.f32.mrb[0].mxu0
      %v5916 = vpop.f32.mrb[0].mxu0
      %v5917 = vadd.f32 0.0, %v5916
      %v5918 = vpop.f32.mrb[0].mxu0
      %5919 = vdwg.mxu0
      %v5920 = vadd.f32 %v5863, %v5914
      %v5921 = vadd.f32 %v5864, %v5917
      %s5922 = scalar_lea.vmem %s10, 16
      %v5923 = vld [vmem:[%s5922] sm:$0xf]
      %v5924 = vld [vmem:[%s5922 + $0x4] sm:$0xf]
      %v5927 = vunpack.c.l.b16 %v5923
      %v5928 = vunpack.c.l.b16 %v5924
      %v5929 = vpack.c.b16 %v5928, %v5927
      %v5931 = vsel %vm5814, %v5929, 0
      %v5934 = vsel %vm5818, %v5793, 0
      %5936 = vmatprep.subr.bf16.mxu0 0
      %5937 = vmatpush1.bf16.msra.mxu0 %v5934
      %5938 = vmatprep.subr.bf16.mxu0 0
      %5939 = vmatpush1.bf16.msra.mxu0 0
      %5940 = vmatprep.subr.bf16.mxu0 0
      %5941 = vmatpush1.bf16.msra.mxu0 0
      %5942 = vmatprep.subr.bf16.mxu0 0
      %5943 = vmatpush1.bf16.msra.mxu0 0
      %5944 = vmatprep.subr.bf16.mxu0 0
      %5945 = vmatpush1.bf16.msra.mxu0 0
      %5946 = vmatprep.subr.bf16.mxu0 0
      %5947 = vmatpush1.bf16.msra.mxu0 0
      %5948 = vmatprep.subr.bf16.mxu0 0
      %5949 = vmatpush1.bf16.msra.mxu0 0
      %5950 = vmatprep.subr.bf16.mxu0 0
      %5951 = vmatpush1.bf16.msra.mxu0 0
      %5952 = vmatprep.subr.bf16.mxu0 0
      %5953 = vmatpush1.bf16.msra.mxu0 0
      %5954 = vmatprep.subr.bf16.mxu0 0
      %5955 = vmatpush1.bf16.msra.mxu0 0
      %5956 = vmatprep.subr.bf16.mxu0 0
      %5957 = vmatpush1.bf16.msra.mxu0 0
      %5958 = vmatprep.subr.bf16.mxu0 0
      %5959 = vmatpush1.bf16.msra.mxu0 0
      %5960 = vmatprep.subr.bf16.mxu0 0
      %5961 = vmatpush1.bf16.msra.mxu0 0
      %5962 = vmatprep.subr.bf16.mxu0 0
      %5963 = vmatpush1.bf16.msra.mxu0 0
      %5964 = vmatprep.subr.bf16.mxu0 0
      %5965 = vmatpush1.bf16.msra.mxu0 0
      %5966 = vmatprep.subr.bf16.mxu0 0
      %5967 = vmatpush1.bf16.msra.mxu0 0
      %5968 = vmatprep.mubr.bf16.mxu0 0
      %5969 = vmatmul.mubr.bf16.gmra.mrb[0].mxu0 %v5931
      %v5970 = vpop.f32.mrb[0].mxu0
      %v5971 = vadd.f32 0.0, %v5970
      %v5972 = vpop.f32.mrb[0].mxu0
      %v5973 = vpop.f32.mrb[0].mxu0
      %v5974 = vadd.f32 0.0, %v5973
      %v5975 = vpop.f32.mrb[0].mxu0
      %5976 = vdwg.mxu0
      %v5977 = vadd.f32 %v5920, %v5971
      %v5978 = vadd.f32 %v5921, %v5974
      %s5979 = scalar_lea.vmem %s10, 24
      %v5980 = vld [vmem:[%s5979] sm:$0xf]
      %v5981 = vld [vmem:[%s5979 + $0x4] sm:$0xf]
      %v5984 = vunpack.c.l.b16 %v5980
      %v5985 = vunpack.c.l.b16 %v5981
      %v5986 = vpack.c.b16 %v5985, %v5984
      %v5988 = vsel %vm5814, %v5986, 0
      %v5991 = vsel %vm5818, %v5794, 0
      %5993 = vmatprep.subr.bf16.mxu0 0
      %5994 = vmatpush1.bf16.msra.mxu0 %v5991
      %5995 = vmatprep.subr.bf16.mxu0 0
      %5996 = vmatpush1.bf16.msra.mxu0 0
      %5997 = vmatprep.subr.bf16.mxu0 0
      %5998 = vmatpush1.bf16.msra.mxu0 0
      %5999 = vmatprep.subr.bf16.mxu0 0
      %6000 = vmatpush1.bf16.msra.mxu0 0
      %6001 = vmatprep.subr.bf16.mxu0 0
      %6002 = vmatpush1.bf16.msra.mxu0 0
      %6003 = vmatprep.subr.bf16.mxu0 0
      %6004 = vmatpush1.bf16.msra.mxu0 0
      %6005 = vmatprep.subr.bf16.mxu0 0
      %6006 = vmatpush1.bf16.msra.mxu0 0
      %6007 = vmatprep.subr.bf16.mxu0 0
      %6008 = vmatpush1.bf16.msra.mxu0 0
      %6009 = vmatprep.subr.bf16.mxu0 0
      %6010 = vmatpush1.bf16.msra.mxu0 0
      %6011 = vmatprep.subr.bf16.mxu0 0
      %6012 = vmatpush1.bf16.msra.mxu0 0
      %6013 = vmatprep.subr.bf16.mxu0 0
      %6014 = vmatpush1.bf16.msra.mxu0 0
      %6015 = vmatprep.subr.bf16.mxu0 0
      %6016 = vmatpush1.bf16.msra.mxu0 0
      %6017 = vmatprep.subr.bf16.mxu0 0
      %6018 = vmatpush1.bf16.msra.mxu0 0
      %6019 = vmatprep.subr.bf16.mxu0 0
      %6020 = vmatpush1.bf16.msra.mxu0 0
      %6021 = vmatprep.subr.bf16.mxu0 0
      %6022 = vmatpush1.bf16.msra.mxu0 0
      %6023 = vmatprep.subr.bf16.mxu0 0
      %6024 = vmatpush1.bf16.msra.mxu0 0
      %6025 = vmatprep.mubr.bf16.mxu0 0
      %6026 = vmatmul.mubr.bf16.gmra.mrb[0].mxu0 %v5988
      %v6027 = vpop.f32.mrb[0].mxu0
      %v6028 = vadd.f32 0.0, %v6027
      %v6029 = vpop.f32.mrb[0].mxu0
      %v6030 = vpop.f32.mrb[0].mxu0
      %v6031 = vadd.f32 0.0, %v6030
      %v6032 = vpop.f32.mrb[0].mxu0
      %6033 = vdwg.mxu0
      %v6034 = vadd.f32 %v5977, %v6028
      %v6035 = vadd.f32 %v5978, %v6031
      %s6036 = scalar_lea.vmem %s10, 32
      %v6037 = vld [vmem:[%s6036] sm:$0xf]
      %v6038 = vld [vmem:[%s6036 + $0x4] sm:$0xf]
      %v6041 = vunpack.c.l.b16 %v6037
      %v6042 = vunpack.c.l.b16 %v6038
      %v6043 = vpack.c.b16 %v6042, %v6041
      %v6045 = vsel %vm5814, %v6043, 0
      %v6048 = vsel %vm5818, %v5795, 0
      %6050 = vmatprep.subr.bf16.mxu0 0
      %6051 = vmatpush1.bf16.msra.mxu0 %v6048
      %6052 = vmatprep.subr.bf16.mxu0 0
      %6053 = vmatpush1.bf16.msra.mxu0 0
      %6054 = vmatprep.subr.bf16.mxu0 0
      %6055 = vmatpush1.bf16.msra.mxu0 0
      %6056 = vmatprep.subr.bf16.mxu0 0
      %6057 = vmatpush1.bf16.msra.mxu0 0
      %6058 = vmatprep.subr.bf16.mxu0 0
      %6059 = vmatpush1.bf16.msra.mxu0 0
      %6060 = vmatprep.subr.bf16.mxu0 0
      %6061 = vmatpush1.bf16.msra.mxu0 0
      %6062 = vmatprep.subr.bf16.mxu0 0
      %6063 = vmatpush1.bf16.msra.mxu0 0
      %6064 = vmatprep.subr.bf16.mxu0 0
      %6065 = vmatpush1.bf16.msra.mxu0 0
      %6066 = vmatprep.subr.bf16.mxu0 0
      %6067 = vmatpush1.bf16.msra.mxu0 0
      %6068 = vmatprep.subr.bf16.mxu0 0
      %6069 = vmatpush1.bf16.msra.mxu0 0
      %6070 = vmatprep.subr.bf16.mxu0 0
      %6071 = vmatpush1.bf16.msra.mxu0 0
      %6072 = vmatprep.subr.bf16.mxu0 0
      %6073 = vmatpush1.bf16.msra.mxu0 0
      %6074 = vmatprep.subr.bf16.mxu0 0
      %6075 = vmatpush1.bf16.msra.mxu0 0
      %6076 = vmatprep.subr.bf16.mxu0 0
      %6077 = vmatpush1.bf16.msra.mxu0 0
      %6078 = vmatprep.subr.bf16.mxu0 0
      %6079 = vmatpush1.bf16.msra.mxu0 0
      %6080 = vmatprep.subr.bf16.mxu0 0
      %6081 = vmatpush1.bf16.msra.mxu0 0
      %6082 = vmatprep.mubr.bf16.mxu0 0
      %6083 = vmatmul.mubr.bf16.gmra.mrb[0].mxu0 %v6045
      %v6084 = vpop.f32.mrb[0].mxu0
      %v6085 = vadd.f32 0.0, %v6084
      %v6086 = vpop.f32.mrb[0].mxu0
      %v6087 = vpop.f32.mrb[0].mxu0
      %v6088 = vadd.f32 0.0, %v6087
      %v6089 = vpop.f32.mrb[0].mxu0
      %6090 = vdwg.mxu0
      %v6091 = vadd.f32 %v6034, %v6085
      %v6092 = vadd.f32 %v6035, %v6088
      %s6093 = scalar_lea.vmem %s10, 40
      %v6094 = vld [vmem:[%s6093] sm:$0xf]
      %v6095 = vld [vmem:[%s6093 + $0x4] sm:$0xf]
      %v6098 = vunpack.c.l.b16 %v6094
      %v6099 = vunpack.c.l.b16 %v6095
      %v6100 = vpack.c.b16 %v6099, %v6098
      %v6102 = vsel %vm5814, %v6100, 0
      %v6105 = vsel %vm5818, %v5796, 0
      %6107 = vmatprep.subr.bf16.mxu0 0
      %6108 = vmatpush1.bf16.msra.mxu0 %v6105
      %6109 = vmatprep.subr.bf16.mxu0 0
      %6110 = vmatpush1.bf16.msra.mxu0 0
      %6111 = vmatprep.subr.bf16.mxu0 0
      %6112 = vmatpush1.bf16.msra.mxu0 0
      %6113 = vmatprep.subr.bf16.mxu0 0
      %6114 = vmatpush1.bf16.msra.mxu0 0
      %6115 = vmatprep.subr.bf16.mxu0 0
      %6116 = vmatpush1.bf16.msra.mxu0 0
      %6117 = vmatprep.subr.bf16.mxu0 0
      %6118 = vmatpush1.bf16.msra.mxu0 0
      %6119 = vmatprep.subr.bf16.mxu0 0
      %6120 = vmatpush1.bf16.msra.mxu0 0
      %6121 = vmatprep.subr.bf16.mxu0 0
      %6122 = vmatpush1.bf16.msra.mxu0 0
      %6123 = vmatprep.subr.bf16.mxu0 0
      %6124 = vmatpush1.bf16.msra.mxu0 0
      %6125 = vmatprep.subr.bf16.mxu0 0
      %6126 = vmatpush1.bf16.msra.mxu0 0
      %6127 = vmatprep.subr.bf16.mxu0 0
      %6128 = vmatpush1.bf16.msra.mxu0 0
      %6129 = vmatprep.subr.bf16.mxu0 0
      %6130 = vmatpush1.bf16.msra.mxu0 0
      %6131 = vmatprep.subr.bf16.mxu0 0
      %6132 = vmatpush1.bf16.msra.mxu0 0
      %6133 = vmatprep.subr.bf16.mxu0 0
      %6134 = vmatpush1.bf16.msra.mxu0 0
      %6135 = vmatprep.subr.bf16.mxu0 0
      %6136 = vmatpush1.bf16.msra.mxu0 0
      %6137 = vmatprep.subr.bf16.mxu0 0
      %6138 = vmatpush1.bf16.msra.mxu0 0
      %6139 = vmatprep.mubr.bf16.mxu0 0
      %6140 = vmatmul.mubr.bf16.gmra.mrb[0].mxu0 %v6102
      %v6141 = vpop.f32.mrb[0].mxu0
      %v6142 = vadd.f32 0.0, %v6141
      %v6143 = vpop.f32.mrb[0].mxu0
      %v6144 = vpop.f32.mrb[0].mxu0
      %v6145 = vadd.f32 0.0, %v6144
      %v6146 = vpop.f32.mrb[0].mxu0
      %6147 = vdwg.mxu0
      %v6148 = vadd.f32 %v6091, %v6142
      %v6149 = vadd.f32 %v6092, %v6145
      %s6150 = scalar_lea.vmem %s10, 48
      %v6151 = vld [vmem:[%s6150] sm:$0xf]
      %v6152 = vld [vmem:[%s6150 + $0x4] sm:$0xf]
      %v6155 = vunpack.c.l.b16 %v6151
      %v6156 = vunpack.c.l.b16 %v6152
      %v6157 = vpack.c.b16 %v6156, %v6155
      %v6159 = vsel %vm5814, %v6157, 0
      %v6162 = vsel %vm5818, %v5797, 0
      %6164 = vmatprep.subr.bf16.mxu0 0
      %6165 = vmatpush1.bf16.msra.mxu0 %v6162
      %6166 = vmatprep.subr.bf16.mxu0 0
      %6167 = vmatpush1.bf16.msra.mxu0 0
      %6168 = vmatprep.subr.bf16.mxu0 0
      %6169 = vmatpush1.bf16.msra.mxu0 0
      %6170 = vmatprep.subr.bf16.mxu0 0
      %6171 = vmatpush1.bf16.msra.mxu0 0
      %6172 = vmatprep.subr.bf16.mxu0 0
      %6173 = vmatpush1.bf16.msra.mxu0 0
      %6174 = vmatprep.subr.bf16.mxu0 0
      %6175 = vmatpush1.bf16.msra.mxu0 0
      %6176 = vmatprep.subr.bf16.mxu0 0
      %6177 = vmatpush1.bf16.msra.mxu0 0
      %6178 = vmatprep.subr.bf16.mxu0 0
      %6179 = vmatpush1.bf16.msra.mxu0 0
      %6180 = vmatprep.subr.bf16.mxu0 0
      %6181 = vmatpush1.bf16.msra.mxu0 0
      %6182 = vmatprep.subr.bf16.mxu0 0
      %6183 = vmatpush1.bf16.msra.mxu0 0
      %6184 = vmatprep.subr.bf16.mxu0 0
      %6185 = vmatpush1.bf16.msra.mxu0 0
      %6186 = vmatprep.subr.bf16.mxu0 0
      %6187 = vmatpush1.bf16.msra.mxu0 0
      %6188 = vmatprep.subr.bf16.mxu0 0
      %6189 = vmatpush1.bf16.msra.mxu0 0
      %6190 = vmatprep.subr.bf16.mxu0 0
      %6191 = vmatpush1.bf16.msra.mxu0 0
      %6192 = vmatprep.subr.bf16.mxu0 0
      %6193 = vmatpush1.bf16.msra.mxu0 0
      %6194 = vmatprep.subr.bf16.mxu0 0
      %6195 = vmatpush1.bf16.msra.mxu0 0
      %6196 = vmatprep.mubr.bf16.mxu0 0
      %6197 = vmatmul.mubr.bf16.gmra.mrb[0].mxu0 %v6159
      %v6198 = vpop.f32.mrb[0].mxu0
      %v6199 = vadd.f32 0.0, %v6198
      %v6200 = vpop.f32.mrb[0].mxu0
      %v6201 = vpop.f32.mrb[0].mxu0
      %v6202 = vadd.f32 0.0, %v6201
      %v6203 = vpop.f32.mrb[0].mxu0
      %6204 = vdwg.mxu0
      %v6205 = vadd.f32 %v6148, %v6199
      %v6206 = vadd.f32 %v6149, %v6202
      %s6207 = scalar_lea.vmem %s10, 56
      %v6208 = vld [vmem:[%s6207] sm:$0xf]
      %v6209 = vld [vmem:[%s6207 + $0x4] sm:$0xf]
      %v6212 = vunpack.c.l.b16 %v6208
      %v6213 = vunpack.c.l.b16 %v6209
      %v6214 = vpack.c.b16 %v6213, %v6212
      %v6216 = vsel %vm5814, %v6214, 0
      %v6219 = vsel %vm5818, %v5798, 0
      %6221 = vmatprep.subr.bf16.mxu0 0
      %6222 = vmatpush1.bf16.msra.mxu0 %v6219
      %6223 = vmatprep.subr.bf16.mxu0 0
      %6224 = vmatpush1.bf16.msra.mxu0 0
      %6225 = vmatprep.subr.bf16.mxu0 0
      %6226 = vmatpush1.bf16.msra.mxu0 0
      %6227 = vmatprep.subr.bf16.mxu0 0
      %6228 = vmatpush1.bf16.msra.mxu0 0
      %6229 = vmatprep.subr.bf16.mxu0 0
      %6230 = vmatpush1.bf16.msra.mxu0 0
      %6231 = vmatprep.subr.bf16.mxu0 0
      %6232 = vmatpush1.bf16.msra.mxu0 0
      %6233 = vmatprep.subr.bf16.mxu0 0
      %6234 = vmatpush1.bf16.msra.mxu0 0
      %6235 = vmatprep.subr.bf16.mxu0 0
      %6236 = vmatpush1.bf16.msra.mxu0 0
      %6237 = vmatprep.subr.bf16.mxu0 0
      %6238 = vmatpush1.bf16.msra.mxu0 0
      %6239 = vmatprep.subr.bf16.mxu0 0
      %6240 = vmatpush1.bf16.msra.mxu0 0
      %6241 = vmatprep.subr.bf16.mxu0 0
      %6242 = vmatpush1.bf16.msra.mxu0 0
      %6243 = vmatprep.subr.bf16.mxu0 0
      %6244 = vmatpush1.bf16.msra.mxu0 0
      %6245 = vmatprep.subr.bf16.mxu0 0
      %6246 = vmatpush1.bf16.msra.mxu0 0
      %6247 = vmatprep.subr.bf16.mxu0 0
      %6248 = vmatpush1.bf16.msra.mxu0 0
      %6249 = vmatprep.subr.bf16.mxu0 0
      %6250 = vmatpush1.bf16.msra.mxu0 0
      %6251 = vmatprep.subr.bf16.mxu0 0
      %6252 = vmatpush1.bf16.msra.mxu0 0
      %6253 = vmatprep.mubr.bf16.mxu0 0
      %6254 = vmatmul.mubr.bf16.gmra.mrb[0].mxu0 %v6216
      %v6255 = vpop.f32.mrb[0].mxu0
      %v6256 = vadd.f32 0.0, %v6255
      %v6257 = vpop.f32.mrb[0].mxu0
      %v6258 = vpop.f32.mrb[0].mxu0
      %v6259 = vadd.f32 0.0, %v6258
      %v6260 = vpop.f32.mrb[0].mxu0
      %6261 = vdwg.mxu0
      %v6262 = vadd.f32 %v6205, %v6256
      %v6263 = vadd.f32 %v6206, %v6259
      %s6264 = scalar_lea.vmem %s10, 64
      %v6265 = vld [vmem:[%s6264] sm:$0xf]
      %v6266 = vld [vmem:[%s6264 + $0x4] sm:$0xf]
      %v6269 = vunpack.c.l.b16 %v6265
      %v6270 = vunpack.c.l.b16 %v6266
      %v6271 = vpack.c.b16 %v6270, %v6269
      %v6273 = vsel %vm5814, %v6271, 0
      %v6276 = vsel %vm5818, %v5799, 0
      %6278 = vmatprep.subr.bf16.mxu0 0
      %6279 = vmatpush1.bf16.msra.mxu0 %v6276
      %6280 = vmatprep.subr.bf16.mxu0 0
      %6281 = vmatpush1.bf16.msra.mxu0 0
      %6282 = vmatprep.subr.bf16.mxu0 0
      %6283 = vmatpush1.bf16.msra.mxu0 0
      %6284 = vmatprep.subr.bf16.mxu0 0
      %6285 = vmatpush1.bf16.msra.mxu0 0
      %6286 = vmatprep.subr.bf16.mxu0 0
      %6287 = vmatpush1.bf16.msra.mxu0 0
      %6288 = vmatprep.subr.bf16.mxu0 0
      %6289 = vmatpush1.bf16.msra.mxu0 0
      %6290 = vmatprep.subr.bf16.mxu0 0
      %6291 = vmatpush1.bf16.msra.mxu0 0
      %6292 = vmatprep.subr.bf16.mxu0 0
      %6293 = vmatpush1.bf16.msra.mxu0 0
      %6294 = vmatprep.subr.bf16.mxu0 0
      %6295 = vmatpush1.bf16.msra.mxu0 0
      %6296 = vmatprep.subr.bf16.mxu0 0
      %6297 = vmatpush1.bf16.msra.mxu0 0
      %6298 = vmatprep.subr.bf16.mxu0 0
      %6299 = vmatpush1.bf16.msra.mxu0 0
      %6300 = vmatprep.subr.bf16.mxu0 0
      %6301 = vmatpush1.bf16.msra.mxu0 0
      %6302 = vmatprep.subr.bf16.mxu0 0
      %6303 = vmatpush1.bf16.msra.mxu0 0
      %6304 = vmatprep.subr.bf16.mxu0 0
      %6305 = vmatpush1.bf16.msra.mxu0 0
      %6306 = vmatprep.subr.bf16.mxu0 0
      %6307 = vmatpush1.bf16.msra.mxu0 0
      %6308 = vmatprep.subr.bf16.mxu0 0
      %6309 = vmatpush1.bf16.msra.mxu0 0
      %6310 = vmatprep.mubr.bf16.mxu0 0
      %6311 = vmatmul.mubr.bf16.gmra.mrb[0].mxu0 %v6273
      %v6312 = vpop.f32.mrb[0].mxu0
      %v6313 = vadd.f32 0.0, %v6312
      %v6314 = vpop.f32.mrb[0].mxu0
      %v6315 = vpop.f32.mrb[0].mxu0
      %v6316 = vadd.f32 0.0, %v6315
      %v6317 = vpop.f32.mrb[0].mxu0
      %6318 = vdwg.mxu0
      %v6319 = vadd.f32 %v6262, %v6313
      %v6320 = vadd.f32 %v6263, %v6316
      %v6321 = vmax.f32 %v6319, 0.0
      %v6322 = vmax.f32 %v6320, 0.0
      %6323 = vxpose.xlu0.b32.start [1/16] %v6321, 128
      %6324 = vxpose.xlu0.b32.cont [2/16] %v6322, 128
      %6325 = vxpose.xlu0.b32.cont [3/16] 0.0, 128
      %6326 = vxpose.xlu0.b32.cont [4/16] 0.0, 128
      %6327 = vxpose.xlu0.b32.cont [5/16] 0.0, 128
      %6328 = vxpose.xlu0.b32.cont [6/16] 0.0, 128
      %6329 = vxpose.xlu0.b32.cont [7/16] 0.0, 128
      %6330 = vxpose.xlu0.b32.cont [8/16] 0.0, 128
      %6331 = vxpose.xlu0.b32.cont [9/16] 0.0, 128
      %6332 = vxpose.xlu0.b32.cont [10/16] 0.0, 128
      %6333 = vxpose.xlu0.b32.cont [11/16] 0.0, 128
      %6334 = vxpose.xlu0.b32.cont [12/16] 0.0, 128
      %6335 = vxpose.xlu0.b32.cont [13/16] 0.0, 128
      %6336 = vxpose.xlu0.b32.cont [14/16] 0.0, 128
      %6337 = vxpose.xlu0.b32.cont [15/16] 0.0, 128
      %6338 = vxpose.xlu0.b32.end [16/16] 0.0, 128
      %v6339 = vpop.trf.xlu0
      %v6340 = vpop.trf.xlu0
      %v6341 = vpop.trf.xlu0
      %v6342 = vpop.trf.xlu0
      %v6343 = vpop.trf.xlu0
      %v6344 = vpop.trf.xlu0
      %v6345 = vpop.trf.xlu0
      %v6346 = vpop.trf.xlu0
      %v6347 = vpop.trf.xlu0
      %v6348 = vpop.trf.xlu0
      %v6349 = vpop.trf.xlu0
      %v6350 = vpop.trf.xlu0
      %v6351 = vpop.trf.xlu0
      %v6352 = vpop.trf.xlu0
      %v6353 = vpop.trf.xlu0
      %v6354 = vpop.trf.xlu0
      %v6355 = vpack.c.bf16 %v6340, %v6339
      %v6356 = vpack.c.bf16 %v6342, %v6341
      %v6357 = vpack.c.bf16 %v6344, %v6343
      %v6358 = vpack.c.bf16 %v6346, %v6345
      %v6359 = vpack.c.bf16 %v6348, %v6347
      %v6360 = vpack.c.bf16 %v6350, %v6349
      %v6361 = vpack.c.bf16 %v6352, %v6351
      %v6362 = vpack.c.bf16 %v6354, %v6353
      %v6363 = vld [vmem:[%s14] sm:$0xf]
      %v6364 = vld [vmem:[%s14 + $0x4] sm:$0xf]
      %v6365 = vld [vmem:[%s14 + $0x8] sm:$0xf]
      %v6366 = vld [vmem:[%s14 + $0xc] sm:$0xf]
      %v6367 = vld [vmem:[%s14 + $0x10] sm:$0xf]
      %v6368 = vld [vmem:[%s14 + $0x14] sm:$0xf]
      %v6369 = vld [vmem:[%s14 + $0x18] sm:$0xf]
      %v6370 = vld [vmem:[%s14 + $0x1c] sm:$0xf]
      %v6371 = vld [vmem:[%s14 + $0x20] sm:$0xf]
      %v6372 = vld [vmem:[%s14 + $0x24] sm:$0xf]
      %v6373 = vld [vmem:[%s14 + $0x28] sm:$0xf]
      %v6374 = vld [vmem:[%s14 + $0x2c] sm:$0xf]
      %v6375 = vld [vmem:[%s14 + $0x30] sm:$0xf]
      %v6376 = vld [vmem:[%s14 + $0x34] sm:$0xf]
      %v6377 = vld [vmem:[%s14 + $0x38] sm:$0xf]
      %v6378 = vld [vmem:[%s14 + $0x3c] sm:$0xf]
      %v6379 = vld [vmem:[%s14 + $0x40] sm:$0xf]
      %v6380 = vld [vmem:[%s14 + $0x44] sm:$0xf]
      %v6381 = vld [vmem:[%s14 + $0x48] sm:$0xf]
      %v6382 = vld [vmem:[%s14 + $0x4c] sm:$0xf]
      %v6383 = vld [vmem:[%s14 + $0x50] sm:$0xf]
      %v6384 = vld [vmem:[%s14 + $0x54] sm:$0xf]
      %v6385 = vld [vmem:[%s14 + $0x58] sm:$0xf]
      %v6386 = vld [vmem:[%s14 + $0x5c] sm:$0xf]
      %v6387 = vld [vmem:[%s14 + $0x60] sm:$0xf]
      %v6388 = vld [vmem:[%s14 + $0x64] sm:$0xf]
      %v6389 = vld [vmem:[%s14 + $0x68] sm:$0xf]
      %v6390 = vld [vmem:[%s14 + $0x6c] sm:$0xf]
      %v6391 = vld [vmem:[%s14 + $0x70] sm:$0xf]
      %v6392 = vld [vmem:[%s14 + $0x74] sm:$0xf]
      %v6393 = vld [vmem:[%s14 + $0x78] sm:$0xf]
      %v6394 = vld [vmem:[%s14 + $0x7c] sm:$0xf]
      %v6395 = vld [vmem:[%s14 + $0x80] sm:$0xf]
      %v6396 = vld [vmem:[%s14 + $0x84] sm:$0xf]
      %v6397 = vld [vmem:[%s14 + $0x88] sm:$0xf]
      %v6398 = vld [vmem:[%s14 + $0x8c] sm:$0xf]
      %v6399 = vld [vmem:[%s14 + $0x90] sm:$0xf]
      %v6400 = vld [vmem:[%s14 + $0x94] sm:$0xf]
      %v6401 = vld [vmem:[%s14 + $0x98] sm:$0xf]
      %v6402 = vld [vmem:[%s14 + $0x9c] sm:$0xf]
      %v6403 = vld [vmem:[%s14 + $0xa0] sm:$0xf]
      %v6404 = vld [vmem:[%s14 + $0xa4] sm:$0xf]
      %v6405 = vld [vmem:[%s14 + $0xa8] sm:$0xf]
      %v6406 = vld [vmem:[%s14 + $0xac] sm:$0xf]
      %v6407 = vld [vmem:[%s14 + $0xb0] sm:$0xf]
      %v6408 = vld [vmem:[%s14 + $0xb4] sm:$0xf]
      %v6409 = vld [vmem:[%s14 + $0xb8] sm:$0xf]
      %v6410 = vld [vmem:[%s14 + $0xbc] sm:$0xf]
      %v6411 = vld [vmem:[%s14 + $0xc0] sm:$0xf]
      %v6412 = vld [vmem:[%s14 + $0xc4] sm:$0xf]
      %v6413 = vld [vmem:[%s14 + $0xc8] sm:$0xf]
      %v6414 = vld [vmem:[%s14 + $0xcc] sm:$0xf]
      %v6415 = vld [vmem:[%s14 + $0xd0] sm:$0xf]
      %v6416 = vld [vmem:[%s14 + $0xd4] sm:$0xf]
      %v6417 = vld [vmem:[%s14 + $0xd8] sm:$0xf]
      %v6418 = vld [vmem:[%s14 + $0xdc] sm:$0xf]
      %v6419 = vld [vmem:[%s14 + $0xe0] sm:$0xf]
      %v6420 = vld [vmem:[%s14 + $0xe4] sm:$0xf]
      %v6421 = vld [vmem:[%s14 + $0xe8] sm:$0xf]
      %v6422 = vld [vmem:[%s14 + $0xec] sm:$0xf]
      %v6423 = vld [vmem:[%s14 + $0xf0] sm:$0xf]
      %v6424 = vld [vmem:[%s14 + $0xf4] sm:$0xf]
      %v6425 = vld [vmem:[%s14 + $0xf8] sm:$0xf]
      %v6426 = vld [vmem:[%s14 + $0xfc] sm:$0xf]
      %v6427 = vld [vmem:[%s14 + $0x100] sm:$0xf]
      %v6428 = vld [vmem:[%s14 + $0x104] sm:$0xf]
      %v6429 = vld [vmem:[%s14 + $0x108] sm:$0xf]
      %v6430 = vld [vmem:[%s14 + $0x10c] sm:$0xf]
      %v6431 = vld [vmem:[%s14 + $0x110] sm:$0xf]
      %v6432 = vld [vmem:[%s14 + $0x114] sm:$0xf]
      %v6433 = vld [vmem:[%s14 + $0x118] sm:$0xf]
      %v6434 = vld [vmem:[%s14 + $0x11c] sm:$0xf]
      %v6507 = vunpack.c.l.b16 %v6363
      %v6508 = vunpack.c.l.b16 %v6364
      %v6509 = vunpack.c.l.b16 %v6365
      %v6510 = vunpack.c.l.b16 %v6366
      %v6511 = vunpack.c.l.b16 %v6367
      %v6512 = vunpack.c.l.b16 %v6368
      %v6513 = vunpack.c.l.b16 %v6369
      %v6514 = vunpack.c.l.b16 %v6370
      %v6515 = vunpack.c.l.b16 %v6371
      %v6516 = vunpack.c.l.b16 %v6372
      %v6517 = vunpack.c.l.b16 %v6373
      %v6518 = vunpack.c.l.b16 %v6374
      %v6519 = vunpack.c.l.b16 %v6375
      %v6520 = vunpack.c.l.b16 %v6376
      %v6521 = vunpack.c.l.b16 %v6377
      %v6522 = vunpack.c.l.b16 %v6378
      %v6523 = vunpack.c.l.b16 %v6379
      %v6524 = vunpack.c.l.b16 %v6380
      %v6525 = vunpack.c.l.b16 %v6381
      %v6526 = vunpack.c.l.b16 %v6382
      %v6527 = vunpack.c.l.b16 %v6383
      %v6528 = vunpack.c.l.b16 %v6384
      %v6529 = vunpack.c.l.b16 %v6385
      %v6530 = vunpack.c.l.b16 %v6386
      %v6531 = vunpack.c.l.b16 %v6387
      %v6532 = vunpack.c.l.b16 %v6388
      %v6533 = vunpack.c.l.b16 %v6389
      %v6534 = vunpack.c.l.b16 %v6390
      %v6535 = vunpack.c.l.b16 %v6391
      %v6536 = vunpack.c.l.b16 %v6392
      %v6537 = vunpack.c.l.b16 %v6393
      %v6538 = vunpack.c.l.b16 %v6394
      %v6539 = vunpack.c.l.b16 %v6395
      %v6540 = vunpack.c.l.b16 %v6396
      %v6541 = vunpack.c.l.b16 %v6397
      %v6542 = vunpack.c.l.b16 %v6398
      %v6543 = vunpack.c.l.b16 %v6399
      %v6544 = vunpack.c.l.b16 %v6400
      %v6545 = vunpack.c.l.b16 %v6401
      %v6546 = vunpack.c.l.b16 %v6402
      %v6547 = vunpack.c.l.b16 %v6403
      %v6548 = vunpack.c.l.b16 %v6404
      %v6549 = vunpack.c.l.b16 %v6405
      %v6550 = vunpack.c.l.b16 %v6406
      %v6551 = vunpack.c.l.b16 %v6407
      %v6552 = vunpack.c.l.b16 %v6408
      %v6553 = vunpack.c.l.b16 %v6409
      %v6554 = vunpack.c.l.b16 %v6410
      %v6555 = vunpack.c.l.b16 %v6411
      %v6556 = vunpack.c.l.b16 %v6412
      %v6557 = vunpack.c.l.b16 %v6413
      %v6558 = vunpack.c.l.b16 %v6414
      %v6559 = vunpack.c.l.b16 %v6415
      %v6560 = vunpack.c.l.b16 %v6416
      %v6561 = vunpack.c.l.b16 %v6417
      %v6562 = vunpack.c.l.b16 %v6418
      %v6563 = vunpack.c.l.b16 %v6419
      %v6564 = vunpack.c.l.b16 %v6420
      %v6565 = vunpack.c.l.b16 %v6421
      %v6566 = vunpack.c.l.b16 %v6422
      %v6567 = vunpack.c.l.b16 %v6423
      %v6568 = vunpack.c.l.b16 %v6424
      %v6569 = vunpack.c.l.b16 %v6425
      %v6570 = vunpack.c.l.b16 %v6426
      %v6571 = vunpack.c.l.b16 %v6427
      %v6572 = vunpack.c.l.b16 %v6428
      %v6573 = vunpack.c.l.b16 %v6429
      %v6574 = vunpack.c.l.b16 %v6430
      %v6575 = vunpack.c.l.b16 %v6431
      %v6576 = vunpack.c.l.b16 %v6432
      %v6577 = vunpack.c.l.b16 %v6433
      %v6578 = vunpack.c.l.b16 %v6434
      %v6579 = vpack.c.b16 %v6508, %v6507
      %v6580 = vpack.c.b16 %v6510, %v6509
      %v6581 = vpack.c.b16 %v6512, %v6511
      %v6582 = vpack.c.b16 %v6514, %v6513
      %v6583 = vpack.c.b16 %v6516, %v6515
      %v6584 = vpack.c.b16 %v6518, %v6517
      %v6585 = vpack.c.b16 %v6520, %v6519
      %v6586 = vpack.c.b16 %v6522, %v6521
      %v6587 = vpack.c.b16 %v6524, %v6523
      %v6588 = vpack.c.b16 %v6526, %v6525
      %v6589 = vpack.c.b16 %v6528, %v6527
      %v6590 = vpack.c.b16 %v6530, %v6529
      %v6591 = vpack.c.b16 %v6532, %v6531
      %v6592 = vpack.c.b16 %v6534, %v6533
      %v6593 = vpack.c.b16 %v6536, %v6535
      %v6594 = vpack.c.b16 %v6538, %v6537
      %v6595 = vpack.c.b16 %v6540, %v6539
      %v6596 = vpack.c.b16 %v6542, %v6541
      %v6597 = vpack.c.b16 %v6544, %v6543
      %v6598 = vpack.c.b16 %v6546, %v6545
      %v6599 = vpack.c.b16 %v6548, %v6547
      %v6600 = vpack.c.b16 %v6550, %v6549
      %v6601 = vpack.c.b16 %v6552, %v6551
      %v6602 = vpack.c.b16 %v6554, %v6553
      %v6603 = vpack.c.b16 %v6556, %v6555
      %v6604 = vpack.c.b16 %v6558, %v6557
      %v6605 = vpack.c.b16 %v6560, %v6559
      %v6606 = vpack.c.b16 %v6562, %v6561
      %v6607 = vpack.c.b16 %v6564, %v6563
      %v6608 = vpack.c.b16 %v6566, %v6565
      %v6609 = vpack.c.b16 %v6568, %v6567
      %v6610 = vpack.c.b16 %v6570, %v6569
      %v6611 = vpack.c.b16 %v6572, %v6571
      %v6612 = vpack.c.b16 %v6574, %v6573
      %v6613 = vpack.c.b16 %v6576, %v6575
      %v6614 = vpack.c.b16 %v6578, %v6577
      %6651 = vmatprep.subr.bf16.mxu0 0
      %6652 = vmatpush1.bf16.msra.mxu0 %v6355
      %6653 = vmatprep.subr.bf16.mxu0 0
      %6654 = vmatpush1.bf16.msra.mxu0 %v6356
      %6655 = vmatprep.subr.bf16.mxu0 0
      %6656 = vmatpush1.bf16.msra.mxu0 %v6357
      %6657 = vmatprep.subr.bf16.mxu0 0
      %6658 = vmatpush1.bf16.msra.mxu0 %v6358
      %6659 = vmatprep.subr.bf16.mxu0 0
      %6660 = vmatpush1.bf16.msra.mxu0 %v6359
      %6661 = vmatprep.subr.bf16.mxu0 0
      %6662 = vmatpush1.bf16.msra.mxu0 %v6360
      %6663 = vmatprep.subr.bf16.mxu0 0
      %6664 = vmatpush1.bf16.msra.mxu0 %v6361
      %6665 = vmatprep.subr.bf16.mxu0 0
      %6666 = vmatpush1.bf16.msra.mxu0 %v6362
      %6667 = vmatprep.subr.bf16.mxu0 0
      %6668 = vmatpush1.bf16.msra.mxu0 0
      %6669 = vmatprep.subr.bf16.mxu0 0
      %6670 = vmatpush1.bf16.msra.mxu0 0
      %6671 = vmatprep.subr.bf16.mxu0 0
      %6672 = vmatpush1.bf16.msra.mxu0 0
      %6673 = vmatprep.subr.bf16.mxu0 0
      %6674 = vmatpush1.bf16.msra.mxu0 0
      %6675 = vmatprep.subr.bf16.mxu0 0
      %6676 = vmatpush1.bf16.msra.mxu0 0
      %6677 = vmatprep.subr.bf16.mxu0 0
      %6678 = vmatpush1.bf16.msra.mxu0 0
      %6679 = vmatprep.subr.bf16.mxu0 0
      %6680 = vmatpush1.bf16.msra.mxu0 0
      %6681 = vmatprep.subr.bf16.mxu0 0
      %6682 = vmatpush1.bf16.msra.mxu0 0
      %6683 = vmatprep.mubr.bf16.mxu0 0
      %6684 = vmatmul.mubr.bf16.gmra.mrb[0].mxu0 %v6579
      %v6685 = vpop.f32.mrb[0].mxu0
      %v6686 = vadd.f32 0.0, %v6685
      %v6687 = vpop.f32.mrb[0].mxu0
      %v6688 = vpop.f32.mrb[0].mxu0
      %v6689 = vadd.f32 0.0, %v6688
      %v6690 = vpop.f32.mrb[0].mxu0
      %6691 = vmatprep.mubr.bf16.mxu0 0
      %6692 = vmatmul.mubr.bf16.gmra.mrb[0].mxu0 %v6580
      %v6693 = vpop.f32.mrb[0].mxu0
      %v6694 = vadd.f32 0.0, %v6693
      %v6695 = vpop.f32.mrb[0].mxu0
      %v6696 = vpop.f32.mrb[0].mxu0
      %v6697 = vadd.f32 0.0, %v6696
      %v6698 = vpop.f32.mrb[0].mxu0
      %6699 = vmatprep.mubr.bf16.mxu0 0
      %6700 = vmatmul.mubr.bf16.gmra.mrb[0].mxu0 %v6581
      %v6701 = vpop.f32.mrb[0].mxu0
      %v6702 = vadd.f32 0.0, %v6701
      %v6703 = vpop.f32.mrb[0].mxu0
      %v6704 = vpop.f32.mrb[0].mxu0
      %v6705 = vadd.f32 0.0, %v6704
      %v6706 = vpop.f32.mrb[0].mxu0
      %6707 = vmatprep.mubr.bf16.mxu0 0
      %6708 = vmatmul.mubr.bf16.gmra.mrb[0].mxu0 %v6582
      %v6709 = vpop.f32.mrb[0].mxu0
      %v6710 = vadd.f32 0.0, %v6709
      %v6711 = vpop.f32.mrb[0].mxu0
      %v6712 = vpop.f32.mrb[0].mxu0
      %v6713 = vadd.f32 0.0, %v6712
      %v6714 = vpop.f32.mrb[0].mxu0
      %6715 = vmatprep.mubr.bf16.mxu0 0
      %6716 = vmatmul.mubr.bf16.gmra.mrb[0].mxu0 %v6583
      %v6717 = vpop.f32.mrb[0].mxu0
      %v6718 = vadd.f32 0.0, %v6717
      %v6719 = vpop.f32.mrb[0].mxu0
      %v6720 = vpop.f32.mrb[0].mxu0
      %v6721 = vadd.f32 0.0, %v6720
      %v6722 = vpop.f32.mrb[0].mxu0
      %6723 = vmatprep.mubr.bf16.mxu0 0
      %6724 = vmatmul.mubr.bf16.gmra.mrb[0].mxu0 %v6584
      %v6725 = vpop.f32.mrb[0].mxu0
      %v6726 = vadd.f32 0.0, %v6725
      %v6727 = vpop.f32.mrb[0].mxu0
      %v6728 = vpop.f32.mrb[0].mxu0
      %v6729 = vadd.f32 0.0, %v6728
      %v6730 = vpop.f32.mrb[0].mxu0
      %6731 = vmatprep.mubr.bf16.mxu0 0
      %6732 = vmatmul.mubr.bf16.gmra.mrb[0].mxu0 %v6585
      %v6733 = vpop.f32.mrb[0].mxu0
      %v6734 = vadd.f32 0.0, %v6733
      %v6735 = vpop.f32.mrb[0].mxu0
      %v6736 = vpop.f32.mrb[0].mxu0
      %v6737 = vadd.f32 0.0, %v6736
      %v6738 = vpop.f32.mrb[0].mxu0
      %6739 = vmatprep.mubr.bf16.mxu0 0
      %6740 = vmatmul.mubr.bf16.gmra.mrb[0].mxu0 %v6586
      %v6741 = vpop.f32.mrb[0].mxu0
      %v6742 = vadd.f32 0.0, %v6741
      %v6743 = vpop.f32.mrb[0].mxu0
      %v6744 = vpop.f32.mrb[0].mxu0
      %v6745 = vadd.f32 0.0, %v6744
      %v6746 = vpop.f32.mrb[0].mxu0
      %6747 = vmatprep.mubr.bf16.mxu0 0
      %6748 = vmatmul.mubr.bf16.gmra.mrb[0].mxu0 %v6587
      %v6749 = vpop.f32.mrb[0].mxu0
      %v6750 = vadd.f32 0.0, %v6749
      %v6751 = vpop.f32.mrb[0].mxu0
      %v6752 = vpop.f32.mrb[0].mxu0
      %v6753 = vadd.f32 0.0, %v6752
      %v6754 = vpop.f32.mrb[0].mxu0
      %6755 = vmatprep.mubr.bf16.mxu0 0
      %6756 = vmatmul.mubr.bf16.gmra.mrb[0].mxu0 %v6588
      %v6757 = vpop.f32.mrb[0].mxu0
      %v6758 = vadd.f32 0.0, %v6757
      %v6759 = vpop.f32.mrb[0].mxu0
      %v6760 = vpop.f32.mrb[0].mxu0
      %v6761 = vadd.f32 0.0, %v6760
      %v6762 = vpop.f32.mrb[0].mxu0
      %6763 = vmatprep.mubr.bf16.mxu0 0
      %6764 = vmatmul.mubr.bf16.gmra.mrb[0].mxu0 %v6589
      %v6765 = vpop.f32.mrb[0].mxu0
      %v6766 = vadd.f32 0.0, %v6765
      %v6767 = vpop.f32.mrb[0].mxu0
      %v6768 = vpop.f32.mrb[0].mxu0
      %v6769 = vadd.f32 0.0, %v6768
      %v6770 = vpop.f32.mrb[0].mxu0
      %6771 = vmatprep.mubr.bf16.mxu0 0
      %6772 = vmatmul.mubr.bf16.gmra.mrb[0].mxu0 %v6590
      %v6773 = vpop.f32.mrb[0].mxu0
      %v6774 = vadd.f32 0.0, %v6773
      %v6775 = vpop.f32.mrb[0].mxu0
      %v6776 = vpop.f32.mrb[0].mxu0
      %v6777 = vadd.f32 0.0, %v6776
      %v6778 = vpop.f32.mrb[0].mxu0
      %6779 = vmatprep.mubr.bf16.mxu0 0
      %6780 = vmatmul.mubr.bf16.gmra.mrb[0].mxu0 %v6591
      %v6781 = vpop.f32.mrb[0].mxu0
      %v6782 = vadd.f32 0.0, %v6781
      %v6783 = vpop.f32.mrb[0].mxu0
      %v6784 = vpop.f32.mrb[0].mxu0
      %v6785 = vadd.f32 0.0, %v6784
      %v6786 = vpop.f32.mrb[0].mxu0
      %6787 = vmatprep.mubr.bf16.mxu0 0
      %6788 = vmatmul.mubr.bf16.gmra.mrb[0].mxu0 %v6592
      %v6789 = vpop.f32.mrb[0].mxu0
      %v6790 = vadd.f32 0.0, %v6789
      %v6791 = vpop.f32.mrb[0].mxu0
      %v6792 = vpop.f32.mrb[0].mxu0
      %v6793 = vadd.f32 0.0, %v6792
      %v6794 = vpop.f32.mrb[0].mxu0
      %6795 = vmatprep.mubr.bf16.mxu0 0
      %6796 = vmatmul.mubr.bf16.gmra.mrb[0].mxu0 %v6593
      %v6797 = vpop.f32.mrb[0].mxu0
      %v6798 = vadd.f32 0.0, %v6797
      %v6799 = vpop.f32.mrb[0].mxu0
      %v6800 = vpop.f32.mrb[0].mxu0
      %v6801 = vadd.f32 0.0, %v6800
      %v6802 = vpop.f32.mrb[0].mxu0
      %6803 = vmatprep.mubr.bf16.mxu0 0
      %6804 = vmatmul.mubr.bf16.gmra.mrb[0].mxu0 %v6594
      %v6805 = vpop.f32.mrb[0].mxu0
      %v6806 = vadd.f32 0.0, %v6805
      %v6807 = vpop.f32.mrb[0].mxu0
      %v6808 = vpop.f32.mrb[0].mxu0
      %v6809 = vadd.f32 0.0, %v6808
      %v6810 = vpop.f32.mrb[0].mxu0
      %6811 = vmatprep.mubr.bf16.mxu0 0
      %6812 = vmatmul.mubr.bf16.gmra.mrb[0].mxu0 %v6595
      %v6813 = vpop.f32.mrb[0].mxu0
      %v6814 = vadd.f32 0.0, %v6813
      %v6815 = vpop.f32.mrb[0].mxu0
      %v6816 = vpop.f32.mrb[0].mxu0
      %v6817 = vadd.f32 0.0, %v6816
      %v6818 = vpop.f32.mrb[0].mxu0
      %6819 = vmatprep.mubr.bf16.mxu0 0
      %6820 = vmatmul.mubr.bf16.gmra.mrb[0].mxu0 %v6596
      %v6821 = vpop.f32.mrb[0].mxu0
      %v6822 = vadd.f32 0.0, %v6821
      %v6823 = vpop.f32.mrb[0].mxu0
      %v6824 = vpop.f32.mrb[0].mxu0
      %v6825 = vadd.f32 0.0, %v6824
      %v6826 = vpop.f32.mrb[0].mxu0
      %6827 = vmatprep.mubr.bf16.mxu0 0
      %6828 = vmatmul.mubr.bf16.gmra.mrb[0].mxu0 %v6597
      %v6829 = vpop.f32.mrb[0].mxu0
      %v6830 = vadd.f32 0.0, %v6829
      %v6831 = vpop.f32.mrb[0].mxu0
      %v6832 = vpop.f32.mrb[0].mxu0
      %v6833 = vadd.f32 0.0, %v6832
      %v6834 = vpop.f32.mrb[0].mxu0
      %6835 = vmatprep.mubr.bf16.mxu0 0
      %6836 = vmatmul.mubr.bf16.gmra.mrb[0].mxu0 %v6598
      %v6837 = vpop.f32.mrb[0].mxu0
      %v6838 = vadd.f32 0.0, %v6837
      %v6839 = vpop.f32.mrb[0].mxu0
      %v6840 = vpop.f32.mrb[0].mxu0
      %v6841 = vadd.f32 0.0, %v6840
      %v6842 = vpop.f32.mrb[0].mxu0
      %6843 = vmatprep.mubr.bf16.mxu0 0
      %6844 = vmatmul.mubr.bf16.gmra.mrb[0].mxu0 %v6599
      %v6845 = vpop.f32.mrb[0].mxu0
      %v6846 = vadd.f32 0.0, %v6845
      %v6847 = vpop.f32.mrb[0].mxu0
      %v6848 = vpop.f32.mrb[0].mxu0
      %v6849 = vadd.f32 0.0, %v6848
      %v6850 = vpop.f32.mrb[0].mxu0
      %6851 = vmatprep.mubr.bf16.mxu0 0
      %6852 = vmatmul.mubr.bf16.gmra.mrb[0].mxu0 %v6600
      %v6853 = vpop.f32.mrb[0].mxu0
      %v6854 = vadd.f32 0.0, %v6853
      %v6855 = vpop.f32.mrb[0].mxu0
      %v6856 = vpop.f32.mrb[0].mxu0
      %v6857 = vadd.f32 0.0, %v6856
      %v6858 = vpop.f32.mrb[0].mxu0
      %6859 = vmatprep.mubr.bf16.mxu0 0
      %6860 = vmatmul.mubr.bf16.gmra.mrb[0].mxu0 %v6601
      %v6861 = vpop.f32.mrb[0].mxu0
      %v6862 = vadd.f32 0.0, %v6861
      %v6863 = vpop.f32.mrb[0].mxu0
      %v6864 = vpop.f32.mrb[0].mxu0
      %v6865 = vadd.f32 0.0, %v6864
      %v6866 = vpop.f32.mrb[0].mxu0
      %6867 = vmatprep.mubr.bf16.mxu0 0
      %6868 = vmatmul.mubr.bf16.gmra.mrb[0].mxu0 %v6602
      %v6869 = vpop.f32.mrb[0].mxu0
      %v6870 = vadd.f32 0.0, %v6869
      %v6871 = vpop.f32.mrb[0].mxu0
      %v6872 = vpop.f32.mrb[0].mxu0
      %v6873 = vadd.f32 0.0, %v6872
      %v6874 = vpop.f32.mrb[0].mxu0
      %6875 = vmatprep.mubr.bf16.mxu0 0
      %6876 = vmatmul.mubr.bf16.gmra.mrb[0].mxu0 %v6603
      %v6877 = vpop.f32.mrb[0].mxu0
      %v6878 = vadd.f32 0.0, %v6877
      %v6879 = vpop.f32.mrb[0].mxu0
      %v6880 = vpop.f32.mrb[0].mxu0
      %v6881 = vadd.f32 0.0, %v6880
      %v6882 = vpop.f32.mrb[0].mxu0
      %6883 = vmatprep.mubr.bf16.mxu0 0
      %6884 = vmatmul.mubr.bf16.gmra.mrb[0].mxu0 %v6604
      %v6885 = vpop.f32.mrb[0].mxu0
      %v6886 = vadd.f32 0.0, %v6885
      %v6887 = vpop.f32.mrb[0].mxu0
      %v6888 = vpop.f32.mrb[0].mxu0
      %v6889 = vadd.f32 0.0, %v6888
      %v6890 = vpop.f32.mrb[0].mxu0
      %6891 = vmatprep.mubr.bf16.mxu0 0
      %6892 = vmatmul.mubr.bf16.gmra.mrb[0].mxu0 %v6605
      %v6893 = vpop.f32.mrb[0].mxu0
      %v6894 = vadd.f32 0.0, %v6893
      %v6895 = vpop.f32.mrb[0].mxu0
      %v6896 = vpop.f32.mrb[0].mxu0
      %v6897 = vadd.f32 0.0, %v6896
      %v6898 = vpop.f32.mrb[0].mxu0
      %6899 = vmatprep.mubr.bf16.mxu0 0
      %6900 = vmatmul.mubr.bf16.gmra.mrb[0].mxu0 %v6606
      %v6901 = vpop.f32.mrb[0].mxu0
      %v6902 = vadd.f32 0.0, %v6901
      %v6903 = vpop.f32.mrb[0].mxu0
      %v6904 = vpop.f32.mrb[0].mxu0
      %v6905 = vadd.f32 0.0, %v6904
      %v6906 = vpop.f32.mrb[0].mxu0
      %6907 = vmatprep.mubr.bf16.mxu0 0
      %6908 = vmatmul.mubr.bf16.gmra.mrb[0].mxu0 %v6607
      %v6909 = vpop.f32.mrb[0].mxu0
      %v6910 = vadd.f32 0.0, %v6909
      %v6911 = vpop.f32.mrb[0].mxu0
      %v6912 = vpop.f32.mrb[0].mxu0
      %v6913 = vadd.f32 0.0, %v6912
      %v6914 = vpop.f32.mrb[0].mxu0
      %6915 = vmatprep.mubr.bf16.mxu0 0
      %6916 = vmatmul.mubr.bf16.gmra.mrb[0].mxu0 %v6608
      %v6917 = vpop.f32.mrb[0].mxu0
      %v6918 = vadd.f32 0.0, %v6917
      %v6919 = vpop.f32.mrb[0].mxu0
      %v6920 = vpop.f32.mrb[0].mxu0
      %v6921 = vadd.f32 0.0, %v6920
      %v6922 = vpop.f32.mrb[0].mxu0
      %6923 = vmatprep.mubr.bf16.mxu0 0
      %6924 = vmatmul.mubr.bf16.gmra.mrb[0].mxu0 %v6609
      %v6925 = vpop.f32.mrb[0].mxu0
      %v6926 = vadd.f32 0.0, %v6925
      %v6927 = vpop.f32.mrb[0].mxu0
      %v6928 = vpop.f32.mrb[0].mxu0
      %v6929 = vadd.f32 0.0, %v6928
      %v6930 = vpop.f32.mrb[0].mxu0
      %6931 = vmatprep.mubr.bf16.mxu0 0
      %6932 = vmatmul.mubr.bf16.gmra.mrb[0].mxu0 %v6610
      %v6933 = vpop.f32.mrb[0].mxu0
      %v6934 = vadd.f32 0.0, %v6933
      %v6935 = vpop.f32.mrb[0].mxu0
      %v6936 = vpop.f32.mrb[0].mxu0
      %v6937 = vadd.f32 0.0, %v6936
      %v6938 = vpop.f32.mrb[0].mxu0
      %6939 = vmatprep.mubr.bf16.mxu0 0
      %6940 = vmatmul.mubr.bf16.gmra.mrb[0].mxu0 %v6611
      %v6941 = vpop.f32.mrb[0].mxu0
      %v6942 = vadd.f32 0.0, %v6941
      %v6943 = vpop.f32.mrb[0].mxu0
      %v6944 = vpop.f32.mrb[0].mxu0
      %v6945 = vadd.f32 0.0, %v6944
      %v6946 = vpop.f32.mrb[0].mxu0
      %6947 = vmatprep.mubr.bf16.mxu0 0
      %6948 = vmatmul.mubr.bf16.gmra.mrb[0].mxu0 %v6612
      %v6949 = vpop.f32.mrb[0].mxu0
      %v6950 = vadd.f32 0.0, %v6949
      %v6951 = vpop.f32.mrb[0].mxu0
      %v6952 = vpop.f32.mrb[0].mxu0
      %v6953 = vadd.f32 0.0, %v6952
      %v6954 = vpop.f32.mrb[0].mxu0
      %6955 = vmatprep.mubr.bf16.mxu0 0
      %6956 = vmatmul.mubr.bf16.gmra.mrb[0].mxu0 %v6613
      %v6957 = vpop.f32.mrb[0].mxu0
      %v6958 = vadd.f32 0.0, %v6957
      %v6959 = vpop.f32.mrb[0].mxu0
      %v6960 = vpop.f32.mrb[0].mxu0
      %v6961 = vadd.f32 0.0, %v6960
      %v6962 = vpop.f32.mrb[0].mxu0
      %6963 = vmatprep.mubr.bf16.mxu0 0
      %6964 = vmatmul.mubr.bf16.gmra.mrb[0].mxu0 %v6614
      %v6965 = vpop.f32.mrb[0].mxu0
      %v6966 = vadd.f32 0.0, %v6965
      %v6967 = vpop.f32.mrb[0].mxu0
      %v6968 = vpop.f32.mrb[0].mxu0
      %v6969 = vadd.f32 0.0, %v6968
      %v6970 = vpop.f32.mrb[0].mxu0
      %6971 = vdwg.mxu0
      %v6972 = vpack.c.bf16 %v6689, %v6686
      %v6973 = vpack.c.bf16 %v6697, %v6694
      %v6974 = vpack.c.bf16 %v6705, %v6702
      %v6975 = vpack.c.bf16 %v6713, %v6710
      %v6976 = vpack.c.bf16 %v6721, %v6718
      %v6977 = vpack.c.bf16 %v6729, %v6726
      %v6978 = vpack.c.bf16 %v6737, %v6734
      %v6979 = vpack.c.bf16 %v6745, %v6742
      %v6980 = vpack.c.bf16 %v6753, %v6750
      %v6981 = vpack.c.bf16 %v6761, %v6758
      %v6982 = vpack.c.bf16 %v6769, %v6766
      %v6983 = vpack.c.bf16 %v6777, %v6774
      %v6984 = vpack.c.bf16 %v6785, %v6782
      %v6985 = vpack.c.bf16 %v6793, %v6790
      %v6986 = vpack.c.bf16 %v6801, %v6798
      %v6987 = vpack.c.bf16 %v6809, %v6806
      %v6988 = vpack.c.bf16 %v6817, %v6814
      %v6989 = vpack.c.bf16 %v6825, %v6822
      %v6990 = vpack.c.bf16 %v6833, %v6830
      %v6991 = vpack.c.bf16 %v6841, %v6838
      %v6992 = vpack.c.bf16 %v6849, %v6846
      %v6993 = vpack.c.bf16 %v6857, %v6854
      %v6994 = vpack.c.bf16 %v6865, %v6862
      %v6995 = vpack.c.bf16 %v6873, %v6870
      %v6996 = vpack.c.bf16 %v6881, %v6878
      %v6997 = vpack.c.bf16 %v6889, %v6886
      %v6998 = vpack.c.bf16 %v6897, %v6894
      %v6999 = vpack.c.bf16 %v6905, %v6902
      %v7000 = vpack.c.bf16 %v6913, %v6910
      %v7001 = vpack.c.bf16 %v6921, %v6918
      %v7002 = vpack.c.bf16 %v6929, %v6926
      %v7003 = vpack.c.bf16 %v6937, %v6934
      %v7004 = vpack.c.bf16 %v6945, %v6942
      %v7005 = vpack.c.bf16 %v6953, %v6950
      %v7006 = vpack.c.bf16 %v6961, %v6958
      %v7007 = vpack.c.bf16 %v6969, %v6966
      %v7008 = vld [vmem:[%s15] sm:$0xff]
      %v7009 = vld [vmem:[%s15 + $0x8] sm:$0xff]
      %v7010 = vld [vmem:[%s15 + $0x10] sm:$0xff]
      %v7011 = vld [vmem:[%s15 + $0x18] sm:$0xff]
      %v7012 = vld [vmem:[%s15 + $0x20] sm:$0xff]
      %v7013 = vld [vmem:[%s15 + $0x28] sm:$0xff]
      %v7014 = vld [vmem:[%s15 + $0x30] sm:$0xff]
      %v7015 = vld [vmem:[%s15 + $0x38] sm:$0xff]
      %7017 = vset.pattern.permute.xlu0 0
      %7018 = vperm.xlu0 %7017, %v7008
      %v7019 = vpop.permute.xlu0 %7018
      %7022 = vset.pattern.permute.xlu0 0
      %7023 = vperm.xlu0 %7022, %v7009
      %v7024 = vpop.permute.xlu0 %7023
      %7027 = vset.pattern.permute.xlu0 0
      %7028 = vperm.xlu0 %7027, %v7010
      %v7029 = vpop.permute.xlu0 %7028
      %7032 = vset.pattern.permute.xlu0 0
      %7033 = vperm.xlu0 %7032, %v7011
      %v7034 = vpop.permute.xlu0 %7033
      %7037 = vset.pattern.permute.xlu0 0
      %7038 = vperm.xlu0 %7037, %v7012
      %v7039 = vpop.permute.xlu0 %7038
      %7042 = vset.pattern.permute.xlu0 0
      %7043 = vperm.xlu0 %7042, %v7013
      %v7044 = vpop.permute.xlu0 %7043
      %7047 = vset.pattern.permute.xlu0 0
      %7048 = vperm.xlu0 %7047, %v7014
      %v7049 = vpop.permute.xlu0 %7048
      %7052 = vset.pattern.permute.xlu0 0
      %7053 = vperm.xlu0 %7052, %v7015
      %v7054 = vpop.permute.xlu0 %7053
      %v7056 = vld [vmem:[%s13] sm:$0xf]
      %v7057 = vld [vmem:[%s13 + $0x4] sm:$0xf]
      %v7060 = vunpack.c.l.b16 %v7056
      %v7061 = vunpack.c.l.b16 %v7057
      %v7062 = vpack.c.b16 %v7061, %v7060
      %v7065 = vsel %vm3311, %v6972, 0
      %v7068 = vsel %vm3311, %v6973, 0
      %v7071 = vsel %vm3311, %v6974, 0
      %v7074 = vsel %vm3311, %v6975, 0
      %7076 = vmatprep.subr.bf16.mxu0 0
      %7077 = vmatpush1.bf16.msra.mxu0 %v7062
      %7078 = vmatprep.subr.bf16.mxu0 0
      %7079 = vmatpush1.bf16.msra.mxu0 0
      %7080 = vmatprep.subr.bf16.mxu0 0
      %7081 = vmatpush1.bf16.msra.mxu0 0
      %7082 = vmatprep.subr.bf16.mxu0 0
      %7083 = vmatpush1.bf16.msra.mxu0 0
      %7084 = vmatprep.subr.bf16.mxu0 0
      %7085 = vmatpush1.bf16.msra.mxu0 0
      %7086 = vmatprep.subr.bf16.mxu0 0
      %7087 = vmatpush1.bf16.msra.mxu0 0
      %7088 = vmatprep.subr.bf16.mxu0 0
      %7089 = vmatpush1.bf16.msra.mxu0 0
      %7090 = vmatprep.subr.bf16.mxu0 0
      %7091 = vmatpush1.bf16.msra.mxu0 0
      %7092 = vmatprep.subr.bf16.mxu0 0
      %7093 = vmatpush1.bf16.msra.mxu0 0
      %7094 = vmatprep.subr.bf16.mxu0 0
      %7095 = vmatpush1.bf16.msra.mxu0 0
      %7096 = vmatprep.subr.bf16.mxu0 0
      %7097 = vmatpush1.bf16.msra.mxu0 0
      %7098 = vmatprep.subr.bf16.mxu0 0
      %7099 = vmatpush1.bf16.msra.mxu0 0
      %7100 = vmatprep.subr.bf16.mxu0 0
      %7101 = vmatpush1.bf16.msra.mxu0 0
      %7102 = vmatprep.subr.bf16.mxu0 0
      %7103 = vmatpush1.bf16.msra.mxu0 0
      %7104 = vmatprep.subr.bf16.mxu0 0
      %7105 = vmatpush1.bf16.msra.mxu0 0
      %7106 = vmatprep.subr.bf16.mxu0 0
      %7107 = vmatpush1.bf16.msra.mxu0 0
      %7108 = vmatprep.mubr.bf16.mxu0 0
      %7109 = vmatmul.mubr.bf16.gmra.mrb[0].mxu0 %v7065
      %v7110 = vpop.f32.mrb[0].mxu0
      %v7111 = vadd.f32 0.0, %v7110
      %v7112 = vpop.f32.mrb[0].mxu0
      %v7113 = vpop.f32.mrb[0].mxu0
      %v7114 = vadd.f32 0.0, %v7113
      %v7115 = vpop.f32.mrb[0].mxu0
      %7116 = vmatprep.mubr.bf16.mxu0 0
      %7117 = vmatmul.mubr.bf16.gmra.mrb[0].mxu0 %v7068
      %v7118 = vpop.f32.mrb[0].mxu0
      %v7119 = vadd.f32 0.0, %v7118
      %v7120 = vpop.f32.mrb[0].mxu0
      %v7121 = vpop.f32.mrb[0].mxu0
      %v7122 = vadd.f32 0.0, %v7121
      %v7123 = vpop.f32.mrb[0].mxu0
      %7124 = vmatprep.mubr.bf16.mxu0 0
      %7125 = vmatmul.mubr.bf16.gmra.mrb[0].mxu0 %v7071
      %v7126 = vpop.f32.mrb[0].mxu0
      %v7127 = vadd.f32 0.0, %v7126
      %v7128 = vpop.f32.mrb[0].mxu0
      %v7129 = vpop.f32.mrb[0].mxu0
      %v7130 = vadd.f32 0.0, %v7129
      %v7131 = vpop.f32.mrb[0].mxu0
      %7132 = vmatprep.mubr.bf16.mxu0 0
      %7133 = vmatmul.mubr.bf16.gmra.mrb[0].mxu0 %v7074
      %v7134 = vpop.f32.mrb[0].mxu0
      %v7135 = vadd.f32 0.0, %v7134
      %v7136 = vpop.f32.mrb[0].mxu0
      %v7137 = vpop.f32.mrb[0].mxu0
      %v7138 = vadd.f32 0.0, %v7137
      %v7139 = vpop.f32.mrb[0].mxu0
      %7140 = vdwg.mxu0
      %v7141 = vadd.f32 %v7019, %v7111
      %v7142 = vadd.f32 %v7024, %v7114
      %v7143 = vadd.f32 %v7029, %v7119
      %v7144 = vadd.f32 %v7034, %v7122
      %v7145 = vadd.f32 %v7039, %v7127
      %v7146 = vadd.f32 %v7044, %v7130
      %v7147 = vadd.f32 %v7049, %v7135
      %v7148 = vadd.f32 %v7054, %v7138
      %s7149 = scalar_lea.vmem %s13, 8
      %v7150 = vld [vmem:[%s7149] sm:$0xf]
      %v7151 = vld [vmem:[%s7149 + $0x4] sm:$0xf]
      %v7154 = vunpack.c.l.b16 %v7150
      %v7155 = vunpack.c.l.b16 %v7151
      %v7156 = vpack.c.b16 %v7155, %v7154
      %v7159 = vsel %vm3311, %v6976, 0
      %v7162 = vsel %vm3311, %v6977, 0
      %v7165 = vsel %vm3311, %v6978, 0
      %v7168 = vsel %vm3311, %v6979, 0
      %7170 = vmatprep.subr.bf16.mxu0 0
      %7171 = vmatpush1.bf16.msra.mxu0 %v7156
      %7172 = vmatprep.subr.bf16.mxu0 0
      %7173 = vmatpush1.bf16.msra.mxu0 0
      %7174 = vmatprep.subr.bf16.mxu0 0
      %7175 = vmatpush1.bf16.msra.mxu0 0
      %7176 = vmatprep.subr.bf16.mxu0 0
      %7177 = vmatpush1.bf16.msra.mxu0 0
      %7178 = vmatprep.subr.bf16.mxu0 0
      %7179 = vmatpush1.bf16.msra.mxu0 0
      %7180 = vmatprep.subr.bf16.mxu0 0
      %7181 = vmatpush1.bf16.msra.mxu0 0
      %7182 = vmatprep.subr.bf16.mxu0 0
      %7183 = vmatpush1.bf16.msra.mxu0 0
      %7184 = vmatprep.subr.bf16.mxu0 0
      %7185 = vmatpush1.bf16.msra.mxu0 0
      %7186 = vmatprep.subr.bf16.mxu0 0
      %7187 = vmatpush1.bf16.msra.mxu0 0
      %7188 = vmatprep.subr.bf16.mxu0 0
      %7189 = vmatpush1.bf16.msra.mxu0 0
      %7190 = vmatprep.subr.bf16.mxu0 0
      %7191 = vmatpush1.bf16.msra.mxu0 0
      %7192 = vmatprep.subr.bf16.mxu0 0
      %7193 = vmatpush1.bf16.msra.mxu0 0
      %7194 = vmatprep.subr.bf16.mxu0 0
      %7195 = vmatpush1.bf16.msra.mxu0 0
      %7196 = vmatprep.subr.bf16.mxu0 0
      %7197 = vmatpush1.bf16.msra.mxu0 0
      %7198 = vmatprep.subr.bf16.mxu0 0
      %7199 = vmatpush1.bf16.msra.mxu0 0
      %7200 = vmatprep.subr.bf16.mxu0 0
      %7201 = vmatpush1.bf16.msra.mxu0 0
      %7202 = vmatprep.mubr.bf16.mxu0 0
      %7203 = vmatmul.mubr.bf16.gmra.mrb[0].mxu0 %v7159
      %v7204 = vpop.f32.mrb[0].mxu0
      %v7205 = vadd.f32 0.0, %v7204
      %v7206 = vpop.f32.mrb[0].mxu0
      %v7207 = vpop.f32.mrb[0].mxu0
      %v7208 = vadd.f32 0.0, %v7207
      %v7209 = vpop.f32.mrb[0].mxu0
      %7210 = vmatprep.mubr.bf16.mxu0 0
      %7211 = vmatmul.mubr.bf16.gmra.mrb[0].mxu0 %v7162
      %v7212 = vpop.f32.mrb[0].mxu0
      %v7213 = vadd.f32 0.0, %v7212
      %v7214 = vpop.f32.mrb[0].mxu0
      %v7215 = vpop.f32.mrb[0].mxu0
      %v7216 = vadd.f32 0.0, %v7215
      %v7217 = vpop.f32.mrb[0].mxu0
      %7218 = vmatprep.mubr.bf16.mxu0 0
      %7219 = vmatmul.mubr.bf16.gmra.mrb[0].mxu0 %v7165
      %v7220 = vpop.f32.mrb[0].mxu0
      %v7221 = vadd.f32 0.0, %v7220
      %v7222 = vpop.f32.mrb[0].mxu0
      %v7223 = vpop.f32.mrb[0].mxu0
      %v7224 = vadd.f32 0.0, %v7223
      %v7225 = vpop.f32.mrb[0].mxu0
      %7226 = vmatprep.mubr.bf16.mxu0 0
      %7227 = vmatmul.mubr.bf16.gmra.mrb[0].mxu0 %v7168
      %v7228 = vpop.f32.mrb[0].mxu0
      %v7229 = vadd.f32 0.0, %v7228
      %v7230 = vpop.f32.mrb[0].mxu0
      %v7231 = vpop.f32.mrb[0].mxu0
      %v7232 = vadd.f32 0.0, %v7231
      %v7233 = vpop.f32.mrb[0].mxu0
      %7234 = vdwg.mxu0
      %v7235 = vadd.f32 %v7141, %v7205
      %v7236 = vadd.f32 %v7142, %v7208
      %v7237 = vadd.f32 %v7143, %v7213
      %v7238 = vadd.f32 %v7144, %v7216
      %v7239 = vadd.f32 %v7145, %v7221
      %v7240 = vadd.f32 %v7146, %v7224
      %v7241 = vadd.f32 %v7147, %v7229
      %v7242 = vadd.f32 %v7148, %v7232
      %s7243 = scalar_lea.vmem %s13, 16
      %v7244 = vld [vmem:[%s7243] sm:$0xf]
      %v7245 = vld [vmem:[%s7243 + $0x4] sm:$0xf]
      %v7248 = vunpack.c.l.b16 %v7244
      %v7249 = vunpack.c.l.b16 %v7245
      %v7250 = vpack.c.b16 %v7249, %v7248
      %v7253 = vsel %vm3311, %v6980, 0
      %v7256 = vsel %vm3311, %v6981, 0
      %v7259 = vsel %vm3311, %v6982, 0
      %v7262 = vsel %vm3311, %v6983, 0
      %7264 = vmatprep.subr.bf16.mxu0 0
      %7265 = vmatpush1.bf16.msra.mxu0 %v7250
      %7266 = vmatprep.subr.bf16.mxu0 0
      %7267 = vmatpush1.bf16.msra.mxu0 0
      %7268 = vmatprep.subr.bf16.mxu0 0
      %7269 = vmatpush1.bf16.msra.mxu0 0
      %7270 = vmatprep.subr.bf16.mxu0 0
      %7271 = vmatpush1.bf16.msra.mxu0 0
      %7272 = vmatprep.subr.bf16.mxu0 0
      %7273 = vmatpush1.bf16.msra.mxu0 0
      %7274 = vmatprep.subr.bf16.mxu0 0
      %7275 = vmatpush1.bf16.msra.mxu0 0
      %7276 = vmatprep.subr.bf16.mxu0 0
      %7277 = vmatpush1.bf16.msra.mxu0 0
      %7278 = vmatprep.subr.bf16.mxu0 0
      %7279 = vmatpush1.bf16.msra.mxu0 0
      %7280 = vmatprep.subr.bf16.mxu0 0
      %7281 = vmatpush1.bf16.msra.mxu0 0
      %7282 = vmatprep.subr.bf16.mxu0 0
      %7283 = vmatpush1.bf16.msra.mxu0 0
      %7284 = vmatprep.subr.bf16.mxu0 0
      %7285 = vmatpush1.bf16.msra.mxu0 0
      %7286 = vmatprep.subr.bf16.mxu0 0
      %7287 = vmatpush1.bf16.msra.mxu0 0
      %7288 = vmatprep.subr.bf16.mxu0 0
      %7289 = vmatpush1.bf16.msra.mxu0 0
      %7290 = vmatprep.subr.bf16.mxu0 0
      %7291 = vmatpush1.bf16.msra.mxu0 0
      %7292 = vmatprep.subr.bf16.mxu0 0
      %7293 = vmatpush1.bf16.msra.mxu0 0
      %7294 = vmatprep.subr.bf16.mxu0 0
      %7295 = vmatpush1.bf16.msra.mxu0 0
      %7296 = vmatprep.mubr.bf16.mxu0 0
      %7297 = vmatmul.mubr.bf16.gmra.mrb[0].mxu0 %v7253
      %v7298 = vpop.f32.mrb[0].mxu0
      %v7299 = vadd.f32 0.0, %v7298
      %v7300 = vpop.f32.mrb[0].mxu0
      %v7301 = vpop.f32.mrb[0].mxu0
      %v7302 = vadd.f32 0.0, %v7301
      %v7303 = vpop.f32.mrb[0].mxu0
      %7304 = vmatprep.mubr.bf16.mxu0 0
      %7305 = vmatmul.mubr.bf16.gmra.mrb[0].mxu0 %v7256
      %v7306 = vpop.f32.mrb[0].mxu0
      %v7307 = vadd.f32 0.0, %v7306
      %v7308 = vpop.f32.mrb[0].mxu0
      %v7309 = vpop.f32.mrb[0].mxu0
      %v7310 = vadd.f32 0.0, %v7309
      %v7311 = vpop.f32.mrb[0].mxu0
      %7312 = vmatprep.mubr.bf16.mxu0 0
      %7313 = vmatmul.mubr.bf16.gmra.mrb[0].mxu0 %v7259
      %v7314 = vpop.f32.mrb[0].mxu0
      %v7315 = vadd.f32 0.0, %v7314
      %v7316 = vpop.f32.mrb[0].mxu0
      %v7317 = vpop.f32.mrb[0].mxu0
      %v7318 = vadd.f32 0.0, %v7317
      %v7319 = vpop.f32.mrb[0].mxu0
      %7320 = vmatprep.mubr.bf16.mxu0 0
      %7321 = vmatmul.mubr.bf16.gmra.mrb[0].mxu0 %v7262
      %v7322 = vpop.f32.mrb[0].mxu0
      %v7323 = vadd.f32 0.0, %v7322
      %v7324 = vpop.f32.mrb[0].mxu0
      %v7325 = vpop.f32.mrb[0].mxu0
      %v7326 = vadd.f32 0.0, %v7325
      %v7327 = vpop.f32.mrb[0].mxu0
      %7328 = vdwg.mxu0
      %v7329 = vadd.f32 %v7235, %v7299
      %v7330 = vadd.f32 %v7236, %v7302
      %v7331 = vadd.f32 %v7237, %v7307
      %v7332 = vadd.f32 %v7238, %v7310
      %v7333 = vadd.f32 %v7239, %v7315
      %v7334 = vadd.f32 %v7240, %v7318
      %v7335 = vadd.f32 %v7241, %v7323
      %v7336 = vadd.f32 %v7242, %v7326
      %s7337 = scalar_lea.vmem %s13, 24
      %v7338 = vld [vmem:[%s7337] sm:$0xf]
      %v7339 = vld [vmem:[%s7337 + $0x4] sm:$0xf]
      %v7342 = vunpack.c.l.b16 %v7338
      %v7343 = vunpack.c.l.b16 %v7339
      %v7344 = vpack.c.b16 %v7343, %v7342
      %v7347 = vsel %vm3311, %v6984, 0
      %v7350 = vsel %vm3311, %v6985, 0
      %v7353 = vsel %vm3311, %v6986, 0
      %v7356 = vsel %vm3311, %v6987, 0
      %7358 = vmatprep.subr.bf16.mxu0 0
      %7359 = vmatpush1.bf16.msra.mxu0 %v7344
      %7360 = vmatprep.subr.bf16.mxu0 0
      %7361 = vmatpush1.bf16.msra.mxu0 0
      %7362 = vmatprep.subr.bf16.mxu0 0
      %7363 = vmatpush1.bf16.msra.mxu0 0
      %7364 = vmatprep.subr.bf16.mxu0 0
      %7365 = vmatpush1.bf16.msra.mxu0 0
      %7366 = vmatprep.subr.bf16.mxu0 0
      %7367 = vmatpush1.bf16.msra.mxu0 0
      %7368 = vmatprep.subr.bf16.mxu0 0
      %7369 = vmatpush1.bf16.msra.mxu0 0
      %7370 = vmatprep.subr.bf16.mxu0 0
      %7371 = vmatpush1.bf16.msra.mxu0 0
      %7372 = vmatprep.subr.bf16.mxu0 0
      %7373 = vmatpush1.bf16.msra.mxu0 0
      %7374 = vmatprep.subr.bf16.mxu0 0
      %7375 = vmatpush1.bf16.msra.mxu0 0
      %7376 = vmatprep.subr.bf16.mxu0 0
      %7377 = vmatpush1.bf16.msra.mxu0 0
      %7378 = vmatprep.subr.bf16.mxu0 0
      %7379 = vmatpush1.bf16.msra.mxu0 0
      %7380 = vmatprep.subr.bf16.mxu0 0
      %7381 = vmatpush1.bf16.msra.mxu0 0
      %7382 = vmatprep.subr.bf16.mxu0 0
      %7383 = vmatpush1.bf16.msra.mxu0 0
      %7384 = vmatprep.subr.bf16.mxu0 0
      %7385 = vmatpush1.bf16.msra.mxu0 0
      %7386 = vmatprep.subr.bf16.mxu0 0
      %7387 = vmatpush1.bf16.msra.mxu0 0
      %7388 = vmatprep.subr.bf16.mxu0 0
      %7389 = vmatpush1.bf16.msra.mxu0 0
      %7390 = vmatprep.mubr.bf16.mxu0 0
      %7391 = vmatmul.mubr.bf16.gmra.mrb[0].mxu0 %v7347
      %v7392 = vpop.f32.mrb[0].mxu0
      %v7393 = vadd.f32 0.0, %v7392
      %v7394 = vpop.f32.mrb[0].mxu0
      %v7395 = vpop.f32.mrb[0].mxu0
      %v7396 = vadd.f32 0.0, %v7395
      %v7397 = vpop.f32.mrb[0].mxu0
      %7398 = vmatprep.mubr.bf16.mxu0 0
      %7399 = vmatmul.mubr.bf16.gmra.mrb[0].mxu0 %v7350
      %v7400 = vpop.f32.mrb[0].mxu0
      %v7401 = vadd.f32 0.0, %v7400
      %v7402 = vpop.f32.mrb[0].mxu0
      %v7403 = vpop.f32.mrb[0].mxu0
      %v7404 = vadd.f32 0.0, %v7403
      %v7405 = vpop.f32.mrb[0].mxu0
      %7406 = vmatprep.mubr.bf16.mxu0 0
      %7407 = vmatmul.mubr.bf16.gmra.mrb[0].mxu0 %v7353
      %v7408 = vpop.f32.mrb[0].mxu0
      %v7409 = vadd.f32 0.0, %v7408
      %v7410 = vpop.f32.mrb[0].mxu0
      %v7411 = vpop.f32.mrb[0].mxu0
      %v7412 = vadd.f32 0.0, %v7411
      %v7413 = vpop.f32.mrb[0].mxu0
      %7414 = vmatprep.mubr.bf16.mxu0 0
      %7415 = vmatmul.mubr.bf16.gmra.mrb[0].mxu0 %v7356
      %v7416 = vpop.f32.mrb[0].mxu0
      %v7417 = vadd.f32 0.0, %v7416
      %v7418 = vpop.f32.mrb[0].mxu0
      %v7419 = vpop.f32.mrb[0].mxu0
      %v7420 = vadd.f32 0.0, %v7419
      %v7421 = vpop.f32.mrb[0].mxu0
      %7422 = vdwg.mxu0
      %v7423 = vadd.f32 %v7329, %v7393
      %v7424 = vadd.f32 %v7330, %v7396
      %v7425 = vadd.f32 %v7331, %v7401
      %v7426 = vadd.f32 %v7332, %v7404
      %v7427 = vadd.f32 %v7333, %v7409
      %v7428 = vadd.f32 %v7334, %v7412
      %v7429 = vadd.f32 %v7335, %v7417
      %v7430 = vadd.f32 %v7336, %v7420
      %s7431 = scalar_lea.vmem %s13, 32
      %v7432 = vld [vmem:[%s7431] sm:$0xf]
      %v7433 = vld [vmem:[%s7431 + $0x4] sm:$0xf]
      %v7436 = vunpack.c.l.b16 %v7432
      %v7437 = vunpack.c.l.b16 %v7433
      %v7438 = vpack.c.b16 %v7437, %v7436
      %v7441 = vsel %vm3311, %v6988, 0
      %v7444 = vsel %vm3311, %v6989, 0
      %v7447 = vsel %vm3311, %v6990, 0
      %v7450 = vsel %vm3311, %v6991, 0
      %7452 = vmatprep.subr.bf16.mxu0 0
      %7453 = vmatpush1.bf16.msra.mxu0 %v7438
      %7454 = vmatprep.subr.bf16.mxu0 0
      %7455 = vmatpush1.bf16.msra.mxu0 0
      %7456 = vmatprep.subr.bf16.mxu0 0
      %7457 = vmatpush1.bf16.msra.mxu0 0
      %7458 = vmatprep.subr.bf16.mxu0 0
      %7459 = vmatpush1.bf16.msra.mxu0 0
      %7460 = vmatprep.subr.bf16.mxu0 0
      %7461 = vmatpush1.bf16.msra.mxu0 0
      %7462 = vmatprep.subr.bf16.mxu0 0
      %7463 = vmatpush1.bf16.msra.mxu0 0
      %7464 = vmatprep.subr.bf16.mxu0 0
      %7465 = vmatpush1.bf16.msra.mxu0 0
      %7466 = vmatprep.subr.bf16.mxu0 0
      %7467 = vmatpush1.bf16.msra.mxu0 0
      %7468 = vmatprep.subr.bf16.mxu0 0
      %7469 = vmatpush1.bf16.msra.mxu0 0
      %7470 = vmatprep.subr.bf16.mxu0 0
      %7471 = vmatpush1.bf16.msra.mxu0 0
      %7472 = vmatprep.subr.bf16.mxu0 0
      %7473 = vmatpush1.bf16.msra.mxu0 0
      %7474 = vmatprep.subr.bf16.mxu0 0
      %7475 = vmatpush1.bf16.msra.mxu0 0
      %7476 = vmatprep.subr.bf16.mxu0 0
      %7477 = vmatpush1.bf16.msra.mxu0 0
      %7478 = vmatprep.subr.bf16.mxu0 0
      %7479 = vmatpush1.bf16.msra.mxu0 0
      %7480 = vmatprep.subr.bf16.mxu0 0
      %7481 = vmatpush1.bf16.msra.mxu0 0
      %7482 = vmatprep.subr.bf16.mxu0 0
      %7483 = vmatpush1.bf16.msra.mxu0 0
      %7484 = vmatprep.mubr.bf16.mxu0 0
      %7485 = vmatmul.mubr.bf16.gmra.mrb[0].mxu0 %v7441
      %v7486 = vpop.f32.mrb[0].mxu0
      %v7487 = vadd.f32 0.0, %v7486
      %v7488 = vpop.f32.mrb[0].mxu0
      %v7489 = vpop.f32.mrb[0].mxu0
      %v7490 = vadd.f32 0.0, %v7489
      %v7491 = vpop.f32.mrb[0].mxu0
      %7492 = vmatprep.mubr.bf16.mxu0 0
      %7493 = vmatmul.mubr.bf16.gmra.mrb[0].mxu0 %v7444
      %v7494 = vpop.f32.mrb[0].mxu0
      %v7495 = vadd.f32 0.0, %v7494
      %v7496 = vpop.f32.mrb[0].mxu0
      %v7497 = vpop.f32.mrb[0].mxu0
      %v7498 = vadd.f32 0.0, %v7497
      %v7499 = vpop.f32.mrb[0].mxu0
      %7500 = vmatprep.mubr.bf16.mxu0 0
      %7501 = vmatmul.mubr.bf16.gmra.mrb[0].mxu0 %v7447
      %v7502 = vpop.f32.mrb[0].mxu0
      %v7503 = vadd.f32 0.0, %v7502
      %v7504 = vpop.f32.mrb[0].mxu0
      %v7505 = vpop.f32.mrb[0].mxu0
      %v7506 = vadd.f32 0.0, %v7505
      %v7507 = vpop.f32.mrb[0].mxu0
      %7508 = vmatprep.mubr.bf16.mxu0 0
      %7509 = vmatmul.mubr.bf16.gmra.mrb[0].mxu0 %v7450
      %v7510 = vpop.f32.mrb[0].mxu0
      %v7511 = vadd.f32 0.0, %v7510
      %v7512 = vpop.f32.mrb[0].mxu0
      %v7513 = vpop.f32.mrb[0].mxu0
      %v7514 = vadd.f32 0.0, %v7513
      %v7515 = vpop.f32.mrb[0].mxu0
      %7516 = vdwg.mxu0
      %v7517 = vadd.f32 %v7423, %v7487
      %v7518 = vadd.f32 %v7424, %v7490
      %v7519 = vadd.f32 %v7425, %v7495
      %v7520 = vadd.f32 %v7426, %v7498
      %v7521 = vadd.f32 %v7427, %v7503
      %v7522 = vadd.f32 %v7428, %v7506
      %v7523 = vadd.f32 %v7429, %v7511
      %v7524 = vadd.f32 %v7430, %v7514
      %s7525 = scalar_lea.vmem %s13, 40
      %v7526 = vld [vmem:[%s7525] sm:$0xf]
      %v7527 = vld [vmem:[%s7525 + $0x4] sm:$0xf]
      %v7530 = vunpack.c.l.b16 %v7526
      %v7531 = vunpack.c.l.b16 %v7527
      %v7532 = vpack.c.b16 %v7531, %v7530
      %v7535 = vsel %vm3311, %v6992, 0
      %v7538 = vsel %vm3311, %v6993, 0
      %v7541 = vsel %vm3311, %v6994, 0
      %v7544 = vsel %vm3311, %v6995, 0
      %7546 = vmatprep.subr.bf16.mxu0 0
      %7547 = vmatpush1.bf16.msra.mxu0 %v7532
      %7548 = vmatprep.subr.bf16.mxu0 0
      %7549 = vmatpush1.bf16.msra.mxu0 0
      %7550 = vmatprep.subr.bf16.mxu0 0
      %7551 = vmatpush1.bf16.msra.mxu0 0
      %7552 = vmatprep.subr.bf16.mxu0 0
      %7553 = vmatpush1.bf16.msra.mxu0 0
      %7554 = vmatprep.subr.bf16.mxu0 0
      %7555 = vmatpush1.bf16.msra.mxu0 0
      %7556 = vmatprep.subr.bf16.mxu0 0
      %7557 = vmatpush1.bf16.msra.mxu0 0
      %7558 = vmatprep.subr.bf16.mxu0 0
      %7559 = vmatpush1.bf16.msra.mxu0 0
      %7560 = vmatprep.subr.bf16.mxu0 0
      %7561 = vmatpush1.bf16.msra.mxu0 0
      %7562 = vmatprep.subr.bf16.mxu0 0
      %7563 = vmatpush1.bf16.msra.mxu0 0
      %7564 = vmatprep.subr.bf16.mxu0 0
      %7565 = vmatpush1.bf16.msra.mxu0 0
      %7566 = vmatprep.subr.bf16.mxu0 0
      %7567 = vmatpush1.bf16.msra.mxu0 0
      %7568 = vmatprep.subr.bf16.mxu0 0
      %7569 = vmatpush1.bf16.msra.mxu0 0
      %7570 = vmatprep.subr.bf16.mxu0 0
      %7571 = vmatpush1.bf16.msra.mxu0 0
      %7572 = vmatprep.subr.bf16.mxu0 0
      %7573 = vmatpush1.bf16.msra.mxu0 0
      %7574 = vmatprep.subr.bf16.mxu0 0
      %7575 = vmatpush1.bf16.msra.mxu0 0
      %7576 = vmatprep.subr.bf16.mxu0 0
      %7577 = vmatpush1.bf16.msra.mxu0 0
      %7578 = vmatprep.mubr.bf16.mxu0 0
      %7579 = vmatmul.mubr.bf16.gmra.mrb[0].mxu0 %v7535
      %v7580 = vpop.f32.mrb[0].mxu0
      %v7581 = vadd.f32 0.0, %v7580
      %v7582 = vpop.f32.mrb[0].mxu0
      %v7583 = vpop.f32.mrb[0].mxu0
      %v7584 = vadd.f32 0.0, %v7583
      %v7585 = vpop.f32.mrb[0].mxu0
      %7586 = vmatprep.mubr.bf16.mxu0 0
      %7587 = vmatmul.mubr.bf16.gmra.mrb[0].mxu0 %v7538
      %v7588 = vpop.f32.mrb[0].mxu0
      %v7589 = vadd.f32 0.0, %v7588
      %v7590 = vpop.f32.mrb[0].mxu0
      %v7591 = vpop.f32.mrb[0].mxu0
      %v7592 = vadd.f32 0.0, %v7591
      %v7593 = vpop.f32.mrb[0].mxu0
      %7594 = vmatprep.mubr.bf16.mxu0 0
      %7595 = vmatmul.mubr.bf16.gmra.mrb[0].mxu0 %v7541
      %v7596 = vpop.f32.mrb[0].mxu0
      %v7597 = vadd.f32 0.0, %v7596
      %v7598 = vpop.f32.mrb[0].mxu0
      %v7599 = vpop.f32.mrb[0].mxu0
      %v7600 = vadd.f32 0.0, %v7599
      %v7601 = vpop.f32.mrb[0].mxu0
      %7602 = vmatprep.mubr.bf16.mxu0 0
      %7603 = vmatmul.mubr.bf16.gmra.mrb[0].mxu0 %v7544
      %v7604 = vpop.f32.mrb[0].mxu0
      %v7605 = vadd.f32 0.0, %v7604
      %v7606 = vpop.f32.mrb[0].mxu0
      %v7607 = vpop.f32.mrb[0].mxu0
      %v7608 = vadd.f32 0.0, %v7607
      %v7609 = vpop.f32.mrb[0].mxu0
      %7610 = vdwg.mxu0
      %v7611 = vadd.f32 %v7517, %v7581
      %v7612 = vadd.f32 %v7518, %v7584
      %v7613 = vadd.f32 %v7519, %v7589
      %v7614 = vadd.f32 %v7520, %v7592
      %v7615 = vadd.f32 %v7521, %v7597
      %v7616 = vadd.f32 %v7522, %v7600
      %v7617 = vadd.f32 %v7523, %v7605
      %v7618 = vadd.f32 %v7524, %v7608
      %s7619 = scalar_lea.vmem %s13, 48
      %v7620 = vld [vmem:[%s7619] sm:$0xf]
      %v7621 = vld [vmem:[%s7619 + $0x4] sm:$0xf]
      %v7624 = vunpack.c.l.b16 %v7620
      %v7625 = vunpack.c.l.b16 %v7621
      %v7626 = vpack.c.b16 %v7625, %v7624
      %v7629 = vsel %vm3311, %v6996, 0
      %v7632 = vsel %vm3311, %v6997, 0
      %v7635 = vsel %vm3311, %v6998, 0
      %v7638 = vsel %vm3311, %v6999, 0
      %7640 = vmatprep.subr.bf16.mxu0 0
      %7641 = vmatpush1.bf16.msra.mxu0 %v7626
      %7642 = vmatprep.subr.bf16.mxu0 0
      %7643 = vmatpush1.bf16.msra.mxu0 0
      %7644 = vmatprep.subr.bf16.mxu0 0
      %7645 = vmatpush1.bf16.msra.mxu0 0
      %7646 = vmatprep.subr.bf16.mxu0 0
      %7647 = vmatpush1.bf16.msra.mxu0 0
      %7648 = vmatprep.subr.bf16.mxu0 0
      %7649 = vmatpush1.bf16.msra.mxu0 0
      %7650 = vmatprep.subr.bf16.mxu0 0
      %7651 = vmatpush1.bf16.msra.mxu0 0
      %7652 = vmatprep.subr.bf16.mxu0 0
      %7653 = vmatpush1.bf16.msra.mxu0 0
      %7654 = vmatprep.subr.bf16.mxu0 0
      %7655 = vmatpush1.bf16.msra.mxu0 0
      %7656 = vmatprep.subr.bf16.mxu0 0
      %7657 = vmatpush1.bf16.msra.mxu0 0
      %7658 = vmatprep.subr.bf16.mxu0 0
      %7659 = vmatpush1.bf16.msra.mxu0 0
      %7660 = vmatprep.subr.bf16.mxu0 0
      %7661 = vmatpush1.bf16.msra.mxu0 0
      %7662 = vmatprep.subr.bf16.mxu0 0
      %7663 = vmatpush1.bf16.msra.mxu0 0
      %7664 = vmatprep.subr.bf16.mxu0 0
      %7665 = vmatpush1.bf16.msra.mxu0 0
      %7666 = vmatprep.subr.bf16.mxu0 0
      %7667 = vmatpush1.bf16.msra.mxu0 0
      %7668 = vmatprep.subr.bf16.mxu0 0
      %7669 = vmatpush1.bf16.msra.mxu0 0
      %7670 = vmatprep.subr.bf16.mxu0 0
      %7671 = vmatpush1.bf16.msra.mxu0 0
      %7672 = vmatprep.mubr.bf16.mxu0 0
      %7673 = vmatmul.mubr.bf16.gmra.mrb[0].mxu0 %v7629
      %v7674 = vpop.f32.mrb[0].mxu0
      %v7675 = vadd.f32 0.0, %v7674
      %v7676 = vpop.f32.mrb[0].mxu0
      %v7677 = vpop.f32.mrb[0].mxu0
      %v7678 = vadd.f32 0.0, %v7677
      %v7679 = vpop.f32.mrb[0].mxu0
      %7680 = vmatprep.mubr.bf16.mxu0 0
      %7681 = vmatmul.mubr.bf16.gmra.mrb[0].mxu0 %v7632
      %v7682 = vpop.f32.mrb[0].mxu0
      %v7683 = vadd.f32 0.0, %v7682
      %v7684 = vpop.f32.mrb[0].mxu0
      %v7685 = vpop.f32.mrb[0].mxu0
      %v7686 = vadd.f32 0.0, %v7685
      %v7687 = vpop.f32.mrb[0].mxu0
      %7688 = vmatprep.mubr.bf16.mxu0 0
      %7689 = vmatmul.mubr.bf16.gmra.mrb[0].mxu0 %v7635
      %v7690 = vpop.f32.mrb[0].mxu0
      %v7691 = vadd.f32 0.0, %v7690
      %v7692 = vpop.f32.mrb[0].mxu0
      %v7693 = vpop.f32.mrb[0].mxu0
      %v7694 = vadd.f32 0.0, %v7693
      %v7695 = vpop.f32.mrb[0].mxu0
      %7696 = vmatprep.mubr.bf16.mxu0 0
      %7697 = vmatmul.mubr.bf16.gmra.mrb[0].mxu0 %v7638
      %v7698 = vpop.f32.mrb[0].mxu0
      %v7699 = vadd.f32 0.0, %v7698
      %v7700 = vpop.f32.mrb[0].mxu0
      %v7701 = vpop.f32.mrb[0].mxu0
      %v7702 = vadd.f32 0.0, %v7701
      %v7703 = vpop.f32.mrb[0].mxu0
      %7704 = vdwg.mxu0
      %v7705 = vadd.f32 %v7611, %v7675
      %v7706 = vadd.f32 %v7612, %v7678
      %v7707 = vadd.f32 %v7613, %v7683
      %v7708 = vadd.f32 %v7614, %v7686
      %v7709 = vadd.f32 %v7615, %v7691
      %v7710 = vadd.f32 %v7616, %v7694
      %v7711 = vadd.f32 %v7617, %v7699
      %v7712 = vadd.f32 %v7618, %v7702
      %s7713 = scalar_lea.vmem %s13, 56
      %v7714 = vld [vmem:[%s7713] sm:$0xf]
      %v7715 = vld [vmem:[%s7713 + $0x4] sm:$0xf]
      %v7718 = vunpack.c.l.b16 %v7714
      %v7719 = vunpack.c.l.b16 %v7715
      %v7720 = vpack.c.b16 %v7719, %v7718
      %v7723 = vsel %vm3311, %v7000, 0
      %v7726 = vsel %vm3311, %v7001, 0
      %v7729 = vsel %vm3311, %v7002, 0
      %v7732 = vsel %vm3311, %v7003, 0
      %7734 = vmatprep.subr.bf16.mxu0 0
      %7735 = vmatpush1.bf16.msra.mxu0 %v7720
      %7736 = vmatprep.subr.bf16.mxu0 0
      %7737 = vmatpush1.bf16.msra.mxu0 0
      %7738 = vmatprep.subr.bf16.mxu0 0
      %7739 = vmatpush1.bf16.msra.mxu0 0
      %7740 = vmatprep.subr.bf16.mxu0 0
      %7741 = vmatpush1.bf16.msra.mxu0 0
      %7742 = vmatprep.subr.bf16.mxu0 0
      %7743 = vmatpush1.bf16.msra.mxu0 0
      %7744 = vmatprep.subr.bf16.mxu0 0
      %7745 = vmatpush1.bf16.msra.mxu0 0
      %7746 = vmatprep.subr.bf16.mxu0 0
      %7747 = vmatpush1.bf16.msra.mxu0 0
      %7748 = vmatprep.subr.bf16.mxu0 0
      %7749 = vmatpush1.bf16.msra.mxu0 0
      %7750 = vmatprep.subr.bf16.mxu0 0
      %7751 = vmatpush1.bf16.msra.mxu0 0
      %7752 = vmatprep.subr.bf16.mxu0 0
      %7753 = vmatpush1.bf16.msra.mxu0 0
      %7754 = vmatprep.subr.bf16.mxu0 0
      %7755 = vmatpush1.bf16.msra.mxu0 0
      %7756 = vmatprep.subr.bf16.mxu0 0
      %7757 = vmatpush1.bf16.msra.mxu0 0
      %7758 = vmatprep.subr.bf16.mxu0 0
      %7759 = vmatpush1.bf16.msra.mxu0 0
      %7760 = vmatprep.subr.bf16.mxu0 0
      %7761 = vmatpush1.bf16.msra.mxu0 0
      %7762 = vmatprep.subr.bf16.mxu0 0
      %7763 = vmatpush1.bf16.msra.mxu0 0
      %7764 = vmatprep.subr.bf16.mxu0 0
      %7765 = vmatpush1.bf16.msra.mxu0 0
      %7766 = vmatprep.mubr.bf16.mxu0 0
      %7767 = vmatmul.mubr.bf16.gmra.mrb[0].mxu0 %v7723
      %v7768 = vpop.f32.mrb[0].mxu0
      %v7769 = vadd.f32 0.0, %v7768
      %v7770 = vpop.f32.mrb[0].mxu0
      %v7771 = vpop.f32.mrb[0].mxu0
      %v7772 = vadd.f32 0.0, %v7771
      %v7773 = vpop.f32.mrb[0].mxu0
      %7774 = vmatprep.mubr.bf16.mxu0 0
      %7775 = vmatmul.mubr.bf16.gmra.mrb[0].mxu0 %v7726
      %v7776 = vpop.f32.mrb[0].mxu0
      %v7777 = vadd.f32 0.0, %v7776
      %v7778 = vpop.f32.mrb[0].mxu0
      %v7779 = vpop.f32.mrb[0].mxu0
      %v7780 = vadd.f32 0.0, %v7779
      %v7781 = vpop.f32.mrb[0].mxu0
      %7782 = vmatprep.mubr.bf16.mxu0 0
      %7783 = vmatmul.mubr.bf16.gmra.mrb[0].mxu0 %v7729
      %v7784 = vpop.f32.mrb[0].mxu0
      %v7785 = vadd.f32 0.0, %v7784
      %v7786 = vpop.f32.mrb[0].mxu0
      %v7787 = vpop.f32.mrb[0].mxu0
      %v7788 = vadd.f32 0.0, %v7787
      %v7789 = vpop.f32.mrb[0].mxu0
      %7790 = vmatprep.mubr.bf16.mxu0 0
      %7791 = vmatmul.mubr.bf16.gmra.mrb[0].mxu0 %v7732
      %v7792 = vpop.f32.mrb[0].mxu0
      %v7793 = vadd.f32 0.0, %v7792
      %v7794 = vpop.f32.mrb[0].mxu0
      %v7795 = vpop.f32.mrb[0].mxu0
      %v7796 = vadd.f32 0.0, %v7795
      %v7797 = vpop.f32.mrb[0].mxu0
      %7798 = vdwg.mxu0
      %v7799 = vadd.f32 %v7705, %v7769
      %v7800 = vadd.f32 %v7706, %v7772
      %v7801 = vadd.f32 %v7707, %v7777
      %v7802 = vadd.f32 %v7708, %v7780
      %v7803 = vadd.f32 %v7709, %v7785
      %v7804 = vadd.f32 %v7710, %v7788
      %v7805 = vadd.f32 %v7711, %v7793
      %v7806 = vadd.f32 %v7712, %v7796
      %s7807 = scalar_lea.vmem %s13, 64
      %v7808 = vld [vmem:[%s7807] sm:$0xf]
      %v7809 = vld [vmem:[%s7807 + $0x4] sm:$0xf]
      %v7812 = vunpack.c.l.b16 %v7808
      %v7813 = vunpack.c.l.b16 %v7809
      %v7814 = vpack.c.b16 %v7813, %v7812
      %v7817 = vsel %vm3311, %v7004, 0
      %v7820 = vsel %vm3311, %v7005, 0
      %v7823 = vsel %vm3311, %v7006, 0
      %v7826 = vsel %vm3311, %v7007, 0
      %7828 = vmatprep.subr.bf16.mxu0 0
      %7829 = vmatpush1.bf16.msra.mxu0 %v7814
      %7830 = vmatprep.subr.bf16.mxu0 0
      %7831 = vmatpush1.bf16.msra.mxu0 0
      %7832 = vmatprep.subr.bf16.mxu0 0
      %7833 = vmatpush1.bf16.msra.mxu0 0
      %7834 = vmatprep.subr.bf16.mxu0 0
      %7835 = vmatpush1.bf16.msra.mxu0 0
      %7836 = vmatprep.subr.bf16.mxu0 0
      %7837 = vmatpush1.bf16.msra.mxu0 0
      %7838 = vmatprep.subr.bf16.mxu0 0
      %7839 = vmatpush1.bf16.msra.mxu0 0
      %7840 = vmatprep.subr.bf16.mxu0 0
      %7841 = vmatpush1.bf16.msra.mxu0 0
      %7842 = vmatprep.subr.bf16.mxu0 0
      %7843 = vmatpush1.bf16.msra.mxu0 0
      %7844 = vmatprep.subr.bf16.mxu0 0
      %7845 = vmatpush1.bf16.msra.mxu0 0
      %7846 = vmatprep.subr.bf16.mxu0 0
      %7847 = vmatpush1.bf16.msra.mxu0 0
      %7848 = vmatprep.subr.bf16.mxu0 0
      %7849 = vmatpush1.bf16.msra.mxu0 0
      %7850 = vmatprep.subr.bf16.mxu0 0
      %7851 = vmatpush1.bf16.msra.mxu0 0
      %7852 = vmatprep.subr.bf16.mxu0 0
      %7853 = vmatpush1.bf16.msra.mxu0 0
      %7854 = vmatprep.subr.bf16.mxu0 0
      %7855 = vmatpush1.bf16.msra.mxu0 0
      %7856 = vmatprep.subr.bf16.mxu0 0
      %7857 = vmatpush1.bf16.msra.mxu0 0
      %7858 = vmatprep.subr.bf16.mxu0 0
      %7859 = vmatpush1.bf16.msra.mxu0 0
      %7860 = vmatprep.mubr.bf16.mxu0 0
      %7861 = vmatmul.mubr.bf16.gmra.mrb[0].mxu0 %v7817
      %v7862 = vpop.f32.mrb[0].mxu0
      %v7863 = vadd.f32 0.0, %v7862
      %v7864 = vpop.f32.mrb[0].mxu0
      %v7865 = vpop.f32.mrb[0].mxu0
      %v7866 = vadd.f32 0.0, %v7865
      %v7867 = vpop.f32.mrb[0].mxu0
      %7868 = vmatprep.mubr.bf16.mxu0 0
      %7869 = vmatmul.mubr.bf16.gmra.mrb[0].mxu0 %v7820
      %v7870 = vpop.f32.mrb[0].mxu0
      %v7871 = vadd.f32 0.0, %v7870
      %v7872 = vpop.f32.mrb[0].mxu0
      %v7873 = vpop.f32.mrb[0].mxu0
      %v7874 = vadd.f32 0.0, %v7873
      %v7875 = vpop.f32.mrb[0].mxu0
      %7876 = vmatprep.mubr.bf16.mxu0 0
      %7877 = vmatmul.mubr.bf16.gmra.mrb[0].mxu0 %v7823
      %v7878 = vpop.f32.mrb[0].mxu0
      %v7879 = vadd.f32 0.0, %v7878
      %v7880 = vpop.f32.mrb[0].mxu0
      %v7881 = vpop.f32.mrb[0].mxu0
      %v7882 = vadd.f32 0.0, %v7881
      %v7883 = vpop.f32.mrb[0].mxu0
      %7884 = vmatprep.mubr.bf16.mxu0 0
      %7885 = vmatmul.mubr.bf16.gmra.mrb[0].mxu0 %v7826
      %v7886 = vpop.f32.mrb[0].mxu0
      %v7887 = vadd.f32 0.0, %v7886
      %v7888 = vpop.f32.mrb[0].mxu0
      %v7889 = vpop.f32.mrb[0].mxu0
      %v7890 = vadd.f32 0.0, %v7889
      %v7891 = vpop.f32.mrb[0].mxu0
      %7892 = vdwg.mxu0
      %v7893 = vadd.f32 %v7799, %v7863
      %v7894 = vadd.f32 %v7800, %v7866
      %v7895 = vadd.f32 %v7801, %v7871
      %v7896 = vadd.f32 %v7802, %v7874
      %v7897 = vadd.f32 %v7803, %v7879
      %v7898 = vadd.f32 %v7804, %v7882
      %v7899 = vadd.f32 %v7805, %v7887
      %v7900 = vadd.f32 %v7806, %v7890
      %v7901 = vmax.f32 %v7893, 0.0
      %v7902 = vmax.f32 %v7894, 0.0
      %v7903 = vmax.f32 %v7895, 0.0
      %v7904 = vmax.f32 %v7896, 0.0
      %v7905 = vmax.f32 %v7897, 0.0
      %v7906 = vmax.f32 %v7898, 0.0
      %v7907 = vmax.f32 %v7899, 0.0
      %v7908 = vmax.f32 %v7900, 0.0
      %v7909 = vpack.c.bf16 %v7902, %v7901
      %v7910 = vpack.c.bf16 %v7904, %v7903
      %v7911 = vpack.c.bf16 %v7906, %v7905
      %v7912 = vpack.c.bf16 %v7908, %v7907
      %v7913 = vld [vmem:[%s17] sm:$0xf]
      %v7914 = vld [vmem:[%s17 + $0x4] sm:$0xf]
      %v7915 = vld [vmem:[%s17 + $0x8] sm:$0xf]
      %v7916 = vld [vmem:[%s17 + $0xc] sm:$0xf]
      %v7917 = vld [vmem:[%s17 + $0x10] sm:$0xf]
      %v7918 = vld [vmem:[%s17 + $0x14] sm:$0xf]
      %v7919 = vld [vmem:[%s17 + $0x18] sm:$0xf]
      %v7920 = vld [vmem:[%s17 + $0x1c] sm:$0xf]
      %v7921 = vld [vmem:[%s17 + $0x20] sm:$0xf]
      %v7931 = vunpack.c.l.b16 %v7913
      %v7932 = vunpack.c.l.b16 %v7914
      %v7933 = vunpack.c.l.b16 %v7915
      %v7934 = vunpack.c.l.b16 %v7916
      %v7935 = vunpack.c.l.b16 %v7917
      %v7936 = vunpack.c.l.b16 %v7918
      %v7937 = vunpack.c.l.b16 %v7919
      %v7938 = vunpack.c.l.b16 %v7920
      %v7939 = vunpack.c.l.b16 %v7921
      %v7940 = vpack.c.b16 %v7932, %v7931
      %v7941 = vpack.c.b16 %v7934, %v7933
      %v7942 = vpack.c.b16 %v7936, %v7935
      %v7943 = vpack.c.b16 %v7938, %v7937
      %v7944 = vpack.c.b16 %v7939, %v7939
      %v7946 = vsel %vm2417, %v7940, 0
      %v7949 = vsel %vm2417, %v7941, 0
      %v7952 = vsel %vm2417, %v7942, 0
      %v7955 = vsel %vm2417, %v7943, 0
      %v7958 = vsel %vm2417, %v7944, 0
      %7960 = vmatprep.subr.bf16.mxu0 0
      %7961 = vmatpush1.bf16.msra.mxu0 %v7909
      %7962 = vmatprep.subr.bf16.mxu0 0
      %7963 = vmatpush1.bf16.msra.mxu0 %v7910
      %7964 = vmatprep.subr.bf16.mxu0 0
      %7965 = vmatpush1.bf16.msra.mxu0 %v7911
      %7966 = vmatprep.subr.bf16.mxu0 0
      %7967 = vmatpush1.bf16.msra.mxu0 %v7912
      %7968 = vmatprep.subr.bf16.mxu0 0
      %7969 = vmatpush1.bf16.msra.mxu0 0
      %7970 = vmatprep.subr.bf16.mxu0 0
      %7971 = vmatpush1.bf16.msra.mxu0 0
      %7972 = vmatprep.subr.bf16.mxu0 0
      %7973 = vmatpush1.bf16.msra.mxu0 0
      %7974 = vmatprep.subr.bf16.mxu0 0
      %7975 = vmatpush1.bf16.msra.mxu0 0
      %7976 = vmatprep.subr.bf16.mxu0 0
      %7977 = vmatpush1.bf16.msra.mxu0 0
      %7978 = vmatprep.subr.bf16.mxu0 0
      %7979 = vmatpush1.bf16.msra.mxu0 0
      %7980 = vmatprep.subr.bf16.mxu0 0
      %7981 = vmatpush1.bf16.msra.mxu0 0
      %7982 = vmatprep.subr.bf16.mxu0 0
      %7983 = vmatpush1.bf16.msra.mxu0 0
      %7984 = vmatprep.subr.bf16.mxu0 0
      %7985 = vmatpush1.bf16.msra.mxu0 0
      %7986 = vmatprep.subr.bf16.mxu0 0
      %7987 = vmatpush1.bf16.msra.mxu0 0
      %7988 = vmatprep.subr.bf16.mxu0 0
      %7989 = vmatpush1.bf16.msra.mxu0 0
      %7990 = vmatprep.subr.bf16.mxu0 0
      %7991 = vmatpush1.bf16.msra.mxu0 0
      %7992 = vmatprep.mubr.bf16.mxu0 0
      %7993 = vmatmul.mubr.bf16.gmra.mrb[0].mxu0 %v7946
      %v7994 = vpop.f32.mrb[0].mxu0
      %v7995 = vadd.f32 0.0, %v7994
      %v7996 = vpop.f32.mrb[0].mxu0
      %v7997 = vpop.f32.mrb[0].mxu0
      %v7998 = vadd.f32 0.0, %v7997
      %v7999 = vpop.f32.mrb[0].mxu0
      %8000 = vmatprep.mubr.bf16.mxu0 0
      %8001 = vmatmul.mubr.bf16.gmra.mrb[0].mxu0 %v7949
      %v8002 = vpop.f32.mrb[0].mxu0
      %v8003 = vadd.f32 0.0, %v8002
      %v8004 = vpop.f32.mrb[0].mxu0
      %v8005 = vpop.f32.mrb[0].mxu0
      %v8006 = vadd.f32 0.0, %v8005
      %v8007 = vpop.f32.mrb[0].mxu0
      %8008 = vmatprep.mubr.bf16.mxu0 0
      %8009 = vmatmul.mubr.bf16.gmra.mrb[0].mxu0 %v7952
      %v8010 = vpop.f32.mrb[0].mxu0
      %v8011 = vadd.f32 0.0, %v8010
      %v8012 = vpop.f32.mrb[0].mxu0
      %v8013 = vpop.f32.mrb[0].mxu0
      %v8014 = vadd.f32 0.0, %v8013
      %v8015 = vpop.f32.mrb[0].mxu0
      %8016 = vmatprep.mubr.bf16.mxu0 0
      %8017 = vmatmul.mubr.bf16.gmra.mrb[0].mxu0 %v7955
      %v8018 = vpop.f32.mrb[0].mxu0
      %v8019 = vadd.f32 0.0, %v8018
      %v8020 = vpop.f32.mrb[0].mxu0
      %v8021 = vpop.f32.mrb[0].mxu0
      %v8022 = vadd.f32 0.0, %v8021
      %v8023 = vpop.f32.mrb[0].mxu0
      %8024 = vmatprep.mubr.bf16.mxu0 0
      %8025 = vmatmul.mubr.bf16.gmra.mrb[0].mxu0 %v7958
      %v8026 = vpop.f32.mrb[0].mxu0
      %v8027 = vadd.f32 0.0, %v8026
      %v8028 = vpop.f32.mrb[0].mxu0
      %v8029 = vpop.f32.mrb[0].mxu0
      %v8030 = vpop.f32.mrb[0].mxu0
      %8031 = vdwg.mxu0
      %v8032 = vpack.c.bf16 %v7998, %v7995
      %v8033 = vpack.c.bf16 %v8006, %v8003
      %v8034 = vpack.c.bf16 %v8014, %v8011
      %v8035 = vpack.c.bf16 %v8022, %v8019
      %v8036 = vpack.c.bf16 %v8027, %v8027
      %v8037 = vld [vmem:[%s18] sm:$0xff]
      %8039 = vset.pattern.permute.xlu0 0
      %8040 = vperm.xlu0 %8039, %v8037
      %v8041 = vpop.permute.xlu0 %8040
      %v8043 = vld [vmem:[%s16] sm:$0xff]
      %v8044 = vld [vmem:[%s16 + $0x8] sm:$0xff]
      %v8045 = vld [vmem:[%s16 + $0x10] sm:$0xff]
      %v8046 = vld [vmem:[%s16 + $0x18] sm:$0xff]
      %v8047 = vld [vmem:[%s16 + $0x20] sm:$0xff]
      %v8048 = vld [vmem:[%s16 + $0x28] sm:$0xff]
      %v8049 = vld [vmem:[%s16 + $0x30] sm:$0xff]
      %v8050 = vld [vmem:[%s16 + $0x38] sm:$0xff]
      %v8059 = vunpack.c.l.b16 %v8043
      %v8060 = vunpack.c.h.b16 %v8043
      %v8061 = vunpack.c.l.b16 %v8044
      %v8062 = vunpack.c.h.b16 %v8044
      %v8063 = vunpack.c.l.b16 %v8045
      %v8064 = vunpack.c.h.b16 %v8045
      %v8065 = vunpack.c.l.b16 %v8046
      %v8066 = vunpack.c.h.b16 %v8046
      %v8067 = vunpack.c.l.b16 %v8047
      %v8068 = vunpack.c.h.b16 %v8047
      %v8069 = vunpack.c.l.b16 %v8048
      %v8070 = vunpack.c.h.b16 %v8048
      %v8071 = vunpack.c.l.b16 %v8049
      %v8072 = vunpack.c.h.b16 %v8049
      %v8073 = vunpack.c.l.b16 %v8050
      %v8074 = vunpack.c.h.b16 %v8050
      %v8075 = vpack.c.b16 %v8061, %v8059
      %v8076 = vpack.c.b16 %v8062, %v8060
      %v8077 = vpack.c.b16 %v8065, %v8063
      %v8078 = vpack.c.b16 %v8066, %v8064
      %v8079 = vpack.c.b16 %v8069, %v8067
      %v8080 = vpack.c.b16 %v8070, %v8068
      %v8081 = vpack.c.b16 %v8073, %v8071
      %v8082 = vpack.c.b16 %v8074, %v8072
      %v8092 = vsel %vm2417, %v8032, 0
      %8094 = vmatprep.subr.bf16.mxu0 %v8076
      %8095 = vmatpush1.bf16.msra.mxu0 %v8075
      %8096 = vmatprep.subr.bf16.mxu0 %v8078
      %8097 = vmatpush1.bf16.msra.mxu0 %v8077
      %8098 = vmatprep.subr.bf16.mxu0 %v8080
      %8099 = vmatpush1.bf16.msra.mxu0 %v8079
      %8100 = vmatprep.subr.bf16.mxu0 %v8082
      %8101 = vmatpush1.bf16.msra.mxu0 %v8081
      %8102 = vmatprep.subr.bf16.mxu0 0
      %8103 = vmatpush1.bf16.msra.mxu0 0
      %8104 = vmatprep.subr.bf16.mxu0 0
      %8105 = vmatpush1.bf16.msra.mxu0 0
      %8106 = vmatprep.subr.bf16.mxu0 0
      %8107 = vmatpush1.bf16.msra.mxu0 0
      %8108 = vmatprep.subr.bf16.mxu0 0
      %8109 = vmatpush1.bf16.msra.mxu0 0
      %8110 = vmatprep.subr.bf16.mxu0 0
      %8111 = vmatpush1.bf16.msra.mxu0 0
      %8112 = vmatprep.subr.bf16.mxu0 0
      %8113 = vmatpush1.bf16.msra.mxu0 0
      %8114 = vmatprep.subr.bf16.mxu0 0
      %8115 = vmatpush1.bf16.msra.mxu0 0
      %8116 = vmatprep.subr.bf16.mxu0 0
      %8117 = vmatpush1.bf16.msra.mxu0 0
      %8118 = vmatprep.subr.bf16.mxu0 0
      %8119 = vmatpush1.bf16.msra.mxu0 0
      %8120 = vmatprep.subr.bf16.mxu0 0
      %8121 = vmatpush1.bf16.msra.mxu0 0
      %8122 = vmatprep.subr.bf16.mxu0 0
      %8123 = vmatpush1.bf16.msra.mxu0 0
      %8124 = vmatprep.subr.bf16.mxu0 0
      %8125 = vmatpush1.bf16.msra.mxu0 0
      %8126 = vmatprep.mubr.bf16.mxu0 0
      %8127 = vmatmul.mubr.bf16.gmra.mrb[0].mxu0 %v8092
      %v8128 = vpop.f32.mrb[0].mxu0
      %v8129 = vadd.f32 0.0, %v8128
      %v8130 = vpop.f32.mrb[0].mxu0
      %v8131 = vadd.f32 0.0, %v8130
      %v8132 = vpop.f32.mrb[0].mxu0
      %v8133 = vpop.f32.mrb[0].mxu0
      %8134 = vdwg.mxu0
      %v8135 = vadd.f32 %v8041, %v8129
      %v8136 = vadd.f32 %v8041, %v8131
      %s8137 = scalar_lea.vmem %s16, 64
      %v8138 = vld [vmem:[%s8137] sm:$0xff]
      %v8139 = vld [vmem:[%s8137 + $0x8] sm:$0xff]
      %v8140 = vld [vmem:[%s8137 + $0x10] sm:$0xff]
      %v8141 = vld [vmem:[%s8137 + $0x18] sm:$0xff]
      %v8142 = vld [vmem:[%s8137 + $0x20] sm:$0xff]
      %v8143 = vld [vmem:[%s8137 + $0x28] sm:$0xff]
      %v8144 = vld [vmem:[%s8137 + $0x30] sm:$0xff]
      %v8145 = vld [vmem:[%s8137 + $0x38] sm:$0xff]
      %v8147 = vrot.slane %v8032, 4
      %v8156 = vunpack.c.l.b16 %v8138
      %v8157 = vunpack.c.h.b16 %v8138
      %v8158 = vunpack.c.l.b16 %v8139
      %v8159 = vunpack.c.h.b16 %v8139
      %v8160 = vunpack.c.l.b16 %v8140
      %v8161 = vunpack.c.h.b16 %v8140
      %v8162 = vunpack.c.l.b16 %v8141
      %v8163 = vunpack.c.h.b16 %v8141
      %v8164 = vunpack.c.l.b16 %v8142
      %v8165 = vunpack.c.h.b16 %v8142
      %v8166 = vunpack.c.l.b16 %v8143
      %v8167 = vunpack.c.h.b16 %v8143
      %v8168 = vunpack.c.l.b16 %v8144
      %v8169 = vunpack.c.h.b16 %v8144
      %v8170 = vunpack.c.l.b16 %v8145
      %v8171 = vunpack.c.h.b16 %v8145
      %v8172 = vpack.c.b16 %v8158, %v8156
      %v8173 = vpack.c.b16 %v8159, %v8157
      %v8174 = vpack.c.b16 %v8162, %v8160
      %v8175 = vpack.c.b16 %v8163, %v8161
      %v8176 = vpack.c.b16 %v8166, %v8164
      %v8177 = vpack.c.b16 %v8167, %v8165
      %v8178 = vpack.c.b16 %v8170, %v8168
      %v8179 = vpack.c.b16 %v8171, %v8169
      %v8189 = vsel %vm2417, %v8147, 0
      %8191 = vmatprep.subr.bf16.mxu0 %v8173
      %8192 = vmatpush1.bf16.msra.mxu0 %v8172
      %8193 = vmatprep.subr.bf16.mxu0 %v8175
      %8194 = vmatpush1.bf16.msra.mxu0 %v8174
      %8195 = vmatprep.subr.bf16.mxu0 %v8177
      %8196 = vmatpush1.bf16.msra.mxu0 %v8176
      %8197 = vmatprep.subr.bf16.mxu0 %v8179
      %8198 = vmatpush1.bf16.msra.mxu0 %v8178
      %8199 = vmatprep.subr.bf16.mxu0 0
      %8200 = vmatpush1.bf16.msra.mxu0 0
      %8201 = vmatprep.subr.bf16.mxu0 0
      %8202 = vmatpush1.bf16.msra.mxu0 0
      %8203 = vmatprep.subr.bf16.mxu0 0
      %8204 = vmatpush1.bf16.msra.mxu0 0
      %8205 = vmatprep.subr.bf16.mxu0 0
      %8206 = vmatpush1.bf16.msra.mxu0 0
      %8207 = vmatprep.subr.bf16.mxu0 0
      %8208 = vmatpush1.bf16.msra.mxu0 0
      %8209 = vmatprep.subr.bf16.mxu0 0
      %8210 = vmatpush1.bf16.msra.mxu0 0
      %8211 = vmatprep.subr.bf16.mxu0 0
      %8212 = vmatpush1.bf16.msra.mxu0 0
      %8213 = vmatprep.subr.bf16.mxu0 0
      %8214 = vmatpush1.bf16.msra.mxu0 0
      %8215 = vmatprep.subr.bf16.mxu0 0
      %8216 = vmatpush1.bf16.msra.mxu0 0
      %8217 = vmatprep.subr.bf16.mxu0 0
      %8218 = vmatpush1.bf16.msra.mxu0 0
      %8219 = vmatprep.subr.bf16.mxu0 0
      %8220 = vmatpush1.bf16.msra.mxu0 0
      %8221 = vmatprep.subr.bf16.mxu0 0
      %8222 = vmatpush1.bf16.msra.mxu0 0
      %8223 = vmatprep.mubr.bf16.mxu0 0
      %8224 = vmatmul.mubr.bf16.gmra.mrb[0].mxu0 %v8189
      %v8225 = vpop.f32.mrb[0].mxu0
      %v8226 = vadd.f32 0.0, %v8225
      %v8227 = vpop.f32.mrb[0].mxu0
      %v8228 = vadd.f32 0.0, %v8227
      %v8229 = vpop.f32.mrb[0].mxu0
      %v8230 = vpop.f32.mrb[0].mxu0
      %8231 = vdwg.mxu0
      %v8232 = vadd.f32 %v8135, %v8226
      %v8233 = vadd.f32 %v8136, %v8228
      %s8234 = scalar_lea.vmem %s16, 128
      %v8235 = vld [vmem:[%s8234] sm:$0xff]
      %v8236 = vld [vmem:[%s8234 + $0x8] sm:$0xff]
      %v8237 = vld [vmem:[%s8234 + $0x10] sm:$0xff]
      %v8238 = vld [vmem:[%s8234 + $0x18] sm:$0xff]
      %v8239 = vld [vmem:[%s8234 + $0x20] sm:$0xff]
      %v8240 = vld [vmem:[%s8234 + $0x28] sm:$0xff]
      %v8241 = vld [vmem:[%s8234 + $0x30] sm:$0xff]
      %v8242 = vld [vmem:[%s8234 + $0x38] sm:$0xff]
      %v8251 = vunpack.c.l.b16 %v8235
      %v8252 = vunpack.c.h.b16 %v8235
      %v8253 = vunpack.c.l.b16 %v8236
      %v8254 = vunpack.c.h.b16 %v8236
      %v8255 = vunpack.c.l.b16 %v8237
      %v8256 = vunpack.c.h.b16 %v8237
      %v8257 = vunpack.c.l.b16 %v8238
      %v8258 = vunpack.c.h.b16 %v8238
      %v8259 = vunpack.c.l.b16 %v8239
      %v8260 = vunpack.c.h.b16 %v8239
      %v8261 = vunpack.c.l.b16 %v8240
      %v8262 = vunpack.c.h.b16 %v8240
      %v8263 = vunpack.c.l.b16 %v8241
      %v8264 = vunpack.c.h.b16 %v8241
      %v8265 = vunpack.c.l.b16 %v8242
      %v8266 = vunpack.c.h.b16 %v8242
      %v8267 = vpack.c.b16 %v8253, %v8251
      %v8268 = vpack.c.b16 %v8254, %v8252
      %v8269 = vpack.c.b16 %v8257, %v8255
      %v8270 = vpack.c.b16 %v8258, %v8256
      %v8271 = vpack.c.b16 %v8261, %v8259
      %v8272 = vpack.c.b16 %v8262, %v8260
      %v8273 = vpack.c.b16 %v8265, %v8263
      %v8274 = vpack.c.b16 %v8266, %v8264
      %v8284 = vsel %vm2417, %v8033, 0
      %8286 = vmatprep.subr.bf16.mxu0 %v8268
      %8287 = vmatpush1.bf16.msra.mxu0 %v8267
      %8288 = vmatprep.subr.bf16.mxu0 %v8270
      %8289 = vmatpush1.bf16.msra.mxu0 %v8269
      %8290 = vmatprep.subr.bf16.mxu0 %v8272
      %8291 = vmatpush1.bf16.msra.mxu0 %v8271
      %8292 = vmatprep.subr.bf16.mxu0 %v8274
      %8293 = vmatpush1.bf16.msra.mxu0 %v8273
      %8294 = vmatprep.subr.bf16.mxu0 0
      %8295 = vmatpush1.bf16.msra.mxu0 0
      %8296 = vmatprep.subr.bf16.mxu0 0
      %8297 = vmatpush1.bf16.msra.mxu0 0
      %8298 = vmatprep.subr.bf16.mxu0 0
      %8299 = vmatpush1.bf16.msra.mxu0 0
      %8300 = vmatprep.subr.bf16.mxu0 0
      %8301 = vmatpush1.bf16.msra.mxu0 0
      %8302 = vmatprep.subr.bf16.mxu0 0
      %8303 = vmatpush1.bf16.msra.mxu0 0
      %8304 = vmatprep.subr.bf16.mxu0 0
      %8305 = vmatpush1.bf16.msra.mxu0 0
      %8306 = vmatprep.subr.bf16.mxu0 0
      %8307 = vmatpush1.bf16.msra.mxu0 0
      %8308 = vmatprep.subr.bf16.mxu0 0
      %8309 = vmatpush1.bf16.msra.mxu0 0
      %8310 = vmatprep.subr.bf16.mxu0 0
      %8311 = vmatpush1.bf16.msra.mxu0 0
      %8312 = vmatprep.subr.bf16.mxu0 0
      %8313 = vmatpush1.bf16.msra.mxu0 0
      %8314 = vmatprep.subr.bf16.mxu0 0
      %8315 = vmatpush1.bf16.msra.mxu0 0
      %8316 = vmatprep.subr.bf16.mxu0 0
      %8317 = vmatpush1.bf16.msra.mxu0 0
      %8318 = vmatprep.mubr.bf16.mxu0 0
      %8319 = vmatmul.mubr.bf16.gmra.mrb[0].mxu0 %v8284
      %v8320 = vpop.f32.mrb[0].mxu0
      %v8321 = vadd.f32 0.0, %v8320
      %v8322 = vpop.f32.mrb[0].mxu0
      %v8323 = vadd.f32 0.0, %v8322
      %v8324 = vpop.f32.mrb[0].mxu0
      %v8325 = vpop.f32.mrb[0].mxu0
      %8326 = vdwg.mxu0
      %v8327 = vadd.f32 %v8232, %v8321
      %v8328 = vadd.f32 %v8233, %v8323
      %s8329 = scalar_lea.vmem %s16, 192
      %v8330 = vld [vmem:[%s8329] sm:$0xff]
      %v8331 = vld [vmem:[%s8329 + $0x8] sm:$0xff]
      %v8332 = vld [vmem:[%s8329 + $0x10] sm:$0xff]
      %v8333 = vld [vmem:[%s8329 + $0x18] sm:$0xff]
      %v8334 = vld [vmem:[%s8329 + $0x20] sm:$0xff]
      %v8335 = vld [vmem:[%s8329 + $0x28] sm:$0xff]
      %v8336 = vld [vmem:[%s8329 + $0x30] sm:$0xff]
      %v8337 = vld [vmem:[%s8329 + $0x38] sm:$0xff]
      %v8339 = vrot.slane %v8033, 4
      %v8348 = vunpack.c.l.b16 %v8330
      %v8349 = vunpack.c.h.b16 %v8330
      %v8350 = vunpack.c.l.b16 %v8331
      %v8351 = vunpack.c.h.b16 %v8331
      %v8352 = vunpack.c.l.b16 %v8332
      %v8353 = vunpack.c.h.b16 %v8332
      %v8354 = vunpack.c.l.b16 %v8333
      %v8355 = vunpack.c.h.b16 %v8333
      %v8356 = vunpack.c.l.b16 %v8334
      %v8357 = vunpack.c.h.b16 %v8334
      %v8358 = vunpack.c.l.b16 %v8335
      %v8359 = vunpack.c.h.b16 %v8335
      %v8360 = vunpack.c.l.b16 %v8336
      %v8361 = vunpack.c.h.b16 %v8336
      %v8362 = vunpack.c.l.b16 %v8337
      %v8363 = vunpack.c.h.b16 %v8337
      %v8364 = vpack.c.b16 %v8350, %v8348
      %v8365 = vpack.c.b16 %v8351, %v8349
      %v8366 = vpack.c.b16 %v8354, %v8352
      %v8367 = vpack.c.b16 %v8355, %v8353
      %v8368 = vpack.c.b16 %v8358, %v8356
      %v8369 = vpack.c.b16 %v8359, %v8357
      %v8370 = vpack.c.b16 %v8362, %v8360
      %v8371 = vpack.c.b16 %v8363, %v8361
      %v8381 = vsel %vm2417, %v8339, 0
      %8383 = vmatprep.subr.bf16.mxu0 %v8365
      %8384 = vmatpush1.bf16.msra.mxu0 %v8364
      %8385 = vmatprep.subr.bf16.mxu0 %v8367
      %8386 = vmatpush1.bf16.msra.mxu0 %v8366
      %8387 = vmatprep.subr.bf16.mxu0 %v8369
      %8388 = vmatpush1.bf16.msra.mxu0 %v8368
      %8389 = vmatprep.subr.bf16.mxu0 %v8371
      %8390 = vmatpush1.bf16.msra.mxu0 %v8370
      %8391 = vmatprep.subr.bf16.mxu0 0
      %8392 = vmatpush1.bf16.msra.mxu0 0
      %8393 = vmatprep.subr.bf16.mxu0 0
      %8394 = vmatpush1.bf16.msra.mxu0 0
      %8395 = vmatprep.subr.bf16.mxu0 0
      %8396 = vmatpush1.bf16.msra.mxu0 0
      %8397 = vmatprep.subr.bf16.mxu0 0
      %8398 = vmatpush1.bf16.msra.mxu0 0
      %8399 = vmatprep.subr.bf16.mxu0 0
      %8400 = vmatpush1.bf16.msra.mxu0 0
      %8401 = vmatprep.subr.bf16.mxu0 0
      %8402 = vmatpush1.bf16.msra.mxu0 0
      %8403 = vmatprep.subr.bf16.mxu0 0
      %8404 = vmatpush1.bf16.msra.mxu0 0
      %8405 = vmatprep.subr.bf16.mxu0 0
      %8406 = vmatpush1.bf16.msra.mxu0 0
      %8407 = vmatprep.subr.bf16.mxu0 0
      %8408 = vmatpush1.bf16.msra.mxu0 0
      %8409 = vmatprep.subr.bf16.mxu0 0
      %8410 = vmatpush1.bf16.msra.mxu0 0
      %8411 = vmatprep.subr.bf16.mxu0 0
      %8412 = vmatpush1.bf16.msra.mxu0 0
      %8413 = vmatprep.subr.bf16.mxu0 0
      %8414 = vmatpush1.bf16.msra.mxu0 0
      %8415 = vmatprep.mubr.bf16.mxu0 0
      %8416 = vmatmul.mubr.bf16.gmra.mrb[0].mxu0 %v8381
      %v8417 = vpop.f32.mrb[0].mxu0
      %v8418 = vadd.f32 0.0, %v8417
      %v8419 = vpop.f32.mrb[0].mxu0
      %v8420 = vadd.f32 0.0, %v8419
      %v8421 = vpop.f32.mrb[0].mxu0
      %v8422 = vpop.f32.mrb[0].mxu0
      %8423 = vdwg.mxu0
      %v8424 = vadd.f32 %v8327, %v8418
      %v8425 = vadd.f32 %v8328, %v8420
      %s8426 = scalar_lea.vmem %s16, 256
      %v8427 = vld [vmem:[%s8426] sm:$0xff]
      %v8428 = vld [vmem:[%s8426 + $0x8] sm:$0xff]
      %v8429 = vld [vmem:[%s8426 + $0x10] sm:$0xff]
      %v8430 = vld [vmem:[%s8426 + $0x18] sm:$0xff]
      %v8431 = vld [vmem:[%s8426 + $0x20] sm:$0xff]
      %v8432 = vld [vmem:[%s8426 + $0x28] sm:$0xff]
      %v8433 = vld [vmem:[%s8426 + $0x30] sm:$0xff]
      %v8434 = vld [vmem:[%s8426 + $0x38] sm:$0xff]
      %v8443 = vunpack.c.l.b16 %v8427
      %v8444 = vunpack.c.h.b16 %v8427
      %v8445 = vunpack.c.l.b16 %v8428
      %v8446 = vunpack.c.h.b16 %v8428
      %v8447 = vunpack.c.l.b16 %v8429
      %v8448 = vunpack.c.h.b16 %v8429
      %v8449 = vunpack.c.l.b16 %v8430
      %v8450 = vunpack.c.h.b16 %v8430
      %v8451 = vunpack.c.l.b16 %v8431
      %v8452 = vunpack.c.h.b16 %v8431
      %v8453 = vunpack.c.l.b16 %v8432
      %v8454 = vunpack.c.h.b16 %v8432
      %v8455 = vunpack.c.l.b16 %v8433
      %v8456 = vunpack.c.h.b16 %v8433
      %v8457 = vunpack.c.l.b16 %v8434
      %v8458 = vunpack.c.h.b16 %v8434
      %v8459 = vpack.c.b16 %v8445, %v8443
      %v8460 = vpack.c.b16 %v8446, %v8444
      %v8461 = vpack.c.b16 %v8449, %v8447
      %v8462 = vpack.c.b16 %v8450, %v8448
      %v8463 = vpack.c.b16 %v8453, %v8451
      %v8464 = vpack.c.b16 %v8454, %v8452
      %v8465 = vpack.c.b16 %v8457, %v8455
      %v8466 = vpack.c.b16 %v8458, %v8456
      %v8476 = vsel %vm2417, %v8034, 0
      %8478 = vmatprep.subr.bf16.mxu0 %v8460
      %8479 = vmatpush1.bf16.msra.mxu0 %v8459
      %8480 = vmatprep.subr.bf16.mxu0 %v8462
      %8481 = vmatpush1.bf16.msra.mxu0 %v8461
      %8482 = vmatprep.subr.bf16.mxu0 %v8464
      %8483 = vmatpush1.bf16.msra.mxu0 %v8463
      %8484 = vmatprep.subr.bf16.mxu0 %v8466
      %8485 = vmatpush1.bf16.msra.mxu0 %v8465
      %8486 = vmatprep.subr.bf16.mxu0 0
      %8487 = vmatpush1.bf16.msra.mxu0 0
      %8488 = vmatprep.subr.bf16.mxu0 0
      %8489 = vmatpush1.bf16.msra.mxu0 0
      %8490 = vmatprep.subr.bf16.mxu0 0
      %8491 = vmatpush1.bf16.msra.mxu0 0
      %8492 = vmatprep.subr.bf16.mxu0 0
      %8493 = vmatpush1.bf16.msra.mxu0 0
      %8494 = vmatprep.subr.bf16.mxu0 0
      %8495 = vmatpush1.bf16.msra.mxu0 0
      %8496 = vmatprep.subr.bf16.mxu0 0
      %8497 = vmatpush1.bf16.msra.mxu0 0
      %8498 = vmatprep.subr.bf16.mxu0 0
      %8499 = vmatpush1.bf16.msra.mxu0 0
      %8500 = vmatprep.subr.bf16.mxu0 0
      %8501 = vmatpush1.bf16.msra.mxu0 0
      %8502 = vmatprep.subr.bf16.mxu0 0
      %8503 = vmatpush1.bf16.msra.mxu0 0
      %8504 = vmatprep.subr.bf16.mxu0 0
      %8505 = vmatpush1.bf16.msra.mxu0 0
      %8506 = vmatprep.subr.bf16.mxu0 0
      %8507 = vmatpush1.bf16.msra.mxu0 0
      %8508 = vmatprep.subr.bf16.mxu0 0
      %8509 = vmatpush1.bf16.msra.mxu0 0
      %8510 = vmatprep.mubr.bf16.mxu0 0
      %8511 = vmatmul.mubr.bf16.gmra.mrb[0].mxu0 %v8476
      %v8512 = vpop.f32.mrb[0].mxu0
      %v8513 = vadd.f32 0.0, %v8512
      %v8514 = vpop.f32.mrb[0].mxu0
      %v8515 = vadd.f32 0.0, %v8514
      %v8516 = vpop.f32.mrb[0].mxu0
      %v8517 = vpop.f32.mrb[0].mxu0
      %8518 = vdwg.mxu0
      %v8519 = vadd.f32 %v8424, %v8513
      %v8520 = vadd.f32 %v8425, %v8515
      %s8521 = scalar_lea.vmem %s16, 320
      %v8522 = vld [vmem:[%s8521] sm:$0xff]
      %v8523 = vld [vmem:[%s8521 + $0x8] sm:$0xff]
      %v8524 = vld [vmem:[%s8521 + $0x10] sm:$0xff]
      %v8525 = vld [vmem:[%s8521 + $0x18] sm:$0xff]
      %v8526 = vld [vmem:[%s8521 + $0x20] sm:$0xff]
      %v8527 = vld [vmem:[%s8521 + $0x28] sm:$0xff]
      %v8528 = vld [vmem:[%s8521 + $0x30] sm:$0xff]
      %v8529 = vld [vmem:[%s8521 + $0x38] sm:$0xff]
      %v8531 = vrot.slane %v8034, 4
      %v8540 = vunpack.c.l.b16 %v8522
      %v8541 = vunpack.c.h.b16 %v8522
      %v8542 = vunpack.c.l.b16 %v8523
      %v8543 = vunpack.c.h.b16 %v8523
      %v8544 = vunpack.c.l.b16 %v8524
      %v8545 = vunpack.c.h.b16 %v8524
      %v8546 = vunpack.c.l.b16 %v8525
      %v8547 = vunpack.c.h.b16 %v8525
      %v8548 = vunpack.c.l.b16 %v8526
      %v8549 = vunpack.c.h.b16 %v8526
      %v8550 = vunpack.c.l.b16 %v8527
      %v8551 = vunpack.c.h.b16 %v8527
      %v8552 = vunpack.c.l.b16 %v8528
      %v8553 = vunpack.c.h.b16 %v8528
      %v8554 = vunpack.c.l.b16 %v8529
      %v8555 = vunpack.c.h.b16 %v8529
      %v8556 = vpack.c.b16 %v8542, %v8540
      %v8557 = vpack.c.b16 %v8543, %v8541
      %v8558 = vpack.c.b16 %v8546, %v8544
      %v8559 = vpack.c.b16 %v8547, %v8545
      %v8560 = vpack.c.b16 %v8550, %v8548
      %v8561 = vpack.c.b16 %v8551, %v8549
      %v8562 = vpack.c.b16 %v8554, %v8552
      %v8563 = vpack.c.b16 %v8555, %v8553
      %v8573 = vsel %vm2417, %v8531, 0
      %8575 = vmatprep.subr.bf16.mxu0 %v8557
      %8576 = vmatpush1.bf16.msra.mxu0 %v8556
      %8577 = vmatprep.subr.bf16.mxu0 %v8559
      %8578 = vmatpush1.bf16.msra.mxu0 %v8558
      %8579 = vmatprep.subr.bf16.mxu0 %v8561
      %8580 = vmatpush1.bf16.msra.mxu0 %v8560
      %8581 = vmatprep.subr.bf16.mxu0 %v8563
      %8582 = vmatpush1.bf16.msra.mxu0 %v8562
      %8583 = vmatprep.subr.bf16.mxu0 0
      %8584 = vmatpush1.bf16.msra.mxu0 0
      %8585 = vmatprep.subr.bf16.mxu0 0
      %8586 = vmatpush1.bf16.msra.mxu0 0
      %8587 = vmatprep.subr.bf16.mxu0 0
      %8588 = vmatpush1.bf16.msra.mxu0 0
      %8589 = vmatprep.subr.bf16.mxu0 0
      %8590 = vmatpush1.bf16.msra.mxu0 0
      %8591 = vmatprep.subr.bf16.mxu0 0
      %8592 = vmatpush1.bf16.msra.mxu0 0
      %8593 = vmatprep.subr.bf16.mxu0 0
      %8594 = vmatpush1.bf16.msra.mxu0 0
      %8595 = vmatprep.subr.bf16.mxu0 0
      %8596 = vmatpush1.bf16.msra.mxu0 0
      %8597 = vmatprep.subr.bf16.mxu0 0
      %8598 = vmatpush1.bf16.msra.mxu0 0
      %8599 = vmatprep.subr.bf16.mxu0 0
      %8600 = vmatpush1.bf16.msra.mxu0 0
      %8601 = vmatprep.subr.bf16.mxu0 0
      %8602 = vmatpush1.bf16.msra.mxu0 0
      %8603 = vmatprep.subr.bf16.mxu0 0
      %8604 = vmatpush1.bf16.msra.mxu0 0
      %8605 = vmatprep.subr.bf16.mxu0 0
      %8606 = vmatpush1.bf16.msra.mxu0 0
      %8607 = vmatprep.mubr.bf16.mxu0 0
      %8608 = vmatmul.mubr.bf16.gmra.mrb[0].mxu0 %v8573
      %v8609 = vpop.f32.mrb[0].mxu0
      %v8610 = vadd.f32 0.0, %v8609
      %v8611 = vpop.f32.mrb[0].mxu0
      %v8612 = vadd.f32 0.0, %v8611
      %v8613 = vpop.f32.mrb[0].mxu0
      %v8614 = vpop.f32.mrb[0].mxu0
      %8615 = vdwg.mxu0
      %v8616 = vadd.f32 %v8519, %v8610
      %v8617 = vadd.f32 %v8520, %v8612
      %s8618 = scalar_lea.vmem %s16, 384
      %v8619 = vld [vmem:[%s8618] sm:$0xff]
      %v8620 = vld [vmem:[%s8618 + $0x8] sm:$0xff]
      %v8621 = vld [vmem:[%s8618 + $0x10] sm:$0xff]
      %v8622 = vld [vmem:[%s8618 + $0x18] sm:$0xff]
      %v8623 = vld [vmem:[%s8618 + $0x20] sm:$0xff]
      %v8624 = vld [vmem:[%s8618 + $0x28] sm:$0xff]
      %v8625 = vld [vmem:[%s8618 + $0x30] sm:$0xff]
      %v8626 = vld [vmem:[%s8618 + $0x38] sm:$0xff]
      %v8635 = vunpack.c.l.b16 %v8619
      %v8636 = vunpack.c.h.b16 %v8619
      %v8637 = vunpack.c.l.b16 %v8620
      %v8638 = vunpack.c.h.b16 %v8620
      %v8639 = vunpack.c.l.b16 %v8621
      %v8640 = vunpack.c.h.b16 %v8621
      %v8641 = vunpack.c.l.b16 %v8622
      %v8642 = vunpack.c.h.b16 %v8622
      %v8643 = vunpack.c.l.b16 %v8623
      %v8644 = vunpack.c.h.b16 %v8623
      %v8645 = vunpack.c.l.b16 %v8624
      %v8646 = vunpack.c.h.b16 %v8624
      %v8647 = vunpack.c.l.b16 %v8625
      %v8648 = vunpack.c.h.b16 %v8625
      %v8649 = vunpack.c.l.b16 %v8626
      %v8650 = vunpack.c.h.b16 %v8626
      %v8651 = vpack.c.b16 %v8637, %v8635
      %v8652 = vpack.c.b16 %v8638, %v8636
      %v8653 = vpack.c.b16 %v8641, %v8639
      %v8654 = vpack.c.b16 %v8642, %v8640
      %v8655 = vpack.c.b16 %v8645, %v8643
      %v8656 = vpack.c.b16 %v8646, %v8644
      %v8657 = vpack.c.b16 %v8649, %v8647
      %v8658 = vpack.c.b16 %v8650, %v8648
      %v8668 = vsel %vm2417, %v8035, 0
      %8670 = vmatprep.subr.bf16.mxu0 %v8652
      %8671 = vmatpush1.bf16.msra.mxu0 %v8651
      %8672 = vmatprep.subr.bf16.mxu0 %v8654
      %8673 = vmatpush1.bf16.msra.mxu0 %v8653
      %8674 = vmatprep.subr.bf16.mxu0 %v8656
      %8675 = vmatpush1.bf16.msra.mxu0 %v8655
      %8676 = vmatprep.subr.bf16.mxu0 %v8658
      %8677 = vmatpush1.bf16.msra.mxu0 %v8657
      %8678 = vmatprep.subr.bf16.mxu0 0
      %8679 = vmatpush1.bf16.msra.mxu0 0
      %8680 = vmatprep.subr.bf16.mxu0 0
      %8681 = vmatpush1.bf16.msra.mxu0 0
      %8682 = vmatprep.subr.bf16.mxu0 0
      %8683 = vmatpush1.bf16.msra.mxu0 0
      %8684 = vmatprep.subr.bf16.mxu0 0
      %8685 = vmatpush1.bf16.msra.mxu0 0
      %8686 = vmatprep.subr.bf16.mxu0 0
      %8687 = vmatpush1.bf16.msra.mxu0 0
      %8688 = vmatprep.subr.bf16.mxu0 0
      %8689 = vmatpush1.bf16.msra.mxu0 0
      %8690 = vmatprep.subr.bf16.mxu0 0
      %8691 = vmatpush1.bf16.msra.mxu0 0
      %8692 = vmatprep.subr.bf16.mxu0 0
      %8693 = vmatpush1.bf16.msra.mxu0 0
      %8694 = vmatprep.subr.bf16.mxu0 0
      %8695 = vmatpush1.bf16.msra.mxu0 0
      %8696 = vmatprep.subr.bf16.mxu0 0
      %8697 = vmatpush1.bf16.msra.mxu0 0
      %8698 = vmatprep.subr.bf16.mxu0 0
      %8699 = vmatpush1.bf16.msra.mxu0 0
      %8700 = vmatprep.subr.bf16.mxu0 0
      %8701 = vmatpush1.bf16.msra.mxu0 0
      %8702 = vmatprep.mubr.bf16.mxu0 0
      %8703 = vmatmul.mubr.bf16.gmra.mrb[0].mxu0 %v8668
      %v8704 = vpop.f32.mrb[0].mxu0
      %v8705 = vadd.f32 0.0, %v8704
      %v8706 = vpop.f32.mrb[0].mxu0
      %v8707 = vadd.f32 0.0, %v8706
      %v8708 = vpop.f32.mrb[0].mxu0
      %v8709 = vpop.f32.mrb[0].mxu0
      %8710 = vdwg.mxu0
      %v8711 = vadd.f32 %v8616, %v8705
      %v8712 = vadd.f32 %v8617, %v8707
      %s8713 = scalar_lea.vmem %s16, 448
      %v8714 = vld [vmem:[%s8713] sm:$0xff]
      %v8715 = vld [vmem:[%s8713 + $0x8] sm:$0xff]
      %v8716 = vld [vmem:[%s8713 + $0x10] sm:$0xff]
      %v8717 = vld [vmem:[%s8713 + $0x18] sm:$0xff]
      %v8718 = vld [vmem:[%s8713 + $0x20] sm:$0xff]
      %v8719 = vld [vmem:[%s8713 + $0x28] sm:$0xff]
      %v8720 = vld [vmem:[%s8713 + $0x30] sm:$0xff]
      %v8721 = vld [vmem:[%s8713 + $0x38] sm:$0xff]
      %v8723 = vrot.slane %v8035, 4
      %v8732 = vunpack.c.l.b16 %v8714
      %v8733 = vunpack.c.h.b16 %v8714
      %v8734 = vunpack.c.l.b16 %v8715
      %v8735 = vunpack.c.h.b16 %v8715
      %v8736 = vunpack.c.l.b16 %v8716
      %v8737 = vunpack.c.h.b16 %v8716
      %v8738 = vunpack.c.l.b16 %v8717
      %v8739 = vunpack.c.h.b16 %v8717
      %v8740 = vunpack.c.l.b16 %v8718
      %v8741 = vunpack.c.h.b16 %v8718
      %v8742 = vunpack.c.l.b16 %v8719
      %v8743 = vunpack.c.h.b16 %v8719
      %v8744 = vunpack.c.l.b16 %v8720
      %v8745 = vunpack.c.h.b16 %v8720
      %v8746 = vunpack.c.l.b16 %v8721
      %v8747 = vunpack.c.h.b16 %v8721
      %v8748 = vpack.c.b16 %v8734, %v8732
      %v8749 = vpack.c.b16 %v8735, %v8733
      %v8750 = vpack.c.b16 %v8738, %v8736
      %v8751 = vpack.c.b16 %v8739, %v8737
      %v8752 = vpack.c.b16 %v8742, %v8740
      %v8753 = vpack.c.b16 %v8743, %v8741
      %v8754 = vpack.c.b16 %v8746, %v8744
      %v8755 = vpack.c.b16 %v8747, %v8745
      %v8765 = vsel %vm2417, %v8723, 0
      %8767 = vmatprep.subr.bf16.mxu0 %v8749
      %8768 = vmatpush1.bf16.msra.mxu0 %v8748
      %8769 = vmatprep.subr.bf16.mxu0 %v8751
      %8770 = vmatpush1.bf16.msra.mxu0 %v8750
      %8771 = vmatprep.subr.bf16.mxu0 %v8753
      %8772 = vmatpush1.bf16.msra.mxu0 %v8752
      %8773 = vmatprep.subr.bf16.mxu0 %v8755
      %8774 = vmatpush1.bf16.msra.mxu0 %v8754
      %8775 = vmatprep.subr.bf16.mxu0 0
      %8776 = vmatpush1.bf16.msra.mxu0 0
      %8777 = vmatprep.subr.bf16.mxu0 0
      %8778 = vmatpush1.bf16.msra.mxu0 0
      %8779 = vmatprep.subr.bf16.mxu0 0
      %8780 = vmatpush1.bf16.msra.mxu0 0
      %8781 = vmatprep.subr.bf16.mxu0 0
      %8782 = vmatpush1.bf16.msra.mxu0 0
      %8783 = vmatprep.subr.bf16.mxu0 0
      %8784 = vmatpush1.bf16.msra.mxu0 0
      %8785 = vmatprep.subr.bf16.mxu0 0
      %8786 = vmatpush1.bf16.msra.mxu0 0
      %8787 = vmatprep.subr.bf16.mxu0 0
      %8788 = vmatpush1.bf16.msra.mxu0 0
      %8789 = vmatprep.subr.bf16.mxu0 0
      %8790 = vmatpush1.bf16.msra.mxu0 0
      %8791 = vmatprep.subr.bf16.mxu0 0
      %8792 = vmatpush1.bf16.msra.mxu0 0
      %8793 = vmatprep.subr.bf16.mxu0 0
      %8794 = vmatpush1.bf16.msra.mxu0 0
      %8795 = vmatprep.subr.bf16.mxu0 0
      %8796 = vmatpush1.bf16.msra.mxu0 0
      %8797 = vmatprep.subr.bf16.mxu0 0
      %8798 = vmatpush1.bf16.msra.mxu0 0
      %8799 = vmatprep.mubr.bf16.mxu0 0
      %8800 = vmatmul.mubr.bf16.gmra.mrb[0].mxu0 %v8765
      %v8801 = vpop.f32.mrb[0].mxu0
      %v8802 = vadd.f32 0.0, %v8801
      %v8803 = vpop.f32.mrb[0].mxu0
      %v8804 = vadd.f32 0.0, %v8803
      %v8805 = vpop.f32.mrb[0].mxu0
      %v8806 = vpop.f32.mrb[0].mxu0
      %8807 = vdwg.mxu0
      %v8808 = vadd.f32 %v8711, %v8802
      %v8809 = vadd.f32 %v8712, %v8804
      %s8810 = scalar_lea.vmem %s16, 512
      %v8811 = vld [vmem:[%s8810] sm:$0xff]
      %v8812 = vld [vmem:[%s8810 + $0x8] sm:$0xff]
      %v8813 = vld [vmem:[%s8810 + $0x10] sm:$0xff]
      %v8814 = vld [vmem:[%s8810 + $0x18] sm:$0xff]
      %v8815 = vld [vmem:[%s8810 + $0x20] sm:$0xff]
      %v8816 = vld [vmem:[%s8810 + $0x28] sm:$0xff]
      %v8817 = vld [vmem:[%s8810 + $0x30] sm:$0xff]
      %v8818 = vld [vmem:[%s8810 + $0x38] sm:$0xff]
      %v8827 = vunpack.c.l.b16 %v8811
      %v8828 = vunpack.c.h.b16 %v8811
      %v8829 = vunpack.c.l.b16 %v8812
      %v8830 = vunpack.c.h.b16 %v8812
      %v8831 = vunpack.c.l.b16 %v8813
      %v8832 = vunpack.c.h.b16 %v8813
      %v8833 = vunpack.c.l.b16 %v8814
      %v8834 = vunpack.c.h.b16 %v8814
      %v8835 = vunpack.c.l.b16 %v8815
      %v8836 = vunpack.c.h.b16 %v8815
      %v8837 = vunpack.c.l.b16 %v8816
      %v8838 = vunpack.c.h.b16 %v8816
      %v8839 = vunpack.c.l.b16 %v8817
      %v8840 = vunpack.c.h.b16 %v8817
      %v8841 = vunpack.c.l.b16 %v8818
      %v8842 = vunpack.c.h.b16 %v8818
      %v8843 = vpack.c.b16 %v8829, %v8827
      %v8844 = vpack.c.b16 %v8830, %v8828
      %v8845 = vpack.c.b16 %v8833, %v8831
      %v8846 = vpack.c.b16 %v8834, %v8832
      %v8847 = vpack.c.b16 %v8837, %v8835
      %v8848 = vpack.c.b16 %v8838, %v8836
      %v8849 = vpack.c.b16 %v8841, %v8839
      %v8850 = vpack.c.b16 %v8842, %v8840
      %v8860 = vsel %vm2417, %v8036, 0
      %8862 = vmatprep.subr.bf16.mxu0 %v8844
      %8863 = vmatpush1.bf16.msra.mxu0 %v8843
      %8864 = vmatprep.subr.bf16.mxu0 %v8846
      %8865 = vmatpush1.bf16.msra.mxu0 %v8845
      %8866 = vmatprep.subr.bf16.mxu0 %v8848
      %8867 = vmatpush1.bf16.msra.mxu0 %v8847
      %8868 = vmatprep.subr.bf16.mxu0 %v8850
      %8869 = vmatpush1.bf16.msra.mxu0 %v8849
      %8870 = vmatprep.subr.bf16.mxu0 0
      %8871 = vmatpush1.bf16.msra.mxu0 0
      %8872 = vmatprep.subr.bf16.mxu0 0
      %8873 = vmatpush1.bf16.msra.mxu0 0
      %8874 = vmatprep.subr.bf16.mxu0 0
      %8875 = vmatpush1.bf16.msra.mxu0 0
      %8876 = vmatprep.subr.bf16.mxu0 0
      %8877 = vmatpush1.bf16.msra.mxu0 0
      %8878 = vmatprep.subr.bf16.mxu0 0
      %8879 = vmatpush1.bf16.msra.mxu0 0
      %8880 = vmatprep.subr.bf16.mxu0 0
      %8881 = vmatpush1.bf16.msra.mxu0 0
      %8882 = vmatprep.subr.bf16.mxu0 0
      %8883 = vmatpush1.bf16.msra.mxu0 0
      %8884 = vmatprep.subr.bf16.mxu0 0
      %8885 = vmatpush1.bf16.msra.mxu0 0
      %8886 = vmatprep.subr.bf16.mxu0 0
      %8887 = vmatpush1.bf16.msra.mxu0 0
      %8888 = vmatprep.subr.bf16.mxu0 0
      %8889 = vmatpush1.bf16.msra.mxu0 0
      %8890 = vmatprep.subr.bf16.mxu0 0
      %8891 = vmatpush1.bf16.msra.mxu0 0
      %8892 = vmatprep.subr.bf16.mxu0 0
      %8893 = vmatpush1.bf16.msra.mxu0 0
      %8894 = vmatprep.mubr.bf16.mxu0 0
      %8895 = vmatmul.mubr.bf16.gmra.mrb[0].mxu0 %v8860
      %v8896 = vpop.f32.mrb[0].mxu0
      %v8897 = vadd.f32 0.0, %v8896
      %v8898 = vpop.f32.mrb[0].mxu0
      %v8899 = vadd.f32 0.0, %v8898
      %v8900 = vpop.f32.mrb[0].mxu0
      %v8901 = vpop.f32.mrb[0].mxu0
      %8902 = vdwg.mxu0
      %v8903 = vadd.f32 %v8808, %v8897
      %v8904 = vadd.f32 %v8809, %v8899
      %v8905 = vsub.f32 0.0, %v8903
      %v8906 = vsub.f32 0.0, %v8904
      %v8907 = vmul.f32 %v8905, 1.442695
      %v8908 = vpow.pop %v8907
      %v8909 = vmul.f32 %v8906, 1.442695
      %v8910 = vpow.pop %v8909
      %v8911 = vadd.f32 %v8908, 1.0
      %v8912 = vadd.f32 %v8910, 1.0
      %v8913 = vrcp.pop %v8911
      %v8914 = vmul.f32 1.0, %v8913
      %v8915 = vrcp.pop %v8912
      %v8916 = vmul.f32 1.0, %v8915
      %8917 = vst [vmem:[%s602] sm:$0xff] %v8914
      %8918 = vst [vmem:[%s602 + $0x8] sm:$0xff] %v8916
      %p8919 = scmp.lt.s32.totalorder %s30, 1
      %s8920 = scalar_select %p8919, %s30, 1
      %s8921 = smul.addr %s8920, 2
      %s8922 = smul.addr %s8921, 8
      %s8923 = scalar_lea.vmem %s19, %s8922
      // Predicated region
      $region97: #{forward.1} parent=95 // pred_check
        %p8924 = pneg %p452
      $region98: #{forward.1} parent=95 // pred_check_branch
        %8926 = sbr.rel (%p8924) target = $region100
      $region99: #{forward.1} parent=95 // pred_region
        _
      $region100: #{forward.1} parent=95 // pred_fallthru
        _
    $region96: #{forward.1} parent=5 // pred_fallthru
      _
    %p8927 = scmp.le.s32.totalorder 2, %s25
    // Predicated region
    $region101: #{forward.1} parent=5 // pred_check
      %p8928 = pneg %p8927
    $region102: #{forward.1} parent=5 // pred_check_branch
      %8930 = sbr.rel (%p8928) target = $region104
    $region103: #{forward.1} parent=5 // pred_region
      %s8931 = ssub.s32 %s25, 2
      // Predicated region
      $region105: #{forward.1} parent=103 // pred_check
        %p8932 = pneg %p458
      $region106: #{forward.1} parent=103 // pred_check_branch
        %8934 = sbr.rel (%p8932) target = $region108
      $region107: #{forward.1} parent=103 // pred_region
        %p8935 = scmp.lt.s32.totalorder %s31, 1
        %s8936 = scalar_select %p8935, %s31, 1
        %s8937 = smul.addr %s8936, 2
        %s8938 = smul.addr %s8937, 8
        %s8939 = scalar_lea.vmem %s19, %s8938
      $region108: #{forward.1} parent=103 // pred_fallthru
        _
    $region104: #{forward.1} parent=5 // pred_fallthru
      _
  $region6: #{forward.1} parent=0 // loop_footer
    %s29 = sadd.s32 1, %s25
  $region7: #{forward.1} parent=0 // loop_footer_branch
    %24 = sbr.rel target = $region3
  $region8: #{forward.1} parent=0 // loop_exit
    _

</llo_original>
